<compile_context>
chip_gen: v5e
topology: v5e:2x2
jax: 0.10.0
libtpu: 0.0.40
codegen_flags: <defaults>
</compile_context>

<pallas_src>
import jax
import jax.numpy as jnp
from jax.experimental import pallas as pl
from jax.experimental.pallas import tpu as pltpu

OUT_CLASSES = 5
OUT_PAD = 128        # Linear(256,5) zero-padded to a lane-dense width; sliced outside
FEAT_DIM = 1280      # EfficientNet-B0 feature width
BN_EPS = 1e-5


def _pick_chunk(hw, max_chunk):
    """Largest spatial chunk that is a multiple of 128, divides hw, <= max_chunk.

    On v7x (64 MiB VMEM) keep max_chunk ~1024; v5e/v6e can take 2x larger.
    """
    if hw % 128 != 0:
        return hw                         # fall back to one full-width block
    c = max(128, (min(max_chunk, hw) // 128) * 128)
    while hw % c != 0:
        c -= 128
    return c


def _make_kernel(inv_hw):
    """Build the fused kernel; inv_hw (= 1/(H*W)) is baked in as a constant."""

    def kernel(x_ref, wft_ref, bfc_ref, weff_ref, beff_ref, o_ref, acc_ref):
        # grid = (image n [parallel], spatial chunk k [arbitrary / reduction])
        k = pl.program_id(1)

        @pl.when(k == 0)
        def _init():
            acc_ref[...] = jnp.zeros_like(acc_ref)

        # ---- features stand-in: pointwise conv + SiLU (transposed layout) ----
        # x chunk is (C, CHUNK): spatial on lanes (dense), C on sublanes.
        # wf^T is (1280, C).  Single 2-D MXU matmul, f32 accumulation.
        xc = x_ref[0]                                         # (C, CHUNK)
        h = jnp.dot(wft_ref[...], xc,
                    preferred_element_type=jnp.float32)       # (1280, CHUNK) f32
        h = h + bfc_ref[...]                                  # bias, lane-broadcast
        h = h * jax.nn.sigmoid(h)                             # SiLU in f32 (v5e-safe)

        # Running spatial SUM per feature; the 1/HW mean is folded in later.
        acc_ref[...] += jnp.sum(h, axis=1, keepdims=True)     # (1280, 1)

        # ---- finalize: global-avg-pool + folded classifier affine ----
        @pl.when(k == pl.num_programs(1) - 1)
        def _finalize():
            feat_sum = acc_ref[...]                           # (1280, 1)
            # (feat_sum/HW) @ W_eff as a lane-broadcast multiply + sublane reduce
            # (tiny: 1280x128), keeping everything in f32.
            logits = jnp.sum(feat_sum * weff_ref[...], axis=0, keepdims=True)
            logits = logits * inv_hw + beff_ref[...]          # (1, OUT_PAD)
            o_ref[0] = logits.astype(o_ref.dtype)

    return kernel


def efficientnet_forward(x_nchw, folded, *, matmul_dtype=jnp.bfloat16,
                         max_chunk=1024):
    """Fused forward pass.  `folded` comes from fold_params(init_params(...))."""
    N, C, H, W = x_nchw.shape
    HW = H * W

    # NCHW already has channels leading: a free reshape gives the lane-dense
    # (N, C, HW) layout.  MXU operands are cast to `matmul_dtype` here so DMA
    # and VMEM also shrink when bf16 is used; accumulation stays f32.
    x = x_nchw.reshape(N, C, HW).astype(matmul_dtype)
    wft = folded['wft'].astype(matmul_dtype)

    chunk = _pick_chunk(HW, max_chunk)
    n_chunks = HW // chunk

    kernel = _make_kernel(inv_hw=1.0 / HW)

    out = pl.pallas_call(
        kernel,
        out_shape=jax.ShapeDtypeStruct((N, 1, OUT_PAD), jnp.float32),
        grid_spec=pltpu.PrefetchScalarGridSpec(
            num_scalar_prefetch=0,
            grid=(N, n_chunks),
            in_specs=[
                pl.BlockSpec((1, C, chunk), lambda n, k: (n, 0, k)),      # x
                pl.BlockSpec((FEAT_DIM, C), lambda n, k: (0, 0)),         # wf^T
                pl.BlockSpec((FEAT_DIM, 1), lambda n, k: (0, 0)),         # bf
                pl.BlockSpec((FEAT_DIM, OUT_PAD), lambda n, k: (0, 0)),   # W_eff
                pl.BlockSpec((1, OUT_PAD), lambda n, k: (0, 0)),          # b_eff
            ],
            out_specs=pl.BlockSpec((1, 1, OUT_PAD), lambda n, k: (n, 0, 0)),
            scratch_shapes=[pltpu.VMEM((FEAT_DIM, 1), jnp.float32)],
        ),
        compiler_params=pltpu.CompilerParams(
            dimension_semantics=("parallel", "arbitrary"),
            vmem_limit_bytes=32 * 1024 * 1024,
        ),
    )(x, wft, folded['bf_col'], folded['w_eff'], folded['b_eff'])

    return out.reshape(N, OUT_PAD)[:, :OUT_CLASSES]


def init_params(key, in_ch):
    keys = jax.random.split(key, 8)

    def linear_init(k, fan_in, fan_out):
        # PyTorch nn.Linear default: U(-1/sqrt(fan_in), 1/sqrt(fan_in))
        kw, kb = jax.random.split(k)
        bound = 1.0 / (fan_in ** 0.5)
        w = jax.random.uniform(kw, (fan_in, fan_out), jnp.float32, -bound, bound)
        b = jax.random.uniform(kb, (1, fan_out), jnp.float32, -bound, bound)
        return w, b

    wf, bf = linear_init(keys[0], in_ch, FEAT_DIM)      # stand-in 1x1 conv
    w1, b1 = linear_init(keys[1], FEAT_DIM, 512)
    w2, b2 = linear_init(keys[2], 512, 256)
    w3, b3 = linear_init(keys[3], 256, OUT_CLASSES)
    w3p = jnp.zeros((256, OUT_PAD), jnp.float32).at[:, :OUT_CLASSES].set(w3)
    b3p = jnp.zeros((1, OUT_PAD), jnp.float32).at[:, :OUT_CLASSES].set(b3)

    gamma = jax.random.uniform(keys[4], (1, 512), jnp.float32, 0.5, 1.5)
    beta = 0.1 * jax.random.normal(keys[5], (1, 512), dtype=jnp.float32)
    rmean = 0.1 * jax.random.normal(keys[6], (1, 512), dtype=jnp.float32)
    rvar = jax.random.uniform(keys[7], (1, 512), jnp.float32, 0.5, 1.5)

    return dict(wf=wf, bf=bf, w1=w1, b1=b1, w2=w2, b2=b2, w3p=w3p, b3p=b3p,
                gamma=gamma, beta=beta, rmean=rmean, rvar=rvar)


def fold_params(p):
    """Precompute (once, outside the kernel) the folded classifier affine."""
    hi = jax.lax.Precision.HIGHEST
    wft = jnp.transpose(p['wf'])                              # (1280, C)
    bf_col = jnp.reshape(p['bf'], (FEAT_DIM, 1))              # (1280, 1)

    # BatchNorm1d (eval) folded into the first Linear:
    s = p['gamma'] * jax.lax.rsqrt(p['rvar'] + BN_EPS)        # (1, 512)
    a1 = p['w1'] * s                                          # (1280, 512)
    c1 = (p['b1'] - p['rmean']) * s + p['beta']               # (1, 512)

    # Dropout(0.7)/Dropout(0.6) are identity at inference -> pure affine chain.
    w12 = jnp.dot(a1, p['w2'], precision=hi)                  # (1280, 256)
    w_eff = jnp.dot(w12, p['w3p'], precision=hi)              # (1280, OUT_PAD)
    b_eff = jnp.dot(jnp.dot(c1, p['w2'], precision=hi) + p['b2'],
                    p['w3p'], precision=hi) + p['b3p']        # (1, OUT_PAD)

    return dict(wft=wft, bf_col=bf_col, w_eff=w_eff, b_eff=b_eff)


def reference_forward(x_nchw, p, *, matmul_dtype=jnp.float32):
    """Unfused, layer-by-layer f32 reference mirroring the PyTorch module."""
    hi = jax.lax.Precision.HIGHEST
    N, C, H, W = x_nchw.shape
    x = x_nchw.reshape(N, C, H * W)
    h = jnp.einsum('ncs,cf->nsf',
                   x.astype(matmul_dtype), p['wf'].astype(matmul_dtype),
                   preferred_element_type=jnp.float32, precision=hi) + p['bf']
    h = h * jax.nn.sigmoid(h)                                  # SiLU
    feat = jnp.mean(h, axis=1)                                 # avgpool + flatten
    # classifier[0] = Dropout(0.2): identity at inference.
    y = jnp.dot(feat, p['w1'], precision=hi) + p['b1']
    y = (y - p['rmean']) / jnp.sqrt(p['rvar'] + BN_EPS) * p['gamma'] + p['beta']
    y = jnp.dot(y, p['w2'], precision=hi) + p['b2']
    y = jnp.dot(y, p['w3p'], precision=hi) + p['b3p']
    return y[:, :OUT_CLASSES]


if __name__ == "__main__":
    key = jax.random.PRNGKey(0)
    k_x, k_p = jax.random.split(key)

    N, C, H, W = 2, 3, 16, 16                       # small NCHW image batch
    x = jax.random.normal(k_x, (N, C, H, W), dtype=jnp.float32)
    params = init_params(k_p, C)
    folded = fold_params(params)

    # 1) f32 MXU path, 2 spatial chunks -> exercises the accumulator; tight check.
    out_f32 = efficientnet_forward(x, folded, matmul_dtype=jnp.float32,
                                   max_chunk=128)
    out_f32 = jax.block_until_ready(out_f32)
    ref_f32 = reference_forward(x, params, matmul_dtype=jnp.float32)
    assert out_f32.shape == (N, OUT_CLASSES)
    assert jnp.allclose(out_f32, ref_f32, rtol=1e-3, atol=1e-3), "f32 mismatch"

    # 2) bf16 MXU operands + f32 accumulation (production config per review).
    out_bf16 = efficientnet_forward(x, folded, matmul_dtype=jnp.bfloat16,
                                    max_chunk=256)
    out_bf16 = jax.block_until_ready(out_bf16)
    ref_bf16 = reference_forward(x, params, matmul_dtype=jnp.bfloat16)
    assert jnp.allclose(out_bf16, ref_bf16, rtol=1e-3, atol=1e-3), "bf16 mismatch"
    assert jnp.allclose(out_bf16, ref_f32, rtol=2e-2, atol=2e-2), "bf16 drift"

    print("KERNEL_OK")
</pallas_src>

<mosaic_0001>
module attributes {stable_mosaic.version = 11 : i64} {
  func.func @kernel(%arg0: i32, %arg1: i32, %arg2: memref<1x3x128xf32, #tpu.memory_space<vmem>>, %arg3: memref<1280x3xf32, #tpu.memory_space<vmem>>, %arg4: memref<1280x1xf32, #tpu.memory_space<vmem>>, %arg5: memref<1280x128xf32, #tpu.memory_space<vmem>>, %arg6: memref<1x128xf32, #tpu.memory_space<vmem>>, %arg7: memref<1x1x128xf32, #tpu.memory_space<vmem>>, %arg8: memref<1280x1xf32, #tpu.memory_space<vmem>>) attributes {dimension_semantics = [#tpu.dimension_semantics<parallel>, #tpu.dimension_semantics<arbitrary>], iteration_bounds = array<i64: 2, 2>, scalar_prefetch = 0 : i64, scratch_operands = 1 : i64, tpu.core_type = #tpu.core_type<tc>, window_params = [{transform_indices = @transform_0, window_bounds = array<i64: 1, 3, 128>}, {pipeline_mode = #tpu.pipeline_mode<synchronous>, transform_indices = @transform_1, window_bounds = array<i64: 1280, 3>}, {pipeline_mode = #tpu.pipeline_mode<synchronous>, transform_indices = @transform_2, window_bounds = array<i64: 1280, 1>}, {pipeline_mode = #tpu.pipeline_mode<synchronous>, transform_indices = @transform_3, window_bounds = array<i64: 1280, 128>}, {pipeline_mode = #tpu.pipeline_mode<synchronous>, transform_indices = @transform_4, window_bounds = array<i64: 1, 128>}, {transform_indices = @transform_5, window_bounds = array<i64: 1, 1, 128>}]} {
    %c0_i32 = arith.constant 0 : i32
    %0 = arith.cmpi eq, %arg1, %c0_i32 : i32
    %1 = arith.extui %0 : i1 to i32
    %c0_i32_0 = arith.constant 0 : i32
    %2 = arith.cmpi ne, %1, %c0_i32_0 : i32
    scf.if %2 {
      %cst_14 = arith.constant 0.000000e+00 : f32
      %24 = vector.broadcast %cst_14 : f32 to vector<1280x1xf32>
      %c0_15 = arith.constant 0 : index
      %c0_16 = arith.constant 0 : index
      %25 = vector.load %arg8[%c0_15, %c0_16] : memref<1280x1xf32, #tpu.memory_space<vmem>>, vector<1280x1xf32>
      tpu.vector_store %arg8[%c0_15, %c0_16], %24 {strides = array<i32>} : memref<1280x1xf32, #tpu.memory_space<vmem>>, vector<1280x1xf32>,
    } else {
    }
    %c0 = arith.constant 0 : index
    %c0_1 = arith.constant 0 : index
    %c0_2 = arith.constant 0 : index
    %3 = vector.load %arg2[%c0, %c0_1, %c0_2] : memref<1x3x128xf32, #tpu.memory_space<vmem>>, vector<1x3x128xf32>
    %4 = vector.shape_cast %3 : vector<1x3x128xf32> to vector<3x128xf32>
    %c0_3 = arith.constant 0 : index
    %c0_4 = arith.constant 0 : index
    %5 = vector.load %arg3[%c0_3, %c0_4] : memref<1280x3xf32, #tpu.memory_space<vmem>>, vector<1280x3xf32>
    %cst = arith.constant dense<0.000000e+00> : vector<1280x128xf32>
    %6 = tpu.matmul %5, %4, %cst {dimension_numbers = #tpu.dot_dimension_numbers<[1], [0], [0], [1], [0, 0, 1, 1], [], []>} : vector<1280x3xf32>, vector<3x128xf32>, vector<1280x128xf32> -> vector<1280x128xf32>
    %c0_5 = arith.constant 0 : index
    %c0_6 = arith.constant 0 : index
    %7 = vector.load %arg4[%c0_5, %c0_6] : memref<1280x1xf32, #tpu.memory_space<vmem>>, vector<1280x1xf32>
    %8 = vector.broadcast %7 : vector<1280x1xf32> to vector<1280x128xf32>
    %9 = arith.addf %6, %8 : vector<1280x128xf32>
    %10 = arith.negf %9 : vector<1280x128xf32>
    %11 = math.exp %10 : vector<1280x128xf32>
    %cst_7 = arith.constant 1.000000e+00 : f32
    %12 = vector.broadcast %cst_7 : f32 to vector<1280x128xf32>
    %13 = arith.addf %12, %11 : vector<1280x128xf32>
    %14 = arith.divf %12, %13 : vector<1280x128xf32>
    %15 = arith.mulf %9, %14 : vector<1280x128xf32>
    %c0_8 = arith.constant 0 : index
    %c0_9 = arith.constant 0 : index
    %16 = vector.load %arg8[%c0_8, %c0_9] : memref<1280x1xf32, #tpu.memory_space<vmem>>, vector<1280x1xf32>
    %cst_10 = arith.constant dense<0.000000e+00> : vector<1280xf32>
    %17 = vector.multi_reduction <add>, %15, %cst_10 [1] : vector<1280x128xf32> to vector<1280xf32>
    %18 = vector.shape_cast %17 : vector<1280xf32> to vector<1280x1xf32>
    %19 = arith.addf %16, %18 : vector<1280x1xf32>
    %c0_11 = arith.constant 0 : index
    %c0_12 = arith.constant 0 : index
    %20 = vector.load %arg8[%c0_11, %c0_12] : memref<1280x1xf32, #tpu.memory_space<vmem>>, vector<1280x1xf32>
    tpu.vector_store %arg8[%c0_11, %c0_12], %19 {strides = array<i32>} : memref<1280x1xf32, #tpu.memory_space<vmem>>, vector<1280x1xf32>,
    %c1_i32 = arith.constant 1 : i32
    %21 = arith.cmpi eq, %arg1, %c1_i32 : i32
    %22 = arith.extui %21 : i1 to i32
    %c0_i32_13 = arith.constant 0 : i32
    %23 = arith.cmpi ne, %22, %c0_i32_13 : i32
    scf.if %23 {
      %c0_14 = arith.constant 0 : index
      %c0_15 = arith.constant 0 : index
      %24 = vector.load %arg8[%c0_14, %c0_15] : memref<1280x1xf32, #tpu.memory_space<vmem>>, vector<1280x1xf32>
      %c0_16 = arith.constant 0 : index
      %c0_17 = arith.constant 0 : index
      %25 = vector.load %arg5[%c0_16, %c0_17] : memref<1280x128xf32, #tpu.memory_space<vmem>>, vector<1280x128xf32>
      %26 = vector.broadcast %24 : vector<1280x1xf32> to vector<1280x128xf32>
      %27 = arith.mulf %26, %25 : vector<1280x128xf32>
      %cst_18 = arith.constant dense<0.000000e+00> : vector<128xf32>
      %28 = vector.multi_reduction <add>, %27, %cst_18 [0] : vector<1280x128xf32> to vector<128xf32>
      %29 = vector.shape_cast %28 : vector<128xf32> to vector<1x128xf32>
      %cst_19 = arith.constant 3.906250e-03 : f32
      %30 = vector.broadcast %cst_19 : f32 to vector<1x128xf32>
      %31 = arith.mulf %29, %30 : vector<1x128xf32>
      %c0_20 = arith.constant 0 : index
      %c0_21 = arith.constant 0 : index
      %32 = vector.load %arg6[%c0_20, %c0_21] : memref<1x128xf32, #tpu.memory_space<vmem>>, vector<1x128xf32>
      %33 = arith.addf %31, %32 : vector<1x128xf32>
      %c0_22 = arith.constant 0 : index
      %c0_23 = arith.constant 0 : index
      %c0_24 = arith.constant 0 : index
      %34 = vector.load %arg7[%c0_22, %c0_23, %c0_24] : memref<1x1x128xf32, #tpu.memory_space<vmem>>, vector<1x1x128xf32>
      %35 = vector.shape_cast %34 : vector<1x1x128xf32> to vector<1x128xf32>
      %36 = vector.shape_cast %33 : vector<1x128xf32> to vector<1x1x128xf32>
      tpu.vector_store %arg7[%c0_22, %c0_23, %c0_24], %36 {strides = array<i32>} : memref<1x1x128xf32, #tpu.memory_space<vmem>>, vector<1x1x128xf32>,
    } else {
    }
    return
  }
  func.func @transform_0(%arg0: i32, %arg1: i32) -> (i32, i32, i32) {
    %c0_i32 = arith.constant 0 : i32
    %c0_i32_0 = arith.constant 0 : i32
    return %arg0, %c0_i32, %arg1 : i32, i32, i32
  }
  func.func @transform_1(%arg0: i32, %arg1: i32) -> (i32, i32) {
    %c0_i32 = arith.constant 0 : i32
    %c0_i32_0 = arith.constant 0 : i32
    %c0_i32_1 = arith.constant 0 : i32
    return %c0_i32, %c0_i32_0 : i32, i32
  }
  func.func @transform_2(%arg0: i32, %arg1: i32) -> (i32, i32) {
    %c0_i32 = arith.constant 0 : i32
    %c0_i32_0 = arith.constant 0 : i32
    %c0_i32_1 = arith.constant 0 : i32
    return %c0_i32, %c0_i32_0 : i32, i32
  }
  func.func @transform_3(%arg0: i32, %arg1: i32) -> (i32, i32) {
    %c0_i32 = arith.constant 0 : i32
    %c0_i32_0 = arith.constant 0 : i32
    %c0_i32_1 = arith.constant 0 : i32
    return %c0_i32, %c0_i32_0 : i32, i32
  }
  func.func @transform_4(%arg0: i32, %arg1: i32) -> (i32, i32) {
    %c0_i32 = arith.constant 0 : i32
    %c0_i32_0 = arith.constant 0 : i32
    %c0_i32_1 = arith.constant 0 : i32
    return %c0_i32, %c0_i32_0 : i32, i32
  }
  func.func @transform_5(%arg0: i32, %arg1: i32) -> (i32, i32, i32) {
    %c0_i32 = arith.constant 0 : i32
    %c0_i32_0 = arith.constant 0 : i32
    %c0_i32_1 = arith.constant 0 : i32
    return %arg0, %c0_i32, %c0_i32_0 : i32, i32, i32
  }
}

</mosaic_0001>

<llo_original>
// kernel: tpu_custom_call.1
$region0: #{tpu_custom_call.1}
  #allocation0 [shape = 'u32[]', space=smem, size = 0x4, offset = 0x4, fixed_abs, tag = 'smem constant byte address 0x4 - core index']
  #allocation1 [shape = 'u32[72,128]{1,0:T(1,128)}', space=vmem, size = 0x9000, scoped, tag = 'internal scratch']
  #allocation2 [shape = 'f32[1280,1]{1,0:T(8,128)}', space=vmem, size = 0xa0000, scoped, tag = 'scratch operand']
  %s0 = inlined_call_operand.vmem [shape: f32[2,3,256], index: 0, kind: input, shape index: {}]
  %s1 = inlined_call_operand.vmem [shape: f32[1280,3], index: 1, kind: input, shape index: {}]
  %s2 = inlined_call_operand.vmem [shape: f32[1280,1], index: 2, kind: input, shape index: {}]
  %s3 = inlined_call_operand.vmem [shape: f32[1280,128], index: 3, kind: input, shape index: {}]
  %s4 = inlined_call_operand.vmem [shape: f32[1,128], index: 4, kind: input, shape index: {}]
  %s5 = inlined_call_operand.hbm [shape: f32[2,1,128], index: 5, kind: output, shape index: {}]
  %s6 = sld [smem:[#allocation0]]
  $region61: #{tpu_custom_call.1} parent=0
    _
  %s8 = ssub.s32 1, %s6
  %s9 = scalar_select 0, %s8, %s6
  $region1: #{tpu_custom_call.1} parent=0
    #allocation3 [shape = 'u8[1024]{0}', space=vmem, size = 0x400, scoped, tag = 'output window, operand 0']
    #allocation4 [shape = 's32[2]{0}', space=sflag, size = 0x8, scoped, tag = 'scoped memory for tpu_custom_call.1']
    %10 = vsyncpa [#allocation4], 0
    %s11 = scalar_lea.sflag [#allocation4], 1
    %12 = vsyncpa %s11, 0
    loop: start=0, step=1, limit=6
    $region2: #{tpu_custom_call.1} parent=1 // loop_pre_header
      _
    $region3: #{tpu_custom_call.1} parent=1 // loop_header
      %s14 = sphi 0, %s18
      %p15 = scmp.ge.s32.totalorder %s14, 6
      %s21 = sphi 0, %s33
      %s22 = sphi 0, %s29
      %s23 = sphi 0, %s21
      %s24 = sphi 0, %s22
      %s25 = sphi 0, %s23
      %s26 = sphi 0, %s24
      %s38 = sphi 0, %s40
      %s41 = sphi 0, %s38
      %s42 = sphi 0, %s41
      %s58 = sphi 0, %s42
      %s62 = sphi 0, %s62
      %s64 = sphi 0, %s62
      %s65 = sphi 0, %s64
      %s79 = sphi 0, %s65
      %s83 = sphi 0, %s83
      %s85 = sphi 0, %s83
      %s86 = sphi 0, %s85
      %s100 = sphi 0, %s86
      %s104 = sphi 0, %s104
      %s106 = sphi 0, %s104
      %s107 = sphi 0, %s106
      %s121 = sphi 0, %s107
      %s125 = sphi 0, %s125
      %s127 = sphi 0, %s125
      %s128 = sphi 0, %s127
      %s142 = sphi 0, %s128
      %s148 = sphi 0, %s150
      %s151 = sphi 0, %s148
      %s152 = sphi 0, %s151
      %s168 = sphi 0, %s152
    $region4: #{tpu_custom_call.1} parent=1 // loop_header_branch
      %17 = sbr.rel (%p15) target = $region8
    $region5: #{tpu_custom_call.1} parent=1 // loop_body
      %s19 = ssub.s32 %s14, 1
      %s20 = ssub.s32 %s14, 2
      %s27 = sadd.s32 1, %s22
      %p28 = scmp.ge.s32.totalorder %s27, 2
      %s29 = scalar_select %p28, 0, %s27
      %s30 = sadd.s32 1, %s21
      %s31 = scalar_select %p28, %s30, %s21
      %p32 = scmp.ge.s32.totalorder %s31, 2
      %s33 = scalar_select %p32, 0, %s31
      %s34 = ssub.s32 %s21, %s33
      %s35 = ssub.s32 %s22, %s29
      %s36 = sor.u32 %s34, %s35
      %p37 = scmp.eq.s32.totalorder %s36, 0
      %s39 = sadd.s32 %s38, 1
      %s40 = scalar_select %p37, %s38, %s39
      %p43 = pneg %p37
      %p44 = scmp.eq.s32.totalorder %s14, 3
      %p45 = por %p43, %p44
      %p46 = scmp.ne.s32.totalorder %s38, %s41
      %p47 = scmp.eq.s32.totalorder %s14, 0
      %p48 = por %p46, %p47
      %p49 = scmp.ne.s32.totalorder %s38, %s41
      %p50 = scmp.eq.s32.totalorder %s19, 3
      %p51 = por %p49, %p50
      %p52 = scmp.ne.s32.totalorder %s41, %s42
      %p53 = scmp.eq.s32.totalorder %s19, 0
      %p54 = por %p52, %p53
      %p55 = scmp.ne.s32.totalorder %s41, %s42
      %p56 = scmp.eq.s32.totalorder %s20, 3
      %p57 = por %p55, %p56
      %p59 = scmp.ne.s32.totalorder %s42, %s58
      %p60 = scmp.eq.s32.totalorder %s20, 0
      %p61 = por %p59, %p60
      %s63 = sadd.s32 %s62, 1
      %p66 = scmp.eq.s32.totalorder %s14, 3
      %p67 = scmp.ne.s32.totalorder %s62, %s64
      %p68 = scmp.eq.s32.totalorder %s14, 0
      %p69 = por %p67, %p68
      %p70 = scmp.ne.s32.totalorder %s62, %s64
      %p71 = scmp.eq.s32.totalorder %s19, 3
      %p72 = por %p70, %p71
      %p73 = scmp.ne.s32.totalorder %s64, %s65
      %p74 = scmp.eq.s32.totalorder %s19, 0
      %p75 = por %p73, %p74
      %p76 = scmp.ne.s32.totalorder %s64, %s65
      %p77 = scmp.eq.s32.totalorder %s20, 3
      %p78 = por %p76, %p77
      %p80 = scmp.ne.s32.totalorder %s65, %s79
      %p81 = scmp.eq.s32.totalorder %s20, 0
      %p82 = por %p80, %p81
      %s84 = sadd.s32 %s83, 1
      %p87 = scmp.eq.s32.totalorder %s14, 3
      %p88 = scmp.ne.s32.totalorder %s83, %s85
      %p89 = scmp.eq.s32.totalorder %s14, 0
      %p90 = por %p88, %p89
      %p91 = scmp.ne.s32.totalorder %s83, %s85
      %p92 = scmp.eq.s32.totalorder %s19, 3
      %p93 = por %p91, %p92
      %p94 = scmp.ne.s32.totalorder %s85, %s86
      %p95 = scmp.eq.s32.totalorder %s19, 0
      %p96 = por %p94, %p95
      %p97 = scmp.ne.s32.totalorder %s85, %s86
      %p98 = scmp.eq.s32.totalorder %s20, 3
      %p99 = por %p97, %p98
      %p101 = scmp.ne.s32.totalorder %s86, %s100
      %p102 = scmp.eq.s32.totalorder %s20, 0
      %p103 = por %p101, %p102
      %s105 = sadd.s32 %s104, 1
      %p108 = scmp.eq.s32.totalorder %s14, 3
      %p109 = scmp.ne.s32.totalorder %s104, %s106
      %p110 = scmp.eq.s32.totalorder %s14, 0
      %p111 = por %p109, %p110
      %p112 = scmp.ne.s32.totalorder %s104, %s106
      %p113 = scmp.eq.s32.totalorder %s19, 3
      %p114 = por %p112, %p113
      %p115 = scmp.ne.s32.totalorder %s106, %s107
      %p116 = scmp.eq.s32.totalorder %s19, 0
      %p117 = por %p115, %p116
      %p118 = scmp.ne.s32.totalorder %s106, %s107
      %p119 = scmp.eq.s32.totalorder %s20, 3
      %p120 = por %p118, %p119
      %p122 = scmp.ne.s32.totalorder %s107, %s121
      %p123 = scmp.eq.s32.totalorder %s20, 0
      %p124 = por %p122, %p123
      %s126 = sadd.s32 %s125, 1
      %p129 = scmp.eq.s32.totalorder %s14, 3
      %p130 = scmp.ne.s32.totalorder %s125, %s127
      %p131 = scmp.eq.s32.totalorder %s14, 0
      %p132 = por %p130, %p131
      %p133 = scmp.ne.s32.totalorder %s125, %s127
      %p134 = scmp.eq.s32.totalorder %s19, 3
      %p135 = por %p133, %p134
      %p136 = scmp.ne.s32.totalorder %s127, %s128
      %p137 = scmp.eq.s32.totalorder %s19, 0
      %p138 = por %p136, %p137
      %p139 = scmp.ne.s32.totalorder %s127, %s128
      %p140 = scmp.eq.s32.totalorder %s20, 3
      %p141 = por %p139, %p140
      %p143 = scmp.ne.s32.totalorder %s128, %s142
      %p144 = scmp.eq.s32.totalorder %s20, 0
      %p145 = por %p143, %p144
      %s146 = ssub.s32 %s21, %s33
      %p147 = scmp.eq.s32.totalorder %s146, 0
      %s149 = sadd.s32 %s148, 1
      %s150 = scalar_select %p147, %s148, %s149
      %p153 = pneg %p147
      %p154 = scmp.eq.s32.totalorder %s14, 3
      %p155 = por %p153, %p154
      %p156 = scmp.ne.s32.totalorder %s148, %s151
      %p157 = scmp.eq.s32.totalorder %s14, 0
      %p158 = por %p156, %p157
      %p159 = scmp.ne.s32.totalorder %s148, %s151
      %p160 = scmp.eq.s32.totalorder %s19, 3
      %p161 = por %p159, %p160
      %p162 = scmp.ne.s32.totalorder %s151, %s152
      %p163 = scmp.eq.s32.totalorder %s19, 0
      %p164 = por %p162, %p163
      %p165 = scmp.ne.s32.totalorder %s151, %s152
      %p166 = scmp.eq.s32.totalorder %s20, 3
      %p167 = por %p165, %p166
      %p169 = scmp.ne.s32.totalorder %s152, %s168
      %p170 = scmp.eq.s32.totalorder %s20, 0
      %p171 = por %p169, %p170
      %p172 = scmp.le.s32.totalorder 1, %s14
      %p173 = scmp.lt.s32.totalorder %s14, 5
      %p174 = pnand %p172, %p173
      %p175 = pneg %p174
      // Predicated region
      $region9: #{tpu_custom_call.1} parent=5 // pred_check
        _
      $region10: #{tpu_custom_call.1} parent=5 // pred_check_branch
        %177 = sbr.rel (%p174) target = $region12
      $region11: #{tpu_custom_call.1} parent=5 // pred_region
        %s178 = ssub.s32 %s14, 1
        // Predicated region
        $region13: #{tpu_custom_call.1} parent=11 // pred_check
          %p179 = pneg %p75
        $region14: #{tpu_custom_call.1} parent=11 // pred_check_branch
          %181 = sbr.rel (%p179) target = $region16
        $region15: #{tpu_custom_call.1} parent=11 // pred_region
          _
        $region16: #{tpu_custom_call.1} parent=11 // pred_fallthru
          _
        // Predicated region
        $region17: #{tpu_custom_call.1} parent=11 // pred_check
          %p182 = pneg %p96
        $region18: #{tpu_custom_call.1} parent=11 // pred_check_branch
          %184 = sbr.rel (%p182) target = $region20
        $region19: #{tpu_custom_call.1} parent=11 // pred_region
          _
        $region20: #{tpu_custom_call.1} parent=11 // pred_fallthru
          _
        // Predicated region
        $region21: #{tpu_custom_call.1} parent=11 // pred_check
          %p185 = pneg %p117
        $region22: #{tpu_custom_call.1} parent=11 // pred_check_branch
          %187 = sbr.rel (%p185) target = $region24
        $region23: #{tpu_custom_call.1} parent=11 // pred_region
          _
        $region24: #{tpu_custom_call.1} parent=11 // pred_fallthru
          _
        // Predicated region
        $region25: #{tpu_custom_call.1} parent=11 // pred_check
          %p188 = pneg %p138
        $region26: #{tpu_custom_call.1} parent=11 // pred_check_branch
          %190 = sbr.rel (%p188) target = $region28
        $region27: #{tpu_custom_call.1} parent=11 // pred_region
          _
        $region28: #{tpu_custom_call.1} parent=11 // pred_fallthru
          _
      $region12: #{tpu_custom_call.1} parent=5 // pred_fallthru
        _
      %p191 = scmp.lt.s32.totalorder %s14, 4
      // Predicated region
      $region29: #{tpu_custom_call.1} parent=5 // pred_check
        %p192 = pneg %p191
      $region30: #{tpu_custom_call.1} parent=5 // pred_check_branch
        %194 = sbr.rel (%p192) target = $region32
      $region31: #{tpu_custom_call.1} parent=5 // pred_region
        // Predicated region
        $region33: #{tpu_custom_call.1} parent=31 // pred_check
          %p195 = pneg %p48
        $region34: #{tpu_custom_call.1} parent=31 // pred_check_branch
          %197 = sbr.rel (%p195) target = $region36
        $region35: #{tpu_custom_call.1} parent=31 // pred_region
          %p198 = scmp.lt.s32.totalorder %s21, 1
          %s199 = scalar_select %p198, %s21, 1
          %p200 = scmp.lt.s32.totalorder %s22, 1
          %s201 = scalar_select %p200, %s22, 1
          %s202 = smul.addr %s199, 2
          %s203 = sadd.s32 %s201, %s202
          %s204 = smul.addr %s203, 4
          %s205 = scalar_lea.vmem %s0, %s204
        $region36: #{tpu_custom_call.1} parent=31 // pred_fallthru
          _
      $region32: #{tpu_custom_call.1} parent=5 // pred_fallthru
        _
      %p206 = scmp.le.s32.totalorder 1, %s14
      %p207 = scmp.lt.s32.totalorder %s14, 5
      %p208 = pnand %p206, %p207
      %p209 = pneg %p208
      // Predicated region
      $region37: #{tpu_custom_call.1} parent=5 // pred_check
        _
      $region38: #{tpu_custom_call.1} parent=5 // pred_check_branch
        %211 = sbr.rel (%p208) target = $region40
      $region39: #{tpu_custom_call.1} parent=5 // pred_region
        %s212 = ssub.s32 %s14, 1
        %p213 = scmp.lt.s32.totalorder %s23, 1
        %s214 = scalar_select %p213, %s23, 1
        %p215 = scmp.lt.s32.totalorder %s24, 1
        %s216 = scalar_select %p215, %s24, 1
        %s217 = smul.addr %s214, 2
        %s218 = sadd.s32 %s216, %s217
        %s219 = smul.addr %s218, 4
        %s220 = scalar_lea.vmem %s0, %s219
        %p221 = pneg %p54
        %p222 = pneg %p51
        %p223 = pneg %p75
        %p224 = pneg %p72
        %p225 = pneg %p96
        %p226 = pneg %p93
        %p227 = pneg %p117
        %p228 = pneg %p114
        %p229 = pneg %p138
        %p230 = pneg %p135
        %p231 = pneg %p164
        %p232 = pneg %p161
        %s233 = sand.u32 %s151, 1
        %s234 = scalar_lea.sflag [#allocation4], %s233
        %s235 = sand.u32 %s151, 1
        %s236 = scalar_lea.vmem [#allocation3], %s235
        %p237 = scmp.lt.s32.totalorder %s23, 1
        %s238 = scalar_select %p237, %s23, 1
        %p239 = scmp.lt.s32.totalorder %s24, 1
        %s240 = scalar_select %p239, %s24, 1
        %s241 = smul.addr %s238, 2
        %s242 = sadd.s32 %s240, %s241
        %s243 = smul.addr %s242, 4
        %s244 = scalar_lea.vmem %s0, %s243
        %p245 = scmp.eq.s32.totalorder %s24, 0
        // Predicated region
        $region41: #{tpu_custom_call.1} parent=39 // pred_check
          %p246 = pneg %p245
        $region42: #{tpu_custom_call.1} parent=39 // pred_check_branch
          %248 = sbr.rel (%p246) target = $region44
        $region43: #{tpu_custom_call.1} parent=39 // pred_region
          %vm249 = vcmask 7168
          %250 = vst.msk [vmem:[#allocation2] sm:$0xff] %vm249, 0.0
          %251 = vst.msk [vmem:[#allocation2 + $0x8] sm:$0xff] %vm249, 0.0
          %252 = vst.msk [vmem:[#allocation2 + $0x10] sm:$0xff] %vm249, 0.0
          %253 = vst.msk [vmem:[#allocation2 + $0x18] sm:$0xff] %vm249, 0.0
          %254 = vst.msk [vmem:[#allocation2 + $0x20] sm:$0xff] %vm249, 0.0
          %255 = vst.msk [vmem:[#allocation2 + $0x28] sm:$0xff] %vm249, 0.0
          %256 = vst.msk [vmem:[#allocation2 + $0x30] sm:$0xff] %vm249, 0.0
          %257 = vst.msk [vmem:[#allocation2 + $0x38] sm:$0xff] %vm249, 0.0
          %258 = vst.msk [vmem:[#allocation2 + $0x40] sm:$0xff] %vm249, 0.0
          %259 = vst.msk [vmem:[#allocation2 + $0x48] sm:$0xff] %vm249, 0.0
          %260 = vst.msk [vmem:[#allocation2 + $0x50] sm:$0xff] %vm249, 0.0
          %261 = vst.msk [vmem:[#allocation2 + $0x58] sm:$0xff] %vm249, 0.0
          %262 = vst.msk [vmem:[#allocation2 + $0x60] sm:$0xff] %vm249, 0.0
          %263 = vst.msk [vmem:[#allocation2 + $0x68] sm:$0xff] %vm249, 0.0
          %264 = vst.msk [vmem:[#allocation2 + $0x70] sm:$0xff] %vm249, 0.0
          %265 = vst.msk [vmem:[#allocation2 + $0x78] sm:$0xff] %vm249, 0.0
          %266 = vst.msk [vmem:[#allocation2 + $0x80] sm:$0xff] %vm249, 0.0
          %267 = vst.msk [vmem:[#allocation2 + $0x88] sm:$0xff] %vm249, 0.0
          %268 = vst.msk [vmem:[#allocation2 + $0x90] sm:$0xff] %vm249, 0.0
          %269 = vst.msk [vmem:[#allocation2 + $0x98] sm:$0xff] %vm249, 0.0
          %270 = vst.msk [vmem:[#allocation2 + $0xa0] sm:$0xff] %vm249, 0.0
          %271 = vst.msk [vmem:[#allocation2 + $0xa8] sm:$0xff] %vm249, 0.0
          %272 = vst.msk [vmem:[#allocation2 + $0xb0] sm:$0xff] %vm249, 0.0
          %273 = vst.msk [vmem:[#allocation2 + $0xb8] sm:$0xff] %vm249, 0.0
          %274 = vst.msk [vmem:[#allocation2 + $0xc0] sm:$0xff] %vm249, 0.0
          %275 = vst.msk [vmem:[#allocation2 + $0xc8] sm:$0xff] %vm249, 0.0
          %276 = vst.msk [vmem:[#allocation2 + $0xd0] sm:$0xff] %vm249, 0.0
          %277 = vst.msk [vmem:[#allocation2 + $0xd8] sm:$0xff] %vm249, 0.0
          %278 = vst.msk [vmem:[#allocation2 + $0xe0] sm:$0xff] %vm249, 0.0
          %279 = vst.msk [vmem:[#allocation2 + $0xe8] sm:$0xff] %vm249, 0.0
          %280 = vst.msk [vmem:[#allocation2 + $0xf0] sm:$0xff] %vm249, 0.0
          %281 = vst.msk [vmem:[#allocation2 + $0xf8] sm:$0xff] %vm249, 0.0
          %282 = vst.msk [vmem:[#allocation2 + $0x100] sm:$0xff] %vm249, 0.0
          %283 = vst.msk [vmem:[#allocation2 + $0x108] sm:$0xff] %vm249, 0.0
          %284 = vst.msk [vmem:[#allocation2 + $0x110] sm:$0xff] %vm249, 0.0
          %285 = vst.msk [vmem:[#allocation2 + $0x118] sm:$0xff] %vm249, 0.0
          %286 = vst.msk [vmem:[#allocation2 + $0x120] sm:$0xff] %vm249, 0.0
          %287 = vst.msk [vmem:[#allocation2 + $0x128] sm:$0xff] %vm249, 0.0
          %288 = vst.msk [vmem:[#allocation2 + $0x130] sm:$0xff] %vm249, 0.0
          %289 = vst.msk [vmem:[#allocation2 + $0x138] sm:$0xff] %vm249, 0.0
          %290 = vst.msk [vmem:[#allocation2 + $0x140] sm:$0xff] %vm249, 0.0
          %291 = vst.msk [vmem:[#allocation2 + $0x148] sm:$0xff] %vm249, 0.0
          %292 = vst.msk [vmem:[#allocation2 + $0x150] sm:$0xff] %vm249, 0.0
          %293 = vst.msk [vmem:[#allocation2 + $0x158] sm:$0xff] %vm249, 0.0
          %294 = vst.msk [vmem:[#allocation2 + $0x160] sm:$0xff] %vm249, 0.0
          %295 = vst.msk [vmem:[#allocation2 + $0x168] sm:$0xff] %vm249, 0.0
          %296 = vst.msk [vmem:[#allocation2 + $0x170] sm:$0xff] %vm249, 0.0
          %297 = vst.msk [vmem:[#allocation2 + $0x178] sm:$0xff] %vm249, 0.0
          %298 = vst.msk [vmem:[#allocation2 + $0x180] sm:$0xff] %vm249, 0.0
          %299 = vst.msk [vmem:[#allocation2 + $0x188] sm:$0xff] %vm249, 0.0
          %300 = vst.msk [vmem:[#allocation2 + $0x190] sm:$0xff] %vm249, 0.0
          %301 = vst.msk [vmem:[#allocation2 + $0x198] sm:$0xff] %vm249, 0.0
          %302 = vst.msk [vmem:[#allocation2 + $0x1a0] sm:$0xff] %vm249, 0.0
          %303 = vst.msk [vmem:[#allocation2 + $0x1a8] sm:$0xff] %vm249, 0.0
          %304 = vst.msk [vmem:[#allocation2 + $0x1b0] sm:$0xff] %vm249, 0.0
          %305 = vst.msk [vmem:[#allocation2 + $0x1b8] sm:$0xff] %vm249, 0.0
          %306 = vst.msk [vmem:[#allocation2 + $0x1c0] sm:$0xff] %vm249, 0.0
          %307 = vst.msk [vmem:[#allocation2 + $0x1c8] sm:$0xff] %vm249, 0.0
          %308 = vst.msk [vmem:[#allocation2 + $0x1d0] sm:$0xff] %vm249, 0.0
          %309 = vst.msk [vmem:[#allocation2 + $0x1d8] sm:$0xff] %vm249, 0.0
          %310 = vst.msk [vmem:[#allocation2 + $0x1e0] sm:$0xff] %vm249, 0.0
          %311 = vst.msk [vmem:[#allocation2 + $0x1e8] sm:$0xff] %vm249, 0.0
          %312 = vst.msk [vmem:[#allocation2 + $0x1f0] sm:$0xff] %vm249, 0.0
          %313 = vst.msk [vmem:[#allocation2 + $0x1f8] sm:$0xff] %vm249, 0.0
          %314 = vst.msk [vmem:[#allocation2 + $0x200] sm:$0xff] %vm249, 0.0
          %315 = vst.msk [vmem:[#allocation2 + $0x208] sm:$0xff] %vm249, 0.0
          %316 = vst.msk [vmem:[#allocation2 + $0x210] sm:$0xff] %vm249, 0.0
          %317 = vst.msk [vmem:[#allocation2 + $0x218] sm:$0xff] %vm249, 0.0
          %318 = vst.msk [vmem:[#allocation2 + $0x220] sm:$0xff] %vm249, 0.0
          %319 = vst.msk [vmem:[#allocation2 + $0x228] sm:$0xff] %vm249, 0.0
          %320 = vst.msk [vmem:[#allocation2 + $0x230] sm:$0xff] %vm249, 0.0
          %321 = vst.msk [vmem:[#allocation2 + $0x238] sm:$0xff] %vm249, 0.0
          %322 = vst.msk [vmem:[#allocation2 + $0x240] sm:$0xff] %vm249, 0.0
          %323 = vst.msk [vmem:[#allocation2 + $0x248] sm:$0xff] %vm249, 0.0
          %324 = vst.msk [vmem:[#allocation2 + $0x250] sm:$0xff] %vm249, 0.0
          %325 = vst.msk [vmem:[#allocation2 + $0x258] sm:$0xff] %vm249, 0.0
          %326 = vst.msk [vmem:[#allocation2 + $0x260] sm:$0xff] %vm249, 0.0
          %327 = vst.msk [vmem:[#allocation2 + $0x268] sm:$0xff] %vm249, 0.0
          %328 = vst.msk [vmem:[#allocation2 + $0x270] sm:$0xff] %vm249, 0.0
          %329 = vst.msk [vmem:[#allocation2 + $0x278] sm:$0xff] %vm249, 0.0
          %330 = vst.msk [vmem:[#allocation2 + $0x280] sm:$0xff] %vm249, 0.0
          %331 = vst.msk [vmem:[#allocation2 + $0x288] sm:$0xff] %vm249, 0.0
          %332 = vst.msk [vmem:[#allocation2 + $0x290] sm:$0xff] %vm249, 0.0
          %333 = vst.msk [vmem:[#allocation2 + $0x298] sm:$0xff] %vm249, 0.0
          %334 = vst.msk [vmem:[#allocation2 + $0x2a0] sm:$0xff] %vm249, 0.0
          %335 = vst.msk [vmem:[#allocation2 + $0x2a8] sm:$0xff] %vm249, 0.0
          %336 = vst.msk [vmem:[#allocation2 + $0x2b0] sm:$0xff] %vm249, 0.0
          %337 = vst.msk [vmem:[#allocation2 + $0x2b8] sm:$0xff] %vm249, 0.0
          %338 = vst.msk [vmem:[#allocation2 + $0x2c0] sm:$0xff] %vm249, 0.0
          %339 = vst.msk [vmem:[#allocation2 + $0x2c8] sm:$0xff] %vm249, 0.0
          %340 = vst.msk [vmem:[#allocation2 + $0x2d0] sm:$0xff] %vm249, 0.0
          %341 = vst.msk [vmem:[#allocation2 + $0x2d8] sm:$0xff] %vm249, 0.0
          %342 = vst.msk [vmem:[#allocation2 + $0x2e0] sm:$0xff] %vm249, 0.0
          %343 = vst.msk [vmem:[#allocation2 + $0x2e8] sm:$0xff] %vm249, 0.0
          %344 = vst.msk [vmem:[#allocation2 + $0x2f0] sm:$0xff] %vm249, 0.0
          %345 = vst.msk [vmem:[#allocation2 + $0x2f8] sm:$0xff] %vm249, 0.0
          %346 = vst.msk [vmem:[#allocation2 + $0x300] sm:$0xff] %vm249, 0.0
          %347 = vst.msk [vmem:[#allocation2 + $0x308] sm:$0xff] %vm249, 0.0
          %348 = vst.msk [vmem:[#allocation2 + $0x310] sm:$0xff] %vm249, 0.0
          %349 = vst.msk [vmem:[#allocation2 + $0x318] sm:$0xff] %vm249, 0.0
          %350 = vst.msk [vmem:[#allocation2 + $0x320] sm:$0xff] %vm249, 0.0
          %351 = vst.msk [vmem:[#allocation2 + $0x328] sm:$0xff] %vm249, 0.0
          %352 = vst.msk [vmem:[#allocation2 + $0x330] sm:$0xff] %vm249, 0.0
          %353 = vst.msk [vmem:[#allocation2 + $0x338] sm:$0xff] %vm249, 0.0
          %354 = vst.msk [vmem:[#allocation2 + $0x340] sm:$0xff] %vm249, 0.0
          %355 = vst.msk [vmem:[#allocation2 + $0x348] sm:$0xff] %vm249, 0.0
          %356 = vst.msk [vmem:[#allocation2 + $0x350] sm:$0xff] %vm249, 0.0
          %357 = vst.msk [vmem:[#allocation2 + $0x358] sm:$0xff] %vm249, 0.0
          %358 = vst.msk [vmem:[#allocation2 + $0x360] sm:$0xff] %vm249, 0.0
          %359 = vst.msk [vmem:[#allocation2 + $0x368] sm:$0xff] %vm249, 0.0
          %360 = vst.msk [vmem:[#allocation2 + $0x370] sm:$0xff] %vm249, 0.0
          %361 = vst.msk [vmem:[#allocation2 + $0x378] sm:$0xff] %vm249, 0.0
          %362 = vst.msk [vmem:[#allocation2 + $0x380] sm:$0xff] %vm249, 0.0
          %363 = vst.msk [vmem:[#allocation2 + $0x388] sm:$0xff] %vm249, 0.0
          %364 = vst.msk [vmem:[#allocation2 + $0x390] sm:$0xff] %vm249, 0.0
          %365 = vst.msk [vmem:[#allocation2 + $0x398] sm:$0xff] %vm249, 0.0
          %366 = vst.msk [vmem:[#allocation2 + $0x3a0] sm:$0xff] %vm249, 0.0
          %367 = vst.msk [vmem:[#allocation2 + $0x3a8] sm:$0xff] %vm249, 0.0
          %368 = vst.msk [vmem:[#allocation2 + $0x3b0] sm:$0xff] %vm249, 0.0
          %369 = vst.msk [vmem:[#allocation2 + $0x3b8] sm:$0xff] %vm249, 0.0
          %370 = vst.msk [vmem:[#allocation2 + $0x3c0] sm:$0xff] %vm249, 0.0
          %371 = vst.msk [vmem:[#allocation2 + $0x3c8] sm:$0xff] %vm249, 0.0
          %372 = vst.msk [vmem:[#allocation2 + $0x3d0] sm:$0xff] %vm249, 0.0
          %373 = vst.msk [vmem:[#allocation2 + $0x3d8] sm:$0xff] %vm249, 0.0
          %374 = vst.msk [vmem:[#allocation2 + $0x3e0] sm:$0xff] %vm249, 0.0
          %375 = vst.msk [vmem:[#allocation2 + $0x3e8] sm:$0xff] %vm249, 0.0
          %376 = vst.msk [vmem:[#allocation2 + $0x3f0] sm:$0xff] %vm249, 0.0
          %377 = vst.msk [vmem:[#allocation2 + $0x3f8] sm:$0xff] %vm249, 0.0
          %378 = vst.msk [vmem:[#allocation2 + $0x400] sm:$0xff] %vm249, 0.0
          %379 = vst.msk [vmem:[#allocation2 + $0x408] sm:$0xff] %vm249, 0.0
          %380 = vst.msk [vmem:[#allocation2 + $0x410] sm:$0xff] %vm249, 0.0
          %381 = vst.msk [vmem:[#allocation2 + $0x418] sm:$0xff] %vm249, 0.0
          %382 = vst.msk [vmem:[#allocation2 + $0x420] sm:$0xff] %vm249, 0.0
          %383 = vst.msk [vmem:[#allocation2 + $0x428] sm:$0xff] %vm249, 0.0
          %384 = vst.msk [vmem:[#allocation2 + $0x430] sm:$0xff] %vm249, 0.0
          %385 = vst.msk [vmem:[#allocation2 + $0x438] sm:$0xff] %vm249, 0.0
          %386 = vst.msk [vmem:[#allocation2 + $0x440] sm:$0xff] %vm249, 0.0
          %387 = vst.msk [vmem:[#allocation2 + $0x448] sm:$0xff] %vm249, 0.0
          %388 = vst.msk [vmem:[#allocation2 + $0x450] sm:$0xff] %vm249, 0.0
          %389 = vst.msk [vmem:[#allocation2 + $0x458] sm:$0xff] %vm249, 0.0
          %390 = vst.msk [vmem:[#allocation2 + $0x460] sm:$0xff] %vm249, 0.0
          %391 = vst.msk [vmem:[#allocation2 + $0x468] sm:$0xff] %vm249, 0.0
          %392 = vst.msk [vmem:[#allocation2 + $0x470] sm:$0xff] %vm249, 0.0
          %393 = vst.msk [vmem:[#allocation2 + $0x478] sm:$0xff] %vm249, 0.0
          %394 = vst.msk [vmem:[#allocation2 + $0x480] sm:$0xff] %vm249, 0.0
          %395 = vst.msk [vmem:[#allocation2 + $0x488] sm:$0xff] %vm249, 0.0
          %396 = vst.msk [vmem:[#allocation2 + $0x490] sm:$0xff] %vm249, 0.0
          %397 = vst.msk [vmem:[#allocation2 + $0x498] sm:$0xff] %vm249, 0.0
          %398 = vst.msk [vmem:[#allocation2 + $0x4a0] sm:$0xff] %vm249, 0.0
          %399 = vst.msk [vmem:[#allocation2 + $0x4a8] sm:$0xff] %vm249, 0.0
          %400 = vst.msk [vmem:[#allocation2 + $0x4b0] sm:$0xff] %vm249, 0.0
          %401 = vst.msk [vmem:[#allocation2 + $0x4b8] sm:$0xff] %vm249, 0.0
          %402 = vst.msk [vmem:[#allocation2 + $0x4c0] sm:$0xff] %vm249, 0.0
          %403 = vst.msk [vmem:[#allocation2 + $0x4c8] sm:$0xff] %vm249, 0.0
          %404 = vst.msk [vmem:[#allocation2 + $0x4d0] sm:$0xff] %vm249, 0.0
          %405 = vst.msk [vmem:[#allocation2 + $0x4d8] sm:$0xff] %vm249, 0.0
          %406 = vst.msk [vmem:[#allocation2 + $0x4e0] sm:$0xff] %vm249, 0.0
          %407 = vst.msk [vmem:[#allocation2 + $0x4e8] sm:$0xff] %vm249, 0.0
          %408 = vst.msk [vmem:[#allocation2 + $0x4f0] sm:$0xff] %vm249, 0.0
          %409 = vst.msk [vmem:[#allocation2 + $0x4f8] sm:$0xff] %vm249, 0.0
        $region44: #{tpu_custom_call.1} parent=39 // pred_fallthru
          _
        %v410 = vld [vmem:[%s244] sm:$0x7]
        %v411 = vld [vmem:[%s1] sm:$0xff]
        %v412 = vld [vmem:[%s1 + $0x8] sm:$0xff]
        %v413 = vld [vmem:[%s1 + $0x10] sm:$0xff]
        %v414 = vld [vmem:[%s1 + $0x18] sm:$0xff]
        %v415 = vld [vmem:[%s1 + $0x20] sm:$0xff]
        %v416 = vld [vmem:[%s1 + $0x28] sm:$0xff]
        %v417 = vld [vmem:[%s1 + $0x30] sm:$0xff]
        %v418 = vld [vmem:[%s1 + $0x38] sm:$0xff]
        %v419 = vld [vmem:[%s1 + $0x40] sm:$0xff]
        %v420 = vld [vmem:[%s1 + $0x48] sm:$0xff]
        %v421 = vld [vmem:[%s1 + $0x50] sm:$0xff]
        %v422 = vld [vmem:[%s1 + $0x58] sm:$0xff]
        %v423 = vld [vmem:[%s1 + $0x60] sm:$0xff]
        %v424 = vld [vmem:[%s1 + $0x68] sm:$0xff]
        %v425 = vld [vmem:[%s1 + $0x70] sm:$0xff]
        %v426 = vld [vmem:[%s1 + $0x78] sm:$0xff]
        %v427 = vld [vmem:[%s1 + $0x80] sm:$0xff]
        %v428 = vld [vmem:[%s1 + $0x88] sm:$0xff]
        %v429 = vld [vmem:[%s1 + $0x90] sm:$0xff]
        %v430 = vld [vmem:[%s1 + $0x98] sm:$0xff]
        %v431 = vld [vmem:[%s1 + $0xa0] sm:$0xff]
        %v432 = vld [vmem:[%s1 + $0xa8] sm:$0xff]
        %v433 = vld [vmem:[%s1 + $0xb0] sm:$0xff]
        %v434 = vld [vmem:[%s1 + $0xb8] sm:$0xff]
        %v435 = vld [vmem:[%s1 + $0xc0] sm:$0xff]
        %v436 = vld [vmem:[%s1 + $0xc8] sm:$0xff]
        %v437 = vld [vmem:[%s1 + $0xd0] sm:$0xff]
        %v438 = vld [vmem:[%s1 + $0xd8] sm:$0xff]
        %v439 = vld [vmem:[%s1 + $0xe0] sm:$0xff]
        %v440 = vld [vmem:[%s1 + $0xe8] sm:$0xff]
        %v441 = vld [vmem:[%s1 + $0xf0] sm:$0xff]
        %v442 = vld [vmem:[%s1 + $0xf8] sm:$0xff]
        %v443 = vld [vmem:[%s1 + $0x100] sm:$0xff]
        %v444 = vld [vmem:[%s1 + $0x108] sm:$0xff]
        %v445 = vld [vmem:[%s1 + $0x110] sm:$0xff]
        %v446 = vld [vmem:[%s1 + $0x118] sm:$0xff]
        %v447 = vld [vmem:[%s1 + $0x120] sm:$0xff]
        %v448 = vld [vmem:[%s1 + $0x128] sm:$0xff]
        %v449 = vld [vmem:[%s1 + $0x130] sm:$0xff]
        %v450 = vld [vmem:[%s1 + $0x138] sm:$0xff]
        %v451 = vld [vmem:[%s1 + $0x140] sm:$0xff]
        %v452 = vld [vmem:[%s1 + $0x148] sm:$0xff]
        %v453 = vld [vmem:[%s1 + $0x150] sm:$0xff]
        %v454 = vld [vmem:[%s1 + $0x158] sm:$0xff]
        %v455 = vld [vmem:[%s1 + $0x160] sm:$0xff]
        %v456 = vld [vmem:[%s1 + $0x168] sm:$0xff]
        %v457 = vld [vmem:[%s1 + $0x170] sm:$0xff]
        %v458 = vld [vmem:[%s1 + $0x178] sm:$0xff]
        %v459 = vld [vmem:[%s1 + $0x180] sm:$0xff]
        %v460 = vld [vmem:[%s1 + $0x188] sm:$0xff]
        %v461 = vld [vmem:[%s1 + $0x190] sm:$0xff]
        %v462 = vld [vmem:[%s1 + $0x198] sm:$0xff]
        %v463 = vld [vmem:[%s1 + $0x1a0] sm:$0xff]
        %v464 = vld [vmem:[%s1 + $0x1a8] sm:$0xff]
        %v465 = vld [vmem:[%s1 + $0x1b0] sm:$0xff]
        %v466 = vld [vmem:[%s1 + $0x1b8] sm:$0xff]
        %v467 = vld [vmem:[%s1 + $0x1c0] sm:$0xff]
        %v468 = vld [vmem:[%s1 + $0x1c8] sm:$0xff]
        %v469 = vld [vmem:[%s1 + $0x1d0] sm:$0xff]
        %v470 = vld [vmem:[%s1 + $0x1d8] sm:$0xff]
        %v471 = vld [vmem:[%s1 + $0x1e0] sm:$0xff]
        %v472 = vld [vmem:[%s1 + $0x1e8] sm:$0xff]
        %v473 = vld [vmem:[%s1 + $0x1f0] sm:$0xff]
        %v474 = vld [vmem:[%s1 + $0x1f8] sm:$0xff]
        %v475 = vld [vmem:[%s1 + $0x200] sm:$0xff]
        %v476 = vld [vmem:[%s1 + $0x208] sm:$0xff]
        %v477 = vld [vmem:[%s1 + $0x210] sm:$0xff]
        %v478 = vld [vmem:[%s1 + $0x218] sm:$0xff]
        %v479 = vld [vmem:[%s1 + $0x220] sm:$0xff]
        %v480 = vld [vmem:[%s1 + $0x228] sm:$0xff]
        %v481 = vld [vmem:[%s1 + $0x230] sm:$0xff]
        %v482 = vld [vmem:[%s1 + $0x238] sm:$0xff]
        %v483 = vld [vmem:[%s1 + $0x240] sm:$0xff]
        %v484 = vld [vmem:[%s1 + $0x248] sm:$0xff]
        %v485 = vld [vmem:[%s1 + $0x250] sm:$0xff]
        %v486 = vld [vmem:[%s1 + $0x258] sm:$0xff]
        %v487 = vld [vmem:[%s1 + $0x260] sm:$0xff]
        %v488 = vld [vmem:[%s1 + $0x268] sm:$0xff]
        %v489 = vld [vmem:[%s1 + $0x270] sm:$0xff]
        %v490 = vld [vmem:[%s1 + $0x278] sm:$0xff]
        %v491 = vld [vmem:[%s1 + $0x280] sm:$0xff]
        %v492 = vld [vmem:[%s1 + $0x288] sm:$0xff]
        %v493 = vld [vmem:[%s1 + $0x290] sm:$0xff]
        %v494 = vld [vmem:[%s1 + $0x298] sm:$0xff]
        %v495 = vld [vmem:[%s1 + $0x2a0] sm:$0xff]
        %v496 = vld [vmem:[%s1 + $0x2a8] sm:$0xff]
        %v497 = vld [vmem:[%s1 + $0x2b0] sm:$0xff]
        %v498 = vld [vmem:[%s1 + $0x2b8] sm:$0xff]
        %v499 = vld [vmem:[%s1 + $0x2c0] sm:$0xff]
        %v500 = vld [vmem:[%s1 + $0x2c8] sm:$0xff]
        %v501 = vld [vmem:[%s1 + $0x2d0] sm:$0xff]
        %v502 = vld [vmem:[%s1 + $0x2d8] sm:$0xff]
        %v503 = vld [vmem:[%s1 + $0x2e0] sm:$0xff]
        %v504 = vld [vmem:[%s1 + $0x2e8] sm:$0xff]
        %v505 = vld [vmem:[%s1 + $0x2f0] sm:$0xff]
        %v506 = vld [vmem:[%s1 + $0x2f8] sm:$0xff]
        %v507 = vld [vmem:[%s1 + $0x300] sm:$0xff]
        %v508 = vld [vmem:[%s1 + $0x308] sm:$0xff]
        %v509 = vld [vmem:[%s1 + $0x310] sm:$0xff]
        %v510 = vld [vmem:[%s1 + $0x318] sm:$0xff]
        %v511 = vld [vmem:[%s1 + $0x320] sm:$0xff]
        %v512 = vld [vmem:[%s1 + $0x328] sm:$0xff]
        %v513 = vld [vmem:[%s1 + $0x330] sm:$0xff]
        %v514 = vld [vmem:[%s1 + $0x338] sm:$0xff]
        %v515 = vld [vmem:[%s1 + $0x340] sm:$0xff]
        %v516 = vld [vmem:[%s1 + $0x348] sm:$0xff]
        %v517 = vld [vmem:[%s1 + $0x350] sm:$0xff]
        %v518 = vld [vmem:[%s1 + $0x358] sm:$0xff]
        %v519 = vld [vmem:[%s1 + $0x360] sm:$0xff]
        %v520 = vld [vmem:[%s1 + $0x368] sm:$0xff]
        %v521 = vld [vmem:[%s1 + $0x370] sm:$0xff]
        %v522 = vld [vmem:[%s1 + $0x378] sm:$0xff]
        %v523 = vld [vmem:[%s1 + $0x380] sm:$0xff]
        %v524 = vld [vmem:[%s1 + $0x388] sm:$0xff]
        %v525 = vld [vmem:[%s1 + $0x390] sm:$0xff]
        %v526 = vld [vmem:[%s1 + $0x398] sm:$0xff]
        %v527 = vld [vmem:[%s1 + $0x3a0] sm:$0xff]
        %v528 = vld [vmem:[%s1 + $0x3a8] sm:$0xff]
        %v529 = vld [vmem:[%s1 + $0x3b0] sm:$0xff]
        %v530 = vld [vmem:[%s1 + $0x3b8] sm:$0xff]
        %v531 = vld [vmem:[%s1 + $0x3c0] sm:$0xff]
        %v532 = vld [vmem:[%s1 + $0x3c8] sm:$0xff]
        %v533 = vld [vmem:[%s1 + $0x3d0] sm:$0xff]
        %v534 = vld [vmem:[%s1 + $0x3d8] sm:$0xff]
        %v535 = vld [vmem:[%s1 + $0x3e0] sm:$0xff]
        %v536 = vld [vmem:[%s1 + $0x3e8] sm:$0xff]
        %v537 = vld [vmem:[%s1 + $0x3f0] sm:$0xff]
        %v538 = vld [vmem:[%s1 + $0x3f8] sm:$0xff]
        %v539 = vld [vmem:[%s1 + $0x400] sm:$0xff]
        %v540 = vld [vmem:[%s1 + $0x408] sm:$0xff]
        %v541 = vld [vmem:[%s1 + $0x410] sm:$0xff]
        %v542 = vld [vmem:[%s1 + $0x418] sm:$0xff]
        %v543 = vld [vmem:[%s1 + $0x420] sm:$0xff]
        %v544 = vld [vmem:[%s1 + $0x428] sm:$0xff]
        %v545 = vld [vmem:[%s1 + $0x430] sm:$0xff]
        %v546 = vld [vmem:[%s1 + $0x438] sm:$0xff]
        %v547 = vld [vmem:[%s1 + $0x440] sm:$0xff]
        %v548 = vld [vmem:[%s1 + $0x448] sm:$0xff]
        %v549 = vld [vmem:[%s1 + $0x450] sm:$0xff]
        %v550 = vld [vmem:[%s1 + $0x458] sm:$0xff]
        %v551 = vld [vmem:[%s1 + $0x460] sm:$0xff]
        %v552 = vld [vmem:[%s1 + $0x468] sm:$0xff]
        %v553 = vld [vmem:[%s1 + $0x470] sm:$0xff]
        %v554 = vld [vmem:[%s1 + $0x478] sm:$0xff]
        %v555 = vld [vmem:[%s1 + $0x480] sm:$0xff]
        %v556 = vld [vmem:[%s1 + $0x488] sm:$0xff]
        %v557 = vld [vmem:[%s1 + $0x490] sm:$0xff]
        %v558 = vld [vmem:[%s1 + $0x498] sm:$0xff]
        %v559 = vld [vmem:[%s1 + $0x4a0] sm:$0xff]
        %v560 = vld [vmem:[%s1 + $0x4a8] sm:$0xff]
        %v561 = vld [vmem:[%s1 + $0x4b0] sm:$0xff]
        %v562 = vld [vmem:[%s1 + $0x4b8] sm:$0xff]
        %v563 = vld [vmem:[%s1 + $0x4c0] sm:$0xff]
        %v564 = vld [vmem:[%s1 + $0x4c8] sm:$0xff]
        %v565 = vld [vmem:[%s1 + $0x4d0] sm:$0xff]
        %v566 = vld [vmem:[%s1 + $0x4d8] sm:$0xff]
        %v567 = vld [vmem:[%s1 + $0x4e0] sm:$0xff]
        %v568 = vld [vmem:[%s1 + $0x4e8] sm:$0xff]
        %v569 = vld [vmem:[%s1 + $0x4f0] sm:$0xff]
        %v570 = vld [vmem:[%s1 + $0x4f8] sm:$0xff]
        %v571 = vld [vmem:[%s2] sm:$0xff]
        %v572 = vld [vmem:[%s2 + $0x8] sm:$0xff]
        %v573 = vld [vmem:[%s2 + $0x10] sm:$0xff]
        %v574 = vld [vmem:[%s2 + $0x18] sm:$0xff]
        %v575 = vld [vmem:[%s2 + $0x20] sm:$0xff]
        %v576 = vld [vmem:[%s2 + $0x28] sm:$0xff]
        %v577 = vld [vmem:[%s2 + $0x30] sm:$0xff]
        %v578 = vld [vmem:[%s2 + $0x38] sm:$0xff]
        %v579 = vld [vmem:[%s2 + $0x40] sm:$0xff]
        %v580 = vld [vmem:[%s2 + $0x48] sm:$0xff]
        %v581 = vld [vmem:[%s2 + $0x50] sm:$0xff]
        %v582 = vld [vmem:[%s2 + $0x58] sm:$0xff]
        %v583 = vld [vmem:[%s2 + $0x60] sm:$0xff]
        %v584 = vld [vmem:[%s2 + $0x68] sm:$0xff]
        %v585 = vld [vmem:[%s2 + $0x70] sm:$0xff]
        %v586 = vld [vmem:[%s2 + $0x78] sm:$0xff]
        %v587 = vld [vmem:[%s2 + $0x80] sm:$0xff]
        %v588 = vld [vmem:[%s2 + $0x88] sm:$0xff]
        %v589 = vld [vmem:[%s2 + $0x90] sm:$0xff]
        %v590 = vld [vmem:[%s2 + $0x98] sm:$0xff]
        %v591 = vld [vmem:[%s2 + $0xa0] sm:$0xff]
        %v592 = vld [vmem:[%s2 + $0xa8] sm:$0xff]
        %v593 = vld [vmem:[%s2 + $0xb0] sm:$0xff]
        %v594 = vld [vmem:[%s2 + $0xb8] sm:$0xff]
        %v595 = vld [vmem:[%s2 + $0xc0] sm:$0xff]
        %v596 = vld [vmem:[%s2 + $0xc8] sm:$0xff]
        %v597 = vld [vmem:[%s2 + $0xd0] sm:$0xff]
        %v598 = vld [vmem:[%s2 + $0xd8] sm:$0xff]
        %v599 = vld [vmem:[%s2 + $0xe0] sm:$0xff]
        %v600 = vld [vmem:[%s2 + $0xe8] sm:$0xff]
        %v601 = vld [vmem:[%s2 + $0xf0] sm:$0xff]
        %v602 = vld [vmem:[%s2 + $0xf8] sm:$0xff]
        %v603 = vld [vmem:[%s2 + $0x100] sm:$0xff]
        %v604 = vld [vmem:[%s2 + $0x108] sm:$0xff]
        %v605 = vld [vmem:[%s2 + $0x110] sm:$0xff]
        %v606 = vld [vmem:[%s2 + $0x118] sm:$0xff]
        %v607 = vld [vmem:[%s2 + $0x120] sm:$0xff]
        %v608 = vld [vmem:[%s2 + $0x128] sm:$0xff]
        %v609 = vld [vmem:[%s2 + $0x130] sm:$0xff]
        %v610 = vld [vmem:[%s2 + $0x138] sm:$0xff]
        %v611 = vld [vmem:[%s2 + $0x140] sm:$0xff]
        %v612 = vld [vmem:[%s2 + $0x148] sm:$0xff]
        %v613 = vld [vmem:[%s2 + $0x150] sm:$0xff]
        %v614 = vld [vmem:[%s2 + $0x158] sm:$0xff]
        %v615 = vld [vmem:[%s2 + $0x160] sm:$0xff]
        %v616 = vld [vmem:[%s2 + $0x168] sm:$0xff]
        %v617 = vld [vmem:[%s2 + $0x170] sm:$0xff]
        %v618 = vld [vmem:[%s2 + $0x178] sm:$0xff]
        %v619 = vld [vmem:[%s2 + $0x180] sm:$0xff]
        %v620 = vld [vmem:[%s2 + $0x188] sm:$0xff]
        %v621 = vld [vmem:[%s2 + $0x190] sm:$0xff]
        %v622 = vld [vmem:[%s2 + $0x198] sm:$0xff]
        %v623 = vld [vmem:[%s2 + $0x1a0] sm:$0xff]
        %v624 = vld [vmem:[%s2 + $0x1a8] sm:$0xff]
        %v625 = vld [vmem:[%s2 + $0x1b0] sm:$0xff]
        %v626 = vld [vmem:[%s2 + $0x1b8] sm:$0xff]
        %v627 = vld [vmem:[%s2 + $0x1c0] sm:$0xff]
        %v628 = vld [vmem:[%s2 + $0x1c8] sm:$0xff]
        %v629 = vld [vmem:[%s2 + $0x1d0] sm:$0xff]
        %v630 = vld [vmem:[%s2 + $0x1d8] sm:$0xff]
        %v631 = vld [vmem:[%s2 + $0x1e0] sm:$0xff]
        %v632 = vld [vmem:[%s2 + $0x1e8] sm:$0xff]
        %v633 = vld [vmem:[%s2 + $0x1f0] sm:$0xff]
        %v634 = vld [vmem:[%s2 + $0x1f8] sm:$0xff]
        %v635 = vld [vmem:[%s2 + $0x200] sm:$0xff]
        %v636 = vld [vmem:[%s2 + $0x208] sm:$0xff]
        %v637 = vld [vmem:[%s2 + $0x210] sm:$0xff]
        %v638 = vld [vmem:[%s2 + $0x218] sm:$0xff]
        %v639 = vld [vmem:[%s2 + $0x220] sm:$0xff]
        %v640 = vld [vmem:[%s2 + $0x228] sm:$0xff]
        %v641 = vld [vmem:[%s2 + $0x230] sm:$0xff]
        %v642 = vld [vmem:[%s2 + $0x238] sm:$0xff]
        %v643 = vld [vmem:[%s2 + $0x240] sm:$0xff]
        %v644 = vld [vmem:[%s2 + $0x248] sm:$0xff]
        %v645 = vld [vmem:[%s2 + $0x250] sm:$0xff]
        %v646 = vld [vmem:[%s2 + $0x258] sm:$0xff]
        %v647 = vld [vmem:[%s2 + $0x260] sm:$0xff]
        %v648 = vld [vmem:[%s2 + $0x268] sm:$0xff]
        %v649 = vld [vmem:[%s2 + $0x270] sm:$0xff]
        %v650 = vld [vmem:[%s2 + $0x278] sm:$0xff]
        %v651 = vld [vmem:[%s2 + $0x280] sm:$0xff]
        %v652 = vld [vmem:[%s2 + $0x288] sm:$0xff]
        %v653 = vld [vmem:[%s2 + $0x290] sm:$0xff]
        %v654 = vld [vmem:[%s2 + $0x298] sm:$0xff]
        %v655 = vld [vmem:[%s2 + $0x2a0] sm:$0xff]
        %v656 = vld [vmem:[%s2 + $0x2a8] sm:$0xff]
        %v657 = vld [vmem:[%s2 + $0x2b0] sm:$0xff]
        %v658 = vld [vmem:[%s2 + $0x2b8] sm:$0xff]
        %v659 = vld [vmem:[%s2 + $0x2c0] sm:$0xff]
        %v660 = vld [vmem:[%s2 + $0x2c8] sm:$0xff]
        %v661 = vld [vmem:[%s2 + $0x2d0] sm:$0xff]
        %v662 = vld [vmem:[%s2 + $0x2d8] sm:$0xff]
        %v663 = vld [vmem:[%s2 + $0x2e0] sm:$0xff]
        %v664 = vld [vmem:[%s2 + $0x2e8] sm:$0xff]
        %v665 = vld [vmem:[%s2 + $0x2f0] sm:$0xff]
        %v666 = vld [vmem:[%s2 + $0x2f8] sm:$0xff]
        %v667 = vld [vmem:[%s2 + $0x300] sm:$0xff]
        %v668 = vld [vmem:[%s2 + $0x308] sm:$0xff]
        %v669 = vld [vmem:[%s2 + $0x310] sm:$0xff]
        %v670 = vld [vmem:[%s2 + $0x318] sm:$0xff]
        %v671 = vld [vmem:[%s2 + $0x320] sm:$0xff]
        %v672 = vld [vmem:[%s2 + $0x328] sm:$0xff]
        %v673 = vld [vmem:[%s2 + $0x330] sm:$0xff]
        %v674 = vld [vmem:[%s2 + $0x338] sm:$0xff]
        %v675 = vld [vmem:[%s2 + $0x340] sm:$0xff]
        %v676 = vld [vmem:[%s2 + $0x348] sm:$0xff]
        %v677 = vld [vmem:[%s2 + $0x350] sm:$0xff]
        %v678 = vld [vmem:[%s2 + $0x358] sm:$0xff]
        %v679 = vld [vmem:[%s2 + $0x360] sm:$0xff]
        %v680 = vld [vmem:[%s2 + $0x368] sm:$0xff]
        %v681 = vld [vmem:[%s2 + $0x370] sm:$0xff]
        %v682 = vld [vmem:[%s2 + $0x378] sm:$0xff]
        %v683 = vld [vmem:[%s2 + $0x380] sm:$0xff]
        %v684 = vld [vmem:[%s2 + $0x388] sm:$0xff]
        %v685 = vld [vmem:[%s2 + $0x390] sm:$0xff]
        %v686 = vld [vmem:[%s2 + $0x398] sm:$0xff]
        %v687 = vld [vmem:[%s2 + $0x3a0] sm:$0xff]
        %v688 = vld [vmem:[%s2 + $0x3a8] sm:$0xff]
        %v689 = vld [vmem:[%s2 + $0x3b0] sm:$0xff]
        %v690 = vld [vmem:[%s2 + $0x3b8] sm:$0xff]
        %v691 = vld [vmem:[%s2 + $0x3c0] sm:$0xff]
        %v692 = vld [vmem:[%s2 + $0x3c8] sm:$0xff]
        %v693 = vld [vmem:[%s2 + $0x3d0] sm:$0xff]
        %v694 = vld [vmem:[%s2 + $0x3d8] sm:$0xff]
        %v695 = vld [vmem:[%s2 + $0x3e0] sm:$0xff]
        %v696 = vld [vmem:[%s2 + $0x3e8] sm:$0xff]
        %v697 = vld [vmem:[%s2 + $0x3f0] sm:$0xff]
        %v698 = vld [vmem:[%s2 + $0x3f8] sm:$0xff]
        %v699 = vld [vmem:[%s2 + $0x400] sm:$0xff]
        %v700 = vld [vmem:[%s2 + $0x408] sm:$0xff]
        %v701 = vld [vmem:[%s2 + $0x410] sm:$0xff]
        %v702 = vld [vmem:[%s2 + $0x418] sm:$0xff]
        %v703 = vld [vmem:[%s2 + $0x420] sm:$0xff]
        %v704 = vld [vmem:[%s2 + $0x428] sm:$0xff]
        %v705 = vld [vmem:[%s2 + $0x430] sm:$0xff]
        %v706 = vld [vmem:[%s2 + $0x438] sm:$0xff]
        %v707 = vld [vmem:[%s2 + $0x440] sm:$0xff]
        %v708 = vld [vmem:[%s2 + $0x448] sm:$0xff]
        %v709 = vld [vmem:[%s2 + $0x450] sm:$0xff]
        %v710 = vld [vmem:[%s2 + $0x458] sm:$0xff]
        %v711 = vld [vmem:[%s2 + $0x460] sm:$0xff]
        %v712 = vld [vmem:[%s2 + $0x468] sm:$0xff]
        %v713 = vld [vmem:[%s2 + $0x470] sm:$0xff]
        %v714 = vld [vmem:[%s2 + $0x478] sm:$0xff]
        %v715 = vld [vmem:[%s2 + $0x480] sm:$0xff]
        %v716 = vld [vmem:[%s2 + $0x488] sm:$0xff]
        %v717 = vld [vmem:[%s2 + $0x490] sm:$0xff]
        %v718 = vld [vmem:[%s2 + $0x498] sm:$0xff]
        %v719 = vld [vmem:[%s2 + $0x4a0] sm:$0xff]
        %v720 = vld [vmem:[%s2 + $0x4a8] sm:$0xff]
        %v721 = vld [vmem:[%s2 + $0x4b0] sm:$0xff]
        %v722 = vld [vmem:[%s2 + $0x4b8] sm:$0xff]
        %v723 = vld [vmem:[%s2 + $0x4c0] sm:$0xff]
        %v724 = vld [vmem:[%s2 + $0x4c8] sm:$0xff]
        %v725 = vld [vmem:[%s2 + $0x4d0] sm:$0xff]
        %v726 = vld [vmem:[%s2 + $0x4d8] sm:$0xff]
        %v727 = vld [vmem:[%s2 + $0x4e0] sm:$0xff]
        %v728 = vld [vmem:[%s2 + $0x4e8] sm:$0xff]
        %v729 = vld [vmem:[%s2 + $0x4f0] sm:$0xff]
        %v730 = vld [vmem:[%s2 + $0x4f8] sm:$0xff]
        %732 = vset.pattern.permute.xlu0 0
        %733 = vperm.xlu0 %732, %v571
        %v734 = vpop.permute.xlu0 %733
        %737 = vset.pattern.permute.xlu0 0
        %738 = vperm.xlu0 %737, %v572
        %v739 = vpop.permute.xlu0 %738
        %742 = vset.pattern.permute.xlu0 0
        %743 = vperm.xlu0 %742, %v573
        %v744 = vpop.permute.xlu0 %743
        %747 = vset.pattern.permute.xlu0 0
        %748 = vperm.xlu0 %747, %v574
        %v749 = vpop.permute.xlu0 %748
        %752 = vset.pattern.permute.xlu0 0
        %753 = vperm.xlu0 %752, %v575
        %v754 = vpop.permute.xlu0 %753
        %757 = vset.pattern.permute.xlu0 0
        %758 = vperm.xlu0 %757, %v576
        %v759 = vpop.permute.xlu0 %758
        %762 = vset.pattern.permute.xlu0 0
        %763 = vperm.xlu0 %762, %v577
        %v764 = vpop.permute.xlu0 %763
        %767 = vset.pattern.permute.xlu0 0
        %768 = vperm.xlu0 %767, %v578
        %v769 = vpop.permute.xlu0 %768
        %772 = vset.pattern.permute.xlu0 0
        %773 = vperm.xlu0 %772, %v579
        %v774 = vpop.permute.xlu0 %773
        %777 = vset.pattern.permute.xlu0 0
        %778 = vperm.xlu0 %777, %v580
        %v779 = vpop.permute.xlu0 %778
        %782 = vset.pattern.permute.xlu0 0
        %783 = vperm.xlu0 %782, %v581
        %v784 = vpop.permute.xlu0 %783
        %787 = vset.pattern.permute.xlu0 0
        %788 = vperm.xlu0 %787, %v582
        %v789 = vpop.permute.xlu0 %788
        %792 = vset.pattern.permute.xlu0 0
        %793 = vperm.xlu0 %792, %v583
        %v794 = vpop.permute.xlu0 %793
        %797 = vset.pattern.permute.xlu0 0
        %798 = vperm.xlu0 %797, %v584
        %v799 = vpop.permute.xlu0 %798
        %802 = vset.pattern.permute.xlu0 0
        %803 = vperm.xlu0 %802, %v585
        %v804 = vpop.permute.xlu0 %803
        %807 = vset.pattern.permute.xlu0 0
        %808 = vperm.xlu0 %807, %v586
        %v809 = vpop.permute.xlu0 %808
        %812 = vset.pattern.permute.xlu0 0
        %813 = vperm.xlu0 %812, %v587
        %v814 = vpop.permute.xlu0 %813
        %817 = vset.pattern.permute.xlu0 0
        %818 = vperm.xlu0 %817, %v588
        %v819 = vpop.permute.xlu0 %818
        %822 = vset.pattern.permute.xlu0 0
        %823 = vperm.xlu0 %822, %v589
        %v824 = vpop.permute.xlu0 %823
        %827 = vset.pattern.permute.xlu0 0
        %828 = vperm.xlu0 %827, %v590
        %v829 = vpop.permute.xlu0 %828
        %832 = vset.pattern.permute.xlu0 0
        %833 = vperm.xlu0 %832, %v591
        %v834 = vpop.permute.xlu0 %833
        %837 = vset.pattern.permute.xlu0 0
        %838 = vperm.xlu0 %837, %v592
        %v839 = vpop.permute.xlu0 %838
        %842 = vset.pattern.permute.xlu0 0
        %843 = vperm.xlu0 %842, %v593
        %v844 = vpop.permute.xlu0 %843
        %847 = vset.pattern.permute.xlu0 0
        %848 = vperm.xlu0 %847, %v594
        %v849 = vpop.permute.xlu0 %848
        %852 = vset.pattern.permute.xlu0 0
        %853 = vperm.xlu0 %852, %v595
        %v854 = vpop.permute.xlu0 %853
        %857 = vset.pattern.permute.xlu0 0
        %858 = vperm.xlu0 %857, %v596
        %v859 = vpop.permute.xlu0 %858
        %862 = vset.pattern.permute.xlu0 0
        %863 = vperm.xlu0 %862, %v597
        %v864 = vpop.permute.xlu0 %863
        %867 = vset.pattern.permute.xlu0 0
        %868 = vperm.xlu0 %867, %v598
        %v869 = vpop.permute.xlu0 %868
        %872 = vset.pattern.permute.xlu0 0
        %873 = vperm.xlu0 %872, %v599
        %v874 = vpop.permute.xlu0 %873
        %877 = vset.pattern.permute.xlu0 0
        %878 = vperm.xlu0 %877, %v600
        %v879 = vpop.permute.xlu0 %878
        %882 = vset.pattern.permute.xlu0 0
        %883 = vperm.xlu0 %882, %v601
        %v884 = vpop.permute.xlu0 %883
        %887 = vset.pattern.permute.xlu0 0
        %888 = vperm.xlu0 %887, %v602
        %v889 = vpop.permute.xlu0 %888
        %892 = vset.pattern.permute.xlu0 0
        %893 = vperm.xlu0 %892, %v603
        %v894 = vpop.permute.xlu0 %893
        %897 = vset.pattern.permute.xlu0 0
        %898 = vperm.xlu0 %897, %v604
        %v899 = vpop.permute.xlu0 %898
        %902 = vset.pattern.permute.xlu0 0
        %903 = vperm.xlu0 %902, %v605
        %v904 = vpop.permute.xlu0 %903
        %907 = vset.pattern.permute.xlu0 0
        %908 = vperm.xlu0 %907, %v606
        %v909 = vpop.permute.xlu0 %908
        %912 = vset.pattern.permute.xlu0 0
        %913 = vperm.xlu0 %912, %v607
        %v914 = vpop.permute.xlu0 %913
        %917 = vset.pattern.permute.xlu0 0
        %918 = vperm.xlu0 %917, %v608
        %v919 = vpop.permute.xlu0 %918
        %922 = vset.pattern.permute.xlu0 0
        %923 = vperm.xlu0 %922, %v609
        %v924 = vpop.permute.xlu0 %923
        %927 = vset.pattern.permute.xlu0 0
        %928 = vperm.xlu0 %927, %v610
        %v929 = vpop.permute.xlu0 %928
        %932 = vset.pattern.permute.xlu0 0
        %933 = vperm.xlu0 %932, %v611
        %v934 = vpop.permute.xlu0 %933
        %937 = vset.pattern.permute.xlu0 0
        %938 = vperm.xlu0 %937, %v612
        %v939 = vpop.permute.xlu0 %938
        %942 = vset.pattern.permute.xlu0 0
        %943 = vperm.xlu0 %942, %v613
        %v944 = vpop.permute.xlu0 %943
        %947 = vset.pattern.permute.xlu0 0
        %948 = vperm.xlu0 %947, %v614
        %v949 = vpop.permute.xlu0 %948
        %952 = vset.pattern.permute.xlu0 0
        %953 = vperm.xlu0 %952, %v615
        %v954 = vpop.permute.xlu0 %953
        %957 = vset.pattern.permute.xlu0 0
        %958 = vperm.xlu0 %957, %v616
        %v959 = vpop.permute.xlu0 %958
        %962 = vset.pattern.permute.xlu0 0
        %963 = vperm.xlu0 %962, %v617
        %v964 = vpop.permute.xlu0 %963
        %967 = vset.pattern.permute.xlu0 0
        %968 = vperm.xlu0 %967, %v618
        %v969 = vpop.permute.xlu0 %968
        %972 = vset.pattern.permute.xlu0 0
        %973 = vperm.xlu0 %972, %v619
        %v974 = vpop.permute.xlu0 %973
        %977 = vset.pattern.permute.xlu0 0
        %978 = vperm.xlu0 %977, %v620
        %v979 = vpop.permute.xlu0 %978
        %982 = vset.pattern.permute.xlu0 0
        %983 = vperm.xlu0 %982, %v621
        %v984 = vpop.permute.xlu0 %983
        %987 = vset.pattern.permute.xlu0 0
        %988 = vperm.xlu0 %987, %v622
        %v989 = vpop.permute.xlu0 %988
        %992 = vset.pattern.permute.xlu0 0
        %993 = vperm.xlu0 %992, %v623
        %v994 = vpop.permute.xlu0 %993
        %997 = vset.pattern.permute.xlu0 0
        %998 = vperm.xlu0 %997, %v624
        %v999 = vpop.permute.xlu0 %998
        %1002 = vset.pattern.permute.xlu0 0
        %1003 = vperm.xlu0 %1002, %v625
        %v1004 = vpop.permute.xlu0 %1003
        %1007 = vset.pattern.permute.xlu0 0
        %1008 = vperm.xlu0 %1007, %v626
        %v1009 = vpop.permute.xlu0 %1008
        %1012 = vset.pattern.permute.xlu0 0
        %1013 = vperm.xlu0 %1012, %v627
        %v1014 = vpop.permute.xlu0 %1013
        %1017 = vset.pattern.permute.xlu0 0
        %1018 = vperm.xlu0 %1017, %v628
        %v1019 = vpop.permute.xlu0 %1018
        %1022 = vset.pattern.permute.xlu0 0
        %1023 = vperm.xlu0 %1022, %v629
        %v1024 = vpop.permute.xlu0 %1023
        %1027 = vset.pattern.permute.xlu0 0
        %1028 = vperm.xlu0 %1027, %v630
        %v1029 = vpop.permute.xlu0 %1028
        %1032 = vset.pattern.permute.xlu0 0
        %1033 = vperm.xlu0 %1032, %v631
        %v1034 = vpop.permute.xlu0 %1033
        %1037 = vset.pattern.permute.xlu0 0
        %1038 = vperm.xlu0 %1037, %v632
        %v1039 = vpop.permute.xlu0 %1038
        %1042 = vset.pattern.permute.xlu0 0
        %1043 = vperm.xlu0 %1042, %v633
        %v1044 = vpop.permute.xlu0 %1043
        %1047 = vset.pattern.permute.xlu0 0
        %1048 = vperm.xlu0 %1047, %v634
        %v1049 = vpop.permute.xlu0 %1048
        %1052 = vset.pattern.permute.xlu0 0
        %1053 = vperm.xlu0 %1052, %v635
        %v1054 = vpop.permute.xlu0 %1053
        %1057 = vset.pattern.permute.xlu0 0
        %1058 = vperm.xlu0 %1057, %v636
        %v1059 = vpop.permute.xlu0 %1058
        %1062 = vset.pattern.permute.xlu0 0
        %1063 = vperm.xlu0 %1062, %v637
        %v1064 = vpop.permute.xlu0 %1063
        %1067 = vset.pattern.permute.xlu0 0
        %1068 = vperm.xlu0 %1067, %v638
        %v1069 = vpop.permute.xlu0 %1068
        %1072 = vset.pattern.permute.xlu0 0
        %1073 = vperm.xlu0 %1072, %v639
        %v1074 = vpop.permute.xlu0 %1073
        %1077 = vset.pattern.permute.xlu0 0
        %1078 = vperm.xlu0 %1077, %v640
        %v1079 = vpop.permute.xlu0 %1078
        %1082 = vset.pattern.permute.xlu0 0
        %1083 = vperm.xlu0 %1082, %v641
        %v1084 = vpop.permute.xlu0 %1083
        %1087 = vset.pattern.permute.xlu0 0
        %1088 = vperm.xlu0 %1087, %v642
        %v1089 = vpop.permute.xlu0 %1088
        %1092 = vset.pattern.permute.xlu0 0
        %1093 = vperm.xlu0 %1092, %v643
        %v1094 = vpop.permute.xlu0 %1093
        %1097 = vset.pattern.permute.xlu0 0
        %1098 = vperm.xlu0 %1097, %v644
        %v1099 = vpop.permute.xlu0 %1098
        %1102 = vset.pattern.permute.xlu0 0
        %1103 = vperm.xlu0 %1102, %v645
        %v1104 = vpop.permute.xlu0 %1103
        %1107 = vset.pattern.permute.xlu0 0
        %1108 = vperm.xlu0 %1107, %v646
        %v1109 = vpop.permute.xlu0 %1108
        %1112 = vset.pattern.permute.xlu0 0
        %1113 = vperm.xlu0 %1112, %v647
        %v1114 = vpop.permute.xlu0 %1113
        %1117 = vset.pattern.permute.xlu0 0
        %1118 = vperm.xlu0 %1117, %v648
        %v1119 = vpop.permute.xlu0 %1118
        %1122 = vset.pattern.permute.xlu0 0
        %1123 = vperm.xlu0 %1122, %v649
        %v1124 = vpop.permute.xlu0 %1123
        %1127 = vset.pattern.permute.xlu0 0
        %1128 = vperm.xlu0 %1127, %v650
        %v1129 = vpop.permute.xlu0 %1128
        %1132 = vset.pattern.permute.xlu0 0
        %1133 = vperm.xlu0 %1132, %v651
        %v1134 = vpop.permute.xlu0 %1133
        %1137 = vset.pattern.permute.xlu0 0
        %1138 = vperm.xlu0 %1137, %v652
        %v1139 = vpop.permute.xlu0 %1138
        %1142 = vset.pattern.permute.xlu0 0
        %1143 = vperm.xlu0 %1142, %v653
        %v1144 = vpop.permute.xlu0 %1143
        %1147 = vset.pattern.permute.xlu0 0
        %1148 = vperm.xlu0 %1147, %v654
        %v1149 = vpop.permute.xlu0 %1148
        %1152 = vset.pattern.permute.xlu0 0
        %1153 = vperm.xlu0 %1152, %v655
        %v1154 = vpop.permute.xlu0 %1153
        %1157 = vset.pattern.permute.xlu0 0
        %1158 = vperm.xlu0 %1157, %v656
        %v1159 = vpop.permute.xlu0 %1158
        %1162 = vset.pattern.permute.xlu0 0
        %1163 = vperm.xlu0 %1162, %v657
        %v1164 = vpop.permute.xlu0 %1163
        %1167 = vset.pattern.permute.xlu0 0
        %1168 = vperm.xlu0 %1167, %v658
        %v1169 = vpop.permute.xlu0 %1168
        %1172 = vset.pattern.permute.xlu0 0
        %1173 = vperm.xlu0 %1172, %v659
        %v1174 = vpop.permute.xlu0 %1173
        %1177 = vset.pattern.permute.xlu0 0
        %1178 = vperm.xlu0 %1177, %v660
        %v1179 = vpop.permute.xlu0 %1178
        %1182 = vset.pattern.permute.xlu0 0
        %1183 = vperm.xlu0 %1182, %v661
        %v1184 = vpop.permute.xlu0 %1183
        %1187 = vset.pattern.permute.xlu0 0
        %1188 = vperm.xlu0 %1187, %v662
        %v1189 = vpop.permute.xlu0 %1188
        %1192 = vset.pattern.permute.xlu0 0
        %1193 = vperm.xlu0 %1192, %v663
        %v1194 = vpop.permute.xlu0 %1193
        %1197 = vset.pattern.permute.xlu0 0
        %1198 = vperm.xlu0 %1197, %v664
        %v1199 = vpop.permute.xlu0 %1198
        %1202 = vset.pattern.permute.xlu0 0
        %1203 = vperm.xlu0 %1202, %v665
        %v1204 = vpop.permute.xlu0 %1203
        %1207 = vset.pattern.permute.xlu0 0
        %1208 = vperm.xlu0 %1207, %v666
        %v1209 = vpop.permute.xlu0 %1208
        %1212 = vset.pattern.permute.xlu0 0
        %1213 = vperm.xlu0 %1212, %v667
        %v1214 = vpop.permute.xlu0 %1213
        %1217 = vset.pattern.permute.xlu0 0
        %1218 = vperm.xlu0 %1217, %v668
        %v1219 = vpop.permute.xlu0 %1218
        %1222 = vset.pattern.permute.xlu0 0
        %1223 = vperm.xlu0 %1222, %v669
        %v1224 = vpop.permute.xlu0 %1223
        %1227 = vset.pattern.permute.xlu0 0
        %1228 = vperm.xlu0 %1227, %v670
        %v1229 = vpop.permute.xlu0 %1228
        %1232 = vset.pattern.permute.xlu0 0
        %1233 = vperm.xlu0 %1232, %v671
        %v1234 = vpop.permute.xlu0 %1233
        %1237 = vset.pattern.permute.xlu0 0
        %1238 = vperm.xlu0 %1237, %v672
        %v1239 = vpop.permute.xlu0 %1238
        %1242 = vset.pattern.permute.xlu0 0
        %1243 = vperm.xlu0 %1242, %v673
        %v1244 = vpop.permute.xlu0 %1243
        %1247 = vset.pattern.permute.xlu0 0
        %1248 = vperm.xlu0 %1247, %v674
        %v1249 = vpop.permute.xlu0 %1248
        %1252 = vset.pattern.permute.xlu0 0
        %1253 = vperm.xlu0 %1252, %v675
        %v1254 = vpop.permute.xlu0 %1253
        %1257 = vset.pattern.permute.xlu0 0
        %1258 = vperm.xlu0 %1257, %v676
        %v1259 = vpop.permute.xlu0 %1258
        %1262 = vset.pattern.permute.xlu0 0
        %1263 = vperm.xlu0 %1262, %v677
        %v1264 = vpop.permute.xlu0 %1263
        %1267 = vset.pattern.permute.xlu0 0
        %1268 = vperm.xlu0 %1267, %v678
        %v1269 = vpop.permute.xlu0 %1268
        %1272 = vset.pattern.permute.xlu0 0
        %1273 = vperm.xlu0 %1272, %v679
        %v1274 = vpop.permute.xlu0 %1273
        %1277 = vset.pattern.permute.xlu0 0
        %1278 = vperm.xlu0 %1277, %v680
        %v1279 = vpop.permute.xlu0 %1278
        %1282 = vset.pattern.permute.xlu0 0
        %1283 = vperm.xlu0 %1282, %v681
        %v1284 = vpop.permute.xlu0 %1283
        %1287 = vset.pattern.permute.xlu0 0
        %1288 = vperm.xlu0 %1287, %v682
        %v1289 = vpop.permute.xlu0 %1288
        %1292 = vset.pattern.permute.xlu0 0
        %1293 = vperm.xlu0 %1292, %v683
        %v1294 = vpop.permute.xlu0 %1293
        %1297 = vset.pattern.permute.xlu0 0
        %1298 = vperm.xlu0 %1297, %v684
        %v1299 = vpop.permute.xlu0 %1298
        %1302 = vset.pattern.permute.xlu0 0
        %1303 = vperm.xlu0 %1302, %v685
        %v1304 = vpop.permute.xlu0 %1303
        %1307 = vset.pattern.permute.xlu0 0
        %1308 = vperm.xlu0 %1307, %v686
        %v1309 = vpop.permute.xlu0 %1308
        %1312 = vset.pattern.permute.xlu0 0
        %1313 = vperm.xlu0 %1312, %v687
        %v1314 = vpop.permute.xlu0 %1313
        %1317 = vset.pattern.permute.xlu0 0
        %1318 = vperm.xlu0 %1317, %v688
        %v1319 = vpop.permute.xlu0 %1318
        %1322 = vset.pattern.permute.xlu0 0
        %1323 = vperm.xlu0 %1322, %v689
        %v1324 = vpop.permute.xlu0 %1323
        %1327 = vset.pattern.permute.xlu0 0
        %1328 = vperm.xlu0 %1327, %v690
        %v1329 = vpop.permute.xlu0 %1328
        %1332 = vset.pattern.permute.xlu0 0
        %1333 = vperm.xlu0 %1332, %v691
        %v1334 = vpop.permute.xlu0 %1333
        %1337 = vset.pattern.permute.xlu0 0
        %1338 = vperm.xlu0 %1337, %v692
        %v1339 = vpop.permute.xlu0 %1338
        %1342 = vset.pattern.permute.xlu0 0
        %1343 = vperm.xlu0 %1342, %v693
        %v1344 = vpop.permute.xlu0 %1343
        %1347 = vset.pattern.permute.xlu0 0
        %1348 = vperm.xlu0 %1347, %v694
        %v1349 = vpop.permute.xlu0 %1348
        %1352 = vset.pattern.permute.xlu0 0
        %1353 = vperm.xlu0 %1352, %v695
        %v1354 = vpop.permute.xlu0 %1353
        %1357 = vset.pattern.permute.xlu0 0
        %1358 = vperm.xlu0 %1357, %v696
        %v1359 = vpop.permute.xlu0 %1358
        %1362 = vset.pattern.permute.xlu0 0
        %1363 = vperm.xlu0 %1362, %v697
        %v1364 = vpop.permute.xlu0 %1363
        %1367 = vset.pattern.permute.xlu0 0
        %1368 = vperm.xlu0 %1367, %v698
        %v1369 = vpop.permute.xlu0 %1368
        %1372 = vset.pattern.permute.xlu0 0
        %1373 = vperm.xlu0 %1372, %v699
        %v1374 = vpop.permute.xlu0 %1373
        %1377 = vset.pattern.permute.xlu0 0
        %1378 = vperm.xlu0 %1377, %v700
        %v1379 = vpop.permute.xlu0 %1378
        %1382 = vset.pattern.permute.xlu0 0
        %1383 = vperm.xlu0 %1382, %v701
        %v1384 = vpop.permute.xlu0 %1383
        %1387 = vset.pattern.permute.xlu0 0
        %1388 = vperm.xlu0 %1387, %v702
        %v1389 = vpop.permute.xlu0 %1388
        %1392 = vset.pattern.permute.xlu0 0
        %1393 = vperm.xlu0 %1392, %v703
        %v1394 = vpop.permute.xlu0 %1393
        %1397 = vset.pattern.permute.xlu0 0
        %1398 = vperm.xlu0 %1397, %v704
        %v1399 = vpop.permute.xlu0 %1398
        %1402 = vset.pattern.permute.xlu0 0
        %1403 = vperm.xlu0 %1402, %v705
        %v1404 = vpop.permute.xlu0 %1403
        %1407 = vset.pattern.permute.xlu0 0
        %1408 = vperm.xlu0 %1407, %v706
        %v1409 = vpop.permute.xlu0 %1408
        %1412 = vset.pattern.permute.xlu0 0
        %1413 = vperm.xlu0 %1412, %v707
        %v1414 = vpop.permute.xlu0 %1413
        %1417 = vset.pattern.permute.xlu0 0
        %1418 = vperm.xlu0 %1417, %v708
        %v1419 = vpop.permute.xlu0 %1418
        %1422 = vset.pattern.permute.xlu0 0
        %1423 = vperm.xlu0 %1422, %v709
        %v1424 = vpop.permute.xlu0 %1423
        %1427 = vset.pattern.permute.xlu0 0
        %1428 = vperm.xlu0 %1427, %v710
        %v1429 = vpop.permute.xlu0 %1428
        %1432 = vset.pattern.permute.xlu0 0
        %1433 = vperm.xlu0 %1432, %v711
        %v1434 = vpop.permute.xlu0 %1433
        %1437 = vset.pattern.permute.xlu0 0
        %1438 = vperm.xlu0 %1437, %v712
        %v1439 = vpop.permute.xlu0 %1438
        %1442 = vset.pattern.permute.xlu0 0
        %1443 = vperm.xlu0 %1442, %v713
        %v1444 = vpop.permute.xlu0 %1443
        %1447 = vset.pattern.permute.xlu0 0
        %1448 = vperm.xlu0 %1447, %v714
        %v1449 = vpop.permute.xlu0 %1448
        %1452 = vset.pattern.permute.xlu0 0
        %1453 = vperm.xlu0 %1452, %v715
        %v1454 = vpop.permute.xlu0 %1453
        %1457 = vset.pattern.permute.xlu0 0
        %1458 = vperm.xlu0 %1457, %v716
        %v1459 = vpop.permute.xlu0 %1458
        %1462 = vset.pattern.permute.xlu0 0
        %1463 = vperm.xlu0 %1462, %v717
        %v1464 = vpop.permute.xlu0 %1463
        %1467 = vset.pattern.permute.xlu0 0
        %1468 = vperm.xlu0 %1467, %v718
        %v1469 = vpop.permute.xlu0 %1468
        %1472 = vset.pattern.permute.xlu0 0
        %1473 = vperm.xlu0 %1472, %v719
        %v1474 = vpop.permute.xlu0 %1473
        %1477 = vset.pattern.permute.xlu0 0
        %1478 = vperm.xlu0 %1477, %v720
        %v1479 = vpop.permute.xlu0 %1478
        %1482 = vset.pattern.permute.xlu0 0
        %1483 = vperm.xlu0 %1482, %v721
        %v1484 = vpop.permute.xlu0 %1483
        %1487 = vset.pattern.permute.xlu0 0
        %1488 = vperm.xlu0 %1487, %v722
        %v1489 = vpop.permute.xlu0 %1488
        %1492 = vset.pattern.permute.xlu0 0
        %1493 = vperm.xlu0 %1492, %v723
        %v1494 = vpop.permute.xlu0 %1493
        %1497 = vset.pattern.permute.xlu0 0
        %1498 = vperm.xlu0 %1497, %v724
        %v1499 = vpop.permute.xlu0 %1498
        %1502 = vset.pattern.permute.xlu0 0
        %1503 = vperm.xlu0 %1502, %v725
        %v1504 = vpop.permute.xlu0 %1503
        %1507 = vset.pattern.permute.xlu0 0
        %1508 = vperm.xlu0 %1507, %v726
        %v1509 = vpop.permute.xlu0 %1508
        %1512 = vset.pattern.permute.xlu0 0
        %1513 = vperm.xlu0 %1512, %v727
        %v1514 = vpop.permute.xlu0 %1513
        %1517 = vset.pattern.permute.xlu0 0
        %1518 = vperm.xlu0 %1517, %v728
        %v1519 = vpop.permute.xlu0 %1518
        %1522 = vset.pattern.permute.xlu0 0
        %1523 = vperm.xlu0 %1522, %v729
        %v1524 = vpop.permute.xlu0 %1523
        %1527 = vset.pattern.permute.xlu0 0
        %1528 = vperm.xlu0 %1527, %v730
        %v1529 = vpop.permute.xlu0 %1528
        %vm1531 = vcmask 23552
        %v1533 = vsel %vm1531, %v411, 0
        %v1536 = vsel %vm1531, %v412, 0
        %v1539 = vsel %vm1531, %v413, 0
        %v1542 = vsel %vm1531, %v414, 0
        %v1545 = vsel %vm1531, %v415, 0
        %v1548 = vsel %vm1531, %v416, 0
        %v1551 = vsel %vm1531, %v417, 0
        %v1554 = vsel %vm1531, %v418, 0
        %v1557 = vsel %vm1531, %v419, 0
        %v1560 = vsel %vm1531, %v420, 0
        %v1563 = vsel %vm1531, %v421, 0
        %v1566 = vsel %vm1531, %v422, 0
        %v1569 = vsel %vm1531, %v423, 0
        %v1572 = vsel %vm1531, %v424, 0
        %v1575 = vsel %vm1531, %v425, 0
        %v1578 = vsel %vm1531, %v426, 0
        %v1581 = vsel %vm1531, %v427, 0
        %v1584 = vsel %vm1531, %v428, 0
        %v1587 = vsel %vm1531, %v429, 0
        %v1590 = vsel %vm1531, %v430, 0
        %v1593 = vsel %vm1531, %v431, 0
        %v1596 = vsel %vm1531, %v432, 0
        %v1599 = vsel %vm1531, %v433, 0
        %v1602 = vsel %vm1531, %v434, 0
        %v1605 = vsel %vm1531, %v435, 0
        %v1608 = vsel %vm1531, %v436, 0
        %v1611 = vsel %vm1531, %v437, 0
        %v1614 = vsel %vm1531, %v438, 0
        %v1617 = vsel %vm1531, %v439, 0
        %v1620 = vsel %vm1531, %v440, 0
        %v1623 = vsel %vm1531, %v441, 0
        %v1626 = vsel %vm1531, %v442, 0
        %v1629 = vsel %vm1531, %v443, 0
        %v1632 = vsel %vm1531, %v444, 0
        %v1635 = vsel %vm1531, %v445, 0
        %v1638 = vsel %vm1531, %v446, 0
        %v1641 = vsel %vm1531, %v447, 0
        %v1644 = vsel %vm1531, %v448, 0
        %v1647 = vsel %vm1531, %v449, 0
        %v1650 = vsel %vm1531, %v450, 0
        %v1653 = vsel %vm1531, %v451, 0
        %v1656 = vsel %vm1531, %v452, 0
        %v1659 = vsel %vm1531, %v453, 0
        %v1662 = vsel %vm1531, %v454, 0
        %v1665 = vsel %vm1531, %v455, 0
        %v1668 = vsel %vm1531, %v456, 0
        %v1671 = vsel %vm1531, %v457, 0
        %v1674 = vsel %vm1531, %v458, 0
        %v1677 = vsel %vm1531, %v459, 0
        %v1680 = vsel %vm1531, %v460, 0
        %v1683 = vsel %vm1531, %v461, 0
        %v1686 = vsel %vm1531, %v462, 0
        %v1689 = vsel %vm1531, %v463, 0
        %v1692 = vsel %vm1531, %v464, 0
        %v1695 = vsel %vm1531, %v465, 0
        %v1698 = vsel %vm1531, %v466, 0
        %v1701 = vsel %vm1531, %v467, 0
        %v1704 = vsel %vm1531, %v468, 0
        %v1707 = vsel %vm1531, %v469, 0
        %v1710 = vsel %vm1531, %v470, 0
        %v1713 = vsel %vm1531, %v471, 0
        %v1716 = vsel %vm1531, %v472, 0
        %v1719 = vsel %vm1531, %v473, 0
        %v1722 = vsel %vm1531, %v474, 0
        %v1725 = vsel %vm1531, %v475, 0
        %v1728 = vsel %vm1531, %v476, 0
        %v1731 = vsel %vm1531, %v477, 0
        %v1734 = vsel %vm1531, %v478, 0
        %v1737 = vsel %vm1531, %v479, 0
        %v1740 = vsel %vm1531, %v480, 0
        %v1743 = vsel %vm1531, %v481, 0
        %v1746 = vsel %vm1531, %v482, 0
        %v1749 = vsel %vm1531, %v483, 0
        %v1752 = vsel %vm1531, %v484, 0
        %v1755 = vsel %vm1531, %v485, 0
        %v1758 = vsel %vm1531, %v486, 0
        %v1761 = vsel %vm1531, %v487, 0
        %v1764 = vsel %vm1531, %v488, 0
        %v1767 = vsel %vm1531, %v489, 0
        %v1770 = vsel %vm1531, %v490, 0
        %v1773 = vsel %vm1531, %v491, 0
        %v1776 = vsel %vm1531, %v492, 0
        %v1779 = vsel %vm1531, %v493, 0
        %v1782 = vsel %vm1531, %v494, 0
        %v1785 = vsel %vm1531, %v495, 0
        %v1788 = vsel %vm1531, %v496, 0
        %v1791 = vsel %vm1531, %v497, 0
        %v1794 = vsel %vm1531, %v498, 0
        %v1797 = vsel %vm1531, %v499, 0
        %v1800 = vsel %vm1531, %v500, 0
        %v1803 = vsel %vm1531, %v501, 0
        %v1806 = vsel %vm1531, %v502, 0
        %v1809 = vsel %vm1531, %v503, 0
        %v1812 = vsel %vm1531, %v504, 0
        %v1815 = vsel %vm1531, %v505, 0
        %v1818 = vsel %vm1531, %v506, 0
        %v1821 = vsel %vm1531, %v507, 0
        %v1824 = vsel %vm1531, %v508, 0
        %v1827 = vsel %vm1531, %v509, 0
        %v1830 = vsel %vm1531, %v510, 0
        %v1833 = vsel %vm1531, %v511, 0
        %v1836 = vsel %vm1531, %v512, 0
        %v1839 = vsel %vm1531, %v513, 0
        %v1842 = vsel %vm1531, %v514, 0
        %v1845 = vsel %vm1531, %v515, 0
        %v1848 = vsel %vm1531, %v516, 0
        %v1851 = vsel %vm1531, %v517, 0
        %v1854 = vsel %vm1531, %v518, 0
        %v1857 = vsel %vm1531, %v519, 0
        %v1860 = vsel %vm1531, %v520, 0
        %v1863 = vsel %vm1531, %v521, 0
        %v1866 = vsel %vm1531, %v522, 0
        %v1869 = vsel %vm1531, %v523, 0
        %v1872 = vsel %vm1531, %v524, 0
        %v1875 = vsel %vm1531, %v525, 0
        %v1878 = vsel %vm1531, %v526, 0
        %v1881 = vsel %vm1531, %v527, 0
        %v1884 = vsel %vm1531, %v528, 0
        %v1887 = vsel %vm1531, %v529, 0
        %v1890 = vsel %vm1531, %v530, 0
        %v1893 = vsel %vm1531, %v531, 0
        %v1896 = vsel %vm1531, %v532, 0
        %v1899 = vsel %vm1531, %v533, 0
        %v1902 = vsel %vm1531, %v534, 0
        %v1905 = vsel %vm1531, %v535, 0
        %v1908 = vsel %vm1531, %v536, 0
        %v1911 = vsel %vm1531, %v537, 0
        %v1914 = vsel %vm1531, %v538, 0
        %v1917 = vsel %vm1531, %v539, 0
        %v1920 = vsel %vm1531, %v540, 0
        %v1923 = vsel %vm1531, %v541, 0
        %v1926 = vsel %vm1531, %v542, 0
        %v1929 = vsel %vm1531, %v543, 0
        %v1932 = vsel %vm1531, %v544, 0
        %v1935 = vsel %vm1531, %v545, 0
        %v1938 = vsel %vm1531, %v546, 0
        %v1941 = vsel %vm1531, %v547, 0
        %v1944 = vsel %vm1531, %v548, 0
        %v1947 = vsel %vm1531, %v549, 0
        %v1950 = vsel %vm1531, %v550, 0
        %v1953 = vsel %vm1531, %v551, 0
        %v1956 = vsel %vm1531, %v552, 0
        %v1959 = vsel %vm1531, %v553, 0
        %v1962 = vsel %vm1531, %v554, 0
        %v1965 = vsel %vm1531, %v555, 0
        %v1968 = vsel %vm1531, %v556, 0
        %v1971 = vsel %vm1531, %v557, 0
        %v1974 = vsel %vm1531, %v558, 0
        %v1977 = vsel %vm1531, %v559, 0
        %v1980 = vsel %vm1531, %v560, 0
        %v1983 = vsel %vm1531, %v561, 0
        %v1986 = vsel %vm1531, %v562, 0
        %v1989 = vsel %vm1531, %v563, 0
        %v1992 = vsel %vm1531, %v564, 0
        %v1995 = vsel %vm1531, %v565, 0
        %v1998 = vsel %vm1531, %v566, 0
        %v2001 = vsel %vm1531, %v567, 0
        %v2004 = vsel %vm1531, %v568, 0
        %v2007 = vsel %vm1531, %v569, 0
        %v2010 = vsel %vm1531, %v570, 0
        %vm2012 = vcmask 1042432
        %v2014 = vsel %vm2012, %v410, 0
        %2016 = vmatpush.msra.mxu0 0.0
        %2017 = vmatpush.msra.mxu0 0.0
        %2018 = vmatpush.msra.mxu0 0.0
        %2019 = vmatpush.msra.mxu0 0.0
        %2020 = vmatpush.msra.mxu0 0.0
        %2021 = vmatpush.msra.mxu0 0.0
        %2022 = vmatpush.msra.mxu0 0.0
        %2023 = vmatpush.msra.mxu0 0.0
        %2024 = vmatpush.msra.mxu0 0.0
        %2025 = vmatpush.msra.mxu0 0.0
        %2026 = vmatpush.msra.mxu0 0.0
        %2027 = vmatpush.msra.mxu0 0.0
        %2028 = vmatpush.msra.mxu0 0.0
        %2029 = vmatpush.msra.mxu0 0.0
        %2030 = vmatpush.msra.mxu0 0.0
        %2031 = vmatpush.msra.mxu0 %v2014
        %2032 = vmatmul.f32.gmra.mxu0 %v1533
        %v2033 = vpop.f32.mrf.mxu0
        %v2034 = vadd.f32 %v734, %v2033
        %2035 = vmatmul.f32.gmra.mxu0 %v1536
        %v2036 = vpop.f32.mrf.mxu0
        %v2037 = vadd.f32 %v739, %v2036
        %2038 = vmatmul.f32.gmra.mxu0 %v1539
        %v2039 = vpop.f32.mrf.mxu0
        %v2040 = vadd.f32 %v744, %v2039
        %2041 = vmatmul.f32.gmra.mxu0 %v1542
        %v2042 = vpop.f32.mrf.mxu0
        %v2043 = vadd.f32 %v749, %v2042
        %2044 = vmatmul.f32.gmra.mxu0 %v1545
        %v2045 = vpop.f32.mrf.mxu0
        %v2046 = vadd.f32 %v754, %v2045
        %2047 = vmatmul.f32.gmra.mxu0 %v1548
        %v2048 = vpop.f32.mrf.mxu0
        %v2049 = vadd.f32 %v759, %v2048
        %2050 = vmatmul.f32.gmra.mxu0 %v1551
        %v2051 = vpop.f32.mrf.mxu0
        %v2052 = vadd.f32 %v764, %v2051
        %2053 = vmatmul.f32.gmra.mxu0 %v1554
        %v2054 = vpop.f32.mrf.mxu0
        %v2055 = vadd.f32 %v769, %v2054
        %2056 = vmatmul.f32.gmra.mxu0 %v1557
        %v2057 = vpop.f32.mrf.mxu0
        %v2058 = vadd.f32 %v774, %v2057
        %2059 = vmatmul.f32.gmra.mxu0 %v1560
        %v2060 = vpop.f32.mrf.mxu0
        %v2061 = vadd.f32 %v779, %v2060
        %2062 = vmatmul.f32.gmra.mxu0 %v1563
        %v2063 = vpop.f32.mrf.mxu0
        %v2064 = vadd.f32 %v784, %v2063
        %2065 = vmatmul.f32.gmra.mxu0 %v1566
        %v2066 = vpop.f32.mrf.mxu0
        %v2067 = vadd.f32 %v789, %v2066
        %2068 = vmatmul.f32.gmra.mxu0 %v1569
        %v2069 = vpop.f32.mrf.mxu0
        %v2070 = vadd.f32 %v794, %v2069
        %2071 = vmatmul.f32.gmra.mxu0 %v1572
        %v2072 = vpop.f32.mrf.mxu0
        %v2073 = vadd.f32 %v799, %v2072
        %2074 = vmatmul.f32.gmra.mxu0 %v1575
        %v2075 = vpop.f32.mrf.mxu0
        %v2076 = vadd.f32 %v804, %v2075
        %2077 = vmatmul.f32.gmra.mxu0 %v1578
        %v2078 = vpop.f32.mrf.mxu0
        %v2079 = vadd.f32 %v809, %v2078
        %2080 = vmatmul.f32.gmra.mxu0 %v1581
        %v2081 = vpop.f32.mrf.mxu0
        %v2082 = vadd.f32 %v814, %v2081
        %2083 = vmatmul.f32.gmra.mxu0 %v1584
        %v2084 = vpop.f32.mrf.mxu0
        %v2085 = vadd.f32 %v819, %v2084
        %2086 = vmatmul.f32.gmra.mxu0 %v1587
        %v2087 = vpop.f32.mrf.mxu0
        %v2088 = vadd.f32 %v824, %v2087
        %2089 = vmatmul.f32.gmra.mxu0 %v1590
        %v2090 = vpop.f32.mrf.mxu0
        %v2091 = vadd.f32 %v829, %v2090
        %2092 = vmatmul.f32.gmra.mxu0 %v1593
        %v2093 = vpop.f32.mrf.mxu0
        %v2094 = vadd.f32 %v834, %v2093
        %2095 = vmatmul.f32.gmra.mxu0 %v1596
        %v2096 = vpop.f32.mrf.mxu0
        %v2097 = vadd.f32 %v839, %v2096
        %2098 = vmatmul.f32.gmra.mxu0 %v1599
        %v2099 = vpop.f32.mrf.mxu0
        %v2100 = vadd.f32 %v844, %v2099
        %2101 = vmatmul.f32.gmra.mxu0 %v1602
        %v2102 = vpop.f32.mrf.mxu0
        %v2103 = vadd.f32 %v849, %v2102
        %2104 = vmatmul.f32.gmra.mxu0 %v1605
        %v2105 = vpop.f32.mrf.mxu0
        %v2106 = vadd.f32 %v854, %v2105
        %2107 = vmatmul.f32.gmra.mxu0 %v1608
        %v2108 = vpop.f32.mrf.mxu0
        %v2109 = vadd.f32 %v859, %v2108
        %2110 = vmatmul.f32.gmra.mxu0 %v1611
        %v2111 = vpop.f32.mrf.mxu0
        %v2112 = vadd.f32 %v864, %v2111
        %2113 = vmatmul.f32.gmra.mxu0 %v1614
        %v2114 = vpop.f32.mrf.mxu0
        %v2115 = vadd.f32 %v869, %v2114
        %2116 = vmatmul.f32.gmra.mxu0 %v1617
        %v2117 = vpop.f32.mrf.mxu0
        %v2118 = vadd.f32 %v874, %v2117
        %2119 = vmatmul.f32.gmra.mxu0 %v1620
        %v2120 = vpop.f32.mrf.mxu0
        %v2121 = vadd.f32 %v879, %v2120
        %2122 = vmatmul.f32.gmra.mxu0 %v1623
        %v2123 = vpop.f32.mrf.mxu0
        %v2124 = vadd.f32 %v884, %v2123
        %2125 = vmatmul.f32.gmra.mxu0 %v1626
        %v2126 = vpop.f32.mrf.mxu0
        %v2127 = vadd.f32 %v889, %v2126
        %2128 = vmatmul.f32.gmra.mxu0 %v1629
        %v2129 = vpop.f32.mrf.mxu0
        %v2130 = vadd.f32 %v894, %v2129
        %2131 = vmatmul.f32.gmra.mxu0 %v1632
        %v2132 = vpop.f32.mrf.mxu0
        %v2133 = vadd.f32 %v899, %v2132
        %2134 = vmatmul.f32.gmra.mxu0 %v1635
        %v2135 = vpop.f32.mrf.mxu0
        %v2136 = vadd.f32 %v904, %v2135
        %2137 = vmatmul.f32.gmra.mxu0 %v1638
        %v2138 = vpop.f32.mrf.mxu0
        %v2139 = vadd.f32 %v909, %v2138
        %2140 = vmatmul.f32.gmra.mxu0 %v1641
        %v2141 = vpop.f32.mrf.mxu0
        %v2142 = vadd.f32 %v914, %v2141
        %2143 = vmatmul.f32.gmra.mxu0 %v1644
        %v2144 = vpop.f32.mrf.mxu0
        %v2145 = vadd.f32 %v919, %v2144
        %2146 = vmatmul.f32.gmra.mxu0 %v1647
        %v2147 = vpop.f32.mrf.mxu0
        %v2148 = vadd.f32 %v924, %v2147
        %2149 = vmatmul.f32.gmra.mxu0 %v1650
        %v2150 = vpop.f32.mrf.mxu0
        %v2151 = vadd.f32 %v929, %v2150
        %2152 = vmatmul.f32.gmra.mxu0 %v1653
        %v2153 = vpop.f32.mrf.mxu0
        %v2154 = vadd.f32 %v934, %v2153
        %2155 = vmatmul.f32.gmra.mxu0 %v1656
        %v2156 = vpop.f32.mrf.mxu0
        %v2157 = vadd.f32 %v939, %v2156
        %2158 = vmatmul.f32.gmra.mxu0 %v1659
        %v2159 = vpop.f32.mrf.mxu0
        %v2160 = vadd.f32 %v944, %v2159
        %2161 = vmatmul.f32.gmra.mxu0 %v1662
        %v2162 = vpop.f32.mrf.mxu0
        %v2163 = vadd.f32 %v949, %v2162
        %2164 = vmatmul.f32.gmra.mxu0 %v1665
        %v2165 = vpop.f32.mrf.mxu0
        %v2166 = vadd.f32 %v954, %v2165
        %2167 = vmatmul.f32.gmra.mxu0 %v1668
        %v2168 = vpop.f32.mrf.mxu0
        %v2169 = vadd.f32 %v959, %v2168
        %2170 = vmatmul.f32.gmra.mxu0 %v1671
        %v2171 = vpop.f32.mrf.mxu0
        %v2172 = vadd.f32 %v964, %v2171
        %2173 = vmatmul.f32.gmra.mxu0 %v1674
        %v2174 = vpop.f32.mrf.mxu0
        %v2175 = vadd.f32 %v969, %v2174
        %2176 = vmatmul.f32.gmra.mxu0 %v1677
        %v2177 = vpop.f32.mrf.mxu0
        %v2178 = vadd.f32 %v974, %v2177
        %2179 = vmatmul.f32.gmra.mxu0 %v1680
        %v2180 = vpop.f32.mrf.mxu0
        %v2181 = vadd.f32 %v979, %v2180
        %2182 = vmatmul.f32.gmra.mxu0 %v1683
        %v2183 = vpop.f32.mrf.mxu0
        %v2184 = vadd.f32 %v984, %v2183
        %2185 = vmatmul.f32.gmra.mxu0 %v1686
        %v2186 = vpop.f32.mrf.mxu0
        %v2187 = vadd.f32 %v989, %v2186
        %2188 = vmatmul.f32.gmra.mxu0 %v1689
        %v2189 = vpop.f32.mrf.mxu0
        %v2190 = vadd.f32 %v994, %v2189
        %2191 = vmatmul.f32.gmra.mxu0 %v1692
        %v2192 = vpop.f32.mrf.mxu0
        %v2193 = vadd.f32 %v999, %v2192
        %2194 = vmatmul.f32.gmra.mxu0 %v1695
        %v2195 = vpop.f32.mrf.mxu0
        %v2196 = vadd.f32 %v1004, %v2195
        %2197 = vmatmul.f32.gmra.mxu0 %v1698
        %v2198 = vpop.f32.mrf.mxu0
        %v2199 = vadd.f32 %v1009, %v2198
        %2200 = vmatmul.f32.gmra.mxu0 %v1701
        %v2201 = vpop.f32.mrf.mxu0
        %v2202 = vadd.f32 %v1014, %v2201
        %2203 = vmatmul.f32.gmra.mxu0 %v1704
        %v2204 = vpop.f32.mrf.mxu0
        %v2205 = vadd.f32 %v1019, %v2204
        %2206 = vmatmul.f32.gmra.mxu0 %v1707
        %v2207 = vpop.f32.mrf.mxu0
        %v2208 = vadd.f32 %v1024, %v2207
        %2209 = vmatmul.f32.gmra.mxu0 %v1710
        %v2210 = vpop.f32.mrf.mxu0
        %v2211 = vadd.f32 %v1029, %v2210
        %2212 = vmatmul.f32.gmra.mxu0 %v1713
        %v2213 = vpop.f32.mrf.mxu0
        %v2214 = vadd.f32 %v1034, %v2213
        %2215 = vmatmul.f32.gmra.mxu0 %v1716
        %v2216 = vpop.f32.mrf.mxu0
        %v2217 = vadd.f32 %v1039, %v2216
        %2218 = vmatmul.f32.gmra.mxu0 %v1719
        %v2219 = vpop.f32.mrf.mxu0
        %v2220 = vadd.f32 %v1044, %v2219
        %2221 = vmatmul.f32.gmra.mxu0 %v1722
        %v2222 = vpop.f32.mrf.mxu0
        %v2223 = vadd.f32 %v1049, %v2222
        %2224 = vmatmul.f32.gmra.mxu0 %v1725
        %v2225 = vpop.f32.mrf.mxu0
        %v2226 = vadd.f32 %v1054, %v2225
        %2227 = vmatmul.f32.gmra.mxu0 %v1728
        %v2228 = vpop.f32.mrf.mxu0
        %v2229 = vadd.f32 %v1059, %v2228
        %2230 = vmatmul.f32.gmra.mxu0 %v1731
        %v2231 = vpop.f32.mrf.mxu0
        %v2232 = vadd.f32 %v1064, %v2231
        %2233 = vmatmul.f32.gmra.mxu0 %v1734
        %v2234 = vpop.f32.mrf.mxu0
        %v2235 = vadd.f32 %v1069, %v2234
        %2236 = vmatmul.f32.gmra.mxu0 %v1737
        %v2237 = vpop.f32.mrf.mxu0
        %v2238 = vadd.f32 %v1074, %v2237
        %2239 = vmatmul.f32.gmra.mxu0 %v1740
        %v2240 = vpop.f32.mrf.mxu0
        %v2241 = vadd.f32 %v1079, %v2240
        %2242 = vmatmul.f32.gmra.mxu0 %v1743
        %v2243 = vpop.f32.mrf.mxu0
        %v2244 = vadd.f32 %v1084, %v2243
        %2245 = vmatmul.f32.gmra.mxu0 %v1746
        %v2246 = vpop.f32.mrf.mxu0
        %v2247 = vadd.f32 %v1089, %v2246
        %2248 = vmatmul.f32.gmra.mxu0 %v1749
        %v2249 = vpop.f32.mrf.mxu0
        %v2250 = vadd.f32 %v1094, %v2249
        %2251 = vmatmul.f32.gmra.mxu0 %v1752
        %v2252 = vpop.f32.mrf.mxu0
        %v2253 = vadd.f32 %v1099, %v2252
        %2254 = vmatmul.f32.gmra.mxu0 %v1755
        %v2255 = vpop.f32.mrf.mxu0
        %v2256 = vadd.f32 %v1104, %v2255
        %2257 = vmatmul.f32.gmra.mxu0 %v1758
        %v2258 = vpop.f32.mrf.mxu0
        %v2259 = vadd.f32 %v1109, %v2258
        %2260 = vmatmul.f32.gmra.mxu0 %v1761
        %v2261 = vpop.f32.mrf.mxu0
        %v2262 = vadd.f32 %v1114, %v2261
        %2263 = vmatmul.f32.gmra.mxu0 %v1764
        %v2264 = vpop.f32.mrf.mxu0
        %v2265 = vadd.f32 %v1119, %v2264
        %2266 = vmatmul.f32.gmra.mxu0 %v1767
        %v2267 = vpop.f32.mrf.mxu0
        %v2268 = vadd.f32 %v1124, %v2267
        %2269 = vmatmul.f32.gmra.mxu0 %v1770
        %v2270 = vpop.f32.mrf.mxu0
        %v2271 = vadd.f32 %v1129, %v2270
        %2272 = vmatmul.f32.gmra.mxu0 %v1773
        %v2273 = vpop.f32.mrf.mxu0
        %v2274 = vadd.f32 %v1134, %v2273
        %2275 = vmatmul.f32.gmra.mxu0 %v1776
        %v2276 = vpop.f32.mrf.mxu0
        %v2277 = vadd.f32 %v1139, %v2276
        %2278 = vmatmul.f32.gmra.mxu0 %v1779
        %v2279 = vpop.f32.mrf.mxu0
        %v2280 = vadd.f32 %v1144, %v2279
        %2281 = vmatmul.f32.gmra.mxu0 %v1782
        %v2282 = vpop.f32.mrf.mxu0
        %v2283 = vadd.f32 %v1149, %v2282
        %2284 = vmatmul.f32.gmra.mxu0 %v1785
        %v2285 = vpop.f32.mrf.mxu0
        %v2286 = vadd.f32 %v1154, %v2285
        %2287 = vmatmul.f32.gmra.mxu0 %v1788
        %v2288 = vpop.f32.mrf.mxu0
        %v2289 = vadd.f32 %v1159, %v2288
        %2290 = vmatmul.f32.gmra.mxu0 %v1791
        %v2291 = vpop.f32.mrf.mxu0
        %v2292 = vadd.f32 %v1164, %v2291
        %2293 = vmatmul.f32.gmra.mxu0 %v1794
        %v2294 = vpop.f32.mrf.mxu0
        %v2295 = vadd.f32 %v1169, %v2294
        %2296 = vmatmul.f32.gmra.mxu0 %v1797
        %v2297 = vpop.f32.mrf.mxu0
        %v2298 = vadd.f32 %v1174, %v2297
        %2299 = vmatmul.f32.gmra.mxu0 %v1800
        %v2300 = vpop.f32.mrf.mxu0
        %v2301 = vadd.f32 %v1179, %v2300
        %2302 = vmatmul.f32.gmra.mxu0 %v1803
        %v2303 = vpop.f32.mrf.mxu0
        %v2304 = vadd.f32 %v1184, %v2303
        %2305 = vmatmul.f32.gmra.mxu0 %v1806
        %v2306 = vpop.f32.mrf.mxu0
        %v2307 = vadd.f32 %v1189, %v2306
        %2308 = vmatmul.f32.gmra.mxu0 %v1809
        %v2309 = vpop.f32.mrf.mxu0
        %v2310 = vadd.f32 %v1194, %v2309
        %2311 = vmatmul.f32.gmra.mxu0 %v1812
        %v2312 = vpop.f32.mrf.mxu0
        %v2313 = vadd.f32 %v1199, %v2312
        %2314 = vmatmul.f32.gmra.mxu0 %v1815
        %v2315 = vpop.f32.mrf.mxu0
        %v2316 = vadd.f32 %v1204, %v2315
        %2317 = vmatmul.f32.gmra.mxu0 %v1818
        %v2318 = vpop.f32.mrf.mxu0
        %v2319 = vadd.f32 %v1209, %v2318
        %2320 = vmatmul.f32.gmra.mxu0 %v1821
        %v2321 = vpop.f32.mrf.mxu0
        %v2322 = vadd.f32 %v1214, %v2321
        %2323 = vmatmul.f32.gmra.mxu0 %v1824
        %v2324 = vpop.f32.mrf.mxu0
        %v2325 = vadd.f32 %v1219, %v2324
        %2326 = vmatmul.f32.gmra.mxu0 %v1827
        %v2327 = vpop.f32.mrf.mxu0
        %v2328 = vadd.f32 %v1224, %v2327
        %2329 = vmatmul.f32.gmra.mxu0 %v1830
        %v2330 = vpop.f32.mrf.mxu0
        %v2331 = vadd.f32 %v1229, %v2330
        %2332 = vmatmul.f32.gmra.mxu0 %v1833
        %v2333 = vpop.f32.mrf.mxu0
        %v2334 = vadd.f32 %v1234, %v2333
        %2335 = vmatmul.f32.gmra.mxu0 %v1836
        %v2336 = vpop.f32.mrf.mxu0
        %v2337 = vadd.f32 %v1239, %v2336
        %2338 = vmatmul.f32.gmra.mxu0 %v1839
        %v2339 = vpop.f32.mrf.mxu0
        %v2340 = vadd.f32 %v1244, %v2339
        %2341 = vmatmul.f32.gmra.mxu0 %v1842
        %v2342 = vpop.f32.mrf.mxu0
        %v2343 = vadd.f32 %v1249, %v2342
        %2344 = vmatmul.f32.gmra.mxu0 %v1845
        %v2345 = vpop.f32.mrf.mxu0
        %v2346 = vadd.f32 %v1254, %v2345
        %2347 = vmatmul.f32.gmra.mxu0 %v1848
        %v2348 = vpop.f32.mrf.mxu0
        %v2349 = vadd.f32 %v1259, %v2348
        %2350 = vmatmul.f32.gmra.mxu0 %v1851
        %v2351 = vpop.f32.mrf.mxu0
        %v2352 = vadd.f32 %v1264, %v2351
        %2353 = vmatmul.f32.gmra.mxu0 %v1854
        %v2354 = vpop.f32.mrf.mxu0
        %v2355 = vadd.f32 %v1269, %v2354
        %2356 = vmatmul.f32.gmra.mxu0 %v1857
        %v2357 = vpop.f32.mrf.mxu0
        %v2358 = vadd.f32 %v1274, %v2357
        %2359 = vmatmul.f32.gmra.mxu0 %v1860
        %v2360 = vpop.f32.mrf.mxu0
        %v2361 = vadd.f32 %v1279, %v2360
        %2362 = vmatmul.f32.gmra.mxu0 %v1863
        %v2363 = vpop.f32.mrf.mxu0
        %v2364 = vadd.f32 %v1284, %v2363
        %2365 = vmatmul.f32.gmra.mxu0 %v1866
        %v2366 = vpop.f32.mrf.mxu0
        %v2367 = vadd.f32 %v1289, %v2366
        %2368 = vmatmul.f32.gmra.mxu0 %v1869
        %v2369 = vpop.f32.mrf.mxu0
        %v2370 = vadd.f32 %v1294, %v2369
        %2371 = vmatmul.f32.gmra.mxu0 %v1872
        %v2372 = vpop.f32.mrf.mxu0
        %v2373 = vadd.f32 %v1299, %v2372
        %2374 = vmatmul.f32.gmra.mxu0 %v1875
        %v2375 = vpop.f32.mrf.mxu0
        %v2376 = vadd.f32 %v1304, %v2375
        %2377 = vmatmul.f32.gmra.mxu0 %v1878
        %v2378 = vpop.f32.mrf.mxu0
        %v2379 = vadd.f32 %v1309, %v2378
        %2380 = vmatmul.f32.gmra.mxu0 %v1881
        %v2381 = vpop.f32.mrf.mxu0
        %v2382 = vadd.f32 %v1314, %v2381
        %2383 = vmatmul.f32.gmra.mxu0 %v1884
        %v2384 = vpop.f32.mrf.mxu0
        %v2385 = vadd.f32 %v1319, %v2384
        %2386 = vmatmul.f32.gmra.mxu0 %v1887
        %v2387 = vpop.f32.mrf.mxu0
        %v2388 = vadd.f32 %v1324, %v2387
        %2389 = vmatmul.f32.gmra.mxu0 %v1890
        %v2390 = vpop.f32.mrf.mxu0
        %v2391 = vadd.f32 %v1329, %v2390
        %2392 = vmatmul.f32.gmra.mxu0 %v1893
        %v2393 = vpop.f32.mrf.mxu0
        %v2394 = vadd.f32 %v1334, %v2393
        %2395 = vmatmul.f32.gmra.mxu0 %v1896
        %v2396 = vpop.f32.mrf.mxu0
        %v2397 = vadd.f32 %v1339, %v2396
        %2398 = vmatmul.f32.gmra.mxu0 %v1899
        %v2399 = vpop.f32.mrf.mxu0
        %v2400 = vadd.f32 %v1344, %v2399
        %2401 = vmatmul.f32.gmra.mxu0 %v1902
        %v2402 = vpop.f32.mrf.mxu0
        %v2403 = vadd.f32 %v1349, %v2402
        %2404 = vmatmul.f32.gmra.mxu0 %v1905
        %v2405 = vpop.f32.mrf.mxu0
        %v2406 = vadd.f32 %v1354, %v2405
        %2407 = vmatmul.f32.gmra.mxu0 %v1908
        %v2408 = vpop.f32.mrf.mxu0
        %v2409 = vadd.f32 %v1359, %v2408
        %2410 = vmatmul.f32.gmra.mxu0 %v1911
        %v2411 = vpop.f32.mrf.mxu0
        %v2412 = vadd.f32 %v1364, %v2411
        %2413 = vmatmul.f32.gmra.mxu0 %v1914
        %v2414 = vpop.f32.mrf.mxu0
        %v2415 = vadd.f32 %v1369, %v2414
        %2416 = vmatmul.f32.gmra.mxu0 %v1917
        %v2417 = vpop.f32.mrf.mxu0
        %v2418 = vadd.f32 %v1374, %v2417
        %2419 = vmatmul.f32.gmra.mxu0 %v1920
        %v2420 = vpop.f32.mrf.mxu0
        %v2421 = vadd.f32 %v1379, %v2420
        %2422 = vmatmul.f32.gmra.mxu0 %v1923
        %v2423 = vpop.f32.mrf.mxu0
        %v2424 = vadd.f32 %v1384, %v2423
        %2425 = vmatmul.f32.gmra.mxu0 %v1926
        %v2426 = vpop.f32.mrf.mxu0
        %v2427 = vadd.f32 %v1389, %v2426
        %2428 = vmatmul.f32.gmra.mxu0 %v1929
        %v2429 = vpop.f32.mrf.mxu0
        %v2430 = vadd.f32 %v1394, %v2429
        %2431 = vmatmul.f32.gmra.mxu0 %v1932
        %v2432 = vpop.f32.mrf.mxu0
        %v2433 = vadd.f32 %v1399, %v2432
        %2434 = vmatmul.f32.gmra.mxu0 %v1935
        %v2435 = vpop.f32.mrf.mxu0
        %v2436 = vadd.f32 %v1404, %v2435
        %2437 = vmatmul.f32.gmra.mxu0 %v1938
        %v2438 = vpop.f32.mrf.mxu0
        %v2439 = vadd.f32 %v1409, %v2438
        %2440 = vmatmul.f32.gmra.mxu0 %v1941
        %v2441 = vpop.f32.mrf.mxu0
        %v2442 = vadd.f32 %v1414, %v2441
        %2443 = vmatmul.f32.gmra.mxu0 %v1944
        %v2444 = vpop.f32.mrf.mxu0
        %v2445 = vadd.f32 %v1419, %v2444
        %2446 = vmatmul.f32.gmra.mxu0 %v1947
        %v2447 = vpop.f32.mrf.mxu0
        %v2448 = vadd.f32 %v1424, %v2447
        %2449 = vmatmul.f32.gmra.mxu0 %v1950
        %v2450 = vpop.f32.mrf.mxu0
        %v2451 = vadd.f32 %v1429, %v2450
        %2452 = vmatmul.f32.gmra.mxu0 %v1953
        %v2453 = vpop.f32.mrf.mxu0
        %v2454 = vadd.f32 %v1434, %v2453
        %2455 = vmatmul.f32.gmra.mxu0 %v1956
        %v2456 = vpop.f32.mrf.mxu0
        %v2457 = vadd.f32 %v1439, %v2456
        %2458 = vmatmul.f32.gmra.mxu0 %v1959
        %v2459 = vpop.f32.mrf.mxu0
        %v2460 = vadd.f32 %v1444, %v2459
        %2461 = vmatmul.f32.gmra.mxu0 %v1962
        %v2462 = vpop.f32.mrf.mxu0
        %v2463 = vadd.f32 %v1449, %v2462
        %2464 = vmatmul.f32.gmra.mxu0 %v1965
        %v2465 = vpop.f32.mrf.mxu0
        %v2466 = vadd.f32 %v1454, %v2465
        %2467 = vmatmul.f32.gmra.mxu0 %v1968
        %v2468 = vpop.f32.mrf.mxu0
        %v2469 = vadd.f32 %v1459, %v2468
        %2470 = vmatmul.f32.gmra.mxu0 %v1971
        %v2471 = vpop.f32.mrf.mxu0
        %v2472 = vadd.f32 %v1464, %v2471
        %2473 = vmatmul.f32.gmra.mxu0 %v1974
        %v2474 = vpop.f32.mrf.mxu0
        %v2475 = vadd.f32 %v1469, %v2474
        %2476 = vmatmul.f32.gmra.mxu0 %v1977
        %v2477 = vpop.f32.mrf.mxu0
        %v2478 = vadd.f32 %v1474, %v2477
        %2479 = vmatmul.f32.gmra.mxu0 %v1980
        %v2480 = vpop.f32.mrf.mxu0
        %v2481 = vadd.f32 %v1479, %v2480
        %2482 = vmatmul.f32.gmra.mxu0 %v1983
        %v2483 = vpop.f32.mrf.mxu0
        %v2484 = vadd.f32 %v1484, %v2483
        %2485 = vmatmul.f32.gmra.mxu0 %v1986
        %v2486 = vpop.f32.mrf.mxu0
        %v2487 = vadd.f32 %v1489, %v2486
        %2488 = vmatmul.f32.gmra.mxu0 %v1989
        %v2489 = vpop.f32.mrf.mxu0
        %v2490 = vadd.f32 %v1494, %v2489
        %2491 = vmatmul.f32.gmra.mxu0 %v1992
        %v2492 = vpop.f32.mrf.mxu0
        %v2493 = vadd.f32 %v1499, %v2492
        %2494 = vmatmul.f32.gmra.mxu0 %v1995
        %v2495 = vpop.f32.mrf.mxu0
        %v2496 = vadd.f32 %v1504, %v2495
        %2497 = vmatmul.f32.gmra.mxu0 %v1998
        %v2498 = vpop.f32.mrf.mxu0
        %v2499 = vadd.f32 %v1509, %v2498
        %2500 = vmatmul.f32.gmra.mxu0 %v2001
        %v2501 = vpop.f32.mrf.mxu0
        %v2502 = vadd.f32 %v1514, %v2501
        %2503 = vmatmul.f32.gmra.mxu0 %v2004
        %v2504 = vpop.f32.mrf.mxu0
        %v2505 = vadd.f32 %v1519, %v2504
        %2506 = vmatmul.f32.gmra.mxu0 %v2007
        %v2507 = vpop.f32.mrf.mxu0
        %v2508 = vadd.f32 %v1524, %v2507
        %2509 = vmatmul.f32.gmra.mxu0 %v2010
        %v2510 = vpop.f32.mrf.mxu0
        %v2511 = vadd.f32 %v1529, %v2510
        %2512 = vdwg.mxu0
        %v2513 = vxor.u32 %v2034, 2147483648
        %v2514 = vxor.u32 %v2037, 2147483648
        %v2515 = vxor.u32 %v2040, 2147483648
        %v2516 = vxor.u32 %v2043, 2147483648
        %v2517 = vxor.u32 %v2046, 2147483648
        %v2518 = vxor.u32 %v2049, 2147483648
        %v2519 = vxor.u32 %v2052, 2147483648
        %v2520 = vxor.u32 %v2055, 2147483648
        %v2521 = vxor.u32 %v2058, 2147483648
        %v2522 = vxor.u32 %v2061, 2147483648
        %v2523 = vxor.u32 %v2064, 2147483648
        %v2524 = vxor.u32 %v2067, 2147483648
        %v2525 = vxor.u32 %v2070, 2147483648
        %v2526 = vxor.u32 %v2073, 2147483648
        %v2527 = vxor.u32 %v2076, 2147483648
        %v2528 = vxor.u32 %v2079, 2147483648
        %v2529 = vxor.u32 %v2082, 2147483648
        %v2530 = vxor.u32 %v2085, 2147483648
        %v2531 = vxor.u32 %v2088, 2147483648
        %v2532 = vxor.u32 %v2091, 2147483648
        %v2533 = vxor.u32 %v2094, 2147483648
        %v2534 = vxor.u32 %v2097, 2147483648
        %v2535 = vxor.u32 %v2100, 2147483648
        %v2536 = vxor.u32 %v2103, 2147483648
        %v2537 = vxor.u32 %v2106, 2147483648
        %v2538 = vxor.u32 %v2109, 2147483648
        %v2539 = vxor.u32 %v2112, 2147483648
        %v2540 = vxor.u32 %v2115, 2147483648
        %v2541 = vxor.u32 %v2118, 2147483648
        %v2542 = vxor.u32 %v2121, 2147483648
        %v2543 = vxor.u32 %v2124, 2147483648
        %v2544 = vxor.u32 %v2127, 2147483648
        %v2545 = vxor.u32 %v2130, 2147483648
        %v2546 = vxor.u32 %v2133, 2147483648
        %v2547 = vxor.u32 %v2136, 2147483648
        %v2548 = vxor.u32 %v2139, 2147483648
        %v2549 = vxor.u32 %v2142, 2147483648
        %v2550 = vxor.u32 %v2145, 2147483648
        %v2551 = vxor.u32 %v2148, 2147483648
        %v2552 = vxor.u32 %v2151, 2147483648
        %v2553 = vxor.u32 %v2154, 2147483648
        %v2554 = vxor.u32 %v2157, 2147483648
        %v2555 = vxor.u32 %v2160, 2147483648
        %v2556 = vxor.u32 %v2163, 2147483648
        %v2557 = vxor.u32 %v2166, 2147483648
        %v2558 = vxor.u32 %v2169, 2147483648
        %v2559 = vxor.u32 %v2172, 2147483648
        %v2560 = vxor.u32 %v2175, 2147483648
        %v2561 = vxor.u32 %v2178, 2147483648
        %v2562 = vxor.u32 %v2181, 2147483648
        %v2563 = vxor.u32 %v2184, 2147483648
        %v2564 = vxor.u32 %v2187, 2147483648
        %v2565 = vxor.u32 %v2190, 2147483648
        %v2566 = vxor.u32 %v2193, 2147483648
        %v2567 = vxor.u32 %v2196, 2147483648
        %v2568 = vxor.u32 %v2199, 2147483648
        %v2569 = vxor.u32 %v2202, 2147483648
        %v2570 = vxor.u32 %v2205, 2147483648
        %v2571 = vxor.u32 %v2208, 2147483648
        %v2572 = vxor.u32 %v2211, 2147483648
        %v2573 = vxor.u32 %v2214, 2147483648
        %v2574 = vxor.u32 %v2217, 2147483648
        %v2575 = vxor.u32 %v2220, 2147483648
        %v2576 = vxor.u32 %v2223, 2147483648
        %v2577 = vxor.u32 %v2226, 2147483648
        %v2578 = vxor.u32 %v2229, 2147483648
        %v2579 = vxor.u32 %v2232, 2147483648
        %v2580 = vxor.u32 %v2235, 2147483648
        %v2581 = vxor.u32 %v2238, 2147483648
        %v2582 = vxor.u32 %v2241, 2147483648
        %v2583 = vxor.u32 %v2244, 2147483648
        %v2584 = vxor.u32 %v2247, 2147483648
        %v2585 = vxor.u32 %v2250, 2147483648
        %v2586 = vxor.u32 %v2253, 2147483648
        %v2587 = vxor.u32 %v2256, 2147483648
        %v2588 = vxor.u32 %v2259, 2147483648
        %v2589 = vxor.u32 %v2262, 2147483648
        %v2590 = vxor.u32 %v2265, 2147483648
        %v2591 = vxor.u32 %v2268, 2147483648
        %v2592 = vxor.u32 %v2271, 2147483648
        %v2593 = vxor.u32 %v2274, 2147483648
        %v2594 = vxor.u32 %v2277, 2147483648
        %v2595 = vxor.u32 %v2280, 2147483648
        %v2596 = vxor.u32 %v2283, 2147483648
        %v2597 = vxor.u32 %v2286, 2147483648
        %v2598 = vxor.u32 %v2289, 2147483648
        %v2599 = vxor.u32 %v2292, 2147483648
        %v2600 = vxor.u32 %v2295, 2147483648
        %v2601 = vxor.u32 %v2298, 2147483648
        %v2602 = vxor.u32 %v2301, 2147483648
        %v2603 = vxor.u32 %v2304, 2147483648
        %v2604 = vxor.u32 %v2307, 2147483648
        %v2605 = vxor.u32 %v2310, 2147483648
        %v2606 = vxor.u32 %v2313, 2147483648
        %v2607 = vxor.u32 %v2316, 2147483648
        %v2608 = vxor.u32 %v2319, 2147483648
        %v2609 = vxor.u32 %v2322, 2147483648
        %v2610 = vxor.u32 %v2325, 2147483648
        %v2611 = vxor.u32 %v2328, 2147483648
        %v2612 = vxor.u32 %v2331, 2147483648
        %v2613 = vxor.u32 %v2334, 2147483648
        %v2614 = vxor.u32 %v2337, 2147483648
        %v2615 = vxor.u32 %v2340, 2147483648
        %v2616 = vxor.u32 %v2343, 2147483648
        %v2617 = vxor.u32 %v2346, 2147483648
        %v2618 = vxor.u32 %v2349, 2147483648
        %v2619 = vxor.u32 %v2352, 2147483648
        %v2620 = vxor.u32 %v2355, 2147483648
        %v2621 = vxor.u32 %v2358, 2147483648
        %v2622 = vxor.u32 %v2361, 2147483648
        %v2623 = vxor.u32 %v2364, 2147483648
        %v2624 = vxor.u32 %v2367, 2147483648
        %v2625 = vxor.u32 %v2370, 2147483648
        %v2626 = vxor.u32 %v2373, 2147483648
        %v2627 = vxor.u32 %v2376, 2147483648
        %v2628 = vxor.u32 %v2379, 2147483648
        %v2629 = vxor.u32 %v2382, 2147483648
        %v2630 = vxor.u32 %v2385, 2147483648
        %v2631 = vxor.u32 %v2388, 2147483648
        %v2632 = vxor.u32 %v2391, 2147483648
        %v2633 = vxor.u32 %v2394, 2147483648
        %v2634 = vxor.u32 %v2397, 2147483648
        %v2635 = vxor.u32 %v2400, 2147483648
        %v2636 = vxor.u32 %v2403, 2147483648
        %v2637 = vxor.u32 %v2406, 2147483648
        %v2638 = vxor.u32 %v2409, 2147483648
        %v2639 = vxor.u32 %v2412, 2147483648
        %v2640 = vxor.u32 %v2415, 2147483648
        %v2641 = vxor.u32 %v2418, 2147483648
        %v2642 = vxor.u32 %v2421, 2147483648
        %v2643 = vxor.u32 %v2424, 2147483648
        %v2644 = vxor.u32 %v2427, 2147483648
        %v2645 = vxor.u32 %v2430, 2147483648
        %v2646 = vxor.u32 %v2433, 2147483648
        %v2647 = vxor.u32 %v2436, 2147483648
        %v2648 = vxor.u32 %v2439, 2147483648
        %v2649 = vxor.u32 %v2442, 2147483648
        %v2650 = vxor.u32 %v2445, 2147483648
        %v2651 = vxor.u32 %v2448, 2147483648
        %v2652 = vxor.u32 %v2451, 2147483648
        %v2653 = vxor.u32 %v2454, 2147483648
        %v2654 = vxor.u32 %v2457, 2147483648
        %v2655 = vxor.u32 %v2460, 2147483648
        %v2656 = vxor.u32 %v2463, 2147483648
        %v2657 = vxor.u32 %v2466, 2147483648
        %v2658 = vxor.u32 %v2469, 2147483648
        %v2659 = vxor.u32 %v2472, 2147483648
        %v2660 = vxor.u32 %v2475, 2147483648
        %v2661 = vxor.u32 %v2478, 2147483648
        %v2662 = vxor.u32 %v2481, 2147483648
        %v2663 = vxor.u32 %v2484, 2147483648
        %v2664 = vxor.u32 %v2487, 2147483648
        %v2665 = vxor.u32 %v2490, 2147483648
        %v2666 = vxor.u32 %v2493, 2147483648
        %v2667 = vxor.u32 %v2496, 2147483648
        %v2668 = vxor.u32 %v2499, 2147483648
        %v2669 = vxor.u32 %v2502, 2147483648
        %v2670 = vxor.u32 %v2505, 2147483648
        %v2671 = vxor.u32 %v2508, 2147483648
        %v2672 = vxor.u32 %v2511, 2147483648
        %v2673 = vmul.f32 %v2513, 1.442695
        %v2674 = vpow.pop %v2673
        %v2675 = vmul.f32 %v2514, 1.442695
        %v2676 = vpow.pop %v2675
        %v2677 = vmul.f32 %v2515, 1.442695
        %v2678 = vpow.pop %v2677
        %v2679 = vmul.f32 %v2516, 1.442695
        %v2680 = vpow.pop %v2679
        %v2681 = vmul.f32 %v2517, 1.442695
        %v2682 = vpow.pop %v2681
        %v2683 = vmul.f32 %v2518, 1.442695
        %v2684 = vpow.pop %v2683
        %v2685 = vmul.f32 %v2519, 1.442695
        %v2686 = vpow.pop %v2685
        %v2687 = vmul.f32 %v2520, 1.442695
        %v2688 = vpow.pop %v2687
        %v2689 = vmul.f32 %v2521, 1.442695
        %v2690 = vpow.pop %v2689
        %v2691 = vmul.f32 %v2522, 1.442695
        %v2692 = vpow.pop %v2691
        %v2693 = vmul.f32 %v2523, 1.442695
        %v2694 = vpow.pop %v2693
        %v2695 = vmul.f32 %v2524, 1.442695
        %v2696 = vpow.pop %v2695
        %v2697 = vmul.f32 %v2525, 1.442695
        %v2698 = vpow.pop %v2697
        %v2699 = vmul.f32 %v2526, 1.442695
        %v2700 = vpow.pop %v2699
        %v2701 = vmul.f32 %v2527, 1.442695
        %v2702 = vpow.pop %v2701
        %v2703 = vmul.f32 %v2528, 1.442695
        %v2704 = vpow.pop %v2703
        %v2705 = vmul.f32 %v2529, 1.442695
        %v2706 = vpow.pop %v2705
        %v2707 = vmul.f32 %v2530, 1.442695
        %v2708 = vpow.pop %v2707
        %v2709 = vmul.f32 %v2531, 1.442695
        %v2710 = vpow.pop %v2709
        %v2711 = vmul.f32 %v2532, 1.442695
        %v2712 = vpow.pop %v2711
        %v2713 = vmul.f32 %v2533, 1.442695
        %v2714 = vpow.pop %v2713
        %v2715 = vmul.f32 %v2534, 1.442695
        %v2716 = vpow.pop %v2715
        %v2717 = vmul.f32 %v2535, 1.442695
        %v2718 = vpow.pop %v2717
        %v2719 = vmul.f32 %v2536, 1.442695
        %v2720 = vpow.pop %v2719
        %v2721 = vmul.f32 %v2537, 1.442695
        %v2722 = vpow.pop %v2721
        %v2723 = vmul.f32 %v2538, 1.442695
        %v2724 = vpow.pop %v2723
        %v2725 = vmul.f32 %v2539, 1.442695
        %v2726 = vpow.pop %v2725
        %v2727 = vmul.f32 %v2540, 1.442695
        %v2728 = vpow.pop %v2727
        %v2729 = vmul.f32 %v2541, 1.442695
        %v2730 = vpow.pop %v2729
        %v2731 = vmul.f32 %v2542, 1.442695
        %v2732 = vpow.pop %v2731
        %v2733 = vmul.f32 %v2543, 1.442695
        %v2734 = vpow.pop %v2733
        %v2735 = vmul.f32 %v2544, 1.442695
        %v2736 = vpow.pop %v2735
        %v2737 = vmul.f32 %v2545, 1.442695
        %v2738 = vpow.pop %v2737
        %v2739 = vmul.f32 %v2546, 1.442695
        %v2740 = vpow.pop %v2739
        %v2741 = vmul.f32 %v2547, 1.442695
        %v2742 = vpow.pop %v2741
        %v2743 = vmul.f32 %v2548, 1.442695
        %v2744 = vpow.pop %v2743
        %v2745 = vmul.f32 %v2549, 1.442695
        %v2746 = vpow.pop %v2745
        %v2747 = vmul.f32 %v2550, 1.442695
        %v2748 = vpow.pop %v2747
        %v2749 = vmul.f32 %v2551, 1.442695
        %v2750 = vpow.pop %v2749
        %v2751 = vmul.f32 %v2552, 1.442695
        %v2752 = vpow.pop %v2751
        %v2753 = vmul.f32 %v2553, 1.442695
        %v2754 = vpow.pop %v2753
        %v2755 = vmul.f32 %v2554, 1.442695
        %v2756 = vpow.pop %v2755
        %v2757 = vmul.f32 %v2555, 1.442695
        %v2758 = vpow.pop %v2757
        %v2759 = vmul.f32 %v2556, 1.442695
        %v2760 = vpow.pop %v2759
        %v2761 = vmul.f32 %v2557, 1.442695
        %v2762 = vpow.pop %v2761
        %v2763 = vmul.f32 %v2558, 1.442695
        %v2764 = vpow.pop %v2763
        %v2765 = vmul.f32 %v2559, 1.442695
        %v2766 = vpow.pop %v2765
        %v2767 = vmul.f32 %v2560, 1.442695
        %v2768 = vpow.pop %v2767
        %v2769 = vmul.f32 %v2561, 1.442695
        %v2770 = vpow.pop %v2769
        %v2771 = vmul.f32 %v2562, 1.442695
        %v2772 = vpow.pop %v2771
        %v2773 = vmul.f32 %v2563, 1.442695
        %v2774 = vpow.pop %v2773
        %v2775 = vmul.f32 %v2564, 1.442695
        %v2776 = vpow.pop %v2775
        %v2777 = vmul.f32 %v2565, 1.442695
        %v2778 = vpow.pop %v2777
        %v2779 = vmul.f32 %v2566, 1.442695
        %v2780 = vpow.pop %v2779
        %v2781 = vmul.f32 %v2567, 1.442695
        %v2782 = vpow.pop %v2781
        %v2783 = vmul.f32 %v2568, 1.442695
        %v2784 = vpow.pop %v2783
        %v2785 = vmul.f32 %v2569, 1.442695
        %v2786 = vpow.pop %v2785
        %v2787 = vmul.f32 %v2570, 1.442695
        %v2788 = vpow.pop %v2787
        %v2789 = vmul.f32 %v2571, 1.442695
        %v2790 = vpow.pop %v2789
        %v2791 = vmul.f32 %v2572, 1.442695
        %v2792 = vpow.pop %v2791
        %v2793 = vmul.f32 %v2573, 1.442695
        %v2794 = vpow.pop %v2793
        %v2795 = vmul.f32 %v2574, 1.442695
        %v2796 = vpow.pop %v2795
        %v2797 = vmul.f32 %v2575, 1.442695
        %v2798 = vpow.pop %v2797
        %v2799 = vmul.f32 %v2576, 1.442695
        %v2800 = vpow.pop %v2799
        %v2801 = vmul.f32 %v2577, 1.442695
        %v2802 = vpow.pop %v2801
        %v2803 = vmul.f32 %v2578, 1.442695
        %v2804 = vpow.pop %v2803
        %v2805 = vmul.f32 %v2579, 1.442695
        %v2806 = vpow.pop %v2805
        %v2807 = vmul.f32 %v2580, 1.442695
        %v2808 = vpow.pop %v2807
        %v2809 = vmul.f32 %v2581, 1.442695
        %v2810 = vpow.pop %v2809
        %v2811 = vmul.f32 %v2582, 1.442695
        %v2812 = vpow.pop %v2811
        %v2813 = vmul.f32 %v2583, 1.442695
        %v2814 = vpow.pop %v2813
        %v2815 = vmul.f32 %v2584, 1.442695
        %v2816 = vpow.pop %v2815
        %v2817 = vmul.f32 %v2585, 1.442695
        %v2818 = vpow.pop %v2817
        %v2819 = vmul.f32 %v2586, 1.442695
        %v2820 = vpow.pop %v2819
        %v2821 = vmul.f32 %v2587, 1.442695
        %v2822 = vpow.pop %v2821
        %v2823 = vmul.f32 %v2588, 1.442695
        %v2824 = vpow.pop %v2823
        %v2825 = vmul.f32 %v2589, 1.442695
        %v2826 = vpow.pop %v2825
        %v2827 = vmul.f32 %v2590, 1.442695
        %v2828 = vpow.pop %v2827
        %v2829 = vmul.f32 %v2591, 1.442695
        %v2830 = vpow.pop %v2829
        %v2831 = vmul.f32 %v2592, 1.442695
        %v2832 = vpow.pop %v2831
        %v2833 = vmul.f32 %v2593, 1.442695
        %v2834 = vpow.pop %v2833
        %v2835 = vmul.f32 %v2594, 1.442695
        %v2836 = vpow.pop %v2835
        %v2837 = vmul.f32 %v2595, 1.442695
        %v2838 = vpow.pop %v2837
        %v2839 = vmul.f32 %v2596, 1.442695
        %v2840 = vpow.pop %v2839
        %v2841 = vmul.f32 %v2597, 1.442695
        %v2842 = vpow.pop %v2841
        %v2843 = vmul.f32 %v2598, 1.442695
        %v2844 = vpow.pop %v2843
        %v2845 = vmul.f32 %v2599, 1.442695
        %v2846 = vpow.pop %v2845
        %v2847 = vmul.f32 %v2600, 1.442695
        %v2848 = vpow.pop %v2847
        %v2849 = vmul.f32 %v2601, 1.442695
        %v2850 = vpow.pop %v2849
        %v2851 = vmul.f32 %v2602, 1.442695
        %v2852 = vpow.pop %v2851
        %v2853 = vmul.f32 %v2603, 1.442695
        %v2854 = vpow.pop %v2853
        %v2855 = vmul.f32 %v2604, 1.442695
        %v2856 = vpow.pop %v2855
        %v2857 = vmul.f32 %v2605, 1.442695
        %v2858 = vpow.pop %v2857
        %v2859 = vmul.f32 %v2606, 1.442695
        %v2860 = vpow.pop %v2859
        %v2861 = vmul.f32 %v2607, 1.442695
        %v2862 = vpow.pop %v2861
        %v2863 = vmul.f32 %v2608, 1.442695
        %v2864 = vpow.pop %v2863
        %v2865 = vmul.f32 %v2609, 1.442695
        %v2866 = vpow.pop %v2865
        %v2867 = vmul.f32 %v2610, 1.442695
        %v2868 = vpow.pop %v2867
        %v2869 = vmul.f32 %v2611, 1.442695
        %v2870 = vpow.pop %v2869
        %v2871 = vmul.f32 %v2612, 1.442695
        %v2872 = vpow.pop %v2871
        %v2873 = vmul.f32 %v2613, 1.442695
        %v2874 = vpow.pop %v2873
        %v2875 = vmul.f32 %v2614, 1.442695
        %v2876 = vpow.pop %v2875
        %v2877 = vmul.f32 %v2615, 1.442695
        %v2878 = vpow.pop %v2877
        %v2879 = vmul.f32 %v2616, 1.442695
        %v2880 = vpow.pop %v2879
        %v2881 = vmul.f32 %v2617, 1.442695
        %v2882 = vpow.pop %v2881
        %v2883 = vmul.f32 %v2618, 1.442695
        %v2884 = vpow.pop %v2883
        %v2885 = vmul.f32 %v2619, 1.442695
        %v2886 = vpow.pop %v2885
        %v2887 = vmul.f32 %v2620, 1.442695
        %v2888 = vpow.pop %v2887
        %v2889 = vmul.f32 %v2621, 1.442695
        %v2890 = vpow.pop %v2889
        %v2891 = vmul.f32 %v2622, 1.442695
        %v2892 = vpow.pop %v2891
        %v2893 = vmul.f32 %v2623, 1.442695
        %v2894 = vpow.pop %v2893
        %v2895 = vmul.f32 %v2624, 1.442695
        %v2896 = vpow.pop %v2895
        %v2897 = vmul.f32 %v2625, 1.442695
        %v2898 = vpow.pop %v2897
        %v2899 = vmul.f32 %v2626, 1.442695
        %v2900 = vpow.pop %v2899
        %v2901 = vmul.f32 %v2627, 1.442695
        %v2902 = vpow.pop %v2901
        %v2903 = vmul.f32 %v2628, 1.442695
        %v2904 = vpow.pop %v2903
        %v2905 = vmul.f32 %v2629, 1.442695
        %v2906 = vpow.pop %v2905
        %v2907 = vmul.f32 %v2630, 1.442695
        %v2908 = vpow.pop %v2907
        %v2909 = vmul.f32 %v2631, 1.442695
        %v2910 = vpow.pop %v2909
        %v2911 = vmul.f32 %v2632, 1.442695
        %v2912 = vpow.pop %v2911
        %v2913 = vmul.f32 %v2633, 1.442695
        %v2914 = vpow.pop %v2913
        %v2915 = vmul.f32 %v2634, 1.442695
        %v2916 = vpow.pop %v2915
        %v2917 = vmul.f32 %v2635, 1.442695
        %v2918 = vpow.pop %v2917
        %v2919 = vmul.f32 %v2636, 1.442695
        %v2920 = vpow.pop %v2919
        %v2921 = vmul.f32 %v2637, 1.442695
        %v2922 = vpow.pop %v2921
        %v2923 = vmul.f32 %v2638, 1.442695
        %v2924 = vpow.pop %v2923
        %v2925 = vmul.f32 %v2639, 1.442695
        %v2926 = vpow.pop %v2925
        %v2927 = vmul.f32 %v2640, 1.442695
        %v2928 = vpow.pop %v2927
        %v2929 = vmul.f32 %v2641, 1.442695
        %v2930 = vpow.pop %v2929
        %v2931 = vmul.f32 %v2642, 1.442695
        %v2932 = vpow.pop %v2931
        %v2933 = vmul.f32 %v2643, 1.442695
        %v2934 = vpow.pop %v2933
        %v2935 = vmul.f32 %v2644, 1.442695
        %v2936 = vpow.pop %v2935
        %v2937 = vmul.f32 %v2645, 1.442695
        %v2938 = vpow.pop %v2937
        %v2939 = vmul.f32 %v2646, 1.442695
        %v2940 = vpow.pop %v2939
        %v2941 = vmul.f32 %v2647, 1.442695
        %v2942 = vpow.pop %v2941
        %v2943 = vmul.f32 %v2648, 1.442695
        %v2944 = vpow.pop %v2943
        %v2945 = vmul.f32 %v2649, 1.442695
        %v2946 = vpow.pop %v2945
        %v2947 = vmul.f32 %v2650, 1.442695
        %v2948 = vpow.pop %v2947
        %v2949 = vmul.f32 %v2651, 1.442695
        %v2950 = vpow.pop %v2949
        %v2951 = vmul.f32 %v2652, 1.442695
        %v2952 = vpow.pop %v2951
        %v2953 = vmul.f32 %v2653, 1.442695
        %v2954 = vpow.pop %v2953
        %v2955 = vmul.f32 %v2654, 1.442695
        %v2956 = vpow.pop %v2955
        %v2957 = vmul.f32 %v2655, 1.442695
        %v2958 = vpow.pop %v2957
        %v2959 = vmul.f32 %v2656, 1.442695
        %v2960 = vpow.pop %v2959
        %v2961 = vmul.f32 %v2657, 1.442695
        %v2962 = vpow.pop %v2961
        %v2963 = vmul.f32 %v2658, 1.442695
        %v2964 = vpow.pop %v2963
        %v2965 = vmul.f32 %v2659, 1.442695
        %v2966 = vpow.pop %v2965
        %v2967 = vmul.f32 %v2660, 1.442695
        %v2968 = vpow.pop %v2967
        %v2969 = vmul.f32 %v2661, 1.442695
        %v2970 = vpow.pop %v2969
        %v2971 = vmul.f32 %v2662, 1.442695
        %v2972 = vpow.pop %v2971
        %v2973 = vmul.f32 %v2663, 1.442695
        %v2974 = vpow.pop %v2973
        %v2975 = vmul.f32 %v2664, 1.442695
        %v2976 = vpow.pop %v2975
        %v2977 = vmul.f32 %v2665, 1.442695
        %v2978 = vpow.pop %v2977
        %v2979 = vmul.f32 %v2666, 1.442695
        %v2980 = vpow.pop %v2979
        %v2981 = vmul.f32 %v2667, 1.442695
        %v2982 = vpow.pop %v2981
        %v2983 = vmul.f32 %v2668, 1.442695
        %v2984 = vpow.pop %v2983
        %v2985 = vmul.f32 %v2669, 1.442695
        %v2986 = vpow.pop %v2985
        %v2987 = vmul.f32 %v2670, 1.442695
        %v2988 = vpow.pop %v2987
        %v2989 = vmul.f32 %v2671, 1.442695
        %v2990 = vpow.pop %v2989
        %v2991 = vmul.f32 %v2672, 1.442695
        %v2992 = vpow.pop %v2991
        %v2993 = vadd.f32 %v2674, 1.0
        %v2994 = vadd.f32 %v2676, 1.0
        %v2995 = vadd.f32 %v2678, 1.0
        %v2996 = vadd.f32 %v2680, 1.0
        %v2997 = vadd.f32 %v2682, 1.0
        %v2998 = vadd.f32 %v2684, 1.0
        %v2999 = vadd.f32 %v2686, 1.0
        %v3000 = vadd.f32 %v2688, 1.0
        %v3001 = vadd.f32 %v2690, 1.0
        %v3002 = vadd.f32 %v2692, 1.0
        %v3003 = vadd.f32 %v2694, 1.0
        %v3004 = vadd.f32 %v2696, 1.0
        %v3005 = vadd.f32 %v2698, 1.0
        %v3006 = vadd.f32 %v2700, 1.0
        %v3007 = vadd.f32 %v2702, 1.0
        %v3008 = vadd.f32 %v2704, 1.0
        %v3009 = vadd.f32 %v2706, 1.0
        %v3010 = vadd.f32 %v2708, 1.0
        %v3011 = vadd.f32 %v2710, 1.0
        %v3012 = vadd.f32 %v2712, 1.0
        %v3013 = vadd.f32 %v2714, 1.0
        %v3014 = vadd.f32 %v2716, 1.0
        %v3015 = vadd.f32 %v2718, 1.0
        %v3016 = vadd.f32 %v2720, 1.0
        %v3017 = vadd.f32 %v2722, 1.0
        %v3018 = vadd.f32 %v2724, 1.0
        %v3019 = vadd.f32 %v2726, 1.0
        %v3020 = vadd.f32 %v2728, 1.0
        %v3021 = vadd.f32 %v2730, 1.0
        %v3022 = vadd.f32 %v2732, 1.0
        %v3023 = vadd.f32 %v2734, 1.0
        %v3024 = vadd.f32 %v2736, 1.0
        %v3025 = vadd.f32 %v2738, 1.0
        %v3026 = vadd.f32 %v2740, 1.0
        %v3027 = vadd.f32 %v2742, 1.0
        %v3028 = vadd.f32 %v2744, 1.0
        %v3029 = vadd.f32 %v2746, 1.0
        %v3030 = vadd.f32 %v2748, 1.0
        %v3031 = vadd.f32 %v2750, 1.0
        %v3032 = vadd.f32 %v2752, 1.0
        %v3033 = vadd.f32 %v2754, 1.0
        %v3034 = vadd.f32 %v2756, 1.0
        %v3035 = vadd.f32 %v2758, 1.0
        %v3036 = vadd.f32 %v2760, 1.0
        %v3037 = vadd.f32 %v2762, 1.0
        %v3038 = vadd.f32 %v2764, 1.0
        %v3039 = vadd.f32 %v2766, 1.0
        %v3040 = vadd.f32 %v2768, 1.0
        %v3041 = vadd.f32 %v2770, 1.0
        %v3042 = vadd.f32 %v2772, 1.0
        %v3043 = vadd.f32 %v2774, 1.0
        %v3044 = vadd.f32 %v2776, 1.0
        %v3045 = vadd.f32 %v2778, 1.0
        %v3046 = vadd.f32 %v2780, 1.0
        %v3047 = vadd.f32 %v2782, 1.0
        %v3048 = vadd.f32 %v2784, 1.0
        %v3049 = vadd.f32 %v2786, 1.0
        %v3050 = vadd.f32 %v2788, 1.0
        %v3051 = vadd.f32 %v2790, 1.0
        %v3052 = vadd.f32 %v2792, 1.0
        %v3053 = vadd.f32 %v2794, 1.0
        %v3054 = vadd.f32 %v2796, 1.0
        %v3055 = vadd.f32 %v2798, 1.0
        %v3056 = vadd.f32 %v2800, 1.0
        %v3057 = vadd.f32 %v2802, 1.0
        %v3058 = vadd.f32 %v2804, 1.0
        %v3059 = vadd.f32 %v2806, 1.0
        %v3060 = vadd.f32 %v2808, 1.0
        %v3061 = vadd.f32 %v2810, 1.0
        %v3062 = vadd.f32 %v2812, 1.0
        %v3063 = vadd.f32 %v2814, 1.0
        %v3064 = vadd.f32 %v2816, 1.0
        %v3065 = vadd.f32 %v2818, 1.0
        %v3066 = vadd.f32 %v2820, 1.0
        %v3067 = vadd.f32 %v2822, 1.0
        %v3068 = vadd.f32 %v2824, 1.0
        %v3069 = vadd.f32 %v2826, 1.0
        %v3070 = vadd.f32 %v2828, 1.0
        %v3071 = vadd.f32 %v2830, 1.0
        %v3072 = vadd.f32 %v2832, 1.0
        %v3073 = vadd.f32 %v2834, 1.0
        %v3074 = vadd.f32 %v2836, 1.0
        %v3075 = vadd.f32 %v2838, 1.0
        %v3076 = vadd.f32 %v2840, 1.0
        %v3077 = vadd.f32 %v2842, 1.0
        %v3078 = vadd.f32 %v2844, 1.0
        %v3079 = vadd.f32 %v2846, 1.0
        %v3080 = vadd.f32 %v2848, 1.0
        %v3081 = vadd.f32 %v2850, 1.0
        %v3082 = vadd.f32 %v2852, 1.0
        %v3083 = vadd.f32 %v2854, 1.0
        %v3084 = vadd.f32 %v2856, 1.0
        %v3085 = vadd.f32 %v2858, 1.0
        %v3086 = vadd.f32 %v2860, 1.0
        %v3087 = vadd.f32 %v2862, 1.0
        %v3088 = vadd.f32 %v2864, 1.0
        %v3089 = vadd.f32 %v2866, 1.0
        %v3090 = vadd.f32 %v2868, 1.0
        %v3091 = vadd.f32 %v2870, 1.0
        %v3092 = vadd.f32 %v2872, 1.0
        %v3093 = vadd.f32 %v2874, 1.0
        %v3094 = vadd.f32 %v2876, 1.0
        %v3095 = vadd.f32 %v2878, 1.0
        %v3096 = vadd.f32 %v2880, 1.0
        %v3097 = vadd.f32 %v2882, 1.0
        %v3098 = vadd.f32 %v2884, 1.0
        %v3099 = vadd.f32 %v2886, 1.0
        %v3100 = vadd.f32 %v2888, 1.0
        %v3101 = vadd.f32 %v2890, 1.0
        %v3102 = vadd.f32 %v2892, 1.0
        %v3103 = vadd.f32 %v2894, 1.0
        %v3104 = vadd.f32 %v2896, 1.0
        %v3105 = vadd.f32 %v2898, 1.0
        %v3106 = vadd.f32 %v2900, 1.0
        %v3107 = vadd.f32 %v2902, 1.0
        %v3108 = vadd.f32 %v2904, 1.0
        %v3109 = vadd.f32 %v2906, 1.0
        %v3110 = vadd.f32 %v2908, 1.0
        %v3111 = vadd.f32 %v2910, 1.0
        %v3112 = vadd.f32 %v2912, 1.0
        %v3113 = vadd.f32 %v2914, 1.0
        %v3114 = vadd.f32 %v2916, 1.0
        %v3115 = vadd.f32 %v2918, 1.0
        %v3116 = vadd.f32 %v2920, 1.0
        %v3117 = vadd.f32 %v2922, 1.0
        %v3118 = vadd.f32 %v2924, 1.0
        %v3119 = vadd.f32 %v2926, 1.0
        %v3120 = vadd.f32 %v2928, 1.0
        %v3121 = vadd.f32 %v2930, 1.0
        %v3122 = vadd.f32 %v2932, 1.0
        %v3123 = vadd.f32 %v2934, 1.0
        %v3124 = vadd.f32 %v2936, 1.0
        %v3125 = vadd.f32 %v2938, 1.0
        %v3126 = vadd.f32 %v2940, 1.0
        %v3127 = vadd.f32 %v2942, 1.0
        %v3128 = vadd.f32 %v2944, 1.0
        %v3129 = vadd.f32 %v2946, 1.0
        %v3130 = vadd.f32 %v2948, 1.0
        %v3131 = vadd.f32 %v2950, 1.0
        %v3132 = vadd.f32 %v2952, 1.0
        %v3133 = vadd.f32 %v2954, 1.0
        %v3134 = vadd.f32 %v2956, 1.0
        %v3135 = vadd.f32 %v2958, 1.0
        %v3136 = vadd.f32 %v2960, 1.0
        %v3137 = vadd.f32 %v2962, 1.0
        %v3138 = vadd.f32 %v2964, 1.0
        %v3139 = vadd.f32 %v2966, 1.0
        %v3140 = vadd.f32 %v2968, 1.0
        %v3141 = vadd.f32 %v2970, 1.0
        %v3142 = vadd.f32 %v2972, 1.0
        %v3143 = vadd.f32 %v2974, 1.0
        %v3144 = vadd.f32 %v2976, 1.0
        %v3145 = vadd.f32 %v2978, 1.0
        %v3146 = vadd.f32 %v2980, 1.0
        %v3147 = vadd.f32 %v2982, 1.0
        %v3148 = vadd.f32 %v2984, 1.0
        %v3149 = vadd.f32 %v2986, 1.0
        %v3150 = vadd.f32 %v2988, 1.0
        %v3151 = vadd.f32 %v2990, 1.0
        %v3152 = vadd.f32 %v2992, 1.0
        %v3153 = vrcp.pop %v2993
        %v3154 = vmul.f32 %v2993, %v3153
        %v3155 = vsub.f32 1.0, %v3154
        %v3156 = vmul.f32 %v3153, %v3155
        %v3157 = vadd.f32 %v3153, %v3156
        %vm3158 = vweird.f32 %v2993
        %vm3159 = vweird.f32 %v3153
        %vm3160 = vmor %vm3158, %vm3159
        %v3161 = vsel %vm3160, %v3153, %v3157
        %v3162 = vand.u32 2147483647, %v2993
        %vm3163 = vcmp.eq.f32.partialorder %v3162, 8.507059e+37
        %v3164 = vand.u32 %v2993, 2147483648
        %v3165 = vor.u32 1.1754944e-38, %v3164
        %v3166 = vsel %vm3163, %v3165, %v3161
        %v3167 = vmul.f32 1.0, %v3166
        %v3168 = vrcp.pop %v2994
        %v3169 = vmul.f32 %v2994, %v3168
        %v3170 = vsub.f32 1.0, %v3169
        %v3171 = vmul.f32 %v3168, %v3170
        %v3172 = vadd.f32 %v3168, %v3171
        %vm3173 = vweird.f32 %v2994
        %vm3174 = vweird.f32 %v3168
        %vm3175 = vmor %vm3173, %vm3174
        %v3176 = vsel %vm3175, %v3168, %v3172
        %v3177 = vand.u32 2147483647, %v2994
        %vm3178 = vcmp.eq.f32.partialorder %v3177, 8.507059e+37
        %v3179 = vand.u32 %v2994, 2147483648
        %v3180 = vor.u32 1.1754944e-38, %v3179
        %v3181 = vsel %vm3178, %v3180, %v3176
        %v3182 = vmul.f32 1.0, %v3181
        %v3183 = vrcp.pop %v2995
        %v3184 = vmul.f32 %v2995, %v3183
        %v3185 = vsub.f32 1.0, %v3184
        %v3186 = vmul.f32 %v3183, %v3185
        %v3187 = vadd.f32 %v3183, %v3186
        %vm3188 = vweird.f32 %v2995
        %vm3189 = vweird.f32 %v3183
        %vm3190 = vmor %vm3188, %vm3189
        %v3191 = vsel %vm3190, %v3183, %v3187
        %v3192 = vand.u32 2147483647, %v2995
        %vm3193 = vcmp.eq.f32.partialorder %v3192, 8.507059e+37
        %v3194 = vand.u32 %v2995, 2147483648
        %v3195 = vor.u32 1.1754944e-38, %v3194
        %v3196 = vsel %vm3193, %v3195, %v3191
        %v3197 = vmul.f32 1.0, %v3196
        %v3198 = vrcp.pop %v2996
        %v3199 = vmul.f32 %v2996, %v3198
        %v3200 = vsub.f32 1.0, %v3199
        %v3201 = vmul.f32 %v3198, %v3200
        %v3202 = vadd.f32 %v3198, %v3201
        %vm3203 = vweird.f32 %v2996
        %vm3204 = vweird.f32 %v3198
        %vm3205 = vmor %vm3203, %vm3204
        %v3206 = vsel %vm3205, %v3198, %v3202
        %v3207 = vand.u32 2147483647, %v2996
        %vm3208 = vcmp.eq.f32.partialorder %v3207, 8.507059e+37
        %v3209 = vand.u32 %v2996, 2147483648
        %v3210 = vor.u32 1.1754944e-38, %v3209
        %v3211 = vsel %vm3208, %v3210, %v3206
        %v3212 = vmul.f32 1.0, %v3211
        %v3213 = vrcp.pop %v2997
        %v3214 = vmul.f32 %v2997, %v3213
        %v3215 = vsub.f32 1.0, %v3214
        %v3216 = vmul.f32 %v3213, %v3215
        %v3217 = vadd.f32 %v3213, %v3216
        %vm3218 = vweird.f32 %v2997
        %vm3219 = vweird.f32 %v3213
        %vm3220 = vmor %vm3218, %vm3219
        %v3221 = vsel %vm3220, %v3213, %v3217
        %v3222 = vand.u32 2147483647, %v2997
        %vm3223 = vcmp.eq.f32.partialorder %v3222, 8.507059e+37
        %v3224 = vand.u32 %v2997, 2147483648
        %v3225 = vor.u32 1.1754944e-38, %v3224
        %v3226 = vsel %vm3223, %v3225, %v3221
        %v3227 = vmul.f32 1.0, %v3226
        %v3228 = vrcp.pop %v2998
        %v3229 = vmul.f32 %v2998, %v3228
        %v3230 = vsub.f32 1.0, %v3229
        %v3231 = vmul.f32 %v3228, %v3230
        %v3232 = vadd.f32 %v3228, %v3231
        %vm3233 = vweird.f32 %v2998
        %vm3234 = vweird.f32 %v3228
        %vm3235 = vmor %vm3233, %vm3234
        %v3236 = vsel %vm3235, %v3228, %v3232
        %v3237 = vand.u32 2147483647, %v2998
        %vm3238 = vcmp.eq.f32.partialorder %v3237, 8.507059e+37
        %v3239 = vand.u32 %v2998, 2147483648
        %v3240 = vor.u32 1.1754944e-38, %v3239
        %v3241 = vsel %vm3238, %v3240, %v3236
        %v3242 = vmul.f32 1.0, %v3241
        %v3243 = vrcp.pop %v2999
        %v3244 = vmul.f32 %v2999, %v3243
        %v3245 = vsub.f32 1.0, %v3244
        %v3246 = vmul.f32 %v3243, %v3245
        %v3247 = vadd.f32 %v3243, %v3246
        %vm3248 = vweird.f32 %v2999
        %vm3249 = vweird.f32 %v3243
        %vm3250 = vmor %vm3248, %vm3249
        %v3251 = vsel %vm3250, %v3243, %v3247
        %v3252 = vand.u32 2147483647, %v2999
        %vm3253 = vcmp.eq.f32.partialorder %v3252, 8.507059e+37
        %v3254 = vand.u32 %v2999, 2147483648
        %v3255 = vor.u32 1.1754944e-38, %v3254
        %v3256 = vsel %vm3253, %v3255, %v3251
        %v3257 = vmul.f32 1.0, %v3256
        %v3258 = vrcp.pop %v3000
        %v3259 = vmul.f32 %v3000, %v3258
        %v3260 = vsub.f32 1.0, %v3259
        %v3261 = vmul.f32 %v3258, %v3260
        %v3262 = vadd.f32 %v3258, %v3261
        %vm3263 = vweird.f32 %v3000
        %vm3264 = vweird.f32 %v3258
        %vm3265 = vmor %vm3263, %vm3264
        %v3266 = vsel %vm3265, %v3258, %v3262
        %v3267 = vand.u32 2147483647, %v3000
        %vm3268 = vcmp.eq.f32.partialorder %v3267, 8.507059e+37
        %v3269 = vand.u32 %v3000, 2147483648
        %v3270 = vor.u32 1.1754944e-38, %v3269
        %v3271 = vsel %vm3268, %v3270, %v3266
        %v3272 = vmul.f32 1.0, %v3271
        %v3273 = vrcp.pop %v3001
        %v3274 = vmul.f32 %v3001, %v3273
        %v3275 = vsub.f32 1.0, %v3274
        %v3276 = vmul.f32 %v3273, %v3275
        %v3277 = vadd.f32 %v3273, %v3276
        %vm3278 = vweird.f32 %v3001
        %vm3279 = vweird.f32 %v3273
        %vm3280 = vmor %vm3278, %vm3279
        %v3281 = vsel %vm3280, %v3273, %v3277
        %v3282 = vand.u32 2147483647, %v3001
        %vm3283 = vcmp.eq.f32.partialorder %v3282, 8.507059e+37
        %v3284 = vand.u32 %v3001, 2147483648
        %v3285 = vor.u32 1.1754944e-38, %v3284
        %v3286 = vsel %vm3283, %v3285, %v3281
        %v3287 = vmul.f32 1.0, %v3286
        %v3288 = vrcp.pop %v3002
        %v3289 = vmul.f32 %v3002, %v3288
        %v3290 = vsub.f32 1.0, %v3289
        %v3291 = vmul.f32 %v3288, %v3290
        %v3292 = vadd.f32 %v3288, %v3291
        %vm3293 = vweird.f32 %v3002
        %vm3294 = vweird.f32 %v3288
        %vm3295 = vmor %vm3293, %vm3294
        %v3296 = vsel %vm3295, %v3288, %v3292
        %v3297 = vand.u32 2147483647, %v3002
        %vm3298 = vcmp.eq.f32.partialorder %v3297, 8.507059e+37
        %v3299 = vand.u32 %v3002, 2147483648
        %v3300 = vor.u32 1.1754944e-38, %v3299
        %v3301 = vsel %vm3298, %v3300, %v3296
        %v3302 = vmul.f32 1.0, %v3301
        %v3303 = vrcp.pop %v3003
        %v3304 = vmul.f32 %v3003, %v3303
        %v3305 = vsub.f32 1.0, %v3304
        %v3306 = vmul.f32 %v3303, %v3305
        %v3307 = vadd.f32 %v3303, %v3306
        %vm3308 = vweird.f32 %v3003
        %vm3309 = vweird.f32 %v3303
        %vm3310 = vmor %vm3308, %vm3309
        %v3311 = vsel %vm3310, %v3303, %v3307
        %v3312 = vand.u32 2147483647, %v3003
        %vm3313 = vcmp.eq.f32.partialorder %v3312, 8.507059e+37
        %v3314 = vand.u32 %v3003, 2147483648
        %v3315 = vor.u32 1.1754944e-38, %v3314
        %v3316 = vsel %vm3313, %v3315, %v3311
        %v3317 = vmul.f32 1.0, %v3316
        %v3318 = vrcp.pop %v3004
        %v3319 = vmul.f32 %v3004, %v3318
        %v3320 = vsub.f32 1.0, %v3319
        %v3321 = vmul.f32 %v3318, %v3320
        %v3322 = vadd.f32 %v3318, %v3321
        %vm3323 = vweird.f32 %v3004
        %vm3324 = vweird.f32 %v3318
        %vm3325 = vmor %vm3323, %vm3324
        %v3326 = vsel %vm3325, %v3318, %v3322
        %v3327 = vand.u32 2147483647, %v3004
        %vm3328 = vcmp.eq.f32.partialorder %v3327, 8.507059e+37
        %v3329 = vand.u32 %v3004, 2147483648
        %v3330 = vor.u32 1.1754944e-38, %v3329
        %v3331 = vsel %vm3328, %v3330, %v3326
        %v3332 = vmul.f32 1.0, %v3331
        %v3333 = vrcp.pop %v3005
        %v3334 = vmul.f32 %v3005, %v3333
        %v3335 = vsub.f32 1.0, %v3334
        %v3336 = vmul.f32 %v3333, %v3335
        %v3337 = vadd.f32 %v3333, %v3336
        %vm3338 = vweird.f32 %v3005
        %vm3339 = vweird.f32 %v3333
        %vm3340 = vmor %vm3338, %vm3339
        %v3341 = vsel %vm3340, %v3333, %v3337
        %v3342 = vand.u32 2147483647, %v3005
        %vm3343 = vcmp.eq.f32.partialorder %v3342, 8.507059e+37
        %v3344 = vand.u32 %v3005, 2147483648
        %v3345 = vor.u32 1.1754944e-38, %v3344
        %v3346 = vsel %vm3343, %v3345, %v3341
        %v3347 = vmul.f32 1.0, %v3346
        %v3348 = vrcp.pop %v3006
        %v3349 = vmul.f32 %v3006, %v3348
        %v3350 = vsub.f32 1.0, %v3349
        %v3351 = vmul.f32 %v3348, %v3350
        %v3352 = vadd.f32 %v3348, %v3351
        %vm3353 = vweird.f32 %v3006
        %vm3354 = vweird.f32 %v3348
        %vm3355 = vmor %vm3353, %vm3354
        %v3356 = vsel %vm3355, %v3348, %v3352
        %v3357 = vand.u32 2147483647, %v3006
        %vm3358 = vcmp.eq.f32.partialorder %v3357, 8.507059e+37
        %v3359 = vand.u32 %v3006, 2147483648
        %v3360 = vor.u32 1.1754944e-38, %v3359
        %v3361 = vsel %vm3358, %v3360, %v3356
        %v3362 = vmul.f32 1.0, %v3361
        %v3363 = vrcp.pop %v3007
        %v3364 = vmul.f32 %v3007, %v3363
        %v3365 = vsub.f32 1.0, %v3364
        %v3366 = vmul.f32 %v3363, %v3365
        %v3367 = vadd.f32 %v3363, %v3366
        %vm3368 = vweird.f32 %v3007
        %vm3369 = vweird.f32 %v3363
        %vm3370 = vmor %vm3368, %vm3369
        %v3371 = vsel %vm3370, %v3363, %v3367
        %v3372 = vand.u32 2147483647, %v3007
        %vm3373 = vcmp.eq.f32.partialorder %v3372, 8.507059e+37
        %v3374 = vand.u32 %v3007, 2147483648
        %v3375 = vor.u32 1.1754944e-38, %v3374
        %v3376 = vsel %vm3373, %v3375, %v3371
        %v3377 = vmul.f32 1.0, %v3376
        %v3378 = vrcp.pop %v3008
        %v3379 = vmul.f32 %v3008, %v3378
        %v3380 = vsub.f32 1.0, %v3379
        %v3381 = vmul.f32 %v3378, %v3380
        %v3382 = vadd.f32 %v3378, %v3381
        %vm3383 = vweird.f32 %v3008
        %vm3384 = vweird.f32 %v3378
        %vm3385 = vmor %vm3383, %vm3384
        %v3386 = vsel %vm3385, %v3378, %v3382
        %v3387 = vand.u32 2147483647, %v3008
        %vm3388 = vcmp.eq.f32.partialorder %v3387, 8.507059e+37
        %v3389 = vand.u32 %v3008, 2147483648
        %v3390 = vor.u32 1.1754944e-38, %v3389
        %v3391 = vsel %vm3388, %v3390, %v3386
        %v3392 = vmul.f32 1.0, %v3391
        %v3393 = vrcp.pop %v3009
        %v3394 = vmul.f32 %v3009, %v3393
        %v3395 = vsub.f32 1.0, %v3394
        %v3396 = vmul.f32 %v3393, %v3395
        %v3397 = vadd.f32 %v3393, %v3396
        %vm3398 = vweird.f32 %v3009
        %vm3399 = vweird.f32 %v3393
        %vm3400 = vmor %vm3398, %vm3399
        %v3401 = vsel %vm3400, %v3393, %v3397
        %v3402 = vand.u32 2147483647, %v3009
        %vm3403 = vcmp.eq.f32.partialorder %v3402, 8.507059e+37
        %v3404 = vand.u32 %v3009, 2147483648
        %v3405 = vor.u32 1.1754944e-38, %v3404
        %v3406 = vsel %vm3403, %v3405, %v3401
        %v3407 = vmul.f32 1.0, %v3406
        %v3408 = vrcp.pop %v3010
        %v3409 = vmul.f32 %v3010, %v3408
        %v3410 = vsub.f32 1.0, %v3409
        %v3411 = vmul.f32 %v3408, %v3410
        %v3412 = vadd.f32 %v3408, %v3411
        %vm3413 = vweird.f32 %v3010
        %vm3414 = vweird.f32 %v3408
        %vm3415 = vmor %vm3413, %vm3414
        %v3416 = vsel %vm3415, %v3408, %v3412
        %v3417 = vand.u32 2147483647, %v3010
        %vm3418 = vcmp.eq.f32.partialorder %v3417, 8.507059e+37
        %v3419 = vand.u32 %v3010, 2147483648
        %v3420 = vor.u32 1.1754944e-38, %v3419
        %v3421 = vsel %vm3418, %v3420, %v3416
        %v3422 = vmul.f32 1.0, %v3421
        %v3423 = vrcp.pop %v3011
        %v3424 = vmul.f32 %v3011, %v3423
        %v3425 = vsub.f32 1.0, %v3424
        %v3426 = vmul.f32 %v3423, %v3425
        %v3427 = vadd.f32 %v3423, %v3426
        %vm3428 = vweird.f32 %v3011
        %vm3429 = vweird.f32 %v3423
        %vm3430 = vmor %vm3428, %vm3429
        %v3431 = vsel %vm3430, %v3423, %v3427
        %v3432 = vand.u32 2147483647, %v3011
        %vm3433 = vcmp.eq.f32.partialorder %v3432, 8.507059e+37
        %v3434 = vand.u32 %v3011, 2147483648
        %v3435 = vor.u32 1.1754944e-38, %v3434
        %v3436 = vsel %vm3433, %v3435, %v3431
        %v3437 = vmul.f32 1.0, %v3436
        %v3438 = vrcp.pop %v3012
        %v3439 = vmul.f32 %v3012, %v3438
        %v3440 = vsub.f32 1.0, %v3439
        %v3441 = vmul.f32 %v3438, %v3440
        %v3442 = vadd.f32 %v3438, %v3441
        %vm3443 = vweird.f32 %v3012
        %vm3444 = vweird.f32 %v3438
        %vm3445 = vmor %vm3443, %vm3444
        %v3446 = vsel %vm3445, %v3438, %v3442
        %v3447 = vand.u32 2147483647, %v3012
        %vm3448 = vcmp.eq.f32.partialorder %v3447, 8.507059e+37
        %v3449 = vand.u32 %v3012, 2147483648
        %v3450 = vor.u32 1.1754944e-38, %v3449
        %v3451 = vsel %vm3448, %v3450, %v3446
        %v3452 = vmul.f32 1.0, %v3451
        %v3453 = vrcp.pop %v3013
        %v3454 = vmul.f32 %v3013, %v3453
        %v3455 = vsub.f32 1.0, %v3454
        %v3456 = vmul.f32 %v3453, %v3455
        %v3457 = vadd.f32 %v3453, %v3456
        %vm3458 = vweird.f32 %v3013
        %vm3459 = vweird.f32 %v3453
        %vm3460 = vmor %vm3458, %vm3459
        %v3461 = vsel %vm3460, %v3453, %v3457
        %v3462 = vand.u32 2147483647, %v3013
        %vm3463 = vcmp.eq.f32.partialorder %v3462, 8.507059e+37
        %v3464 = vand.u32 %v3013, 2147483648
        %v3465 = vor.u32 1.1754944e-38, %v3464
        %v3466 = vsel %vm3463, %v3465, %v3461
        %v3467 = vmul.f32 1.0, %v3466
        %v3468 = vrcp.pop %v3014
        %v3469 = vmul.f32 %v3014, %v3468
        %v3470 = vsub.f32 1.0, %v3469
        %v3471 = vmul.f32 %v3468, %v3470
        %v3472 = vadd.f32 %v3468, %v3471
        %vm3473 = vweird.f32 %v3014
        %vm3474 = vweird.f32 %v3468
        %vm3475 = vmor %vm3473, %vm3474
        %v3476 = vsel %vm3475, %v3468, %v3472
        %v3477 = vand.u32 2147483647, %v3014
        %vm3478 = vcmp.eq.f32.partialorder %v3477, 8.507059e+37
        %v3479 = vand.u32 %v3014, 2147483648
        %v3480 = vor.u32 1.1754944e-38, %v3479
        %v3481 = vsel %vm3478, %v3480, %v3476
        %v3482 = vmul.f32 1.0, %v3481
        %v3483 = vrcp.pop %v3015
        %v3484 = vmul.f32 %v3015, %v3483
        %v3485 = vsub.f32 1.0, %v3484
        %v3486 = vmul.f32 %v3483, %v3485
        %v3487 = vadd.f32 %v3483, %v3486
        %vm3488 = vweird.f32 %v3015
        %vm3489 = vweird.f32 %v3483
        %vm3490 = vmor %vm3488, %vm3489
        %v3491 = vsel %vm3490, %v3483, %v3487
        %v3492 = vand.u32 2147483647, %v3015
        %vm3493 = vcmp.eq.f32.partialorder %v3492, 8.507059e+37
        %v3494 = vand.u32 %v3015, 2147483648
        %v3495 = vor.u32 1.1754944e-38, %v3494
        %v3496 = vsel %vm3493, %v3495, %v3491
        %v3497 = vmul.f32 1.0, %v3496
        %v3498 = vrcp.pop %v3016
        %v3499 = vmul.f32 %v3016, %v3498
        %v3500 = vsub.f32 1.0, %v3499
        %v3501 = vmul.f32 %v3498, %v3500
        %v3502 = vadd.f32 %v3498, %v3501
        %vm3503 = vweird.f32 %v3016
        %vm3504 = vweird.f32 %v3498
        %vm3505 = vmor %vm3503, %vm3504
        %v3506 = vsel %vm3505, %v3498, %v3502
        %v3507 = vand.u32 2147483647, %v3016
        %vm3508 = vcmp.eq.f32.partialorder %v3507, 8.507059e+37
        %v3509 = vand.u32 %v3016, 2147483648
        %v3510 = vor.u32 1.1754944e-38, %v3509
        %v3511 = vsel %vm3508, %v3510, %v3506
        %v3512 = vmul.f32 1.0, %v3511
        %v3513 = vrcp.pop %v3017
        %v3514 = vmul.f32 %v3017, %v3513
        %v3515 = vsub.f32 1.0, %v3514
        %v3516 = vmul.f32 %v3513, %v3515
        %v3517 = vadd.f32 %v3513, %v3516
        %vm3518 = vweird.f32 %v3017
        %vm3519 = vweird.f32 %v3513
        %vm3520 = vmor %vm3518, %vm3519
        %v3521 = vsel %vm3520, %v3513, %v3517
        %v3522 = vand.u32 2147483647, %v3017
        %vm3523 = vcmp.eq.f32.partialorder %v3522, 8.507059e+37
        %v3524 = vand.u32 %v3017, 2147483648
        %v3525 = vor.u32 1.1754944e-38, %v3524
        %v3526 = vsel %vm3523, %v3525, %v3521
        %v3527 = vmul.f32 1.0, %v3526
        %v3528 = vrcp.pop %v3018
        %v3529 = vmul.f32 %v3018, %v3528
        %v3530 = vsub.f32 1.0, %v3529
        %v3531 = vmul.f32 %v3528, %v3530
        %v3532 = vadd.f32 %v3528, %v3531
        %vm3533 = vweird.f32 %v3018
        %vm3534 = vweird.f32 %v3528
        %vm3535 = vmor %vm3533, %vm3534
        %v3536 = vsel %vm3535, %v3528, %v3532
        %v3537 = vand.u32 2147483647, %v3018
        %vm3538 = vcmp.eq.f32.partialorder %v3537, 8.507059e+37
        %v3539 = vand.u32 %v3018, 2147483648
        %v3540 = vor.u32 1.1754944e-38, %v3539
        %v3541 = vsel %vm3538, %v3540, %v3536
        %v3542 = vmul.f32 1.0, %v3541
        %v3543 = vrcp.pop %v3019
        %v3544 = vmul.f32 %v3019, %v3543
        %v3545 = vsub.f32 1.0, %v3544
        %v3546 = vmul.f32 %v3543, %v3545
        %v3547 = vadd.f32 %v3543, %v3546
        %vm3548 = vweird.f32 %v3019
        %vm3549 = vweird.f32 %v3543
        %vm3550 = vmor %vm3548, %vm3549
        %v3551 = vsel %vm3550, %v3543, %v3547
        %v3552 = vand.u32 2147483647, %v3019
        %vm3553 = vcmp.eq.f32.partialorder %v3552, 8.507059e+37
        %v3554 = vand.u32 %v3019, 2147483648
        %v3555 = vor.u32 1.1754944e-38, %v3554
        %v3556 = vsel %vm3553, %v3555, %v3551
        %v3557 = vmul.f32 1.0, %v3556
        %v3558 = vrcp.pop %v3020
        %v3559 = vmul.f32 %v3020, %v3558
        %v3560 = vsub.f32 1.0, %v3559
        %v3561 = vmul.f32 %v3558, %v3560
        %v3562 = vadd.f32 %v3558, %v3561
        %vm3563 = vweird.f32 %v3020
        %vm3564 = vweird.f32 %v3558
        %vm3565 = vmor %vm3563, %vm3564
        %v3566 = vsel %vm3565, %v3558, %v3562
        %v3567 = vand.u32 2147483647, %v3020
        %vm3568 = vcmp.eq.f32.partialorder %v3567, 8.507059e+37
        %v3569 = vand.u32 %v3020, 2147483648
        %v3570 = vor.u32 1.1754944e-38, %v3569
        %v3571 = vsel %vm3568, %v3570, %v3566
        %v3572 = vmul.f32 1.0, %v3571
        %v3573 = vrcp.pop %v3021
        %v3574 = vmul.f32 %v3021, %v3573
        %v3575 = vsub.f32 1.0, %v3574
        %v3576 = vmul.f32 %v3573, %v3575
        %v3577 = vadd.f32 %v3573, %v3576
        %vm3578 = vweird.f32 %v3021
        %vm3579 = vweird.f32 %v3573
        %vm3580 = vmor %vm3578, %vm3579
        %v3581 = vsel %vm3580, %v3573, %v3577
        %v3582 = vand.u32 2147483647, %v3021
        %vm3583 = vcmp.eq.f32.partialorder %v3582, 8.507059e+37
        %v3584 = vand.u32 %v3021, 2147483648
        %v3585 = vor.u32 1.1754944e-38, %v3584
        %v3586 = vsel %vm3583, %v3585, %v3581
        %v3587 = vmul.f32 1.0, %v3586
        %v3588 = vrcp.pop %v3022
        %v3589 = vmul.f32 %v3022, %v3588
        %v3590 = vsub.f32 1.0, %v3589
        %v3591 = vmul.f32 %v3588, %v3590
        %v3592 = vadd.f32 %v3588, %v3591
        %vm3593 = vweird.f32 %v3022
        %vm3594 = vweird.f32 %v3588
        %vm3595 = vmor %vm3593, %vm3594
        %v3596 = vsel %vm3595, %v3588, %v3592
        %v3597 = vand.u32 2147483647, %v3022
        %vm3598 = vcmp.eq.f32.partialorder %v3597, 8.507059e+37
        %v3599 = vand.u32 %v3022, 2147483648
        %v3600 = vor.u32 1.1754944e-38, %v3599
        %v3601 = vsel %vm3598, %v3600, %v3596
        %v3602 = vmul.f32 1.0, %v3601
        %v3603 = vrcp.pop %v3023
        %v3604 = vmul.f32 %v3023, %v3603
        %v3605 = vsub.f32 1.0, %v3604
        %v3606 = vmul.f32 %v3603, %v3605
        %v3607 = vadd.f32 %v3603, %v3606
        %vm3608 = vweird.f32 %v3023
        %vm3609 = vweird.f32 %v3603
        %vm3610 = vmor %vm3608, %vm3609
        %v3611 = vsel %vm3610, %v3603, %v3607
        %v3612 = vand.u32 2147483647, %v3023
        %vm3613 = vcmp.eq.f32.partialorder %v3612, 8.507059e+37
        %v3614 = vand.u32 %v3023, 2147483648
        %v3615 = vor.u32 1.1754944e-38, %v3614
        %v3616 = vsel %vm3613, %v3615, %v3611
        %v3617 = vmul.f32 1.0, %v3616
        %v3618 = vrcp.pop %v3024
        %v3619 = vmul.f32 %v3024, %v3618
        %v3620 = vsub.f32 1.0, %v3619
        %v3621 = vmul.f32 %v3618, %v3620
        %v3622 = vadd.f32 %v3618, %v3621
        %vm3623 = vweird.f32 %v3024
        %vm3624 = vweird.f32 %v3618
        %vm3625 = vmor %vm3623, %vm3624
        %v3626 = vsel %vm3625, %v3618, %v3622
        %v3627 = vand.u32 2147483647, %v3024
        %vm3628 = vcmp.eq.f32.partialorder %v3627, 8.507059e+37
        %v3629 = vand.u32 %v3024, 2147483648
        %v3630 = vor.u32 1.1754944e-38, %v3629
        %v3631 = vsel %vm3628, %v3630, %v3626
        %v3632 = vmul.f32 1.0, %v3631
        %v3633 = vrcp.pop %v3025
        %v3634 = vmul.f32 %v3025, %v3633
        %v3635 = vsub.f32 1.0, %v3634
        %v3636 = vmul.f32 %v3633, %v3635
        %v3637 = vadd.f32 %v3633, %v3636
        %vm3638 = vweird.f32 %v3025
        %vm3639 = vweird.f32 %v3633
        %vm3640 = vmor %vm3638, %vm3639
        %v3641 = vsel %vm3640, %v3633, %v3637
        %v3642 = vand.u32 2147483647, %v3025
        %vm3643 = vcmp.eq.f32.partialorder %v3642, 8.507059e+37
        %v3644 = vand.u32 %v3025, 2147483648
        %v3645 = vor.u32 1.1754944e-38, %v3644
        %v3646 = vsel %vm3643, %v3645, %v3641
        %v3647 = vmul.f32 1.0, %v3646
        %v3648 = vrcp.pop %v3026
        %v3649 = vmul.f32 %v3026, %v3648
        %v3650 = vsub.f32 1.0, %v3649
        %v3651 = vmul.f32 %v3648, %v3650
        %v3652 = vadd.f32 %v3648, %v3651
        %vm3653 = vweird.f32 %v3026
        %vm3654 = vweird.f32 %v3648
        %vm3655 = vmor %vm3653, %vm3654
        %v3656 = vsel %vm3655, %v3648, %v3652
        %v3657 = vand.u32 2147483647, %v3026
        %vm3658 = vcmp.eq.f32.partialorder %v3657, 8.507059e+37
        %v3659 = vand.u32 %v3026, 2147483648
        %v3660 = vor.u32 1.1754944e-38, %v3659
        %v3661 = vsel %vm3658, %v3660, %v3656
        %v3662 = vmul.f32 1.0, %v3661
        %v3663 = vrcp.pop %v3027
        %v3664 = vmul.f32 %v3027, %v3663
        %v3665 = vsub.f32 1.0, %v3664
        %v3666 = vmul.f32 %v3663, %v3665
        %v3667 = vadd.f32 %v3663, %v3666
        %vm3668 = vweird.f32 %v3027
        %vm3669 = vweird.f32 %v3663
        %vm3670 = vmor %vm3668, %vm3669
        %v3671 = vsel %vm3670, %v3663, %v3667
        %v3672 = vand.u32 2147483647, %v3027
        %vm3673 = vcmp.eq.f32.partialorder %v3672, 8.507059e+37
        %v3674 = vand.u32 %v3027, 2147483648
        %v3675 = vor.u32 1.1754944e-38, %v3674
        %v3676 = vsel %vm3673, %v3675, %v3671
        %v3677 = vmul.f32 1.0, %v3676
        %v3678 = vrcp.pop %v3028
        %v3679 = vmul.f32 %v3028, %v3678
        %v3680 = vsub.f32 1.0, %v3679
        %v3681 = vmul.f32 %v3678, %v3680
        %v3682 = vadd.f32 %v3678, %v3681
        %vm3683 = vweird.f32 %v3028
        %vm3684 = vweird.f32 %v3678
        %vm3685 = vmor %vm3683, %vm3684
        %v3686 = vsel %vm3685, %v3678, %v3682
        %v3687 = vand.u32 2147483647, %v3028
        %vm3688 = vcmp.eq.f32.partialorder %v3687, 8.507059e+37
        %v3689 = vand.u32 %v3028, 2147483648
        %v3690 = vor.u32 1.1754944e-38, %v3689
        %v3691 = vsel %vm3688, %v3690, %v3686
        %v3692 = vmul.f32 1.0, %v3691
        %v3693 = vrcp.pop %v3029
        %v3694 = vmul.f32 %v3029, %v3693
        %v3695 = vsub.f32 1.0, %v3694
        %v3696 = vmul.f32 %v3693, %v3695
        %v3697 = vadd.f32 %v3693, %v3696
        %vm3698 = vweird.f32 %v3029
        %vm3699 = vweird.f32 %v3693
        %vm3700 = vmor %vm3698, %vm3699
        %v3701 = vsel %vm3700, %v3693, %v3697
        %v3702 = vand.u32 2147483647, %v3029
        %vm3703 = vcmp.eq.f32.partialorder %v3702, 8.507059e+37
        %v3704 = vand.u32 %v3029, 2147483648
        %v3705 = vor.u32 1.1754944e-38, %v3704
        %v3706 = vsel %vm3703, %v3705, %v3701
        %v3707 = vmul.f32 1.0, %v3706
        %v3708 = vrcp.pop %v3030
        %v3709 = vmul.f32 %v3030, %v3708
        %v3710 = vsub.f32 1.0, %v3709
        %v3711 = vmul.f32 %v3708, %v3710
        %v3712 = vadd.f32 %v3708, %v3711
        %vm3713 = vweird.f32 %v3030
        %vm3714 = vweird.f32 %v3708
        %vm3715 = vmor %vm3713, %vm3714
        %v3716 = vsel %vm3715, %v3708, %v3712
        %v3717 = vand.u32 2147483647, %v3030
        %vm3718 = vcmp.eq.f32.partialorder %v3717, 8.507059e+37
        %v3719 = vand.u32 %v3030, 2147483648
        %v3720 = vor.u32 1.1754944e-38, %v3719
        %v3721 = vsel %vm3718, %v3720, %v3716
        %v3722 = vmul.f32 1.0, %v3721
        %v3723 = vrcp.pop %v3031
        %v3724 = vmul.f32 %v3031, %v3723
        %v3725 = vsub.f32 1.0, %v3724
        %v3726 = vmul.f32 %v3723, %v3725
        %v3727 = vadd.f32 %v3723, %v3726
        %vm3728 = vweird.f32 %v3031
        %vm3729 = vweird.f32 %v3723
        %vm3730 = vmor %vm3728, %vm3729
        %v3731 = vsel %vm3730, %v3723, %v3727
        %v3732 = vand.u32 2147483647, %v3031
        %vm3733 = vcmp.eq.f32.partialorder %v3732, 8.507059e+37
        %v3734 = vand.u32 %v3031, 2147483648
        %v3735 = vor.u32 1.1754944e-38, %v3734
        %v3736 = vsel %vm3733, %v3735, %v3731
        %v3737 = vmul.f32 1.0, %v3736
        %v3738 = vrcp.pop %v3032
        %v3739 = vmul.f32 %v3032, %v3738
        %v3740 = vsub.f32 1.0, %v3739
        %v3741 = vmul.f32 %v3738, %v3740
        %v3742 = vadd.f32 %v3738, %v3741
        %vm3743 = vweird.f32 %v3032
        %vm3744 = vweird.f32 %v3738
        %vm3745 = vmor %vm3743, %vm3744
        %v3746 = vsel %vm3745, %v3738, %v3742
        %v3747 = vand.u32 2147483647, %v3032
        %vm3748 = vcmp.eq.f32.partialorder %v3747, 8.507059e+37
        %v3749 = vand.u32 %v3032, 2147483648
        %v3750 = vor.u32 1.1754944e-38, %v3749
        %v3751 = vsel %vm3748, %v3750, %v3746
        %v3752 = vmul.f32 1.0, %v3751
        %v3753 = vrcp.pop %v3033
        %v3754 = vmul.f32 %v3033, %v3753
        %v3755 = vsub.f32 1.0, %v3754
        %v3756 = vmul.f32 %v3753, %v3755
        %v3757 = vadd.f32 %v3753, %v3756
        %vm3758 = vweird.f32 %v3033
        %vm3759 = vweird.f32 %v3753
        %vm3760 = vmor %vm3758, %vm3759
        %v3761 = vsel %vm3760, %v3753, %v3757
        %v3762 = vand.u32 2147483647, %v3033
        %vm3763 = vcmp.eq.f32.partialorder %v3762, 8.507059e+37
        %v3764 = vand.u32 %v3033, 2147483648
        %v3765 = vor.u32 1.1754944e-38, %v3764
        %v3766 = vsel %vm3763, %v3765, %v3761
        %v3767 = vmul.f32 1.0, %v3766
        %v3768 = vrcp.pop %v3034
        %v3769 = vmul.f32 %v3034, %v3768
        %v3770 = vsub.f32 1.0, %v3769
        %v3771 = vmul.f32 %v3768, %v3770
        %v3772 = vadd.f32 %v3768, %v3771
        %vm3773 = vweird.f32 %v3034
        %vm3774 = vweird.f32 %v3768
        %vm3775 = vmor %vm3773, %vm3774
        %v3776 = vsel %vm3775, %v3768, %v3772
        %v3777 = vand.u32 2147483647, %v3034
        %vm3778 = vcmp.eq.f32.partialorder %v3777, 8.507059e+37
        %v3779 = vand.u32 %v3034, 2147483648
        %v3780 = vor.u32 1.1754944e-38, %v3779
        %v3781 = vsel %vm3778, %v3780, %v3776
        %v3782 = vmul.f32 1.0, %v3781
        %v3783 = vrcp.pop %v3035
        %v3784 = vmul.f32 %v3035, %v3783
        %v3785 = vsub.f32 1.0, %v3784
        %v3786 = vmul.f32 %v3783, %v3785
        %v3787 = vadd.f32 %v3783, %v3786
        %vm3788 = vweird.f32 %v3035
        %vm3789 = vweird.f32 %v3783
        %vm3790 = vmor %vm3788, %vm3789
        %v3791 = vsel %vm3790, %v3783, %v3787
        %v3792 = vand.u32 2147483647, %v3035
        %vm3793 = vcmp.eq.f32.partialorder %v3792, 8.507059e+37
        %v3794 = vand.u32 %v3035, 2147483648
        %v3795 = vor.u32 1.1754944e-38, %v3794
        %v3796 = vsel %vm3793, %v3795, %v3791
        %v3797 = vmul.f32 1.0, %v3796
        %v3798 = vrcp.pop %v3036
        %v3799 = vmul.f32 %v3036, %v3798
        %v3800 = vsub.f32 1.0, %v3799
        %v3801 = vmul.f32 %v3798, %v3800
        %v3802 = vadd.f32 %v3798, %v3801
        %vm3803 = vweird.f32 %v3036
        %vm3804 = vweird.f32 %v3798
        %vm3805 = vmor %vm3803, %vm3804
        %v3806 = vsel %vm3805, %v3798, %v3802
        %v3807 = vand.u32 2147483647, %v3036
        %vm3808 = vcmp.eq.f32.partialorder %v3807, 8.507059e+37
        %v3809 = vand.u32 %v3036, 2147483648
        %v3810 = vor.u32 1.1754944e-38, %v3809
        %v3811 = vsel %vm3808, %v3810, %v3806
        %v3812 = vmul.f32 1.0, %v3811
        %v3813 = vrcp.pop %v3037
        %v3814 = vmul.f32 %v3037, %v3813
        %v3815 = vsub.f32 1.0, %v3814
        %v3816 = vmul.f32 %v3813, %v3815
        %v3817 = vadd.f32 %v3813, %v3816
        %vm3818 = vweird.f32 %v3037
        %vm3819 = vweird.f32 %v3813
        %vm3820 = vmor %vm3818, %vm3819
        %v3821 = vsel %vm3820, %v3813, %v3817
        %v3822 = vand.u32 2147483647, %v3037
        %vm3823 = vcmp.eq.f32.partialorder %v3822, 8.507059e+37
        %v3824 = vand.u32 %v3037, 2147483648
        %v3825 = vor.u32 1.1754944e-38, %v3824
        %v3826 = vsel %vm3823, %v3825, %v3821
        %v3827 = vmul.f32 1.0, %v3826
        %v3828 = vrcp.pop %v3038
        %v3829 = vmul.f32 %v3038, %v3828
        %v3830 = vsub.f32 1.0, %v3829
        %v3831 = vmul.f32 %v3828, %v3830
        %v3832 = vadd.f32 %v3828, %v3831
        %vm3833 = vweird.f32 %v3038
        %vm3834 = vweird.f32 %v3828
        %vm3835 = vmor %vm3833, %vm3834
        %v3836 = vsel %vm3835, %v3828, %v3832
        %v3837 = vand.u32 2147483647, %v3038
        %vm3838 = vcmp.eq.f32.partialorder %v3837, 8.507059e+37
        %v3839 = vand.u32 %v3038, 2147483648
        %v3840 = vor.u32 1.1754944e-38, %v3839
        %v3841 = vsel %vm3838, %v3840, %v3836
        %v3842 = vmul.f32 1.0, %v3841
        %v3843 = vrcp.pop %v3039
        %v3844 = vmul.f32 %v3039, %v3843
        %v3845 = vsub.f32 1.0, %v3844
        %v3846 = vmul.f32 %v3843, %v3845
        %v3847 = vadd.f32 %v3843, %v3846
        %vm3848 = vweird.f32 %v3039
        %vm3849 = vweird.f32 %v3843
        %vm3850 = vmor %vm3848, %vm3849
        %v3851 = vsel %vm3850, %v3843, %v3847
        %v3852 = vand.u32 2147483647, %v3039
        %vm3853 = vcmp.eq.f32.partialorder %v3852, 8.507059e+37
        %v3854 = vand.u32 %v3039, 2147483648
        %v3855 = vor.u32 1.1754944e-38, %v3854
        %v3856 = vsel %vm3853, %v3855, %v3851
        %v3857 = vmul.f32 1.0, %v3856
        %v3858 = vrcp.pop %v3040
        %v3859 = vmul.f32 %v3040, %v3858
        %v3860 = vsub.f32 1.0, %v3859
        %v3861 = vmul.f32 %v3858, %v3860
        %v3862 = vadd.f32 %v3858, %v3861
        %vm3863 = vweird.f32 %v3040
        %vm3864 = vweird.f32 %v3858
        %vm3865 = vmor %vm3863, %vm3864
        %v3866 = vsel %vm3865, %v3858, %v3862
        %v3867 = vand.u32 2147483647, %v3040
        %vm3868 = vcmp.eq.f32.partialorder %v3867, 8.507059e+37
        %v3869 = vand.u32 %v3040, 2147483648
        %v3870 = vor.u32 1.1754944e-38, %v3869
        %v3871 = vsel %vm3868, %v3870, %v3866
        %v3872 = vmul.f32 1.0, %v3871
        %v3873 = vrcp.pop %v3041
        %v3874 = vmul.f32 %v3041, %v3873
        %v3875 = vsub.f32 1.0, %v3874
        %v3876 = vmul.f32 %v3873, %v3875
        %v3877 = vadd.f32 %v3873, %v3876
        %vm3878 = vweird.f32 %v3041
        %vm3879 = vweird.f32 %v3873
        %vm3880 = vmor %vm3878, %vm3879
        %v3881 = vsel %vm3880, %v3873, %v3877
        %v3882 = vand.u32 2147483647, %v3041
        %vm3883 = vcmp.eq.f32.partialorder %v3882, 8.507059e+37
        %v3884 = vand.u32 %v3041, 2147483648
        %v3885 = vor.u32 1.1754944e-38, %v3884
        %v3886 = vsel %vm3883, %v3885, %v3881
        %v3887 = vmul.f32 1.0, %v3886
        %v3888 = vrcp.pop %v3042
        %v3889 = vmul.f32 %v3042, %v3888
        %v3890 = vsub.f32 1.0, %v3889
        %v3891 = vmul.f32 %v3888, %v3890
        %v3892 = vadd.f32 %v3888, %v3891
        %vm3893 = vweird.f32 %v3042
        %vm3894 = vweird.f32 %v3888
        %vm3895 = vmor %vm3893, %vm3894
        %v3896 = vsel %vm3895, %v3888, %v3892
        %v3897 = vand.u32 2147483647, %v3042
        %vm3898 = vcmp.eq.f32.partialorder %v3897, 8.507059e+37
        %v3899 = vand.u32 %v3042, 2147483648
        %v3900 = vor.u32 1.1754944e-38, %v3899
        %v3901 = vsel %vm3898, %v3900, %v3896
        %v3902 = vmul.f32 1.0, %v3901
        %v3903 = vrcp.pop %v3043
        %v3904 = vmul.f32 %v3043, %v3903
        %v3905 = vsub.f32 1.0, %v3904
        %v3906 = vmul.f32 %v3903, %v3905
        %v3907 = vadd.f32 %v3903, %v3906
        %vm3908 = vweird.f32 %v3043
        %vm3909 = vweird.f32 %v3903
        %vm3910 = vmor %vm3908, %vm3909
        %v3911 = vsel %vm3910, %v3903, %v3907
        %v3912 = vand.u32 2147483647, %v3043
        %vm3913 = vcmp.eq.f32.partialorder %v3912, 8.507059e+37
        %v3914 = vand.u32 %v3043, 2147483648
        %v3915 = vor.u32 1.1754944e-38, %v3914
        %v3916 = vsel %vm3913, %v3915, %v3911
        %v3917 = vmul.f32 1.0, %v3916
        %v3918 = vrcp.pop %v3044
        %v3919 = vmul.f32 %v3044, %v3918
        %v3920 = vsub.f32 1.0, %v3919
        %v3921 = vmul.f32 %v3918, %v3920
        %v3922 = vadd.f32 %v3918, %v3921
        %vm3923 = vweird.f32 %v3044
        %vm3924 = vweird.f32 %v3918
        %vm3925 = vmor %vm3923, %vm3924
        %v3926 = vsel %vm3925, %v3918, %v3922
        %v3927 = vand.u32 2147483647, %v3044
        %vm3928 = vcmp.eq.f32.partialorder %v3927, 8.507059e+37
        %v3929 = vand.u32 %v3044, 2147483648
        %v3930 = vor.u32 1.1754944e-38, %v3929
        %v3931 = vsel %vm3928, %v3930, %v3926
        %v3932 = vmul.f32 1.0, %v3931
        %v3933 = vrcp.pop %v3045
        %v3934 = vmul.f32 %v3045, %v3933
        %v3935 = vsub.f32 1.0, %v3934
        %v3936 = vmul.f32 %v3933, %v3935
        %v3937 = vadd.f32 %v3933, %v3936
        %vm3938 = vweird.f32 %v3045
        %vm3939 = vweird.f32 %v3933
        %vm3940 = vmor %vm3938, %vm3939
        %v3941 = vsel %vm3940, %v3933, %v3937
        %v3942 = vand.u32 2147483647, %v3045
        %vm3943 = vcmp.eq.f32.partialorder %v3942, 8.507059e+37
        %v3944 = vand.u32 %v3045, 2147483648
        %v3945 = vor.u32 1.1754944e-38, %v3944
        %v3946 = vsel %vm3943, %v3945, %v3941
        %v3947 = vmul.f32 1.0, %v3946
        %v3948 = vrcp.pop %v3046
        %v3949 = vmul.f32 %v3046, %v3948
        %v3950 = vsub.f32 1.0, %v3949
        %v3951 = vmul.f32 %v3948, %v3950
        %v3952 = vadd.f32 %v3948, %v3951
        %vm3953 = vweird.f32 %v3046
        %vm3954 = vweird.f32 %v3948
        %vm3955 = vmor %vm3953, %vm3954
        %v3956 = vsel %vm3955, %v3948, %v3952
        %v3957 = vand.u32 2147483647, %v3046
        %vm3958 = vcmp.eq.f32.partialorder %v3957, 8.507059e+37
        %v3959 = vand.u32 %v3046, 2147483648
        %v3960 = vor.u32 1.1754944e-38, %v3959
        %v3961 = vsel %vm3958, %v3960, %v3956
        %v3962 = vmul.f32 1.0, %v3961
        %v3963 = vrcp.pop %v3047
        %v3964 = vmul.f32 %v3047, %v3963
        %v3965 = vsub.f32 1.0, %v3964
        %v3966 = vmul.f32 %v3963, %v3965
        %v3967 = vadd.f32 %v3963, %v3966
        %vm3968 = vweird.f32 %v3047
        %vm3969 = vweird.f32 %v3963
        %vm3970 = vmor %vm3968, %vm3969
        %v3971 = vsel %vm3970, %v3963, %v3967
        %v3972 = vand.u32 2147483647, %v3047
        %vm3973 = vcmp.eq.f32.partialorder %v3972, 8.507059e+37
        %v3974 = vand.u32 %v3047, 2147483648
        %v3975 = vor.u32 1.1754944e-38, %v3974
        %v3976 = vsel %vm3973, %v3975, %v3971
        %v3977 = vmul.f32 1.0, %v3976
        %v3978 = vrcp.pop %v3048
        %v3979 = vmul.f32 %v3048, %v3978
        %v3980 = vsub.f32 1.0, %v3979
        %v3981 = vmul.f32 %v3978, %v3980
        %v3982 = vadd.f32 %v3978, %v3981
        %vm3983 = vweird.f32 %v3048
        %vm3984 = vweird.f32 %v3978
        %vm3985 = vmor %vm3983, %vm3984
        %v3986 = vsel %vm3985, %v3978, %v3982
        %v3987 = vand.u32 2147483647, %v3048
        %vm3988 = vcmp.eq.f32.partialorder %v3987, 8.507059e+37
        %v3989 = vand.u32 %v3048, 2147483648
        %v3990 = vor.u32 1.1754944e-38, %v3989
        %v3991 = vsel %vm3988, %v3990, %v3986
        %v3992 = vmul.f32 1.0, %v3991
        %v3993 = vrcp.pop %v3049
        %v3994 = vmul.f32 %v3049, %v3993
        %v3995 = vsub.f32 1.0, %v3994
        %v3996 = vmul.f32 %v3993, %v3995
        %v3997 = vadd.f32 %v3993, %v3996
        %vm3998 = vweird.f32 %v3049
        %vm3999 = vweird.f32 %v3993
        %vm4000 = vmor %vm3998, %vm3999
        %v4001 = vsel %vm4000, %v3993, %v3997
        %v4002 = vand.u32 2147483647, %v3049
        %vm4003 = vcmp.eq.f32.partialorder %v4002, 8.507059e+37
        %v4004 = vand.u32 %v3049, 2147483648
        %v4005 = vor.u32 1.1754944e-38, %v4004
        %v4006 = vsel %vm4003, %v4005, %v4001
        %v4007 = vmul.f32 1.0, %v4006
        %v4008 = vrcp.pop %v3050
        %v4009 = vmul.f32 %v3050, %v4008
        %v4010 = vsub.f32 1.0, %v4009
        %v4011 = vmul.f32 %v4008, %v4010
        %v4012 = vadd.f32 %v4008, %v4011
        %vm4013 = vweird.f32 %v3050
        %vm4014 = vweird.f32 %v4008
        %vm4015 = vmor %vm4013, %vm4014
        %v4016 = vsel %vm4015, %v4008, %v4012
        %v4017 = vand.u32 2147483647, %v3050
        %vm4018 = vcmp.eq.f32.partialorder %v4017, 8.507059e+37
        %v4019 = vand.u32 %v3050, 2147483648
        %v4020 = vor.u32 1.1754944e-38, %v4019
        %v4021 = vsel %vm4018, %v4020, %v4016
        %v4022 = vmul.f32 1.0, %v4021
        %v4023 = vrcp.pop %v3051
        %v4024 = vmul.f32 %v3051, %v4023
        %v4025 = vsub.f32 1.0, %v4024
        %v4026 = vmul.f32 %v4023, %v4025
        %v4027 = vadd.f32 %v4023, %v4026
        %vm4028 = vweird.f32 %v3051
        %vm4029 = vweird.f32 %v4023
        %vm4030 = vmor %vm4028, %vm4029
        %v4031 = vsel %vm4030, %v4023, %v4027
        %v4032 = vand.u32 2147483647, %v3051
        %vm4033 = vcmp.eq.f32.partialorder %v4032, 8.507059e+37
        %v4034 = vand.u32 %v3051, 2147483648
        %v4035 = vor.u32 1.1754944e-38, %v4034
        %v4036 = vsel %vm4033, %v4035, %v4031
        %v4037 = vmul.f32 1.0, %v4036
        %v4038 = vrcp.pop %v3052
        %v4039 = vmul.f32 %v3052, %v4038
        %v4040 = vsub.f32 1.0, %v4039
        %v4041 = vmul.f32 %v4038, %v4040
        %v4042 = vadd.f32 %v4038, %v4041
        %vm4043 = vweird.f32 %v3052
        %vm4044 = vweird.f32 %v4038
        %vm4045 = vmor %vm4043, %vm4044
        %v4046 = vsel %vm4045, %v4038, %v4042
        %v4047 = vand.u32 2147483647, %v3052
        %vm4048 = vcmp.eq.f32.partialorder %v4047, 8.507059e+37
        %v4049 = vand.u32 %v3052, 2147483648
        %v4050 = vor.u32 1.1754944e-38, %v4049
        %v4051 = vsel %vm4048, %v4050, %v4046
        %v4052 = vmul.f32 1.0, %v4051
        %v4053 = vrcp.pop %v3053
        %v4054 = vmul.f32 %v3053, %v4053
        %v4055 = vsub.f32 1.0, %v4054
        %v4056 = vmul.f32 %v4053, %v4055
        %v4057 = vadd.f32 %v4053, %v4056
        %vm4058 = vweird.f32 %v3053
        %vm4059 = vweird.f32 %v4053
        %vm4060 = vmor %vm4058, %vm4059
        %v4061 = vsel %vm4060, %v4053, %v4057
        %v4062 = vand.u32 2147483647, %v3053
        %vm4063 = vcmp.eq.f32.partialorder %v4062, 8.507059e+37
        %v4064 = vand.u32 %v3053, 2147483648
        %v4065 = vor.u32 1.1754944e-38, %v4064
        %v4066 = vsel %vm4063, %v4065, %v4061
        %v4067 = vmul.f32 1.0, %v4066
        %v4068 = vrcp.pop %v3054
        %v4069 = vmul.f32 %v3054, %v4068
        %v4070 = vsub.f32 1.0, %v4069
        %v4071 = vmul.f32 %v4068, %v4070
        %v4072 = vadd.f32 %v4068, %v4071
        %vm4073 = vweird.f32 %v3054
        %vm4074 = vweird.f32 %v4068
        %vm4075 = vmor %vm4073, %vm4074
        %v4076 = vsel %vm4075, %v4068, %v4072
        %v4077 = vand.u32 2147483647, %v3054
        %vm4078 = vcmp.eq.f32.partialorder %v4077, 8.507059e+37
        %v4079 = vand.u32 %v3054, 2147483648
        %v4080 = vor.u32 1.1754944e-38, %v4079
        %v4081 = vsel %vm4078, %v4080, %v4076
        %v4082 = vmul.f32 1.0, %v4081
        %v4083 = vrcp.pop %v3055
        %v4084 = vmul.f32 %v3055, %v4083
        %v4085 = vsub.f32 1.0, %v4084
        %v4086 = vmul.f32 %v4083, %v4085
        %v4087 = vadd.f32 %v4083, %v4086
        %vm4088 = vweird.f32 %v3055
        %vm4089 = vweird.f32 %v4083
        %vm4090 = vmor %vm4088, %vm4089
        %v4091 = vsel %vm4090, %v4083, %v4087
        %v4092 = vand.u32 2147483647, %v3055
        %vm4093 = vcmp.eq.f32.partialorder %v4092, 8.507059e+37
        %v4094 = vand.u32 %v3055, 2147483648
        %v4095 = vor.u32 1.1754944e-38, %v4094
        %v4096 = vsel %vm4093, %v4095, %v4091
        %v4097 = vmul.f32 1.0, %v4096
        %v4098 = vrcp.pop %v3056
        %v4099 = vmul.f32 %v3056, %v4098
        %v4100 = vsub.f32 1.0, %v4099
        %v4101 = vmul.f32 %v4098, %v4100
        %v4102 = vadd.f32 %v4098, %v4101
        %vm4103 = vweird.f32 %v3056
        %vm4104 = vweird.f32 %v4098
        %vm4105 = vmor %vm4103, %vm4104
        %v4106 = vsel %vm4105, %v4098, %v4102
        %v4107 = vand.u32 2147483647, %v3056
        %vm4108 = vcmp.eq.f32.partialorder %v4107, 8.507059e+37
        %v4109 = vand.u32 %v3056, 2147483648
        %v4110 = vor.u32 1.1754944e-38, %v4109
        %v4111 = vsel %vm4108, %v4110, %v4106
        %v4112 = vmul.f32 1.0, %v4111
        %v4113 = vrcp.pop %v3057
        %v4114 = vmul.f32 %v3057, %v4113
        %v4115 = vsub.f32 1.0, %v4114
        %v4116 = vmul.f32 %v4113, %v4115
        %v4117 = vadd.f32 %v4113, %v4116
        %vm4118 = vweird.f32 %v3057
        %vm4119 = vweird.f32 %v4113
        %vm4120 = vmor %vm4118, %vm4119
        %v4121 = vsel %vm4120, %v4113, %v4117
        %v4122 = vand.u32 2147483647, %v3057
        %vm4123 = vcmp.eq.f32.partialorder %v4122, 8.507059e+37
        %v4124 = vand.u32 %v3057, 2147483648
        %v4125 = vor.u32 1.1754944e-38, %v4124
        %v4126 = vsel %vm4123, %v4125, %v4121
        %v4127 = vmul.f32 1.0, %v4126
        %v4128 = vrcp.pop %v3058
        %v4129 = vmul.f32 %v3058, %v4128
        %v4130 = vsub.f32 1.0, %v4129
        %v4131 = vmul.f32 %v4128, %v4130
        %v4132 = vadd.f32 %v4128, %v4131
        %vm4133 = vweird.f32 %v3058
        %vm4134 = vweird.f32 %v4128
        %vm4135 = vmor %vm4133, %vm4134
        %v4136 = vsel %vm4135, %v4128, %v4132
        %v4137 = vand.u32 2147483647, %v3058
        %vm4138 = vcmp.eq.f32.partialorder %v4137, 8.507059e+37
        %v4139 = vand.u32 %v3058, 2147483648
        %v4140 = vor.u32 1.1754944e-38, %v4139
        %v4141 = vsel %vm4138, %v4140, %v4136
        %v4142 = vmul.f32 1.0, %v4141
        %v4143 = vrcp.pop %v3059
        %v4144 = vmul.f32 %v3059, %v4143
        %v4145 = vsub.f32 1.0, %v4144
        %v4146 = vmul.f32 %v4143, %v4145
        %v4147 = vadd.f32 %v4143, %v4146
        %vm4148 = vweird.f32 %v3059
        %vm4149 = vweird.f32 %v4143
        %vm4150 = vmor %vm4148, %vm4149
        %v4151 = vsel %vm4150, %v4143, %v4147
        %v4152 = vand.u32 2147483647, %v3059
        %vm4153 = vcmp.eq.f32.partialorder %v4152, 8.507059e+37
        %v4154 = vand.u32 %v3059, 2147483648
        %v4155 = vor.u32 1.1754944e-38, %v4154
        %v4156 = vsel %vm4153, %v4155, %v4151
        %v4157 = vmul.f32 1.0, %v4156
        %v4158 = vrcp.pop %v3060
        %v4159 = vmul.f32 %v3060, %v4158
        %v4160 = vsub.f32 1.0, %v4159
        %v4161 = vmul.f32 %v4158, %v4160
        %v4162 = vadd.f32 %v4158, %v4161
        %vm4163 = vweird.f32 %v3060
        %vm4164 = vweird.f32 %v4158
        %vm4165 = vmor %vm4163, %vm4164
        %v4166 = vsel %vm4165, %v4158, %v4162
        %v4167 = vand.u32 2147483647, %v3060
        %vm4168 = vcmp.eq.f32.partialorder %v4167, 8.507059e+37
        %v4169 = vand.u32 %v3060, 2147483648
        %v4170 = vor.u32 1.1754944e-38, %v4169
        %v4171 = vsel %vm4168, %v4170, %v4166
        %v4172 = vmul.f32 1.0, %v4171
        %v4173 = vrcp.pop %v3061
        %v4174 = vmul.f32 %v3061, %v4173
        %v4175 = vsub.f32 1.0, %v4174
        %v4176 = vmul.f32 %v4173, %v4175
        %v4177 = vadd.f32 %v4173, %v4176
        %vm4178 = vweird.f32 %v3061
        %vm4179 = vweird.f32 %v4173
        %vm4180 = vmor %vm4178, %vm4179
        %v4181 = vsel %vm4180, %v4173, %v4177
        %v4182 = vand.u32 2147483647, %v3061
        %vm4183 = vcmp.eq.f32.partialorder %v4182, 8.507059e+37
        %v4184 = vand.u32 %v3061, 2147483648
        %v4185 = vor.u32 1.1754944e-38, %v4184
        %v4186 = vsel %vm4183, %v4185, %v4181
        %v4187 = vmul.f32 1.0, %v4186
        %v4188 = vrcp.pop %v3062
        %v4189 = vmul.f32 %v3062, %v4188
        %v4190 = vsub.f32 1.0, %v4189
        %v4191 = vmul.f32 %v4188, %v4190
        %v4192 = vadd.f32 %v4188, %v4191
        %vm4193 = vweird.f32 %v3062
        %vm4194 = vweird.f32 %v4188
        %vm4195 = vmor %vm4193, %vm4194
        %v4196 = vsel %vm4195, %v4188, %v4192
        %v4197 = vand.u32 2147483647, %v3062
        %vm4198 = vcmp.eq.f32.partialorder %v4197, 8.507059e+37
        %v4199 = vand.u32 %v3062, 2147483648
        %v4200 = vor.u32 1.1754944e-38, %v4199
        %v4201 = vsel %vm4198, %v4200, %v4196
        %v4202 = vmul.f32 1.0, %v4201
        %v4203 = vrcp.pop %v3063
        %v4204 = vmul.f32 %v3063, %v4203
        %v4205 = vsub.f32 1.0, %v4204
        %v4206 = vmul.f32 %v4203, %v4205
        %v4207 = vadd.f32 %v4203, %v4206
        %vm4208 = vweird.f32 %v3063
        %vm4209 = vweird.f32 %v4203
        %vm4210 = vmor %vm4208, %vm4209
        %v4211 = vsel %vm4210, %v4203, %v4207
        %v4212 = vand.u32 2147483647, %v3063
        %vm4213 = vcmp.eq.f32.partialorder %v4212, 8.507059e+37
        %v4214 = vand.u32 %v3063, 2147483648
        %v4215 = vor.u32 1.1754944e-38, %v4214
        %v4216 = vsel %vm4213, %v4215, %v4211
        %v4217 = vmul.f32 1.0, %v4216
        %v4218 = vrcp.pop %v3064
        %v4219 = vmul.f32 %v3064, %v4218
        %v4220 = vsub.f32 1.0, %v4219
        %v4221 = vmul.f32 %v4218, %v4220
        %v4222 = vadd.f32 %v4218, %v4221
        %vm4223 = vweird.f32 %v3064
        %vm4224 = vweird.f32 %v4218
        %vm4225 = vmor %vm4223, %vm4224
        %v4226 = vsel %vm4225, %v4218, %v4222
        %v4227 = vand.u32 2147483647, %v3064
        %vm4228 = vcmp.eq.f32.partialorder %v4227, 8.507059e+37
        %v4229 = vand.u32 %v3064, 2147483648
        %v4230 = vor.u32 1.1754944e-38, %v4229
        %v4231 = vsel %vm4228, %v4230, %v4226
        %v4232 = vmul.f32 1.0, %v4231
        %v4233 = vrcp.pop %v3065
        %v4234 = vmul.f32 %v3065, %v4233
        %v4235 = vsub.f32 1.0, %v4234
        %v4236 = vmul.f32 %v4233, %v4235
        %v4237 = vadd.f32 %v4233, %v4236
        %vm4238 = vweird.f32 %v3065
        %vm4239 = vweird.f32 %v4233
        %vm4240 = vmor %vm4238, %vm4239
        %v4241 = vsel %vm4240, %v4233, %v4237
        %v4242 = vand.u32 2147483647, %v3065
        %vm4243 = vcmp.eq.f32.partialorder %v4242, 8.507059e+37
        %v4244 = vand.u32 %v3065, 2147483648
        %v4245 = vor.u32 1.1754944e-38, %v4244
        %v4246 = vsel %vm4243, %v4245, %v4241
        %v4247 = vmul.f32 1.0, %v4246
        %v4248 = vrcp.pop %v3066
        %v4249 = vmul.f32 %v3066, %v4248
        %v4250 = vsub.f32 1.0, %v4249
        %v4251 = vmul.f32 %v4248, %v4250
        %v4252 = vadd.f32 %v4248, %v4251
        %vm4253 = vweird.f32 %v3066
        %vm4254 = vweird.f32 %v4248
        %vm4255 = vmor %vm4253, %vm4254
        %v4256 = vsel %vm4255, %v4248, %v4252
        %v4257 = vand.u32 2147483647, %v3066
        %vm4258 = vcmp.eq.f32.partialorder %v4257, 8.507059e+37
        %v4259 = vand.u32 %v3066, 2147483648
        %v4260 = vor.u32 1.1754944e-38, %v4259
        %v4261 = vsel %vm4258, %v4260, %v4256
        %v4262 = vmul.f32 1.0, %v4261
        %v4263 = vrcp.pop %v3067
        %v4264 = vmul.f32 %v3067, %v4263
        %v4265 = vsub.f32 1.0, %v4264
        %v4266 = vmul.f32 %v4263, %v4265
        %v4267 = vadd.f32 %v4263, %v4266
        %vm4268 = vweird.f32 %v3067
        %vm4269 = vweird.f32 %v4263
        %vm4270 = vmor %vm4268, %vm4269
        %v4271 = vsel %vm4270, %v4263, %v4267
        %v4272 = vand.u32 2147483647, %v3067
        %vm4273 = vcmp.eq.f32.partialorder %v4272, 8.507059e+37
        %v4274 = vand.u32 %v3067, 2147483648
        %v4275 = vor.u32 1.1754944e-38, %v4274
        %v4276 = vsel %vm4273, %v4275, %v4271
        %v4277 = vmul.f32 1.0, %v4276
        %v4278 = vrcp.pop %v3068
        %v4279 = vmul.f32 %v3068, %v4278
        %v4280 = vsub.f32 1.0, %v4279
        %v4281 = vmul.f32 %v4278, %v4280
        %v4282 = vadd.f32 %v4278, %v4281
        %vm4283 = vweird.f32 %v3068
        %vm4284 = vweird.f32 %v4278
        %vm4285 = vmor %vm4283, %vm4284
        %v4286 = vsel %vm4285, %v4278, %v4282
        %v4287 = vand.u32 2147483647, %v3068
        %vm4288 = vcmp.eq.f32.partialorder %v4287, 8.507059e+37
        %v4289 = vand.u32 %v3068, 2147483648
        %v4290 = vor.u32 1.1754944e-38, %v4289
        %v4291 = vsel %vm4288, %v4290, %v4286
        %v4292 = vmul.f32 1.0, %v4291
        %v4293 = vrcp.pop %v3069
        %v4294 = vmul.f32 %v3069, %v4293
        %v4295 = vsub.f32 1.0, %v4294
        %v4296 = vmul.f32 %v4293, %v4295
        %v4297 = vadd.f32 %v4293, %v4296
        %vm4298 = vweird.f32 %v3069
        %vm4299 = vweird.f32 %v4293
        %vm4300 = vmor %vm4298, %vm4299
        %v4301 = vsel %vm4300, %v4293, %v4297
        %v4302 = vand.u32 2147483647, %v3069
        %vm4303 = vcmp.eq.f32.partialorder %v4302, 8.507059e+37
        %v4304 = vand.u32 %v3069, 2147483648
        %v4305 = vor.u32 1.1754944e-38, %v4304
        %v4306 = vsel %vm4303, %v4305, %v4301
        %v4307 = vmul.f32 1.0, %v4306
        %v4308 = vrcp.pop %v3070
        %v4309 = vmul.f32 %v3070, %v4308
        %v4310 = vsub.f32 1.0, %v4309
        %v4311 = vmul.f32 %v4308, %v4310
        %v4312 = vadd.f32 %v4308, %v4311
        %vm4313 = vweird.f32 %v3070
        %vm4314 = vweird.f32 %v4308
        %vm4315 = vmor %vm4313, %vm4314
        %v4316 = vsel %vm4315, %v4308, %v4312
        %v4317 = vand.u32 2147483647, %v3070
        %vm4318 = vcmp.eq.f32.partialorder %v4317, 8.507059e+37
        %v4319 = vand.u32 %v3070, 2147483648
        %v4320 = vor.u32 1.1754944e-38, %v4319
        %v4321 = vsel %vm4318, %v4320, %v4316
        %v4322 = vmul.f32 1.0, %v4321
        %v4323 = vrcp.pop %v3071
        %v4324 = vmul.f32 %v3071, %v4323
        %v4325 = vsub.f32 1.0, %v4324
        %v4326 = vmul.f32 %v4323, %v4325
        %v4327 = vadd.f32 %v4323, %v4326
        %vm4328 = vweird.f32 %v3071
        %vm4329 = vweird.f32 %v4323
        %vm4330 = vmor %vm4328, %vm4329
        %v4331 = vsel %vm4330, %v4323, %v4327
        %v4332 = vand.u32 2147483647, %v3071
        %vm4333 = vcmp.eq.f32.partialorder %v4332, 8.507059e+37
        %v4334 = vand.u32 %v3071, 2147483648
        %v4335 = vor.u32 1.1754944e-38, %v4334
        %v4336 = vsel %vm4333, %v4335, %v4331
        %v4337 = vmul.f32 1.0, %v4336
        %v4338 = vrcp.pop %v3072
        %v4339 = vmul.f32 %v3072, %v4338
        %v4340 = vsub.f32 1.0, %v4339
        %v4341 = vmul.f32 %v4338, %v4340
        %v4342 = vadd.f32 %v4338, %v4341
        %vm4343 = vweird.f32 %v3072
        %vm4344 = vweird.f32 %v4338
        %vm4345 = vmor %vm4343, %vm4344
        %v4346 = vsel %vm4345, %v4338, %v4342
        %v4347 = vand.u32 2147483647, %v3072
        %vm4348 = vcmp.eq.f32.partialorder %v4347, 8.507059e+37
        %v4349 = vand.u32 %v3072, 2147483648
        %v4350 = vor.u32 1.1754944e-38, %v4349
        %v4351 = vsel %vm4348, %v4350, %v4346
        %v4352 = vmul.f32 1.0, %v4351
        %v4353 = vrcp.pop %v3073
        %v4354 = vmul.f32 %v3073, %v4353
        %v4355 = vsub.f32 1.0, %v4354
        %v4356 = vmul.f32 %v4353, %v4355
        %v4357 = vadd.f32 %v4353, %v4356
        %vm4358 = vweird.f32 %v3073
        %vm4359 = vweird.f32 %v4353
        %vm4360 = vmor %vm4358, %vm4359
        %v4361 = vsel %vm4360, %v4353, %v4357
        %v4362 = vand.u32 2147483647, %v3073
        %vm4363 = vcmp.eq.f32.partialorder %v4362, 8.507059e+37
        %v4364 = vand.u32 %v3073, 2147483648
        %v4365 = vor.u32 1.1754944e-38, %v4364
        %v4366 = vsel %vm4363, %v4365, %v4361
        %v4367 = vmul.f32 1.0, %v4366
        %v4368 = vrcp.pop %v3074
        %v4369 = vmul.f32 %v3074, %v4368
        %v4370 = vsub.f32 1.0, %v4369
        %v4371 = vmul.f32 %v4368, %v4370
        %v4372 = vadd.f32 %v4368, %v4371
        %vm4373 = vweird.f32 %v3074
        %vm4374 = vweird.f32 %v4368
        %vm4375 = vmor %vm4373, %vm4374
        %v4376 = vsel %vm4375, %v4368, %v4372
        %v4377 = vand.u32 2147483647, %v3074
        %vm4378 = vcmp.eq.f32.partialorder %v4377, 8.507059e+37
        %v4379 = vand.u32 %v3074, 2147483648
        %v4380 = vor.u32 1.1754944e-38, %v4379
        %v4381 = vsel %vm4378, %v4380, %v4376
        %v4382 = vmul.f32 1.0, %v4381
        %v4383 = vrcp.pop %v3075
        %v4384 = vmul.f32 %v3075, %v4383
        %v4385 = vsub.f32 1.0, %v4384
        %v4386 = vmul.f32 %v4383, %v4385
        %v4387 = vadd.f32 %v4383, %v4386
        %vm4388 = vweird.f32 %v3075
        %vm4389 = vweird.f32 %v4383
        %vm4390 = vmor %vm4388, %vm4389
        %v4391 = vsel %vm4390, %v4383, %v4387
        %v4392 = vand.u32 2147483647, %v3075
        %vm4393 = vcmp.eq.f32.partialorder %v4392, 8.507059e+37
        %v4394 = vand.u32 %v3075, 2147483648
        %v4395 = vor.u32 1.1754944e-38, %v4394
        %v4396 = vsel %vm4393, %v4395, %v4391
        %v4397 = vmul.f32 1.0, %v4396
        %v4398 = vrcp.pop %v3076
        %v4399 = vmul.f32 %v3076, %v4398
        %v4400 = vsub.f32 1.0, %v4399
        %v4401 = vmul.f32 %v4398, %v4400
        %v4402 = vadd.f32 %v4398, %v4401
        %vm4403 = vweird.f32 %v3076
        %vm4404 = vweird.f32 %v4398
        %vm4405 = vmor %vm4403, %vm4404
        %v4406 = vsel %vm4405, %v4398, %v4402
        %v4407 = vand.u32 2147483647, %v3076
        %vm4408 = vcmp.eq.f32.partialorder %v4407, 8.507059e+37
        %v4409 = vand.u32 %v3076, 2147483648
        %v4410 = vor.u32 1.1754944e-38, %v4409
        %v4411 = vsel %vm4408, %v4410, %v4406
        %v4412 = vmul.f32 1.0, %v4411
        %v4413 = vrcp.pop %v3077
        %v4414 = vmul.f32 %v3077, %v4413
        %v4415 = vsub.f32 1.0, %v4414
        %v4416 = vmul.f32 %v4413, %v4415
        %v4417 = vadd.f32 %v4413, %v4416
        %vm4418 = vweird.f32 %v3077
        %vm4419 = vweird.f32 %v4413
        %vm4420 = vmor %vm4418, %vm4419
        %v4421 = vsel %vm4420, %v4413, %v4417
        %v4422 = vand.u32 2147483647, %v3077
        %vm4423 = vcmp.eq.f32.partialorder %v4422, 8.507059e+37
        %v4424 = vand.u32 %v3077, 2147483648
        %v4425 = vor.u32 1.1754944e-38, %v4424
        %v4426 = vsel %vm4423, %v4425, %v4421
        %v4427 = vmul.f32 1.0, %v4426
        %v4428 = vrcp.pop %v3078
        %v4429 = vmul.f32 %v3078, %v4428
        %v4430 = vsub.f32 1.0, %v4429
        %v4431 = vmul.f32 %v4428, %v4430
        %v4432 = vadd.f32 %v4428, %v4431
        %vm4433 = vweird.f32 %v3078
        %vm4434 = vweird.f32 %v4428
        %vm4435 = vmor %vm4433, %vm4434
        %v4436 = vsel %vm4435, %v4428, %v4432
        %v4437 = vand.u32 2147483647, %v3078
        %vm4438 = vcmp.eq.f32.partialorder %v4437, 8.507059e+37
        %v4439 = vand.u32 %v3078, 2147483648
        %v4440 = vor.u32 1.1754944e-38, %v4439
        %v4441 = vsel %vm4438, %v4440, %v4436
        %v4442 = vmul.f32 1.0, %v4441
        %v4443 = vrcp.pop %v3079
        %v4444 = vmul.f32 %v3079, %v4443
        %v4445 = vsub.f32 1.0, %v4444
        %v4446 = vmul.f32 %v4443, %v4445
        %v4447 = vadd.f32 %v4443, %v4446
        %vm4448 = vweird.f32 %v3079
        %vm4449 = vweird.f32 %v4443
        %vm4450 = vmor %vm4448, %vm4449
        %v4451 = vsel %vm4450, %v4443, %v4447
        %v4452 = vand.u32 2147483647, %v3079
        %vm4453 = vcmp.eq.f32.partialorder %v4452, 8.507059e+37
        %v4454 = vand.u32 %v3079, 2147483648
        %v4455 = vor.u32 1.1754944e-38, %v4454
        %v4456 = vsel %vm4453, %v4455, %v4451
        %v4457 = vmul.f32 1.0, %v4456
        %v4458 = vrcp.pop %v3080
        %v4459 = vmul.f32 %v3080, %v4458
        %v4460 = vsub.f32 1.0, %v4459
        %v4461 = vmul.f32 %v4458, %v4460
        %v4462 = vadd.f32 %v4458, %v4461
        %vm4463 = vweird.f32 %v3080
        %vm4464 = vweird.f32 %v4458
        %vm4465 = vmor %vm4463, %vm4464
        %v4466 = vsel %vm4465, %v4458, %v4462
        %v4467 = vand.u32 2147483647, %v3080
        %vm4468 = vcmp.eq.f32.partialorder %v4467, 8.507059e+37
        %v4469 = vand.u32 %v3080, 2147483648
        %v4470 = vor.u32 1.1754944e-38, %v4469
        %v4471 = vsel %vm4468, %v4470, %v4466
        %v4472 = vmul.f32 1.0, %v4471
        %v4473 = vrcp.pop %v3081
        %v4474 = vmul.f32 %v3081, %v4473
        %v4475 = vsub.f32 1.0, %v4474
        %v4476 = vmul.f32 %v4473, %v4475
        %v4477 = vadd.f32 %v4473, %v4476
        %vm4478 = vweird.f32 %v3081
        %vm4479 = vweird.f32 %v4473
        %vm4480 = vmor %vm4478, %vm4479
        %v4481 = vsel %vm4480, %v4473, %v4477
        %v4482 = vand.u32 2147483647, %v3081
        %vm4483 = vcmp.eq.f32.partialorder %v4482, 8.507059e+37
        %v4484 = vand.u32 %v3081, 2147483648
        %v4485 = vor.u32 1.1754944e-38, %v4484
        %v4486 = vsel %vm4483, %v4485, %v4481
        %v4487 = vmul.f32 1.0, %v4486
        %v4488 = vrcp.pop %v3082
        %v4489 = vmul.f32 %v3082, %v4488
        %v4490 = vsub.f32 1.0, %v4489
        %v4491 = vmul.f32 %v4488, %v4490
        %v4492 = vadd.f32 %v4488, %v4491
        %vm4493 = vweird.f32 %v3082
        %vm4494 = vweird.f32 %v4488
        %vm4495 = vmor %vm4493, %vm4494
        %v4496 = vsel %vm4495, %v4488, %v4492
        %v4497 = vand.u32 2147483647, %v3082
        %vm4498 = vcmp.eq.f32.partialorder %v4497, 8.507059e+37
        %v4499 = vand.u32 %v3082, 2147483648
        %v4500 = vor.u32 1.1754944e-38, %v4499
        %v4501 = vsel %vm4498, %v4500, %v4496
        %v4502 = vmul.f32 1.0, %v4501
        %v4503 = vrcp.pop %v3083
        %v4504 = vmul.f32 %v3083, %v4503
        %v4505 = vsub.f32 1.0, %v4504
        %v4506 = vmul.f32 %v4503, %v4505
        %v4507 = vadd.f32 %v4503, %v4506
        %vm4508 = vweird.f32 %v3083
        %vm4509 = vweird.f32 %v4503
        %vm4510 = vmor %vm4508, %vm4509
        %v4511 = vsel %vm4510, %v4503, %v4507
        %v4512 = vand.u32 2147483647, %v3083
        %vm4513 = vcmp.eq.f32.partialorder %v4512, 8.507059e+37
        %v4514 = vand.u32 %v3083, 2147483648
        %v4515 = vor.u32 1.1754944e-38, %v4514
        %v4516 = vsel %vm4513, %v4515, %v4511
        %v4517 = vmul.f32 1.0, %v4516
        %v4518 = vrcp.pop %v3084
        %v4519 = vmul.f32 %v3084, %v4518
        %v4520 = vsub.f32 1.0, %v4519
        %v4521 = vmul.f32 %v4518, %v4520
        %v4522 = vadd.f32 %v4518, %v4521
        %vm4523 = vweird.f32 %v3084
        %vm4524 = vweird.f32 %v4518
        %vm4525 = vmor %vm4523, %vm4524
        %v4526 = vsel %vm4525, %v4518, %v4522
        %v4527 = vand.u32 2147483647, %v3084
        %vm4528 = vcmp.eq.f32.partialorder %v4527, 8.507059e+37
        %v4529 = vand.u32 %v3084, 2147483648
        %v4530 = vor.u32 1.1754944e-38, %v4529
        %v4531 = vsel %vm4528, %v4530, %v4526
        %v4532 = vmul.f32 1.0, %v4531
        %v4533 = vrcp.pop %v3085
        %v4534 = vmul.f32 %v3085, %v4533
        %v4535 = vsub.f32 1.0, %v4534
        %v4536 = vmul.f32 %v4533, %v4535
        %v4537 = vadd.f32 %v4533, %v4536
        %vm4538 = vweird.f32 %v3085
        %vm4539 = vweird.f32 %v4533
        %vm4540 = vmor %vm4538, %vm4539
        %v4541 = vsel %vm4540, %v4533, %v4537
        %v4542 = vand.u32 2147483647, %v3085
        %vm4543 = vcmp.eq.f32.partialorder %v4542, 8.507059e+37
        %v4544 = vand.u32 %v3085, 2147483648
        %v4545 = vor.u32 1.1754944e-38, %v4544
        %v4546 = vsel %vm4543, %v4545, %v4541
        %v4547 = vmul.f32 1.0, %v4546
        %v4548 = vrcp.pop %v3086
        %v4549 = vmul.f32 %v3086, %v4548
        %v4550 = vsub.f32 1.0, %v4549
        %v4551 = vmul.f32 %v4548, %v4550
        %v4552 = vadd.f32 %v4548, %v4551
        %vm4553 = vweird.f32 %v3086
        %vm4554 = vweird.f32 %v4548
        %vm4555 = vmor %vm4553, %vm4554
        %v4556 = vsel %vm4555, %v4548, %v4552
        %v4557 = vand.u32 2147483647, %v3086
        %vm4558 = vcmp.eq.f32.partialorder %v4557, 8.507059e+37
        %v4559 = vand.u32 %v3086, 2147483648
        %v4560 = vor.u32 1.1754944e-38, %v4559
        %v4561 = vsel %vm4558, %v4560, %v4556
        %v4562 = vmul.f32 1.0, %v4561
        %v4563 = vrcp.pop %v3087
        %v4564 = vmul.f32 %v3087, %v4563
        %v4565 = vsub.f32 1.0, %v4564
        %v4566 = vmul.f32 %v4563, %v4565
        %v4567 = vadd.f32 %v4563, %v4566
        %vm4568 = vweird.f32 %v3087
        %vm4569 = vweird.f32 %v4563
        %vm4570 = vmor %vm4568, %vm4569
        %v4571 = vsel %vm4570, %v4563, %v4567
        %v4572 = vand.u32 2147483647, %v3087
        %vm4573 = vcmp.eq.f32.partialorder %v4572, 8.507059e+37
        %v4574 = vand.u32 %v3087, 2147483648
        %v4575 = vor.u32 1.1754944e-38, %v4574
        %v4576 = vsel %vm4573, %v4575, %v4571
        %v4577 = vmul.f32 1.0, %v4576
        %v4578 = vrcp.pop %v3088
        %v4579 = vmul.f32 %v3088, %v4578
        %v4580 = vsub.f32 1.0, %v4579
        %v4581 = vmul.f32 %v4578, %v4580
        %v4582 = vadd.f32 %v4578, %v4581
        %vm4583 = vweird.f32 %v3088
        %vm4584 = vweird.f32 %v4578
        %vm4585 = vmor %vm4583, %vm4584
        %v4586 = vsel %vm4585, %v4578, %v4582
        %v4587 = vand.u32 2147483647, %v3088
        %vm4588 = vcmp.eq.f32.partialorder %v4587, 8.507059e+37
        %v4589 = vand.u32 %v3088, 2147483648
        %v4590 = vor.u32 1.1754944e-38, %v4589
        %v4591 = vsel %vm4588, %v4590, %v4586
        %v4592 = vmul.f32 1.0, %v4591
        %v4593 = vrcp.pop %v3089
        %v4594 = vmul.f32 %v3089, %v4593
        %v4595 = vsub.f32 1.0, %v4594
        %v4596 = vmul.f32 %v4593, %v4595
        %v4597 = vadd.f32 %v4593, %v4596
        %vm4598 = vweird.f32 %v3089
        %vm4599 = vweird.f32 %v4593
        %vm4600 = vmor %vm4598, %vm4599
        %v4601 = vsel %vm4600, %v4593, %v4597
        %v4602 = vand.u32 2147483647, %v3089
        %vm4603 = vcmp.eq.f32.partialorder %v4602, 8.507059e+37
        %v4604 = vand.u32 %v3089, 2147483648
        %v4605 = vor.u32 1.1754944e-38, %v4604
        %v4606 = vsel %vm4603, %v4605, %v4601
        %v4607 = vmul.f32 1.0, %v4606
        %v4608 = vrcp.pop %v3090
        %v4609 = vmul.f32 %v3090, %v4608
        %v4610 = vsub.f32 1.0, %v4609
        %v4611 = vmul.f32 %v4608, %v4610
        %v4612 = vadd.f32 %v4608, %v4611
        %vm4613 = vweird.f32 %v3090
        %vm4614 = vweird.f32 %v4608
        %vm4615 = vmor %vm4613, %vm4614
        %v4616 = vsel %vm4615, %v4608, %v4612
        %v4617 = vand.u32 2147483647, %v3090
        %vm4618 = vcmp.eq.f32.partialorder %v4617, 8.507059e+37
        %v4619 = vand.u32 %v3090, 2147483648
        %v4620 = vor.u32 1.1754944e-38, %v4619
        %v4621 = vsel %vm4618, %v4620, %v4616
        %v4622 = vmul.f32 1.0, %v4621
        %v4623 = vrcp.pop %v3091
        %v4624 = vmul.f32 %v3091, %v4623
        %v4625 = vsub.f32 1.0, %v4624
        %v4626 = vmul.f32 %v4623, %v4625
        %v4627 = vadd.f32 %v4623, %v4626
        %vm4628 = vweird.f32 %v3091
        %vm4629 = vweird.f32 %v4623
        %vm4630 = vmor %vm4628, %vm4629
        %v4631 = vsel %vm4630, %v4623, %v4627
        %v4632 = vand.u32 2147483647, %v3091
        %vm4633 = vcmp.eq.f32.partialorder %v4632, 8.507059e+37
        %v4634 = vand.u32 %v3091, 2147483648
        %v4635 = vor.u32 1.1754944e-38, %v4634
        %v4636 = vsel %vm4633, %v4635, %v4631
        %v4637 = vmul.f32 1.0, %v4636
        %v4638 = vrcp.pop %v3092
        %v4639 = vmul.f32 %v3092, %v4638
        %v4640 = vsub.f32 1.0, %v4639
        %v4641 = vmul.f32 %v4638, %v4640
        %v4642 = vadd.f32 %v4638, %v4641
        %vm4643 = vweird.f32 %v3092
        %vm4644 = vweird.f32 %v4638
        %vm4645 = vmor %vm4643, %vm4644
        %v4646 = vsel %vm4645, %v4638, %v4642
        %v4647 = vand.u32 2147483647, %v3092
        %vm4648 = vcmp.eq.f32.partialorder %v4647, 8.507059e+37
        %v4649 = vand.u32 %v3092, 2147483648
        %v4650 = vor.u32 1.1754944e-38, %v4649
        %v4651 = vsel %vm4648, %v4650, %v4646
        %v4652 = vmul.f32 1.0, %v4651
        %v4653 = vrcp.pop %v3093
        %v4654 = vmul.f32 %v3093, %v4653
        %v4655 = vsub.f32 1.0, %v4654
        %v4656 = vmul.f32 %v4653, %v4655
        %v4657 = vadd.f32 %v4653, %v4656
        %vm4658 = vweird.f32 %v3093
        %vm4659 = vweird.f32 %v4653
        %vm4660 = vmor %vm4658, %vm4659
        %v4661 = vsel %vm4660, %v4653, %v4657
        %v4662 = vand.u32 2147483647, %v3093
        %vm4663 = vcmp.eq.f32.partialorder %v4662, 8.507059e+37
        %v4664 = vand.u32 %v3093, 2147483648
        %v4665 = vor.u32 1.1754944e-38, %v4664
        %v4666 = vsel %vm4663, %v4665, %v4661
        %v4667 = vmul.f32 1.0, %v4666
        %v4668 = vrcp.pop %v3094
        %v4669 = vmul.f32 %v3094, %v4668
        %v4670 = vsub.f32 1.0, %v4669
        %v4671 = vmul.f32 %v4668, %v4670
        %v4672 = vadd.f32 %v4668, %v4671
        %vm4673 = vweird.f32 %v3094
        %vm4674 = vweird.f32 %v4668
        %vm4675 = vmor %vm4673, %vm4674
        %v4676 = vsel %vm4675, %v4668, %v4672
        %v4677 = vand.u32 2147483647, %v3094
        %vm4678 = vcmp.eq.f32.partialorder %v4677, 8.507059e+37
        %v4679 = vand.u32 %v3094, 2147483648
        %v4680 = vor.u32 1.1754944e-38, %v4679
        %v4681 = vsel %vm4678, %v4680, %v4676
        %v4682 = vmul.f32 1.0, %v4681
        %v4683 = vrcp.pop %v3095
        %v4684 = vmul.f32 %v3095, %v4683
        %v4685 = vsub.f32 1.0, %v4684
        %v4686 = vmul.f32 %v4683, %v4685
        %v4687 = vadd.f32 %v4683, %v4686
        %vm4688 = vweird.f32 %v3095
        %vm4689 = vweird.f32 %v4683
        %vm4690 = vmor %vm4688, %vm4689
        %v4691 = vsel %vm4690, %v4683, %v4687
        %v4692 = vand.u32 2147483647, %v3095
        %vm4693 = vcmp.eq.f32.partialorder %v4692, 8.507059e+37
        %v4694 = vand.u32 %v3095, 2147483648
        %v4695 = vor.u32 1.1754944e-38, %v4694
        %v4696 = vsel %vm4693, %v4695, %v4691
        %v4697 = vmul.f32 1.0, %v4696
        %v4698 = vrcp.pop %v3096
        %v4699 = vmul.f32 %v3096, %v4698
        %v4700 = vsub.f32 1.0, %v4699
        %v4701 = vmul.f32 %v4698, %v4700
        %v4702 = vadd.f32 %v4698, %v4701
        %vm4703 = vweird.f32 %v3096
        %vm4704 = vweird.f32 %v4698
        %vm4705 = vmor %vm4703, %vm4704
        %v4706 = vsel %vm4705, %v4698, %v4702
        %v4707 = vand.u32 2147483647, %v3096
        %vm4708 = vcmp.eq.f32.partialorder %v4707, 8.507059e+37
        %v4709 = vand.u32 %v3096, 2147483648
        %v4710 = vor.u32 1.1754944e-38, %v4709
        %v4711 = vsel %vm4708, %v4710, %v4706
        %v4712 = vmul.f32 1.0, %v4711
        %v4713 = vrcp.pop %v3097
        %v4714 = vmul.f32 %v3097, %v4713
        %v4715 = vsub.f32 1.0, %v4714
        %v4716 = vmul.f32 %v4713, %v4715
        %v4717 = vadd.f32 %v4713, %v4716
        %vm4718 = vweird.f32 %v3097
        %vm4719 = vweird.f32 %v4713
        %vm4720 = vmor %vm4718, %vm4719
        %v4721 = vsel %vm4720, %v4713, %v4717
        %v4722 = vand.u32 2147483647, %v3097
        %vm4723 = vcmp.eq.f32.partialorder %v4722, 8.507059e+37
        %v4724 = vand.u32 %v3097, 2147483648
        %v4725 = vor.u32 1.1754944e-38, %v4724
        %v4726 = vsel %vm4723, %v4725, %v4721
        %v4727 = vmul.f32 1.0, %v4726
        %v4728 = vrcp.pop %v3098
        %v4729 = vmul.f32 %v3098, %v4728
        %v4730 = vsub.f32 1.0, %v4729
        %v4731 = vmul.f32 %v4728, %v4730
        %v4732 = vadd.f32 %v4728, %v4731
        %vm4733 = vweird.f32 %v3098
        %vm4734 = vweird.f32 %v4728
        %vm4735 = vmor %vm4733, %vm4734
        %v4736 = vsel %vm4735, %v4728, %v4732
        %v4737 = vand.u32 2147483647, %v3098
        %vm4738 = vcmp.eq.f32.partialorder %v4737, 8.507059e+37
        %v4739 = vand.u32 %v3098, 2147483648
        %v4740 = vor.u32 1.1754944e-38, %v4739
        %v4741 = vsel %vm4738, %v4740, %v4736
        %v4742 = vmul.f32 1.0, %v4741
        %v4743 = vrcp.pop %v3099
        %v4744 = vmul.f32 %v3099, %v4743
        %v4745 = vsub.f32 1.0, %v4744
        %v4746 = vmul.f32 %v4743, %v4745
        %v4747 = vadd.f32 %v4743, %v4746
        %vm4748 = vweird.f32 %v3099
        %vm4749 = vweird.f32 %v4743
        %vm4750 = vmor %vm4748, %vm4749
        %v4751 = vsel %vm4750, %v4743, %v4747
        %v4752 = vand.u32 2147483647, %v3099
        %vm4753 = vcmp.eq.f32.partialorder %v4752, 8.507059e+37
        %v4754 = vand.u32 %v3099, 2147483648
        %v4755 = vor.u32 1.1754944e-38, %v4754
        %v4756 = vsel %vm4753, %v4755, %v4751
        %v4757 = vmul.f32 1.0, %v4756
        %v4758 = vrcp.pop %v3100
        %v4759 = vmul.f32 %v3100, %v4758
        %v4760 = vsub.f32 1.0, %v4759
        %v4761 = vmul.f32 %v4758, %v4760
        %v4762 = vadd.f32 %v4758, %v4761
        %vm4763 = vweird.f32 %v3100
        %vm4764 = vweird.f32 %v4758
        %vm4765 = vmor %vm4763, %vm4764
        %v4766 = vsel %vm4765, %v4758, %v4762
        %v4767 = vand.u32 2147483647, %v3100
        %vm4768 = vcmp.eq.f32.partialorder %v4767, 8.507059e+37
        %v4769 = vand.u32 %v3100, 2147483648
        %v4770 = vor.u32 1.1754944e-38, %v4769
        %v4771 = vsel %vm4768, %v4770, %v4766
        %v4772 = vmul.f32 1.0, %v4771
        %v4773 = vrcp.pop %v3101
        %v4774 = vmul.f32 %v3101, %v4773
        %v4775 = vsub.f32 1.0, %v4774
        %v4776 = vmul.f32 %v4773, %v4775
        %v4777 = vadd.f32 %v4773, %v4776
        %vm4778 = vweird.f32 %v3101
        %vm4779 = vweird.f32 %v4773
        %vm4780 = vmor %vm4778, %vm4779
        %v4781 = vsel %vm4780, %v4773, %v4777
        %v4782 = vand.u32 2147483647, %v3101
        %vm4783 = vcmp.eq.f32.partialorder %v4782, 8.507059e+37
        %v4784 = vand.u32 %v3101, 2147483648
        %v4785 = vor.u32 1.1754944e-38, %v4784
        %v4786 = vsel %vm4783, %v4785, %v4781
        %v4787 = vmul.f32 1.0, %v4786
        %v4788 = vrcp.pop %v3102
        %v4789 = vmul.f32 %v3102, %v4788
        %v4790 = vsub.f32 1.0, %v4789
        %v4791 = vmul.f32 %v4788, %v4790
        %v4792 = vadd.f32 %v4788, %v4791
        %vm4793 = vweird.f32 %v3102
        %vm4794 = vweird.f32 %v4788
        %vm4795 = vmor %vm4793, %vm4794
        %v4796 = vsel %vm4795, %v4788, %v4792
        %v4797 = vand.u32 2147483647, %v3102
        %vm4798 = vcmp.eq.f32.partialorder %v4797, 8.507059e+37
        %v4799 = vand.u32 %v3102, 2147483648
        %v4800 = vor.u32 1.1754944e-38, %v4799
        %v4801 = vsel %vm4798, %v4800, %v4796
        %v4802 = vmul.f32 1.0, %v4801
        %v4803 = vrcp.pop %v3103
        %v4804 = vmul.f32 %v3103, %v4803
        %v4805 = vsub.f32 1.0, %v4804
        %v4806 = vmul.f32 %v4803, %v4805
        %v4807 = vadd.f32 %v4803, %v4806
        %vm4808 = vweird.f32 %v3103
        %vm4809 = vweird.f32 %v4803
        %vm4810 = vmor %vm4808, %vm4809
        %v4811 = vsel %vm4810, %v4803, %v4807
        %v4812 = vand.u32 2147483647, %v3103
        %vm4813 = vcmp.eq.f32.partialorder %v4812, 8.507059e+37
        %v4814 = vand.u32 %v3103, 2147483648
        %v4815 = vor.u32 1.1754944e-38, %v4814
        %v4816 = vsel %vm4813, %v4815, %v4811
        %v4817 = vmul.f32 1.0, %v4816
        %v4818 = vrcp.pop %v3104
        %v4819 = vmul.f32 %v3104, %v4818
        %v4820 = vsub.f32 1.0, %v4819
        %v4821 = vmul.f32 %v4818, %v4820
        %v4822 = vadd.f32 %v4818, %v4821
        %vm4823 = vweird.f32 %v3104
        %vm4824 = vweird.f32 %v4818
        %vm4825 = vmor %vm4823, %vm4824
        %v4826 = vsel %vm4825, %v4818, %v4822
        %v4827 = vand.u32 2147483647, %v3104
        %vm4828 = vcmp.eq.f32.partialorder %v4827, 8.507059e+37
        %v4829 = vand.u32 %v3104, 2147483648
        %v4830 = vor.u32 1.1754944e-38, %v4829
        %v4831 = vsel %vm4828, %v4830, %v4826
        %v4832 = vmul.f32 1.0, %v4831
        %v4833 = vrcp.pop %v3105
        %v4834 = vmul.f32 %v3105, %v4833
        %v4835 = vsub.f32 1.0, %v4834
        %v4836 = vmul.f32 %v4833, %v4835
        %v4837 = vadd.f32 %v4833, %v4836
        %vm4838 = vweird.f32 %v3105
        %vm4839 = vweird.f32 %v4833
        %vm4840 = vmor %vm4838, %vm4839
        %v4841 = vsel %vm4840, %v4833, %v4837
        %v4842 = vand.u32 2147483647, %v3105
        %vm4843 = vcmp.eq.f32.partialorder %v4842, 8.507059e+37
        %v4844 = vand.u32 %v3105, 2147483648
        %v4845 = vor.u32 1.1754944e-38, %v4844
        %v4846 = vsel %vm4843, %v4845, %v4841
        %v4847 = vmul.f32 1.0, %v4846
        %v4848 = vrcp.pop %v3106
        %v4849 = vmul.f32 %v3106, %v4848
        %v4850 = vsub.f32 1.0, %v4849
        %v4851 = vmul.f32 %v4848, %v4850
        %v4852 = vadd.f32 %v4848, %v4851
        %vm4853 = vweird.f32 %v3106
        %vm4854 = vweird.f32 %v4848
        %vm4855 = vmor %vm4853, %vm4854
        %v4856 = vsel %vm4855, %v4848, %v4852
        %v4857 = vand.u32 2147483647, %v3106
        %vm4858 = vcmp.eq.f32.partialorder %v4857, 8.507059e+37
        %v4859 = vand.u32 %v3106, 2147483648
        %v4860 = vor.u32 1.1754944e-38, %v4859
        %v4861 = vsel %vm4858, %v4860, %v4856
        %v4862 = vmul.f32 1.0, %v4861
        %v4863 = vrcp.pop %v3107
        %v4864 = vmul.f32 %v3107, %v4863
        %v4865 = vsub.f32 1.0, %v4864
        %v4866 = vmul.f32 %v4863, %v4865
        %v4867 = vadd.f32 %v4863, %v4866
        %vm4868 = vweird.f32 %v3107
        %vm4869 = vweird.f32 %v4863
        %vm4870 = vmor %vm4868, %vm4869
        %v4871 = vsel %vm4870, %v4863, %v4867
        %v4872 = vand.u32 2147483647, %v3107
        %vm4873 = vcmp.eq.f32.partialorder %v4872, 8.507059e+37
        %v4874 = vand.u32 %v3107, 2147483648
        %v4875 = vor.u32 1.1754944e-38, %v4874
        %v4876 = vsel %vm4873, %v4875, %v4871
        %v4877 = vmul.f32 1.0, %v4876
        %v4878 = vrcp.pop %v3108
        %v4879 = vmul.f32 %v3108, %v4878
        %v4880 = vsub.f32 1.0, %v4879
        %v4881 = vmul.f32 %v4878, %v4880
        %v4882 = vadd.f32 %v4878, %v4881
        %vm4883 = vweird.f32 %v3108
        %vm4884 = vweird.f32 %v4878
        %vm4885 = vmor %vm4883, %vm4884
        %v4886 = vsel %vm4885, %v4878, %v4882
        %v4887 = vand.u32 2147483647, %v3108
        %vm4888 = vcmp.eq.f32.partialorder %v4887, 8.507059e+37
        %v4889 = vand.u32 %v3108, 2147483648
        %v4890 = vor.u32 1.1754944e-38, %v4889
        %v4891 = vsel %vm4888, %v4890, %v4886
        %v4892 = vmul.f32 1.0, %v4891
        %v4893 = vrcp.pop %v3109
        %v4894 = vmul.f32 %v3109, %v4893
        %v4895 = vsub.f32 1.0, %v4894
        %v4896 = vmul.f32 %v4893, %v4895
        %v4897 = vadd.f32 %v4893, %v4896
        %vm4898 = vweird.f32 %v3109
        %vm4899 = vweird.f32 %v4893
        %vm4900 = vmor %vm4898, %vm4899
        %v4901 = vsel %vm4900, %v4893, %v4897
        %v4902 = vand.u32 2147483647, %v3109
        %vm4903 = vcmp.eq.f32.partialorder %v4902, 8.507059e+37
        %v4904 = vand.u32 %v3109, 2147483648
        %v4905 = vor.u32 1.1754944e-38, %v4904
        %v4906 = vsel %vm4903, %v4905, %v4901
        %v4907 = vmul.f32 1.0, %v4906
        %v4908 = vrcp.pop %v3110
        %v4909 = vmul.f32 %v3110, %v4908
        %v4910 = vsub.f32 1.0, %v4909
        %v4911 = vmul.f32 %v4908, %v4910
        %v4912 = vadd.f32 %v4908, %v4911
        %vm4913 = vweird.f32 %v3110
        %vm4914 = vweird.f32 %v4908
        %vm4915 = vmor %vm4913, %vm4914
        %v4916 = vsel %vm4915, %v4908, %v4912
        %v4917 = vand.u32 2147483647, %v3110
        %vm4918 = vcmp.eq.f32.partialorder %v4917, 8.507059e+37
        %v4919 = vand.u32 %v3110, 2147483648
        %v4920 = vor.u32 1.1754944e-38, %v4919
        %v4921 = vsel %vm4918, %v4920, %v4916
        %v4922 = vmul.f32 1.0, %v4921
        %v4923 = vrcp.pop %v3111
        %v4924 = vmul.f32 %v3111, %v4923
        %v4925 = vsub.f32 1.0, %v4924
        %v4926 = vmul.f32 %v4923, %v4925
        %v4927 = vadd.f32 %v4923, %v4926
        %vm4928 = vweird.f32 %v3111
        %vm4929 = vweird.f32 %v4923
        %vm4930 = vmor %vm4928, %vm4929
        %v4931 = vsel %vm4930, %v4923, %v4927
        %v4932 = vand.u32 2147483647, %v3111
        %vm4933 = vcmp.eq.f32.partialorder %v4932, 8.507059e+37
        %v4934 = vand.u32 %v3111, 2147483648
        %v4935 = vor.u32 1.1754944e-38, %v4934
        %v4936 = vsel %vm4933, %v4935, %v4931
        %v4937 = vmul.f32 1.0, %v4936
        %v4938 = vrcp.pop %v3112
        %v4939 = vmul.f32 %v3112, %v4938
        %v4940 = vsub.f32 1.0, %v4939
        %v4941 = vmul.f32 %v4938, %v4940
        %v4942 = vadd.f32 %v4938, %v4941
        %vm4943 = vweird.f32 %v3112
        %vm4944 = vweird.f32 %v4938
        %vm4945 = vmor %vm4943, %vm4944
        %v4946 = vsel %vm4945, %v4938, %v4942
        %v4947 = vand.u32 2147483647, %v3112
        %vm4948 = vcmp.eq.f32.partialorder %v4947, 8.507059e+37
        %v4949 = vand.u32 %v3112, 2147483648
        %v4950 = vor.u32 1.1754944e-38, %v4949
        %v4951 = vsel %vm4948, %v4950, %v4946
        %v4952 = vmul.f32 1.0, %v4951
        %v4953 = vrcp.pop %v3113
        %v4954 = vmul.f32 %v3113, %v4953
        %v4955 = vsub.f32 1.0, %v4954
        %v4956 = vmul.f32 %v4953, %v4955
        %v4957 = vadd.f32 %v4953, %v4956
        %vm4958 = vweird.f32 %v3113
        %vm4959 = vweird.f32 %v4953
        %vm4960 = vmor %vm4958, %vm4959
        %v4961 = vsel %vm4960, %v4953, %v4957
        %v4962 = vand.u32 2147483647, %v3113
        %vm4963 = vcmp.eq.f32.partialorder %v4962, 8.507059e+37
        %v4964 = vand.u32 %v3113, 2147483648
        %v4965 = vor.u32 1.1754944e-38, %v4964
        %v4966 = vsel %vm4963, %v4965, %v4961
        %v4967 = vmul.f32 1.0, %v4966
        %v4968 = vrcp.pop %v3114
        %v4969 = vmul.f32 %v3114, %v4968
        %v4970 = vsub.f32 1.0, %v4969
        %v4971 = vmul.f32 %v4968, %v4970
        %v4972 = vadd.f32 %v4968, %v4971
        %vm4973 = vweird.f32 %v3114
        %vm4974 = vweird.f32 %v4968
        %vm4975 = vmor %vm4973, %vm4974
        %v4976 = vsel %vm4975, %v4968, %v4972
        %v4977 = vand.u32 2147483647, %v3114
        %vm4978 = vcmp.eq.f32.partialorder %v4977, 8.507059e+37
        %v4979 = vand.u32 %v3114, 2147483648
        %v4980 = vor.u32 1.1754944e-38, %v4979
        %v4981 = vsel %vm4978, %v4980, %v4976
        %v4982 = vmul.f32 1.0, %v4981
        %v4983 = vrcp.pop %v3115
        %v4984 = vmul.f32 %v3115, %v4983
        %v4985 = vsub.f32 1.0, %v4984
        %v4986 = vmul.f32 %v4983, %v4985
        %v4987 = vadd.f32 %v4983, %v4986
        %vm4988 = vweird.f32 %v3115
        %vm4989 = vweird.f32 %v4983
        %vm4990 = vmor %vm4988, %vm4989
        %v4991 = vsel %vm4990, %v4983, %v4987
        %v4992 = vand.u32 2147483647, %v3115
        %vm4993 = vcmp.eq.f32.partialorder %v4992, 8.507059e+37
        %v4994 = vand.u32 %v3115, 2147483648
        %v4995 = vor.u32 1.1754944e-38, %v4994
        %v4996 = vsel %vm4993, %v4995, %v4991
        %v4997 = vmul.f32 1.0, %v4996
        %v4998 = vrcp.pop %v3116
        %v4999 = vmul.f32 %v3116, %v4998
        %v5000 = vsub.f32 1.0, %v4999
        %v5001 = vmul.f32 %v4998, %v5000
        %v5002 = vadd.f32 %v4998, %v5001
        %vm5003 = vweird.f32 %v3116
        %vm5004 = vweird.f32 %v4998
        %vm5005 = vmor %vm5003, %vm5004
        %v5006 = vsel %vm5005, %v4998, %v5002
        %v5007 = vand.u32 2147483647, %v3116
        %vm5008 = vcmp.eq.f32.partialorder %v5007, 8.507059e+37
        %v5009 = vand.u32 %v3116, 2147483648
        %v5010 = vor.u32 1.1754944e-38, %v5009
        %v5011 = vsel %vm5008, %v5010, %v5006
        %v5012 = vmul.f32 1.0, %v5011
        %v5013 = vrcp.pop %v3117
        %v5014 = vmul.f32 %v3117, %v5013
        %v5015 = vsub.f32 1.0, %v5014
        %v5016 = vmul.f32 %v5013, %v5015
        %v5017 = vadd.f32 %v5013, %v5016
        %vm5018 = vweird.f32 %v3117
        %vm5019 = vweird.f32 %v5013
        %vm5020 = vmor %vm5018, %vm5019
        %v5021 = vsel %vm5020, %v5013, %v5017
        %v5022 = vand.u32 2147483647, %v3117
        %vm5023 = vcmp.eq.f32.partialorder %v5022, 8.507059e+37
        %v5024 = vand.u32 %v3117, 2147483648
        %v5025 = vor.u32 1.1754944e-38, %v5024
        %v5026 = vsel %vm5023, %v5025, %v5021
        %v5027 = vmul.f32 1.0, %v5026
        %v5028 = vrcp.pop %v3118
        %v5029 = vmul.f32 %v3118, %v5028
        %v5030 = vsub.f32 1.0, %v5029
        %v5031 = vmul.f32 %v5028, %v5030
        %v5032 = vadd.f32 %v5028, %v5031
        %vm5033 = vweird.f32 %v3118
        %vm5034 = vweird.f32 %v5028
        %vm5035 = vmor %vm5033, %vm5034
        %v5036 = vsel %vm5035, %v5028, %v5032
        %v5037 = vand.u32 2147483647, %v3118
        %vm5038 = vcmp.eq.f32.partialorder %v5037, 8.507059e+37
        %v5039 = vand.u32 %v3118, 2147483648
        %v5040 = vor.u32 1.1754944e-38, %v5039
        %v5041 = vsel %vm5038, %v5040, %v5036
        %v5042 = vmul.f32 1.0, %v5041
        %v5043 = vrcp.pop %v3119
        %v5044 = vmul.f32 %v3119, %v5043
        %v5045 = vsub.f32 1.0, %v5044
        %v5046 = vmul.f32 %v5043, %v5045
        %v5047 = vadd.f32 %v5043, %v5046
        %vm5048 = vweird.f32 %v3119
        %vm5049 = vweird.f32 %v5043
        %vm5050 = vmor %vm5048, %vm5049
        %v5051 = vsel %vm5050, %v5043, %v5047
        %v5052 = vand.u32 2147483647, %v3119
        %vm5053 = vcmp.eq.f32.partialorder %v5052, 8.507059e+37
        %v5054 = vand.u32 %v3119, 2147483648
        %v5055 = vor.u32 1.1754944e-38, %v5054
        %v5056 = vsel %vm5053, %v5055, %v5051
        %v5057 = vmul.f32 1.0, %v5056
        %v5058 = vrcp.pop %v3120
        %v5059 = vmul.f32 %v3120, %v5058
        %v5060 = vsub.f32 1.0, %v5059
        %v5061 = vmul.f32 %v5058, %v5060
        %v5062 = vadd.f32 %v5058, %v5061
        %vm5063 = vweird.f32 %v3120
        %vm5064 = vweird.f32 %v5058
        %vm5065 = vmor %vm5063, %vm5064
        %v5066 = vsel %vm5065, %v5058, %v5062
        %v5067 = vand.u32 2147483647, %v3120
        %vm5068 = vcmp.eq.f32.partialorder %v5067, 8.507059e+37
        %v5069 = vand.u32 %v3120, 2147483648
        %v5070 = vor.u32 1.1754944e-38, %v5069
        %v5071 = vsel %vm5068, %v5070, %v5066
        %v5072 = vmul.f32 1.0, %v5071
        %v5073 = vrcp.pop %v3121
        %v5074 = vmul.f32 %v3121, %v5073
        %v5075 = vsub.f32 1.0, %v5074
        %v5076 = vmul.f32 %v5073, %v5075
        %v5077 = vadd.f32 %v5073, %v5076
        %vm5078 = vweird.f32 %v3121
        %vm5079 = vweird.f32 %v5073
        %vm5080 = vmor %vm5078, %vm5079
        %v5081 = vsel %vm5080, %v5073, %v5077
        %v5082 = vand.u32 2147483647, %v3121
        %vm5083 = vcmp.eq.f32.partialorder %v5082, 8.507059e+37
        %v5084 = vand.u32 %v3121, 2147483648
        %v5085 = vor.u32 1.1754944e-38, %v5084
        %v5086 = vsel %vm5083, %v5085, %v5081
        %v5087 = vmul.f32 1.0, %v5086
        %v5088 = vrcp.pop %v3122
        %v5089 = vmul.f32 %v3122, %v5088
        %v5090 = vsub.f32 1.0, %v5089
        %v5091 = vmul.f32 %v5088, %v5090
        %v5092 = vadd.f32 %v5088, %v5091
        %vm5093 = vweird.f32 %v3122
        %vm5094 = vweird.f32 %v5088
        %vm5095 = vmor %vm5093, %vm5094
        %v5096 = vsel %vm5095, %v5088, %v5092
        %v5097 = vand.u32 2147483647, %v3122
        %vm5098 = vcmp.eq.f32.partialorder %v5097, 8.507059e+37
        %v5099 = vand.u32 %v3122, 2147483648
        %v5100 = vor.u32 1.1754944e-38, %v5099
        %v5101 = vsel %vm5098, %v5100, %v5096
        %v5102 = vmul.f32 1.0, %v5101
        %v5103 = vrcp.pop %v3123
        %v5104 = vmul.f32 %v3123, %v5103
        %v5105 = vsub.f32 1.0, %v5104
        %v5106 = vmul.f32 %v5103, %v5105
        %v5107 = vadd.f32 %v5103, %v5106
        %vm5108 = vweird.f32 %v3123
        %vm5109 = vweird.f32 %v5103
        %vm5110 = vmor %vm5108, %vm5109
        %v5111 = vsel %vm5110, %v5103, %v5107
        %v5112 = vand.u32 2147483647, %v3123
        %vm5113 = vcmp.eq.f32.partialorder %v5112, 8.507059e+37
        %v5114 = vand.u32 %v3123, 2147483648
        %v5115 = vor.u32 1.1754944e-38, %v5114
        %v5116 = vsel %vm5113, %v5115, %v5111
        %v5117 = vmul.f32 1.0, %v5116
        %v5118 = vrcp.pop %v3124
        %v5119 = vmul.f32 %v3124, %v5118
        %v5120 = vsub.f32 1.0, %v5119
        %v5121 = vmul.f32 %v5118, %v5120
        %v5122 = vadd.f32 %v5118, %v5121
        %vm5123 = vweird.f32 %v3124
        %vm5124 = vweird.f32 %v5118
        %vm5125 = vmor %vm5123, %vm5124
        %v5126 = vsel %vm5125, %v5118, %v5122
        %v5127 = vand.u32 2147483647, %v3124
        %vm5128 = vcmp.eq.f32.partialorder %v5127, 8.507059e+37
        %v5129 = vand.u32 %v3124, 2147483648
        %v5130 = vor.u32 1.1754944e-38, %v5129
        %v5131 = vsel %vm5128, %v5130, %v5126
        %v5132 = vmul.f32 1.0, %v5131
        %v5133 = vrcp.pop %v3125
        %v5134 = vmul.f32 %v3125, %v5133
        %v5135 = vsub.f32 1.0, %v5134
        %v5136 = vmul.f32 %v5133, %v5135
        %v5137 = vadd.f32 %v5133, %v5136
        %vm5138 = vweird.f32 %v3125
        %vm5139 = vweird.f32 %v5133
        %vm5140 = vmor %vm5138, %vm5139
        %v5141 = vsel %vm5140, %v5133, %v5137
        %v5142 = vand.u32 2147483647, %v3125
        %vm5143 = vcmp.eq.f32.partialorder %v5142, 8.507059e+37
        %v5144 = vand.u32 %v3125, 2147483648
        %v5145 = vor.u32 1.1754944e-38, %v5144
        %v5146 = vsel %vm5143, %v5145, %v5141
        %v5147 = vmul.f32 1.0, %v5146
        %v5148 = vrcp.pop %v3126
        %v5149 = vmul.f32 %v3126, %v5148
        %v5150 = vsub.f32 1.0, %v5149
        %v5151 = vmul.f32 %v5148, %v5150
        %v5152 = vadd.f32 %v5148, %v5151
        %vm5153 = vweird.f32 %v3126
        %vm5154 = vweird.f32 %v5148
        %vm5155 = vmor %vm5153, %vm5154
        %v5156 = vsel %vm5155, %v5148, %v5152
        %v5157 = vand.u32 2147483647, %v3126
        %vm5158 = vcmp.eq.f32.partialorder %v5157, 8.507059e+37
        %v5159 = vand.u32 %v3126, 2147483648
        %v5160 = vor.u32 1.1754944e-38, %v5159
        %v5161 = vsel %vm5158, %v5160, %v5156
        %v5162 = vmul.f32 1.0, %v5161
        %v5163 = vrcp.pop %v3127
        %v5164 = vmul.f32 %v3127, %v5163
        %v5165 = vsub.f32 1.0, %v5164
        %v5166 = vmul.f32 %v5163, %v5165
        %v5167 = vadd.f32 %v5163, %v5166
        %vm5168 = vweird.f32 %v3127
        %vm5169 = vweird.f32 %v5163
        %vm5170 = vmor %vm5168, %vm5169
        %v5171 = vsel %vm5170, %v5163, %v5167
        %v5172 = vand.u32 2147483647, %v3127
        %vm5173 = vcmp.eq.f32.partialorder %v5172, 8.507059e+37
        %v5174 = vand.u32 %v3127, 2147483648
        %v5175 = vor.u32 1.1754944e-38, %v5174
        %v5176 = vsel %vm5173, %v5175, %v5171
        %v5177 = vmul.f32 1.0, %v5176
        %v5178 = vrcp.pop %v3128
        %v5179 = vmul.f32 %v3128, %v5178
        %v5180 = vsub.f32 1.0, %v5179
        %v5181 = vmul.f32 %v5178, %v5180
        %v5182 = vadd.f32 %v5178, %v5181
        %vm5183 = vweird.f32 %v3128
        %vm5184 = vweird.f32 %v5178
        %vm5185 = vmor %vm5183, %vm5184
        %v5186 = vsel %vm5185, %v5178, %v5182
        %v5187 = vand.u32 2147483647, %v3128
        %vm5188 = vcmp.eq.f32.partialorder %v5187, 8.507059e+37
        %v5189 = vand.u32 %v3128, 2147483648
        %v5190 = vor.u32 1.1754944e-38, %v5189
        %v5191 = vsel %vm5188, %v5190, %v5186
        %v5192 = vmul.f32 1.0, %v5191
        %v5193 = vrcp.pop %v3129
        %v5194 = vmul.f32 %v3129, %v5193
        %v5195 = vsub.f32 1.0, %v5194
        %v5196 = vmul.f32 %v5193, %v5195
        %v5197 = vadd.f32 %v5193, %v5196
        %vm5198 = vweird.f32 %v3129
        %vm5199 = vweird.f32 %v5193
        %vm5200 = vmor %vm5198, %vm5199
        %v5201 = vsel %vm5200, %v5193, %v5197
        %v5202 = vand.u32 2147483647, %v3129
        %vm5203 = vcmp.eq.f32.partialorder %v5202, 8.507059e+37
        %v5204 = vand.u32 %v3129, 2147483648
        %v5205 = vor.u32 1.1754944e-38, %v5204
        %v5206 = vsel %vm5203, %v5205, %v5201
        %v5207 = vmul.f32 1.0, %v5206
        %v5208 = vrcp.pop %v3130
        %v5209 = vmul.f32 %v3130, %v5208
        %v5210 = vsub.f32 1.0, %v5209
        %v5211 = vmul.f32 %v5208, %v5210
        %v5212 = vadd.f32 %v5208, %v5211
        %vm5213 = vweird.f32 %v3130
        %vm5214 = vweird.f32 %v5208
        %vm5215 = vmor %vm5213, %vm5214
        %v5216 = vsel %vm5215, %v5208, %v5212
        %v5217 = vand.u32 2147483647, %v3130
        %vm5218 = vcmp.eq.f32.partialorder %v5217, 8.507059e+37
        %v5219 = vand.u32 %v3130, 2147483648
        %v5220 = vor.u32 1.1754944e-38, %v5219
        %v5221 = vsel %vm5218, %v5220, %v5216
        %v5222 = vmul.f32 1.0, %v5221
        %v5223 = vrcp.pop %v3131
        %v5224 = vmul.f32 %v3131, %v5223
        %v5225 = vsub.f32 1.0, %v5224
        %v5226 = vmul.f32 %v5223, %v5225
        %v5227 = vadd.f32 %v5223, %v5226
        %vm5228 = vweird.f32 %v3131
        %vm5229 = vweird.f32 %v5223
        %vm5230 = vmor %vm5228, %vm5229
        %v5231 = vsel %vm5230, %v5223, %v5227
        %v5232 = vand.u32 2147483647, %v3131
        %vm5233 = vcmp.eq.f32.partialorder %v5232, 8.507059e+37
        %v5234 = vand.u32 %v3131, 2147483648
        %v5235 = vor.u32 1.1754944e-38, %v5234
        %v5236 = vsel %vm5233, %v5235, %v5231
        %v5237 = vmul.f32 1.0, %v5236
        %v5238 = vrcp.pop %v3132
        %v5239 = vmul.f32 %v3132, %v5238
        %v5240 = vsub.f32 1.0, %v5239
        %v5241 = vmul.f32 %v5238, %v5240
        %v5242 = vadd.f32 %v5238, %v5241
        %vm5243 = vweird.f32 %v3132
        %vm5244 = vweird.f32 %v5238
        %vm5245 = vmor %vm5243, %vm5244
        %v5246 = vsel %vm5245, %v5238, %v5242
        %v5247 = vand.u32 2147483647, %v3132
        %vm5248 = vcmp.eq.f32.partialorder %v5247, 8.507059e+37
        %v5249 = vand.u32 %v3132, 2147483648
        %v5250 = vor.u32 1.1754944e-38, %v5249
        %v5251 = vsel %vm5248, %v5250, %v5246
        %v5252 = vmul.f32 1.0, %v5251
        %v5253 = vrcp.pop %v3133
        %v5254 = vmul.f32 %v3133, %v5253
        %v5255 = vsub.f32 1.0, %v5254
        %v5256 = vmul.f32 %v5253, %v5255
        %v5257 = vadd.f32 %v5253, %v5256
        %vm5258 = vweird.f32 %v3133
        %vm5259 = vweird.f32 %v5253
        %vm5260 = vmor %vm5258, %vm5259
        %v5261 = vsel %vm5260, %v5253, %v5257
        %v5262 = vand.u32 2147483647, %v3133
        %vm5263 = vcmp.eq.f32.partialorder %v5262, 8.507059e+37
        %v5264 = vand.u32 %v3133, 2147483648
        %v5265 = vor.u32 1.1754944e-38, %v5264
        %v5266 = vsel %vm5263, %v5265, %v5261
        %v5267 = vmul.f32 1.0, %v5266
        %v5268 = vrcp.pop %v3134
        %v5269 = vmul.f32 %v3134, %v5268
        %v5270 = vsub.f32 1.0, %v5269
        %v5271 = vmul.f32 %v5268, %v5270
        %v5272 = vadd.f32 %v5268, %v5271
        %vm5273 = vweird.f32 %v3134
        %vm5274 = vweird.f32 %v5268
        %vm5275 = vmor %vm5273, %vm5274
        %v5276 = vsel %vm5275, %v5268, %v5272
        %v5277 = vand.u32 2147483647, %v3134
        %vm5278 = vcmp.eq.f32.partialorder %v5277, 8.507059e+37
        %v5279 = vand.u32 %v3134, 2147483648
        %v5280 = vor.u32 1.1754944e-38, %v5279
        %v5281 = vsel %vm5278, %v5280, %v5276
        %v5282 = vmul.f32 1.0, %v5281
        %v5283 = vrcp.pop %v3135
        %v5284 = vmul.f32 %v3135, %v5283
        %v5285 = vsub.f32 1.0, %v5284
        %v5286 = vmul.f32 %v5283, %v5285
        %v5287 = vadd.f32 %v5283, %v5286
        %vm5288 = vweird.f32 %v3135
        %vm5289 = vweird.f32 %v5283
        %vm5290 = vmor %vm5288, %vm5289
        %v5291 = vsel %vm5290, %v5283, %v5287
        %v5292 = vand.u32 2147483647, %v3135
        %vm5293 = vcmp.eq.f32.partialorder %v5292, 8.507059e+37
        %v5294 = vand.u32 %v3135, 2147483648
        %v5295 = vor.u32 1.1754944e-38, %v5294
        %v5296 = vsel %vm5293, %v5295, %v5291
        %v5297 = vmul.f32 1.0, %v5296
        %v5298 = vrcp.pop %v3136
        %v5299 = vmul.f32 %v3136, %v5298
        %v5300 = vsub.f32 1.0, %v5299
        %v5301 = vmul.f32 %v5298, %v5300
        %v5302 = vadd.f32 %v5298, %v5301
        %vm5303 = vweird.f32 %v3136
        %vm5304 = vweird.f32 %v5298
        %vm5305 = vmor %vm5303, %vm5304
        %v5306 = vsel %vm5305, %v5298, %v5302
        %v5307 = vand.u32 2147483647, %v3136
        %vm5308 = vcmp.eq.f32.partialorder %v5307, 8.507059e+37
        %v5309 = vand.u32 %v3136, 2147483648
        %v5310 = vor.u32 1.1754944e-38, %v5309
        %v5311 = vsel %vm5308, %v5310, %v5306
        %v5312 = vmul.f32 1.0, %v5311
        %v5313 = vrcp.pop %v3137
        %v5314 = vmul.f32 %v3137, %v5313
        %v5315 = vsub.f32 1.0, %v5314
        %v5316 = vmul.f32 %v5313, %v5315
        %v5317 = vadd.f32 %v5313, %v5316
        %vm5318 = vweird.f32 %v3137
        %vm5319 = vweird.f32 %v5313
        %vm5320 = vmor %vm5318, %vm5319
        %v5321 = vsel %vm5320, %v5313, %v5317
        %v5322 = vand.u32 2147483647, %v3137
        %vm5323 = vcmp.eq.f32.partialorder %v5322, 8.507059e+37
        %v5324 = vand.u32 %v3137, 2147483648
        %v5325 = vor.u32 1.1754944e-38, %v5324
        %v5326 = vsel %vm5323, %v5325, %v5321
        %v5327 = vmul.f32 1.0, %v5326
        %v5328 = vrcp.pop %v3138
        %v5329 = vmul.f32 %v3138, %v5328
        %v5330 = vsub.f32 1.0, %v5329
        %v5331 = vmul.f32 %v5328, %v5330
        %v5332 = vadd.f32 %v5328, %v5331
        %vm5333 = vweird.f32 %v3138
        %vm5334 = vweird.f32 %v5328
        %vm5335 = vmor %vm5333, %vm5334
        %v5336 = vsel %vm5335, %v5328, %v5332
        %v5337 = vand.u32 2147483647, %v3138
        %vm5338 = vcmp.eq.f32.partialorder %v5337, 8.507059e+37
        %v5339 = vand.u32 %v3138, 2147483648
        %v5340 = vor.u32 1.1754944e-38, %v5339
        %v5341 = vsel %vm5338, %v5340, %v5336
        %v5342 = vmul.f32 1.0, %v5341
        %v5343 = vrcp.pop %v3139
        %v5344 = vmul.f32 %v3139, %v5343
        %v5345 = vsub.f32 1.0, %v5344
        %v5346 = vmul.f32 %v5343, %v5345
        %v5347 = vadd.f32 %v5343, %v5346
        %vm5348 = vweird.f32 %v3139
        %vm5349 = vweird.f32 %v5343
        %vm5350 = vmor %vm5348, %vm5349
        %v5351 = vsel %vm5350, %v5343, %v5347
        %v5352 = vand.u32 2147483647, %v3139
        %vm5353 = vcmp.eq.f32.partialorder %v5352, 8.507059e+37
        %v5354 = vand.u32 %v3139, 2147483648
        %v5355 = vor.u32 1.1754944e-38, %v5354
        %v5356 = vsel %vm5353, %v5355, %v5351
        %v5357 = vmul.f32 1.0, %v5356
        %v5358 = vrcp.pop %v3140
        %v5359 = vmul.f32 %v3140, %v5358
        %v5360 = vsub.f32 1.0, %v5359
        %v5361 = vmul.f32 %v5358, %v5360
        %v5362 = vadd.f32 %v5358, %v5361
        %vm5363 = vweird.f32 %v3140
        %vm5364 = vweird.f32 %v5358
        %vm5365 = vmor %vm5363, %vm5364
        %v5366 = vsel %vm5365, %v5358, %v5362
        %v5367 = vand.u32 2147483647, %v3140
        %vm5368 = vcmp.eq.f32.partialorder %v5367, 8.507059e+37
        %v5369 = vand.u32 %v3140, 2147483648
        %v5370 = vor.u32 1.1754944e-38, %v5369
        %v5371 = vsel %vm5368, %v5370, %v5366
        %v5372 = vmul.f32 1.0, %v5371
        %v5373 = vrcp.pop %v3141
        %v5374 = vmul.f32 %v3141, %v5373
        %v5375 = vsub.f32 1.0, %v5374
        %v5376 = vmul.f32 %v5373, %v5375
        %v5377 = vadd.f32 %v5373, %v5376
        %vm5378 = vweird.f32 %v3141
        %vm5379 = vweird.f32 %v5373
        %vm5380 = vmor %vm5378, %vm5379
        %v5381 = vsel %vm5380, %v5373, %v5377
        %v5382 = vand.u32 2147483647, %v3141
        %vm5383 = vcmp.eq.f32.partialorder %v5382, 8.507059e+37
        %v5384 = vand.u32 %v3141, 2147483648
        %v5385 = vor.u32 1.1754944e-38, %v5384
        %v5386 = vsel %vm5383, %v5385, %v5381
        %v5387 = vmul.f32 1.0, %v5386
        %v5388 = vrcp.pop %v3142
        %v5389 = vmul.f32 %v3142, %v5388
        %v5390 = vsub.f32 1.0, %v5389
        %v5391 = vmul.f32 %v5388, %v5390
        %v5392 = vadd.f32 %v5388, %v5391
        %vm5393 = vweird.f32 %v3142
        %vm5394 = vweird.f32 %v5388
        %vm5395 = vmor %vm5393, %vm5394
        %v5396 = vsel %vm5395, %v5388, %v5392
        %v5397 = vand.u32 2147483647, %v3142
        %vm5398 = vcmp.eq.f32.partialorder %v5397, 8.507059e+37
        %v5399 = vand.u32 %v3142, 2147483648
        %v5400 = vor.u32 1.1754944e-38, %v5399
        %v5401 = vsel %vm5398, %v5400, %v5396
        %v5402 = vmul.f32 1.0, %v5401
        %v5403 = vrcp.pop %v3143
        %v5404 = vmul.f32 %v3143, %v5403
        %v5405 = vsub.f32 1.0, %v5404
        %v5406 = vmul.f32 %v5403, %v5405
        %v5407 = vadd.f32 %v5403, %v5406
        %vm5408 = vweird.f32 %v3143
        %vm5409 = vweird.f32 %v5403
        %vm5410 = vmor %vm5408, %vm5409
        %v5411 = vsel %vm5410, %v5403, %v5407
        %v5412 = vand.u32 2147483647, %v3143
        %vm5413 = vcmp.eq.f32.partialorder %v5412, 8.507059e+37
        %v5414 = vand.u32 %v3143, 2147483648
        %v5415 = vor.u32 1.1754944e-38, %v5414
        %v5416 = vsel %vm5413, %v5415, %v5411
        %v5417 = vmul.f32 1.0, %v5416
        %v5418 = vrcp.pop %v3144
        %v5419 = vmul.f32 %v3144, %v5418
        %v5420 = vsub.f32 1.0, %v5419
        %v5421 = vmul.f32 %v5418, %v5420
        %v5422 = vadd.f32 %v5418, %v5421
        %vm5423 = vweird.f32 %v3144
        %vm5424 = vweird.f32 %v5418
        %vm5425 = vmor %vm5423, %vm5424
        %v5426 = vsel %vm5425, %v5418, %v5422
        %v5427 = vand.u32 2147483647, %v3144
        %vm5428 = vcmp.eq.f32.partialorder %v5427, 8.507059e+37
        %v5429 = vand.u32 %v3144, 2147483648
        %v5430 = vor.u32 1.1754944e-38, %v5429
        %v5431 = vsel %vm5428, %v5430, %v5426
        %v5432 = vmul.f32 1.0, %v5431
        %v5433 = vrcp.pop %v3145
        %v5434 = vmul.f32 %v3145, %v5433
        %v5435 = vsub.f32 1.0, %v5434
        %v5436 = vmul.f32 %v5433, %v5435
        %v5437 = vadd.f32 %v5433, %v5436
        %vm5438 = vweird.f32 %v3145
        %vm5439 = vweird.f32 %v5433
        %vm5440 = vmor %vm5438, %vm5439
        %v5441 = vsel %vm5440, %v5433, %v5437
        %v5442 = vand.u32 2147483647, %v3145
        %vm5443 = vcmp.eq.f32.partialorder %v5442, 8.507059e+37
        %v5444 = vand.u32 %v3145, 2147483648
        %v5445 = vor.u32 1.1754944e-38, %v5444
        %v5446 = vsel %vm5443, %v5445, %v5441
        %v5447 = vmul.f32 1.0, %v5446
        %v5448 = vrcp.pop %v3146
        %v5449 = vmul.f32 %v3146, %v5448
        %v5450 = vsub.f32 1.0, %v5449
        %v5451 = vmul.f32 %v5448, %v5450
        %v5452 = vadd.f32 %v5448, %v5451
        %vm5453 = vweird.f32 %v3146
        %vm5454 = vweird.f32 %v5448
        %vm5455 = vmor %vm5453, %vm5454
        %v5456 = vsel %vm5455, %v5448, %v5452
        %v5457 = vand.u32 2147483647, %v3146
        %vm5458 = vcmp.eq.f32.partialorder %v5457, 8.507059e+37
        %v5459 = vand.u32 %v3146, 2147483648
        %v5460 = vor.u32 1.1754944e-38, %v5459
        %v5461 = vsel %vm5458, %v5460, %v5456
        %v5462 = vmul.f32 1.0, %v5461
        %v5463 = vrcp.pop %v3147
        %v5464 = vmul.f32 %v3147, %v5463
        %v5465 = vsub.f32 1.0, %v5464
        %v5466 = vmul.f32 %v5463, %v5465
        %v5467 = vadd.f32 %v5463, %v5466
        %vm5468 = vweird.f32 %v3147
        %vm5469 = vweird.f32 %v5463
        %vm5470 = vmor %vm5468, %vm5469
        %v5471 = vsel %vm5470, %v5463, %v5467
        %v5472 = vand.u32 2147483647, %v3147
        %vm5473 = vcmp.eq.f32.partialorder %v5472, 8.507059e+37
        %v5474 = vand.u32 %v3147, 2147483648
        %v5475 = vor.u32 1.1754944e-38, %v5474
        %v5476 = vsel %vm5473, %v5475, %v5471
        %v5477 = vmul.f32 1.0, %v5476
        %v5478 = vrcp.pop %v3148
        %v5479 = vmul.f32 %v3148, %v5478
        %v5480 = vsub.f32 1.0, %v5479
        %v5481 = vmul.f32 %v5478, %v5480
        %v5482 = vadd.f32 %v5478, %v5481
        %vm5483 = vweird.f32 %v3148
        %vm5484 = vweird.f32 %v5478
        %vm5485 = vmor %vm5483, %vm5484
        %v5486 = vsel %vm5485, %v5478, %v5482
        %v5487 = vand.u32 2147483647, %v3148
        %vm5488 = vcmp.eq.f32.partialorder %v5487, 8.507059e+37
        %v5489 = vand.u32 %v3148, 2147483648
        %v5490 = vor.u32 1.1754944e-38, %v5489
        %v5491 = vsel %vm5488, %v5490, %v5486
        %v5492 = vmul.f32 1.0, %v5491
        %v5493 = vrcp.pop %v3149
        %v5494 = vmul.f32 %v3149, %v5493
        %v5495 = vsub.f32 1.0, %v5494
        %v5496 = vmul.f32 %v5493, %v5495
        %v5497 = vadd.f32 %v5493, %v5496
        %vm5498 = vweird.f32 %v3149
        %vm5499 = vweird.f32 %v5493
        %vm5500 = vmor %vm5498, %vm5499
        %v5501 = vsel %vm5500, %v5493, %v5497
        %v5502 = vand.u32 2147483647, %v3149
        %vm5503 = vcmp.eq.f32.partialorder %v5502, 8.507059e+37
        %v5504 = vand.u32 %v3149, 2147483648
        %v5505 = vor.u32 1.1754944e-38, %v5504
        %v5506 = vsel %vm5503, %v5505, %v5501
        %v5507 = vmul.f32 1.0, %v5506
        %v5508 = vrcp.pop %v3150
        %v5509 = vmul.f32 %v3150, %v5508
        %v5510 = vsub.f32 1.0, %v5509
        %v5511 = vmul.f32 %v5508, %v5510
        %v5512 = vadd.f32 %v5508, %v5511
        %vm5513 = vweird.f32 %v3150
        %vm5514 = vweird.f32 %v5508
        %vm5515 = vmor %vm5513, %vm5514
        %v5516 = vsel %vm5515, %v5508, %v5512
        %v5517 = vand.u32 2147483647, %v3150
        %vm5518 = vcmp.eq.f32.partialorder %v5517, 8.507059e+37
        %v5519 = vand.u32 %v3150, 2147483648
        %v5520 = vor.u32 1.1754944e-38, %v5519
        %v5521 = vsel %vm5518, %v5520, %v5516
        %v5522 = vmul.f32 1.0, %v5521
        %v5523 = vrcp.pop %v3151
        %v5524 = vmul.f32 %v3151, %v5523
        %v5525 = vsub.f32 1.0, %v5524
        %v5526 = vmul.f32 %v5523, %v5525
        %v5527 = vadd.f32 %v5523, %v5526
        %vm5528 = vweird.f32 %v3151
        %vm5529 = vweird.f32 %v5523
        %vm5530 = vmor %vm5528, %vm5529
        %v5531 = vsel %vm5530, %v5523, %v5527
        %v5532 = vand.u32 2147483647, %v3151
        %vm5533 = vcmp.eq.f32.partialorder %v5532, 8.507059e+37
        %v5534 = vand.u32 %v3151, 2147483648
        %v5535 = vor.u32 1.1754944e-38, %v5534
        %v5536 = vsel %vm5533, %v5535, %v5531
        %v5537 = vmul.f32 1.0, %v5536
        %v5538 = vrcp.pop %v3152
        %v5539 = vmul.f32 %v3152, %v5538
        %v5540 = vsub.f32 1.0, %v5539
        %v5541 = vmul.f32 %v5538, %v5540
        %v5542 = vadd.f32 %v5538, %v5541
        %vm5543 = vweird.f32 %v3152
        %vm5544 = vweird.f32 %v5538
        %vm5545 = vmor %vm5543, %vm5544
        %v5546 = vsel %vm5545, %v5538, %v5542
        %v5547 = vand.u32 2147483647, %v3152
        %vm5548 = vcmp.eq.f32.partialorder %v5547, 8.507059e+37
        %v5549 = vand.u32 %v3152, 2147483648
        %v5550 = vor.u32 1.1754944e-38, %v5549
        %v5551 = vsel %vm5548, %v5550, %v5546
        %v5552 = vmul.f32 1.0, %v5551
        %v5553 = vmul.f32 %v2034, %v3167
        %v5554 = vmul.f32 %v2037, %v3182
        %v5555 = vmul.f32 %v2040, %v3197
        %v5556 = vmul.f32 %v2043, %v3212
        %v5557 = vmul.f32 %v2046, %v3227
        %v5558 = vmul.f32 %v2049, %v3242
        %v5559 = vmul.f32 %v2052, %v3257
        %v5560 = vmul.f32 %v2055, %v3272
        %v5561 = vmul.f32 %v2058, %v3287
        %v5562 = vmul.f32 %v2061, %v3302
        %v5563 = vmul.f32 %v2064, %v3317
        %v5564 = vmul.f32 %v2067, %v3332
        %v5565 = vmul.f32 %v2070, %v3347
        %v5566 = vmul.f32 %v2073, %v3362
        %v5567 = vmul.f32 %v2076, %v3377
        %v5568 = vmul.f32 %v2079, %v3392
        %v5569 = vmul.f32 %v2082, %v3407
        %v5570 = vmul.f32 %v2085, %v3422
        %v5571 = vmul.f32 %v2088, %v3437
        %v5572 = vmul.f32 %v2091, %v3452
        %v5573 = vmul.f32 %v2094, %v3467
        %v5574 = vmul.f32 %v2097, %v3482
        %v5575 = vmul.f32 %v2100, %v3497
        %v5576 = vmul.f32 %v2103, %v3512
        %v5577 = vmul.f32 %v2106, %v3527
        %v5578 = vmul.f32 %v2109, %v3542
        %v5579 = vmul.f32 %v2112, %v3557
        %v5580 = vmul.f32 %v2115, %v3572
        %v5581 = vmul.f32 %v2118, %v3587
        %v5582 = vmul.f32 %v2121, %v3602
        %v5583 = vmul.f32 %v2124, %v3617
        %v5584 = vmul.f32 %v2127, %v3632
        %v5585 = vmul.f32 %v2130, %v3647
        %v5586 = vmul.f32 %v2133, %v3662
        %v5587 = vmul.f32 %v2136, %v3677
        %v5588 = vmul.f32 %v2139, %v3692
        %v5589 = vmul.f32 %v2142, %v3707
        %v5590 = vmul.f32 %v2145, %v3722
        %v5591 = vmul.f32 %v2148, %v3737
        %v5592 = vmul.f32 %v2151, %v3752
        %v5593 = vmul.f32 %v2154, %v3767
        %v5594 = vmul.f32 %v2157, %v3782
        %v5595 = vmul.f32 %v2160, %v3797
        %v5596 = vmul.f32 %v2163, %v3812
        %v5597 = vmul.f32 %v2166, %v3827
        %v5598 = vmul.f32 %v2169, %v3842
        %v5599 = vmul.f32 %v2172, %v3857
        %v5600 = vmul.f32 %v2175, %v3872
        %v5601 = vmul.f32 %v2178, %v3887
        %v5602 = vmul.f32 %v2181, %v3902
        %v5603 = vmul.f32 %v2184, %v3917
        %v5604 = vmul.f32 %v2187, %v3932
        %v5605 = vmul.f32 %v2190, %v3947
        %v5606 = vmul.f32 %v2193, %v3962
        %v5607 = vmul.f32 %v2196, %v3977
        %v5608 = vmul.f32 %v2199, %v3992
        %v5609 = vmul.f32 %v2202, %v4007
        %v5610 = vmul.f32 %v2205, %v4022
        %v5611 = vmul.f32 %v2208, %v4037
        %v5612 = vmul.f32 %v2211, %v4052
        %v5613 = vmul.f32 %v2214, %v4067
        %v5614 = vmul.f32 %v2217, %v4082
        %v5615 = vmul.f32 %v2220, %v4097
        %v5616 = vmul.f32 %v2223, %v4112
        %v5617 = vmul.f32 %v2226, %v4127
        %v5618 = vmul.f32 %v2229, %v4142
        %v5619 = vmul.f32 %v2232, %v4157
        %v5620 = vmul.f32 %v2235, %v4172
        %v5621 = vmul.f32 %v2238, %v4187
        %v5622 = vmul.f32 %v2241, %v4202
        %v5623 = vmul.f32 %v2244, %v4217
        %v5624 = vmul.f32 %v2247, %v4232
        %v5625 = vmul.f32 %v2250, %v4247
        %v5626 = vmul.f32 %v2253, %v4262
        %v5627 = vmul.f32 %v2256, %v4277
        %v5628 = vmul.f32 %v2259, %v4292
        %v5629 = vmul.f32 %v2262, %v4307
        %v5630 = vmul.f32 %v2265, %v4322
        %v5631 = vmul.f32 %v2268, %v4337
        %v5632 = vmul.f32 %v2271, %v4352
        %v5633 = vmul.f32 %v2274, %v4367
        %v5634 = vmul.f32 %v2277, %v4382
        %v5635 = vmul.f32 %v2280, %v4397
        %v5636 = vmul.f32 %v2283, %v4412
        %v5637 = vmul.f32 %v2286, %v4427
        %v5638 = vmul.f32 %v2289, %v4442
        %v5639 = vmul.f32 %v2292, %v4457
        %v5640 = vmul.f32 %v2295, %v4472
        %v5641 = vmul.f32 %v2298, %v4487
        %v5642 = vmul.f32 %v2301, %v4502
        %v5643 = vmul.f32 %v2304, %v4517
        %v5644 = vmul.f32 %v2307, %v4532
        %v5645 = vmul.f32 %v2310, %v4547
        %v5646 = vmul.f32 %v2313, %v4562
        %v5647 = vmul.f32 %v2316, %v4577
        %v5648 = vmul.f32 %v2319, %v4592
        %v5649 = vmul.f32 %v2322, %v4607
        %v5650 = vmul.f32 %v2325, %v4622
        %v5651 = vmul.f32 %v2328, %v4637
        %v5652 = vmul.f32 %v2331, %v4652
        %v5653 = vmul.f32 %v2334, %v4667
        %v5654 = vmul.f32 %v2337, %v4682
        %v5655 = vmul.f32 %v2340, %v4697
        %v5656 = vmul.f32 %v2343, %v4712
        %v5657 = vmul.f32 %v2346, %v4727
        %v5658 = vmul.f32 %v2349, %v4742
        %v5659 = vmul.f32 %v2352, %v4757
        %v5660 = vmul.f32 %v2355, %v4772
        %v5661 = vmul.f32 %v2358, %v4787
        %v5662 = vmul.f32 %v2361, %v4802
        %v5663 = vmul.f32 %v2364, %v4817
        %v5664 = vmul.f32 %v2367, %v4832
        %v5665 = vmul.f32 %v2370, %v4847
        %v5666 = vmul.f32 %v2373, %v4862
        %v5667 = vmul.f32 %v2376, %v4877
        %v5668 = vmul.f32 %v2379, %v4892
        %v5669 = vmul.f32 %v2382, %v4907
        %v5670 = vmul.f32 %v2385, %v4922
        %v5671 = vmul.f32 %v2388, %v4937
        %v5672 = vmul.f32 %v2391, %v4952
        %v5673 = vmul.f32 %v2394, %v4967
        %v5674 = vmul.f32 %v2397, %v4982
        %v5675 = vmul.f32 %v2400, %v4997
        %v5676 = vmul.f32 %v2403, %v5012
        %v5677 = vmul.f32 %v2406, %v5027
        %v5678 = vmul.f32 %v2409, %v5042
        %v5679 = vmul.f32 %v2412, %v5057
        %v5680 = vmul.f32 %v2415, %v5072
        %v5681 = vmul.f32 %v2418, %v5087
        %v5682 = vmul.f32 %v2421, %v5102
        %v5683 = vmul.f32 %v2424, %v5117
        %v5684 = vmul.f32 %v2427, %v5132
        %v5685 = vmul.f32 %v2430, %v5147
        %v5686 = vmul.f32 %v2433, %v5162
        %v5687 = vmul.f32 %v2436, %v5177
        %v5688 = vmul.f32 %v2439, %v5192
        %v5689 = vmul.f32 %v2442, %v5207
        %v5690 = vmul.f32 %v2445, %v5222
        %v5691 = vmul.f32 %v2448, %v5237
        %v5692 = vmul.f32 %v2451, %v5252
        %v5693 = vmul.f32 %v2454, %v5267
        %v5694 = vmul.f32 %v2457, %v5282
        %v5695 = vmul.f32 %v2460, %v5297
        %v5696 = vmul.f32 %v2463, %v5312
        %v5697 = vmul.f32 %v2466, %v5327
        %v5698 = vmul.f32 %v2469, %v5342
        %v5699 = vmul.f32 %v2472, %v5357
        %v5700 = vmul.f32 %v2475, %v5372
        %v5701 = vmul.f32 %v2478, %v5387
        %v5702 = vmul.f32 %v2481, %v5402
        %v5703 = vmul.f32 %v2484, %v5417
        %v5704 = vmul.f32 %v2487, %v5432
        %v5705 = vmul.f32 %v2490, %v5447
        %v5706 = vmul.f32 %v2493, %v5462
        %v5707 = vmul.f32 %v2496, %v5477
        %v5708 = vmul.f32 %v2499, %v5492
        %v5709 = vmul.f32 %v2502, %v5507
        %v5710 = vmul.f32 %v2505, %v5522
        %v5711 = vmul.f32 %v2508, %v5537
        %v5712 = vmul.f32 %v2511, %v5552
        %v5713 = vld [vmem:[#allocation2] sm:$0xff]
        %v5714 = vld [vmem:[#allocation2 + $0x8] sm:$0xff]
        %v5715 = vld [vmem:[#allocation2 + $0x10] sm:$0xff]
        %v5716 = vld [vmem:[#allocation2 + $0x18] sm:$0xff]
        %v5717 = vld [vmem:[#allocation2 + $0x20] sm:$0xff]
        %v5718 = vld [vmem:[#allocation2 + $0x28] sm:$0xff]
        %v5719 = vld [vmem:[#allocation2 + $0x30] sm:$0xff]
        %v5720 = vld [vmem:[#allocation2 + $0x38] sm:$0xff]
        %v5721 = vld [vmem:[#allocation2 + $0x40] sm:$0xff]
        %v5722 = vld [vmem:[#allocation2 + $0x48] sm:$0xff]
        %v5723 = vld [vmem:[#allocation2 + $0x50] sm:$0xff]
        %v5724 = vld [vmem:[#allocation2 + $0x58] sm:$0xff]
        %v5725 = vld [vmem:[#allocation2 + $0x60] sm:$0xff]
        %v5726 = vld [vmem:[#allocation2 + $0x68] sm:$0xff]
        %v5727 = vld [vmem:[#allocation2 + $0x70] sm:$0xff]
        %v5728 = vld [vmem:[#allocation2 + $0x78] sm:$0xff]
        %v5729 = vld [vmem:[#allocation2 + $0x80] sm:$0xff]
        %v5730 = vld [vmem:[#allocation2 + $0x88] sm:$0xff]
        %v5731 = vld [vmem:[#allocation2 + $0x90] sm:$0xff]
        %v5732 = vld [vmem:[#allocation2 + $0x98] sm:$0xff]
        %v5733 = vld [vmem:[#allocation2 + $0xa0] sm:$0xff]
        %v5734 = vld [vmem:[#allocation2 + $0xa8] sm:$0xff]
        %v5735 = vld [vmem:[#allocation2 + $0xb0] sm:$0xff]
        %v5736 = vld [vmem:[#allocation2 + $0xb8] sm:$0xff]
        %v5737 = vld [vmem:[#allocation2 + $0xc0] sm:$0xff]
        %v5738 = vld [vmem:[#allocation2 + $0xc8] sm:$0xff]
        %v5739 = vld [vmem:[#allocation2 + $0xd0] sm:$0xff]
        %v5740 = vld [vmem:[#allocation2 + $0xd8] sm:$0xff]
        %v5741 = vld [vmem:[#allocation2 + $0xe0] sm:$0xff]
        %v5742 = vld [vmem:[#allocation2 + $0xe8] sm:$0xff]
        %v5743 = vld [vmem:[#allocation2 + $0xf0] sm:$0xff]
        %v5744 = vld [vmem:[#allocation2 + $0xf8] sm:$0xff]
        %v5745 = vld [vmem:[#allocation2 + $0x100] sm:$0xff]
        %v5746 = vld [vmem:[#allocation2 + $0x108] sm:$0xff]
        %v5747 = vld [vmem:[#allocation2 + $0x110] sm:$0xff]
        %v5748 = vld [vmem:[#allocation2 + $0x118] sm:$0xff]
        %v5749 = vld [vmem:[#allocation2 + $0x120] sm:$0xff]
        %v5750 = vld [vmem:[#allocation2 + $0x128] sm:$0xff]
        %v5751 = vld [vmem:[#allocation2 + $0x130] sm:$0xff]
        %v5752 = vld [vmem:[#allocation2 + $0x138] sm:$0xff]
        %v5753 = vld [vmem:[#allocation2 + $0x140] sm:$0xff]
        %v5754 = vld [vmem:[#allocation2 + $0x148] sm:$0xff]
        %v5755 = vld [vmem:[#allocation2 + $0x150] sm:$0xff]
        %v5756 = vld [vmem:[#allocation2 + $0x158] sm:$0xff]
        %v5757 = vld [vmem:[#allocation2 + $0x160] sm:$0xff]
        %v5758 = vld [vmem:[#allocation2 + $0x168] sm:$0xff]
        %v5759 = vld [vmem:[#allocation2 + $0x170] sm:$0xff]
        %v5760 = vld [vmem:[#allocation2 + $0x178] sm:$0xff]
        %v5761 = vld [vmem:[#allocation2 + $0x180] sm:$0xff]
        %v5762 = vld [vmem:[#allocation2 + $0x188] sm:$0xff]
        %v5763 = vld [vmem:[#allocation2 + $0x190] sm:$0xff]
        %v5764 = vld [vmem:[#allocation2 + $0x198] sm:$0xff]
        %v5765 = vld [vmem:[#allocation2 + $0x1a0] sm:$0xff]
        %v5766 = vld [vmem:[#allocation2 + $0x1a8] sm:$0xff]
        %v5767 = vld [vmem:[#allocation2 + $0x1b0] sm:$0xff]
        %v5768 = vld [vmem:[#allocation2 + $0x1b8] sm:$0xff]
        %v5769 = vld [vmem:[#allocation2 + $0x1c0] sm:$0xff]
        %v5770 = vld [vmem:[#allocation2 + $0x1c8] sm:$0xff]
        %v5771 = vld [vmem:[#allocation2 + $0x1d0] sm:$0xff]
        %v5772 = vld [vmem:[#allocation2 + $0x1d8] sm:$0xff]
        %v5773 = vld [vmem:[#allocation2 + $0x1e0] sm:$0xff]
        %v5774 = vld [vmem:[#allocation2 + $0x1e8] sm:$0xff]
        %v5775 = vld [vmem:[#allocation2 + $0x1f0] sm:$0xff]
        %v5776 = vld [vmem:[#allocation2 + $0x1f8] sm:$0xff]
        %v5777 = vld [vmem:[#allocation2 + $0x200] sm:$0xff]
        %v5778 = vld [vmem:[#allocation2 + $0x208] sm:$0xff]
        %v5779 = vld [vmem:[#allocation2 + $0x210] sm:$0xff]
        %v5780 = vld [vmem:[#allocation2 + $0x218] sm:$0xff]
        %v5781 = vld [vmem:[#allocation2 + $0x220] sm:$0xff]
        %v5782 = vld [vmem:[#allocation2 + $0x228] sm:$0xff]
        %v5783 = vld [vmem:[#allocation2 + $0x230] sm:$0xff]
        %v5784 = vld [vmem:[#allocation2 + $0x238] sm:$0xff]
        %v5785 = vld [vmem:[#allocation2 + $0x240] sm:$0xff]
        %v5786 = vld [vmem:[#allocation2 + $0x248] sm:$0xff]
        %v5787 = vld [vmem:[#allocation2 + $0x250] sm:$0xff]
        %v5788 = vld [vmem:[#allocation2 + $0x258] sm:$0xff]
        %v5789 = vld [vmem:[#allocation2 + $0x260] sm:$0xff]
        %v5790 = vld [vmem:[#allocation2 + $0x268] sm:$0xff]
        %v5791 = vld [vmem:[#allocation2 + $0x270] sm:$0xff]
        %v5792 = vld [vmem:[#allocation2 + $0x278] sm:$0xff]
        %v5793 = vld [vmem:[#allocation2 + $0x280] sm:$0xff]
        %v5794 = vld [vmem:[#allocation2 + $0x288] sm:$0xff]
        %v5795 = vld [vmem:[#allocation2 + $0x290] sm:$0xff]
        %v5796 = vld [vmem:[#allocation2 + $0x298] sm:$0xff]
        %v5797 = vld [vmem:[#allocation2 + $0x2a0] sm:$0xff]
        %v5798 = vld [vmem:[#allocation2 + $0x2a8] sm:$0xff]
        %v5799 = vld [vmem:[#allocation2 + $0x2b0] sm:$0xff]
        %v5800 = vld [vmem:[#allocation2 + $0x2b8] sm:$0xff]
        %v5801 = vld [vmem:[#allocation2 + $0x2c0] sm:$0xff]
        %v5802 = vld [vmem:[#allocation2 + $0x2c8] sm:$0xff]
        %v5803 = vld [vmem:[#allocation2 + $0x2d0] sm:$0xff]
        %v5804 = vld [vmem:[#allocation2 + $0x2d8] sm:$0xff]
        %v5805 = vld [vmem:[#allocation2 + $0x2e0] sm:$0xff]
        %v5806 = vld [vmem:[#allocation2 + $0x2e8] sm:$0xff]
        %v5807 = vld [vmem:[#allocation2 + $0x2f0] sm:$0xff]
        %v5808 = vld [vmem:[#allocation2 + $0x2f8] sm:$0xff]
        %v5809 = vld [vmem:[#allocation2 + $0x300] sm:$0xff]
        %v5810 = vld [vmem:[#allocation2 + $0x308] sm:$0xff]
        %v5811 = vld [vmem:[#allocation2 + $0x310] sm:$0xff]
        %v5812 = vld [vmem:[#allocation2 + $0x318] sm:$0xff]
        %v5813 = vld [vmem:[#allocation2 + $0x320] sm:$0xff]
        %v5814 = vld [vmem:[#allocation2 + $0x328] sm:$0xff]
        %v5815 = vld [vmem:[#allocation2 + $0x330] sm:$0xff]
        %v5816 = vld [vmem:[#allocation2 + $0x338] sm:$0xff]
        %v5817 = vld [vmem:[#allocation2 + $0x340] sm:$0xff]
        %v5818 = vld [vmem:[#allocation2 + $0x348] sm:$0xff]
        %v5819 = vld [vmem:[#allocation2 + $0x350] sm:$0xff]
        %v5820 = vld [vmem:[#allocation2 + $0x358] sm:$0xff]
        %v5821 = vld [vmem:[#allocation2 + $0x360] sm:$0xff]
        %v5822 = vld [vmem:[#allocation2 + $0x368] sm:$0xff]
        %v5823 = vld [vmem:[#allocation2 + $0x370] sm:$0xff]
        %v5824 = vld [vmem:[#allocation2 + $0x378] sm:$0xff]
        %v5825 = vld [vmem:[#allocation2 + $0x380] sm:$0xff]
        %v5826 = vld [vmem:[#allocation2 + $0x388] sm:$0xff]
        %v5827 = vld [vmem:[#allocation2 + $0x390] sm:$0xff]
        %v5828 = vld [vmem:[#allocation2 + $0x398] sm:$0xff]
        %v5829 = vld [vmem:[#allocation2 + $0x3a0] sm:$0xff]
        %v5830 = vld [vmem:[#allocation2 + $0x3a8] sm:$0xff]
        %v5831 = vld [vmem:[#allocation2 + $0x3b0] sm:$0xff]
        %v5832 = vld [vmem:[#allocation2 + $0x3b8] sm:$0xff]
        %v5833 = vld [vmem:[#allocation2 + $0x3c0] sm:$0xff]
        %v5834 = vld [vmem:[#allocation2 + $0x3c8] sm:$0xff]
        %v5835 = vld [vmem:[#allocation2 + $0x3d0] sm:$0xff]
        %v5836 = vld [vmem:[#allocation2 + $0x3d8] sm:$0xff]
        %v5837 = vld [vmem:[#allocation2 + $0x3e0] sm:$0xff]
        %v5838 = vld [vmem:[#allocation2 + $0x3e8] sm:$0xff]
        %v5839 = vld [vmem:[#allocation2 + $0x3f0] sm:$0xff]
        %v5840 = vld [vmem:[#allocation2 + $0x3f8] sm:$0xff]
        %v5841 = vld [vmem:[#allocation2 + $0x400] sm:$0xff]
        %v5842 = vld [vmem:[#allocation2 + $0x408] sm:$0xff]
        %v5843 = vld [vmem:[#allocation2 + $0x410] sm:$0xff]
        %v5844 = vld [vmem:[#allocation2 + $0x418] sm:$0xff]
        %v5845 = vld [vmem:[#allocation2 + $0x420] sm:$0xff]
        %v5846 = vld [vmem:[#allocation2 + $0x428] sm:$0xff]
        %v5847 = vld [vmem:[#allocation2 + $0x430] sm:$0xff]
        %v5848 = vld [vmem:[#allocation2 + $0x438] sm:$0xff]
        %v5849 = vld [vmem:[#allocation2 + $0x440] sm:$0xff]
        %v5850 = vld [vmem:[#allocation2 + $0x448] sm:$0xff]
        %v5851 = vld [vmem:[#allocation2 + $0x450] sm:$0xff]
        %v5852 = vld [vmem:[#allocation2 + $0x458] sm:$0xff]
        %v5853 = vld [vmem:[#allocation2 + $0x460] sm:$0xff]
        %v5854 = vld [vmem:[#allocation2 + $0x468] sm:$0xff]
        %v5855 = vld [vmem:[#allocation2 + $0x470] sm:$0xff]
        %v5856 = vld [vmem:[#allocation2 + $0x478] sm:$0xff]
        %v5857 = vld [vmem:[#allocation2 + $0x480] sm:$0xff]
        %v5858 = vld [vmem:[#allocation2 + $0x488] sm:$0xff]
        %v5859 = vld [vmem:[#allocation2 + $0x490] sm:$0xff]
        %v5860 = vld [vmem:[#allocation2 + $0x498] sm:$0xff]
        %v5861 = vld [vmem:[#allocation2 + $0x4a0] sm:$0xff]
        %v5862 = vld [vmem:[#allocation2 + $0x4a8] sm:$0xff]
        %v5863 = vld [vmem:[#allocation2 + $0x4b0] sm:$0xff]
        %v5864 = vld [vmem:[#allocation2 + $0x4b8] sm:$0xff]
        %v5865 = vld [vmem:[#allocation2 + $0x4c0] sm:$0xff]
        %v5866 = vld [vmem:[#allocation2 + $0x4c8] sm:$0xff]
        %v5867 = vld [vmem:[#allocation2 + $0x4d0] sm:$0xff]
        %v5868 = vld [vmem:[#allocation2 + $0x4d8] sm:$0xff]
        %v5869 = vld [vmem:[#allocation2 + $0x4e0] sm:$0xff]
        %v5870 = vld [vmem:[#allocation2 + $0x4e8] sm:$0xff]
        %v5871 = vld [vmem:[#allocation2 + $0x4f0] sm:$0xff]
        %v5872 = vld [vmem:[#allocation2 + $0x4f8] sm:$0xff]
        %5873 = vadd.xlane.f32.xlu0 %v5553
        %v5874 = vpop.xlane.xlu0 %5873
        %5875 = vadd.xlane.f32.xlu0 %v5554
        %v5876 = vpop.xlane.xlu0 %5875
        %5877 = vadd.xlane.f32.xlu0 %v5555
        %v5878 = vpop.xlane.xlu0 %5877
        %5879 = vadd.xlane.f32.xlu0 %v5556
        %v5880 = vpop.xlane.xlu0 %5879
        %5881 = vadd.xlane.f32.xlu0 %v5557
        %v5882 = vpop.xlane.xlu0 %5881
        %5883 = vadd.xlane.f32.xlu0 %v5558
        %v5884 = vpop.xlane.xlu0 %5883
        %5885 = vadd.xlane.f32.xlu0 %v5559
        %v5886 = vpop.xlane.xlu0 %5885
        %5887 = vadd.xlane.f32.xlu0 %v5560
        %v5888 = vpop.xlane.xlu0 %5887
        %5889 = vadd.xlane.f32.xlu0 %v5561
        %v5890 = vpop.xlane.xlu0 %5889
        %5891 = vadd.xlane.f32.xlu0 %v5562
        %v5892 = vpop.xlane.xlu0 %5891
        %5893 = vadd.xlane.f32.xlu0 %v5563
        %v5894 = vpop.xlane.xlu0 %5893
        %5895 = vadd.xlane.f32.xlu0 %v5564
        %v5896 = vpop.xlane.xlu0 %5895
        %5897 = vadd.xlane.f32.xlu0 %v5565
        %v5898 = vpop.xlane.xlu0 %5897
        %5899 = vadd.xlane.f32.xlu0 %v5566
        %v5900 = vpop.xlane.xlu0 %5899
        %5901 = vadd.xlane.f32.xlu0 %v5567
        %v5902 = vpop.xlane.xlu0 %5901
        %5903 = vadd.xlane.f32.xlu0 %v5568
        %v5904 = vpop.xlane.xlu0 %5903
        %5905 = vadd.xlane.f32.xlu0 %v5569
        %v5906 = vpop.xlane.xlu0 %5905
        %5907 = vadd.xlane.f32.xlu0 %v5570
        %v5908 = vpop.xlane.xlu0 %5907
        %5909 = vadd.xlane.f32.xlu0 %v5571
        %v5910 = vpop.xlane.xlu0 %5909
        %5911 = vadd.xlane.f32.xlu0 %v5572
        %v5912 = vpop.xlane.xlu0 %5911
        %5913 = vadd.xlane.f32.xlu0 %v5573
        %v5914 = vpop.xlane.xlu0 %5913
        %5915 = vadd.xlane.f32.xlu0 %v5574
        %v5916 = vpop.xlane.xlu0 %5915
        %5917 = vadd.xlane.f32.xlu0 %v5575
        %v5918 = vpop.xlane.xlu0 %5917
        %5919 = vadd.xlane.f32.xlu0 %v5576
        %v5920 = vpop.xlane.xlu0 %5919
        %5921 = vadd.xlane.f32.xlu0 %v5577
        %v5922 = vpop.xlane.xlu0 %5921
        %5923 = vadd.xlane.f32.xlu0 %v5578
        %v5924 = vpop.xlane.xlu0 %5923
        %5925 = vadd.xlane.f32.xlu0 %v5579
        %v5926 = vpop.xlane.xlu0 %5925
        %5927 = vadd.xlane.f32.xlu0 %v5580
        %v5928 = vpop.xlane.xlu0 %5927
        %5929 = vadd.xlane.f32.xlu0 %v5581
        %v5930 = vpop.xlane.xlu0 %5929
        %5931 = vadd.xlane.f32.xlu0 %v5582
        %v5932 = vpop.xlane.xlu0 %5931
        %5933 = vadd.xlane.f32.xlu0 %v5583
        %v5934 = vpop.xlane.xlu0 %5933
        %5935 = vadd.xlane.f32.xlu0 %v5584
        %v5936 = vpop.xlane.xlu0 %5935
        %5937 = vadd.xlane.f32.xlu0 %v5585
        %v5938 = vpop.xlane.xlu0 %5937
        %5939 = vadd.xlane.f32.xlu0 %v5586
        %v5940 = vpop.xlane.xlu0 %5939
        %5941 = vadd.xlane.f32.xlu0 %v5587
        %v5942 = vpop.xlane.xlu0 %5941
        %5943 = vadd.xlane.f32.xlu0 %v5588
        %v5944 = vpop.xlane.xlu0 %5943
        %5945 = vadd.xlane.f32.xlu0 %v5589
        %v5946 = vpop.xlane.xlu0 %5945
        %5947 = vadd.xlane.f32.xlu0 %v5590
        %v5948 = vpop.xlane.xlu0 %5947
        %5949 = vadd.xlane.f32.xlu0 %v5591
        %v5950 = vpop.xlane.xlu0 %5949
        %5951 = vadd.xlane.f32.xlu0 %v5592
        %v5952 = vpop.xlane.xlu0 %5951
        %5953 = vadd.xlane.f32.xlu0 %v5593
        %v5954 = vpop.xlane.xlu0 %5953
        %5955 = vadd.xlane.f32.xlu0 %v5594
        %v5956 = vpop.xlane.xlu0 %5955
        %5957 = vadd.xlane.f32.xlu0 %v5595
        %v5958 = vpop.xlane.xlu0 %5957
        %5959 = vadd.xlane.f32.xlu0 %v5596
        %v5960 = vpop.xlane.xlu0 %5959
        %5961 = vadd.xlane.f32.xlu0 %v5597
        %v5962 = vpop.xlane.xlu0 %5961
        %5963 = vadd.xlane.f32.xlu0 %v5598
        %v5964 = vpop.xlane.xlu0 %5963
        %5965 = vadd.xlane.f32.xlu0 %v5599
        %v5966 = vpop.xlane.xlu0 %5965
        %5967 = vadd.xlane.f32.xlu0 %v5600
        %v5968 = vpop.xlane.xlu0 %5967
        %5969 = vadd.xlane.f32.xlu0 %v5601
        %v5970 = vpop.xlane.xlu0 %5969
        %5971 = vadd.xlane.f32.xlu0 %v5602
        %v5972 = vpop.xlane.xlu0 %5971
        %5973 = vadd.xlane.f32.xlu0 %v5603
        %v5974 = vpop.xlane.xlu0 %5973
        %5975 = vadd.xlane.f32.xlu0 %v5604
        %v5976 = vpop.xlane.xlu0 %5975
        %5977 = vadd.xlane.f32.xlu0 %v5605
        %v5978 = vpop.xlane.xlu0 %5977
        %5979 = vadd.xlane.f32.xlu0 %v5606
        %v5980 = vpop.xlane.xlu0 %5979
        %5981 = vadd.xlane.f32.xlu0 %v5607
        %v5982 = vpop.xlane.xlu0 %5981
        %5983 = vadd.xlane.f32.xlu0 %v5608
        %v5984 = vpop.xlane.xlu0 %5983
        %5985 = vadd.xlane.f32.xlu0 %v5609
        %v5986 = vpop.xlane.xlu0 %5985
        %5987 = vadd.xlane.f32.xlu0 %v5610
        %v5988 = vpop.xlane.xlu0 %5987
        %5989 = vadd.xlane.f32.xlu0 %v5611
        %v5990 = vpop.xlane.xlu0 %5989
        %5991 = vadd.xlane.f32.xlu0 %v5612
        %v5992 = vpop.xlane.xlu0 %5991
        %5993 = vadd.xlane.f32.xlu0 %v5613
        %v5994 = vpop.xlane.xlu0 %5993
        %5995 = vadd.xlane.f32.xlu0 %v5614
        %v5996 = vpop.xlane.xlu0 %5995
        %5997 = vadd.xlane.f32.xlu0 %v5615
        %v5998 = vpop.xlane.xlu0 %5997
        %5999 = vadd.xlane.f32.xlu0 %v5616
        %v6000 = vpop.xlane.xlu0 %5999
        %6001 = vadd.xlane.f32.xlu0 %v5617
        %v6002 = vpop.xlane.xlu0 %6001
        %6003 = vadd.xlane.f32.xlu0 %v5618
        %v6004 = vpop.xlane.xlu0 %6003
        %6005 = vadd.xlane.f32.xlu0 %v5619
        %v6006 = vpop.xlane.xlu0 %6005
        %6007 = vadd.xlane.f32.xlu0 %v5620
        %v6008 = vpop.xlane.xlu0 %6007
        %6009 = vadd.xlane.f32.xlu0 %v5621
        %v6010 = vpop.xlane.xlu0 %6009
        %6011 = vadd.xlane.f32.xlu0 %v5622
        %v6012 = vpop.xlane.xlu0 %6011
        %6013 = vadd.xlane.f32.xlu0 %v5623
        %v6014 = vpop.xlane.xlu0 %6013
        %6015 = vadd.xlane.f32.xlu0 %v5624
        %v6016 = vpop.xlane.xlu0 %6015
        %6017 = vadd.xlane.f32.xlu0 %v5625
        %v6018 = vpop.xlane.xlu0 %6017
        %6019 = vadd.xlane.f32.xlu0 %v5626
        %v6020 = vpop.xlane.xlu0 %6019
        %6021 = vadd.xlane.f32.xlu0 %v5627
        %v6022 = vpop.xlane.xlu0 %6021
        %6023 = vadd.xlane.f32.xlu0 %v5628
        %v6024 = vpop.xlane.xlu0 %6023
        %6025 = vadd.xlane.f32.xlu0 %v5629
        %v6026 = vpop.xlane.xlu0 %6025
        %6027 = vadd.xlane.f32.xlu0 %v5630
        %v6028 = vpop.xlane.xlu0 %6027
        %6029 = vadd.xlane.f32.xlu0 %v5631
        %v6030 = vpop.xlane.xlu0 %6029
        %6031 = vadd.xlane.f32.xlu0 %v5632
        %v6032 = vpop.xlane.xlu0 %6031
        %6033 = vadd.xlane.f32.xlu0 %v5633
        %v6034 = vpop.xlane.xlu0 %6033
        %6035 = vadd.xlane.f32.xlu0 %v5634
        %v6036 = vpop.xlane.xlu0 %6035
        %6037 = vadd.xlane.f32.xlu0 %v5635
        %v6038 = vpop.xlane.xlu0 %6037
        %6039 = vadd.xlane.f32.xlu0 %v5636
        %v6040 = vpop.xlane.xlu0 %6039
        %6041 = vadd.xlane.f32.xlu0 %v5637
        %v6042 = vpop.xlane.xlu0 %6041
        %6043 = vadd.xlane.f32.xlu0 %v5638
        %v6044 = vpop.xlane.xlu0 %6043
        %6045 = vadd.xlane.f32.xlu0 %v5639
        %v6046 = vpop.xlane.xlu0 %6045
        %6047 = vadd.xlane.f32.xlu0 %v5640
        %v6048 = vpop.xlane.xlu0 %6047
        %6049 = vadd.xlane.f32.xlu0 %v5641
        %v6050 = vpop.xlane.xlu0 %6049
        %6051 = vadd.xlane.f32.xlu0 %v5642
        %v6052 = vpop.xlane.xlu0 %6051
        %6053 = vadd.xlane.f32.xlu0 %v5643
        %v6054 = vpop.xlane.xlu0 %6053
        %6055 = vadd.xlane.f32.xlu0 %v5644
        %v6056 = vpop.xlane.xlu0 %6055
        %6057 = vadd.xlane.f32.xlu0 %v5645
        %v6058 = vpop.xlane.xlu0 %6057
        %6059 = vadd.xlane.f32.xlu0 %v5646
        %v6060 = vpop.xlane.xlu0 %6059
        %6061 = vadd.xlane.f32.xlu0 %v5647
        %v6062 = vpop.xlane.xlu0 %6061
        %6063 = vadd.xlane.f32.xlu0 %v5648
        %v6064 = vpop.xlane.xlu0 %6063
        %6065 = vadd.xlane.f32.xlu0 %v5649
        %v6066 = vpop.xlane.xlu0 %6065
        %6067 = vadd.xlane.f32.xlu0 %v5650
        %v6068 = vpop.xlane.xlu0 %6067
        %6069 = vadd.xlane.f32.xlu0 %v5651
        %v6070 = vpop.xlane.xlu0 %6069
        %6071 = vadd.xlane.f32.xlu0 %v5652
        %v6072 = vpop.xlane.xlu0 %6071
        %6073 = vadd.xlane.f32.xlu0 %v5653
        %v6074 = vpop.xlane.xlu0 %6073
        %6075 = vadd.xlane.f32.xlu0 %v5654
        %v6076 = vpop.xlane.xlu0 %6075
        %6077 = vadd.xlane.f32.xlu0 %v5655
        %v6078 = vpop.xlane.xlu0 %6077
        %6079 = vadd.xlane.f32.xlu0 %v5656
        %v6080 = vpop.xlane.xlu0 %6079
        %6081 = vadd.xlane.f32.xlu0 %v5657
        %v6082 = vpop.xlane.xlu0 %6081
        %6083 = vadd.xlane.f32.xlu0 %v5658
        %v6084 = vpop.xlane.xlu0 %6083
        %6085 = vadd.xlane.f32.xlu0 %v5659
        %v6086 = vpop.xlane.xlu0 %6085
        %6087 = vadd.xlane.f32.xlu0 %v5660
        %v6088 = vpop.xlane.xlu0 %6087
        %6089 = vadd.xlane.f32.xlu0 %v5661
        %v6090 = vpop.xlane.xlu0 %6089
        %6091 = vadd.xlane.f32.xlu0 %v5662
        %v6092 = vpop.xlane.xlu0 %6091
        %6093 = vadd.xlane.f32.xlu0 %v5663
        %v6094 = vpop.xlane.xlu0 %6093
        %6095 = vadd.xlane.f32.xlu0 %v5664
        %v6096 = vpop.xlane.xlu0 %6095
        %6097 = vadd.xlane.f32.xlu0 %v5665
        %v6098 = vpop.xlane.xlu0 %6097
        %6099 = vadd.xlane.f32.xlu0 %v5666
        %v6100 = vpop.xlane.xlu0 %6099
        %6101 = vadd.xlane.f32.xlu0 %v5667
        %v6102 = vpop.xlane.xlu0 %6101
        %6103 = vadd.xlane.f32.xlu0 %v5668
        %v6104 = vpop.xlane.xlu0 %6103
        %6105 = vadd.xlane.f32.xlu0 %v5669
        %v6106 = vpop.xlane.xlu0 %6105
        %6107 = vadd.xlane.f32.xlu0 %v5670
        %v6108 = vpop.xlane.xlu0 %6107
        %6109 = vadd.xlane.f32.xlu0 %v5671
        %v6110 = vpop.xlane.xlu0 %6109
        %6111 = vadd.xlane.f32.xlu0 %v5672
        %v6112 = vpop.xlane.xlu0 %6111
        %6113 = vadd.xlane.f32.xlu0 %v5673
        %v6114 = vpop.xlane.xlu0 %6113
        %6115 = vadd.xlane.f32.xlu0 %v5674
        %v6116 = vpop.xlane.xlu0 %6115
        %6117 = vadd.xlane.f32.xlu0 %v5675
        %v6118 = vpop.xlane.xlu0 %6117
        %6119 = vadd.xlane.f32.xlu0 %v5676
        %v6120 = vpop.xlane.xlu0 %6119
        %6121 = vadd.xlane.f32.xlu0 %v5677
        %v6122 = vpop.xlane.xlu0 %6121
        %6123 = vadd.xlane.f32.xlu0 %v5678
        %v6124 = vpop.xlane.xlu0 %6123
        %6125 = vadd.xlane.f32.xlu0 %v5679
        %v6126 = vpop.xlane.xlu0 %6125
        %6127 = vadd.xlane.f32.xlu0 %v5680
        %v6128 = vpop.xlane.xlu0 %6127
        %6129 = vadd.xlane.f32.xlu0 %v5681
        %v6130 = vpop.xlane.xlu0 %6129
        %6131 = vadd.xlane.f32.xlu0 %v5682
        %v6132 = vpop.xlane.xlu0 %6131
        %6133 = vadd.xlane.f32.xlu0 %v5683
        %v6134 = vpop.xlane.xlu0 %6133
        %6135 = vadd.xlane.f32.xlu0 %v5684
        %v6136 = vpop.xlane.xlu0 %6135
        %6137 = vadd.xlane.f32.xlu0 %v5685
        %v6138 = vpop.xlane.xlu0 %6137
        %6139 = vadd.xlane.f32.xlu0 %v5686
        %v6140 = vpop.xlane.xlu0 %6139
        %6141 = vadd.xlane.f32.xlu0 %v5687
        %v6142 = vpop.xlane.xlu0 %6141
        %6143 = vadd.xlane.f32.xlu0 %v5688
        %v6144 = vpop.xlane.xlu0 %6143
        %6145 = vadd.xlane.f32.xlu0 %v5689
        %v6146 = vpop.xlane.xlu0 %6145
        %6147 = vadd.xlane.f32.xlu0 %v5690
        %v6148 = vpop.xlane.xlu0 %6147
        %6149 = vadd.xlane.f32.xlu0 %v5691
        %v6150 = vpop.xlane.xlu0 %6149
        %6151 = vadd.xlane.f32.xlu0 %v5692
        %v6152 = vpop.xlane.xlu0 %6151
        %6153 = vadd.xlane.f32.xlu0 %v5693
        %v6154 = vpop.xlane.xlu0 %6153
        %6155 = vadd.xlane.f32.xlu0 %v5694
        %v6156 = vpop.xlane.xlu0 %6155
        %6157 = vadd.xlane.f32.xlu0 %v5695
        %v6158 = vpop.xlane.xlu0 %6157
        %6159 = vadd.xlane.f32.xlu0 %v5696
        %v6160 = vpop.xlane.xlu0 %6159
        %6161 = vadd.xlane.f32.xlu0 %v5697
        %v6162 = vpop.xlane.xlu0 %6161
        %6163 = vadd.xlane.f32.xlu0 %v5698
        %v6164 = vpop.xlane.xlu0 %6163
        %6165 = vadd.xlane.f32.xlu0 %v5699
        %v6166 = vpop.xlane.xlu0 %6165
        %6167 = vadd.xlane.f32.xlu0 %v5700
        %v6168 = vpop.xlane.xlu0 %6167
        %6169 = vadd.xlane.f32.xlu0 %v5701
        %v6170 = vpop.xlane.xlu0 %6169
        %6171 = vadd.xlane.f32.xlu0 %v5702
        %v6172 = vpop.xlane.xlu0 %6171
        %6173 = vadd.xlane.f32.xlu0 %v5703
        %v6174 = vpop.xlane.xlu0 %6173
        %6175 = vadd.xlane.f32.xlu0 %v5704
        %v6176 = vpop.xlane.xlu0 %6175
        %6177 = vadd.xlane.f32.xlu0 %v5705
        %v6178 = vpop.xlane.xlu0 %6177
        %6179 = vadd.xlane.f32.xlu0 %v5706
        %v6180 = vpop.xlane.xlu0 %6179
        %6181 = vadd.xlane.f32.xlu0 %v5707
        %v6182 = vpop.xlane.xlu0 %6181
        %6183 = vadd.xlane.f32.xlu0 %v5708
        %v6184 = vpop.xlane.xlu0 %6183
        %6185 = vadd.xlane.f32.xlu0 %v5709
        %v6186 = vpop.xlane.xlu0 %6185
        %6187 = vadd.xlane.f32.xlu0 %v5710
        %v6188 = vpop.xlane.xlu0 %6187
        %6189 = vadd.xlane.f32.xlu0 %v5711
        %v6190 = vpop.xlane.xlu0 %6189
        %6191 = vadd.xlane.f32.xlu0 %v5712
        %v6192 = vpop.xlane.xlu0 %6191
        %v6193 = vadd.f32 %v5713, %v5874
        %v6194 = vadd.f32 %v5714, %v5876
        %v6195 = vadd.f32 %v5715, %v5878
        %v6196 = vadd.f32 %v5716, %v5880
        %v6197 = vadd.f32 %v5717, %v5882
        %v6198 = vadd.f32 %v5718, %v5884
        %v6199 = vadd.f32 %v5719, %v5886
        %v6200 = vadd.f32 %v5720, %v5888
        %v6201 = vadd.f32 %v5721, %v5890
        %v6202 = vadd.f32 %v5722, %v5892
        %v6203 = vadd.f32 %v5723, %v5894
        %v6204 = vadd.f32 %v5724, %v5896
        %v6205 = vadd.f32 %v5725, %v5898
        %v6206 = vadd.f32 %v5726, %v5900
        %v6207 = vadd.f32 %v5727, %v5902
        %v6208 = vadd.f32 %v5728, %v5904
        %v6209 = vadd.f32 %v5729, %v5906
        %v6210 = vadd.f32 %v5730, %v5908
        %v6211 = vadd.f32 %v5731, %v5910
        %v6212 = vadd.f32 %v5732, %v5912
        %v6213 = vadd.f32 %v5733, %v5914
        %v6214 = vadd.f32 %v5734, %v5916
        %v6215 = vadd.f32 %v5735, %v5918
        %v6216 = vadd.f32 %v5736, %v5920
        %v6217 = vadd.f32 %v5737, %v5922
        %v6218 = vadd.f32 %v5738, %v5924
        %v6219 = vadd.f32 %v5739, %v5926
        %v6220 = vadd.f32 %v5740, %v5928
        %v6221 = vadd.f32 %v5741, %v5930
        %v6222 = vadd.f32 %v5742, %v5932
        %v6223 = vadd.f32 %v5743, %v5934
        %v6224 = vadd.f32 %v5744, %v5936
        %v6225 = vadd.f32 %v5745, %v5938
        %v6226 = vadd.f32 %v5746, %v5940
        %v6227 = vadd.f32 %v5747, %v5942
        %v6228 = vadd.f32 %v5748, %v5944
        %v6229 = vadd.f32 %v5749, %v5946
        %v6230 = vadd.f32 %v5750, %v5948
        %v6231 = vadd.f32 %v5751, %v5950
        %v6232 = vadd.f32 %v5752, %v5952
        %v6233 = vadd.f32 %v5753, %v5954
        %v6234 = vadd.f32 %v5754, %v5956
        %v6235 = vadd.f32 %v5755, %v5958
        %v6236 = vadd.f32 %v5756, %v5960
        %v6237 = vadd.f32 %v5757, %v5962
        %v6238 = vadd.f32 %v5758, %v5964
        %v6239 = vadd.f32 %v5759, %v5966
        %v6240 = vadd.f32 %v5760, %v5968
        %v6241 = vadd.f32 %v5761, %v5970
        %v6242 = vadd.f32 %v5762, %v5972
        %v6243 = vadd.f32 %v5763, %v5974
        %v6244 = vadd.f32 %v5764, %v5976
        %v6245 = vadd.f32 %v5765, %v5978
        %v6246 = vadd.f32 %v5766, %v5980
        %v6247 = vadd.f32 %v5767, %v5982
        %v6248 = vadd.f32 %v5768, %v5984
        %v6249 = vadd.f32 %v5769, %v5986
        %v6250 = vadd.f32 %v5770, %v5988
        %v6251 = vadd.f32 %v5771, %v5990
        %v6252 = vadd.f32 %v5772, %v5992
        %v6253 = vadd.f32 %v5773, %v5994
        %v6254 = vadd.f32 %v5774, %v5996
        %v6255 = vadd.f32 %v5775, %v5998
        %v6256 = vadd.f32 %v5776, %v6000
        %v6257 = vadd.f32 %v5777, %v6002
        %v6258 = vadd.f32 %v5778, %v6004
        %v6259 = vadd.f32 %v5779, %v6006
        %v6260 = vadd.f32 %v5780, %v6008
        %v6261 = vadd.f32 %v5781, %v6010
        %v6262 = vadd.f32 %v5782, %v6012
        %v6263 = vadd.f32 %v5783, %v6014
        %v6264 = vadd.f32 %v5784, %v6016
        %v6265 = vadd.f32 %v5785, %v6018
        %v6266 = vadd.f32 %v5786, %v6020
        %v6267 = vadd.f32 %v5787, %v6022
        %v6268 = vadd.f32 %v5788, %v6024
        %v6269 = vadd.f32 %v5789, %v6026
        %v6270 = vadd.f32 %v5790, %v6028
        %v6271 = vadd.f32 %v5791, %v6030
        %v6272 = vadd.f32 %v5792, %v6032
        %v6273 = vadd.f32 %v5793, %v6034
        %v6274 = vadd.f32 %v5794, %v6036
        %v6275 = vadd.f32 %v5795, %v6038
        %v6276 = vadd.f32 %v5796, %v6040
        %v6277 = vadd.f32 %v5797, %v6042
        %v6278 = vadd.f32 %v5798, %v6044
        %v6279 = vadd.f32 %v5799, %v6046
        %v6280 = vadd.f32 %v5800, %v6048
        %v6281 = vadd.f32 %v5801, %v6050
        %v6282 = vadd.f32 %v5802, %v6052
        %v6283 = vadd.f32 %v5803, %v6054
        %v6284 = vadd.f32 %v5804, %v6056
        %v6285 = vadd.f32 %v5805, %v6058
        %v6286 = vadd.f32 %v5806, %v6060
        %v6287 = vadd.f32 %v5807, %v6062
        %v6288 = vadd.f32 %v5808, %v6064
        %v6289 = vadd.f32 %v5809, %v6066
        %v6290 = vadd.f32 %v5810, %v6068
        %v6291 = vadd.f32 %v5811, %v6070
        %v6292 = vadd.f32 %v5812, %v6072
        %v6293 = vadd.f32 %v5813, %v6074
        %v6294 = vadd.f32 %v5814, %v6076
        %v6295 = vadd.f32 %v5815, %v6078
        %v6296 = vadd.f32 %v5816, %v6080
        %v6297 = vadd.f32 %v5817, %v6082
        %v6298 = vadd.f32 %v5818, %v6084
        %v6299 = vadd.f32 %v5819, %v6086
        %v6300 = vadd.f32 %v5820, %v6088
        %v6301 = vadd.f32 %v5821, %v6090
        %v6302 = vadd.f32 %v5822, %v6092
        %v6303 = vadd.f32 %v5823, %v6094
        %v6304 = vadd.f32 %v5824, %v6096
        %v6305 = vadd.f32 %v5825, %v6098
        %v6306 = vadd.f32 %v5826, %v6100
        %v6307 = vadd.f32 %v5827, %v6102
        %v6308 = vadd.f32 %v5828, %v6104
        %v6309 = vadd.f32 %v5829, %v6106
        %v6310 = vadd.f32 %v5830, %v6108
        %v6311 = vadd.f32 %v5831, %v6110
        %v6312 = vadd.f32 %v5832, %v6112
        %v6313 = vadd.f32 %v5833, %v6114
        %v6314 = vadd.f32 %v5834, %v6116
        %v6315 = vadd.f32 %v5835, %v6118
        %v6316 = vadd.f32 %v5836, %v6120
        %v6317 = vadd.f32 %v5837, %v6122
        %v6318 = vadd.f32 %v5838, %v6124
        %v6319 = vadd.f32 %v5839, %v6126
        %v6320 = vadd.f32 %v5840, %v6128
        %v6321 = vadd.f32 %v5841, %v6130
        %v6322 = vadd.f32 %v5842, %v6132
        %v6323 = vadd.f32 %v5843, %v6134
        %v6324 = vadd.f32 %v5844, %v6136
        %v6325 = vadd.f32 %v5845, %v6138
        %v6326 = vadd.f32 %v5846, %v6140
        %v6327 = vadd.f32 %v5847, %v6142
        %v6328 = vadd.f32 %v5848, %v6144
        %v6329 = vadd.f32 %v5849, %v6146
        %v6330 = vadd.f32 %v5850, %v6148
        %v6331 = vadd.f32 %v5851, %v6150
        %v6332 = vadd.f32 %v5852, %v6152
        %v6333 = vadd.f32 %v5853, %v6154
        %v6334 = vadd.f32 %v5854, %v6156
        %v6335 = vadd.f32 %v5855, %v6158
        %v6336 = vadd.f32 %v5856, %v6160
        %v6337 = vadd.f32 %v5857, %v6162
        %v6338 = vadd.f32 %v5858, %v6164
        %v6339 = vadd.f32 %v5859, %v6166
        %v6340 = vadd.f32 %v5860, %v6168
        %v6341 = vadd.f32 %v5861, %v6170
        %v6342 = vadd.f32 %v5862, %v6172
        %v6343 = vadd.f32 %v5863, %v6174
        %v6344 = vadd.f32 %v5864, %v6176
        %v6345 = vadd.f32 %v5865, %v6178
        %v6346 = vadd.f32 %v5866, %v6180
        %v6347 = vadd.f32 %v5867, %v6182
        %v6348 = vadd.f32 %v5868, %v6184
        %v6349 = vadd.f32 %v5869, %v6186
        %v6350 = vadd.f32 %v5870, %v6188
        %v6351 = vadd.f32 %v5871, %v6190
        %v6352 = vadd.f32 %v5872, %v6192
        %vm6353 = vcmask 7168
        %6354 = vst.msk [vmem:[#allocation2] sm:$0xff] %vm6353, %v6193
        %6355 = vst.msk [vmem:[#allocation2 + $0x8] sm:$0xff] %vm6353, %v6194
        %6356 = vst.msk [vmem:[#allocation2 + $0x10] sm:$0xff] %vm6353, %v6195
        %6357 = vst.msk [vmem:[#allocation2 + $0x18] sm:$0xff] %vm6353, %v6196
        %6358 = vst.msk [vmem:[#allocation2 + $0x20] sm:$0xff] %vm6353, %v6197
        %6359 = vst.msk [vmem:[#allocation2 + $0x28] sm:$0xff] %vm6353, %v6198
        %6360 = vst.msk [vmem:[#allocation2 + $0x30] sm:$0xff] %vm6353, %v6199
        %6361 = vst.msk [vmem:[#allocation2 + $0x38] sm:$0xff] %vm6353, %v6200
        %6362 = vst.msk [vmem:[#allocation2 + $0x40] sm:$0xff] %vm6353, %v6201
        %6363 = vst.msk [vmem:[#allocation2 + $0x48] sm:$0xff] %vm6353, %v6202
        %6364 = vst.msk [vmem:[#allocation2 + $0x50] sm:$0xff] %vm6353, %v6203
        %6365 = vst.msk [vmem:[#allocation2 + $0x58] sm:$0xff] %vm6353, %v6204
        %6366 = vst.msk [vmem:[#allocation2 + $0x60] sm:$0xff] %vm6353, %v6205
        %6367 = vst.msk [vmem:[#allocation2 + $0x68] sm:$0xff] %vm6353, %v6206
        %6368 = vst.msk [vmem:[#allocation2 + $0x70] sm:$0xff] %vm6353, %v6207
        %6369 = vst.msk [vmem:[#allocation2 + $0x78] sm:$0xff] %vm6353, %v6208
        %6370 = vst.msk [vmem:[#allocation2 + $0x80] sm:$0xff] %vm6353, %v6209
        %6371 = vst.msk [vmem:[#allocation2 + $0x88] sm:$0xff] %vm6353, %v6210
        %6372 = vst.msk [vmem:[#allocation2 + $0x90] sm:$0xff] %vm6353, %v6211
        %6373 = vst.msk [vmem:[#allocation2 + $0x98] sm:$0xff] %vm6353, %v6212
        %6374 = vst.msk [vmem:[#allocation2 + $0xa0] sm:$0xff] %vm6353, %v6213
        %6375 = vst.msk [vmem:[#allocation2 + $0xa8] sm:$0xff] %vm6353, %v6214
        %6376 = vst.msk [vmem:[#allocation2 + $0xb0] sm:$0xff] %vm6353, %v6215
        %6377 = vst.msk [vmem:[#allocation2 + $0xb8] sm:$0xff] %vm6353, %v6216
        %6378 = vst.msk [vmem:[#allocation2 + $0xc0] sm:$0xff] %vm6353, %v6217
        %6379 = vst.msk [vmem:[#allocation2 + $0xc8] sm:$0xff] %vm6353, %v6218
        %6380 = vst.msk [vmem:[#allocation2 + $0xd0] sm:$0xff] %vm6353, %v6219
        %6381 = vst.msk [vmem:[#allocation2 + $0xd8] sm:$0xff] %vm6353, %v6220
        %6382 = vst.msk [vmem:[#allocation2 + $0xe0] sm:$0xff] %vm6353, %v6221
        %6383 = vst.msk [vmem:[#allocation2 + $0xe8] sm:$0xff] %vm6353, %v6222
        %6384 = vst.msk [vmem:[#allocation2 + $0xf0] sm:$0xff] %vm6353, %v6223
        %6385 = vst.msk [vmem:[#allocation2 + $0xf8] sm:$0xff] %vm6353, %v6224
        %6386 = vst.msk [vmem:[#allocation2 + $0x100] sm:$0xff] %vm6353, %v6225
        %6387 = vst.msk [vmem:[#allocation2 + $0x108] sm:$0xff] %vm6353, %v6226
        %6388 = vst.msk [vmem:[#allocation2 + $0x110] sm:$0xff] %vm6353, %v6227
        %6389 = vst.msk [vmem:[#allocation2 + $0x118] sm:$0xff] %vm6353, %v6228
        %6390 = vst.msk [vmem:[#allocation2 + $0x120] sm:$0xff] %vm6353, %v6229
        %6391 = vst.msk [vmem:[#allocation2 + $0x128] sm:$0xff] %vm6353, %v6230
        %6392 = vst.msk [vmem:[#allocation2 + $0x130] sm:$0xff] %vm6353, %v6231
        %6393 = vst.msk [vmem:[#allocation2 + $0x138] sm:$0xff] %vm6353, %v6232
        %6394 = vst.msk [vmem:[#allocation2 + $0x140] sm:$0xff] %vm6353, %v6233
        %6395 = vst.msk [vmem:[#allocation2 + $0x148] sm:$0xff] %vm6353, %v6234
        %6396 = vst.msk [vmem:[#allocation2 + $0x150] sm:$0xff] %vm6353, %v6235
        %6397 = vst.msk [vmem:[#allocation2 + $0x158] sm:$0xff] %vm6353, %v6236
        %6398 = vst.msk [vmem:[#allocation2 + $0x160] sm:$0xff] %vm6353, %v6237
        %6399 = vst.msk [vmem:[#allocation2 + $0x168] sm:$0xff] %vm6353, %v6238
        %6400 = vst.msk [vmem:[#allocation2 + $0x170] sm:$0xff] %vm6353, %v6239
        %6401 = vst.msk [vmem:[#allocation2 + $0x178] sm:$0xff] %vm6353, %v6240
        %6402 = vst.msk [vmem:[#allocation2 + $0x180] sm:$0xff] %vm6353, %v6241
        %6403 = vst.msk [vmem:[#allocation2 + $0x188] sm:$0xff] %vm6353, %v6242
        %6404 = vst.msk [vmem:[#allocation2 + $0x190] sm:$0xff] %vm6353, %v6243
        %6405 = vst.msk [vmem:[#allocation2 + $0x198] sm:$0xff] %vm6353, %v6244
        %6406 = vst.msk [vmem:[#allocation2 + $0x1a0] sm:$0xff] %vm6353, %v6245
        %6407 = vst.msk [vmem:[#allocation2 + $0x1a8] sm:$0xff] %vm6353, %v6246
        %6408 = vst.msk [vmem:[#allocation2 + $0x1b0] sm:$0xff] %vm6353, %v6247
        %6409 = vst.msk [vmem:[#allocation2 + $0x1b8] sm:$0xff] %vm6353, %v6248
        %6410 = vst.msk [vmem:[#allocation2 + $0x1c0] sm:$0xff] %vm6353, %v6249
        %6411 = vst.msk [vmem:[#allocation2 + $0x1c8] sm:$0xff] %vm6353, %v6250
        %6412 = vst.msk [vmem:[#allocation2 + $0x1d0] sm:$0xff] %vm6353, %v6251
        %6413 = vst.msk [vmem:[#allocation2 + $0x1d8] sm:$0xff] %vm6353, %v6252
        %6414 = vst.msk [vmem:[#allocation2 + $0x1e0] sm:$0xff] %vm6353, %v6253
        %6415 = vst.msk [vmem:[#allocation2 + $0x1e8] sm:$0xff] %vm6353, %v6254
        %6416 = vst.msk [vmem:[#allocation2 + $0x1f0] sm:$0xff] %vm6353, %v6255
        %6417 = vst.msk [vmem:[#allocation2 + $0x1f8] sm:$0xff] %vm6353, %v6256
        %6418 = vst.msk [vmem:[#allocation2 + $0x200] sm:$0xff] %vm6353, %v6257
        %6419 = vst.msk [vmem:[#allocation2 + $0x208] sm:$0xff] %vm6353, %v6258
        %6420 = vst.msk [vmem:[#allocation2 + $0x210] sm:$0xff] %vm6353, %v6259
        %6421 = vst.msk [vmem:[#allocation2 + $0x218] sm:$0xff] %vm6353, %v6260
        %6422 = vst.msk [vmem:[#allocation2 + $0x220] sm:$0xff] %vm6353, %v6261
        %6423 = vst.msk [vmem:[#allocation2 + $0x228] sm:$0xff] %vm6353, %v6262
        %6424 = vst.msk [vmem:[#allocation2 + $0x230] sm:$0xff] %vm6353, %v6263
        %6425 = vst.msk [vmem:[#allocation2 + $0x238] sm:$0xff] %vm6353, %v6264
        %6426 = vst.msk [vmem:[#allocation2 + $0x240] sm:$0xff] %vm6353, %v6265
        %6427 = vst.msk [vmem:[#allocation2 + $0x248] sm:$0xff] %vm6353, %v6266
        %6428 = vst.msk [vmem:[#allocation2 + $0x250] sm:$0xff] %vm6353, %v6267
        %6429 = vst.msk [vmem:[#allocation2 + $0x258] sm:$0xff] %vm6353, %v6268
        %6430 = vst.msk [vmem:[#allocation2 + $0x260] sm:$0xff] %vm6353, %v6269
        %6431 = vst.msk [vmem:[#allocation2 + $0x268] sm:$0xff] %vm6353, %v6270
        %6432 = vst.msk [vmem:[#allocation2 + $0x270] sm:$0xff] %vm6353, %v6271
        %6433 = vst.msk [vmem:[#allocation2 + $0x278] sm:$0xff] %vm6353, %v6272
        %6434 = vst.msk [vmem:[#allocation2 + $0x280] sm:$0xff] %vm6353, %v6273
        %6435 = vst.msk [vmem:[#allocation2 + $0x288] sm:$0xff] %vm6353, %v6274
        %6436 = vst.msk [vmem:[#allocation2 + $0x290] sm:$0xff] %vm6353, %v6275
        %6437 = vst.msk [vmem:[#allocation2 + $0x298] sm:$0xff] %vm6353, %v6276
        %6438 = vst.msk [vmem:[#allocation2 + $0x2a0] sm:$0xff] %vm6353, %v6277
        %6439 = vst.msk [vmem:[#allocation2 + $0x2a8] sm:$0xff] %vm6353, %v6278
        %6440 = vst.msk [vmem:[#allocation2 + $0x2b0] sm:$0xff] %vm6353, %v6279
        %6441 = vst.msk [vmem:[#allocation2 + $0x2b8] sm:$0xff] %vm6353, %v6280
        %6442 = vst.msk [vmem:[#allocation2 + $0x2c0] sm:$0xff] %vm6353, %v6281
        %6443 = vst.msk [vmem:[#allocation2 + $0x2c8] sm:$0xff] %vm6353, %v6282
        %6444 = vst.msk [vmem:[#allocation2 + $0x2d0] sm:$0xff] %vm6353, %v6283
        %6445 = vst.msk [vmem:[#allocation2 + $0x2d8] sm:$0xff] %vm6353, %v6284
        %6446 = vst.msk [vmem:[#allocation2 + $0x2e0] sm:$0xff] %vm6353, %v6285
        %6447 = vst.msk [vmem:[#allocation2 + $0x2e8] sm:$0xff] %vm6353, %v6286
        %6448 = vst.msk [vmem:[#allocation2 + $0x2f0] sm:$0xff] %vm6353, %v6287
        %6449 = vst.msk [vmem:[#allocation2 + $0x2f8] sm:$0xff] %vm6353, %v6288
        %6450 = vst.msk [vmem:[#allocation2 + $0x300] sm:$0xff] %vm6353, %v6289
        %6451 = vst.msk [vmem:[#allocation2 + $0x308] sm:$0xff] %vm6353, %v6290
        %6452 = vst.msk [vmem:[#allocation2 + $0x310] sm:$0xff] %vm6353, %v6291
        %6453 = vst.msk [vmem:[#allocation2 + $0x318] sm:$0xff] %vm6353, %v6292
        %6454 = vst.msk [vmem:[#allocation2 + $0x320] sm:$0xff] %vm6353, %v6293
        %6455 = vst.msk [vmem:[#allocation2 + $0x328] sm:$0xff] %vm6353, %v6294
        %6456 = vst.msk [vmem:[#allocation2 + $0x330] sm:$0xff] %vm6353, %v6295
        %6457 = vst.msk [vmem:[#allocation2 + $0x338] sm:$0xff] %vm6353, %v6296
        %6458 = vst.msk [vmem:[#allocation2 + $0x340] sm:$0xff] %vm6353, %v6297
        %6459 = vst.msk [vmem:[#allocation2 + $0x348] sm:$0xff] %vm6353, %v6298
        %6460 = vst.msk [vmem:[#allocation2 + $0x350] sm:$0xff] %vm6353, %v6299
        %6461 = vst.msk [vmem:[#allocation2 + $0x358] sm:$0xff] %vm6353, %v6300
        %6462 = vst.msk [vmem:[#allocation2 + $0x360] sm:$0xff] %vm6353, %v6301
        %6463 = vst.msk [vmem:[#allocation2 + $0x368] sm:$0xff] %vm6353, %v6302
        %6464 = vst.msk [vmem:[#allocation2 + $0x370] sm:$0xff] %vm6353, %v6303
        %6465 = vst.msk [vmem:[#allocation2 + $0x378] sm:$0xff] %vm6353, %v6304
        %6466 = vst.msk [vmem:[#allocation2 + $0x380] sm:$0xff] %vm6353, %v6305
        %6467 = vst.msk [vmem:[#allocation2 + $0x388] sm:$0xff] %vm6353, %v6306
        %6468 = vst.msk [vmem:[#allocation2 + $0x390] sm:$0xff] %vm6353, %v6307
        %6469 = vst.msk [vmem:[#allocation2 + $0x398] sm:$0xff] %vm6353, %v6308
        %6470 = vst.msk [vmem:[#allocation2 + $0x3a0] sm:$0xff] %vm6353, %v6309
        %6471 = vst.msk [vmem:[#allocation2 + $0x3a8] sm:$0xff] %vm6353, %v6310
        %6472 = vst.msk [vmem:[#allocation2 + $0x3b0] sm:$0xff] %vm6353, %v6311
        %6473 = vst.msk [vmem:[#allocation2 + $0x3b8] sm:$0xff] %vm6353, %v6312
        %6474 = vst.msk [vmem:[#allocation2 + $0x3c0] sm:$0xff] %vm6353, %v6313
        %6475 = vst.msk [vmem:[#allocation2 + $0x3c8] sm:$0xff] %vm6353, %v6314
        %6476 = vst.msk [vmem:[#allocation2 + $0x3d0] sm:$0xff] %vm6353, %v6315
        %6477 = vst.msk [vmem:[#allocation2 + $0x3d8] sm:$0xff] %vm6353, %v6316
        %6478 = vst.msk [vmem:[#allocation2 + $0x3e0] sm:$0xff] %vm6353, %v6317
        %6479 = vst.msk [vmem:[#allocation2 + $0x3e8] sm:$0xff] %vm6353, %v6318
        %6480 = vst.msk [vmem:[#allocation2 + $0x3f0] sm:$0xff] %vm6353, %v6319
        %6481 = vst.msk [vmem:[#allocation2 + $0x3f8] sm:$0xff] %vm6353, %v6320
        %6482 = vst.msk [vmem:[#allocation2 + $0x400] sm:$0xff] %vm6353, %v6321
        %6483 = vst.msk [vmem:[#allocation2 + $0x408] sm:$0xff] %vm6353, %v6322
        %6484 = vst.msk [vmem:[#allocation2 + $0x410] sm:$0xff] %vm6353, %v6323
        %6485 = vst.msk [vmem:[#allocation2 + $0x418] sm:$0xff] %vm6353, %v6324
        %6486 = vst.msk [vmem:[#allocation2 + $0x420] sm:$0xff] %vm6353, %v6325
        %6487 = vst.msk [vmem:[#allocation2 + $0x428] sm:$0xff] %vm6353, %v6326
        %6488 = vst.msk [vmem:[#allocation2 + $0x430] sm:$0xff] %vm6353, %v6327
        %6489 = vst.msk [vmem:[#allocation2 + $0x438] sm:$0xff] %vm6353, %v6328
        %6490 = vst.msk [vmem:[#allocation2 + $0x440] sm:$0xff] %vm6353, %v6329
        %6491 = vst.msk [vmem:[#allocation2 + $0x448] sm:$0xff] %vm6353, %v6330
        %6492 = vst.msk [vmem:[#allocation2 + $0x450] sm:$0xff] %vm6353, %v6331
        %6493 = vst.msk [vmem:[#allocation2 + $0x458] sm:$0xff] %vm6353, %v6332
        %6494 = vst.msk [vmem:[#allocation2 + $0x460] sm:$0xff] %vm6353, %v6333
        %6495 = vst.msk [vmem:[#allocation2 + $0x468] sm:$0xff] %vm6353, %v6334
        %6496 = vst.msk [vmem:[#allocation2 + $0x470] sm:$0xff] %vm6353, %v6335
        %6497 = vst.msk [vmem:[#allocation2 + $0x478] sm:$0xff] %vm6353, %v6336
        %6498 = vst.msk [vmem:[#allocation2 + $0x480] sm:$0xff] %vm6353, %v6337
        %6499 = vst.msk [vmem:[#allocation2 + $0x488] sm:$0xff] %vm6353, %v6338
        %6500 = vst.msk [vmem:[#allocation2 + $0x490] sm:$0xff] %vm6353, %v6339
        %6501 = vst.msk [vmem:[#allocation2 + $0x498] sm:$0xff] %vm6353, %v6340
        %6502 = vst.msk [vmem:[#allocation2 + $0x4a0] sm:$0xff] %vm6353, %v6341
        %6503 = vst.msk [vmem:[#allocation2 + $0x4a8] sm:$0xff] %vm6353, %v6342
        %6504 = vst.msk [vmem:[#allocation2 + $0x4b0] sm:$0xff] %vm6353, %v6343
        %6505 = vst.msk [vmem:[#allocation2 + $0x4b8] sm:$0xff] %vm6353, %v6344
        %6506 = vst.msk [vmem:[#allocation2 + $0x4c0] sm:$0xff] %vm6353, %v6345
        %6507 = vst.msk [vmem:[#allocation2 + $0x4c8] sm:$0xff] %vm6353, %v6346
        %6508 = vst.msk [vmem:[#allocation2 + $0x4d0] sm:$0xff] %vm6353, %v6347
        %6509 = vst.msk [vmem:[#allocation2 + $0x4d8] sm:$0xff] %vm6353, %v6348
        %6510 = vst.msk [vmem:[#allocation2 + $0x4e0] sm:$0xff] %vm6353, %v6349
        %6511 = vst.msk [vmem:[#allocation2 + $0x4e8] sm:$0xff] %vm6353, %v6350
        %6512 = vst.msk [vmem:[#allocation2 + $0x4f0] sm:$0xff] %vm6353, %v6351
        %6513 = vst.msk [vmem:[#allocation2 + $0x4f8] sm:$0xff] %vm6353, %v6352
        %p6514 = scmp.eq.s32.totalorder %s24, 1
        // Predicated region
        $region45: #{tpu_custom_call.1} parent=39 // pred_check
          %p6515 = pneg %p6514
        $region46: #{tpu_custom_call.1} parent=39 // pred_check_branch
          %6517 = sbr.rel (%p6515) target = $region48
        $region47: #{tpu_custom_call.1} parent=39 // pred_region
          %v6518 = vld [vmem:[#allocation2] sm:$0xff]
          %v6519 = vld [vmem:[#allocation2 + $0x8] sm:$0xff]
          %v6520 = vld [vmem:[#allocation2 + $0x10] sm:$0xff]
          %v6521 = vld [vmem:[#allocation2 + $0x18] sm:$0xff]
          %v6522 = vld [vmem:[#allocation2 + $0x20] sm:$0xff]
          %v6523 = vld [vmem:[#allocation2 + $0x28] sm:$0xff]
          %v6524 = vld [vmem:[#allocation2 + $0x30] sm:$0xff]
          %v6525 = vld [vmem:[#allocation2 + $0x38] sm:$0xff]
          %v6526 = vld [vmem:[#allocation2 + $0x40] sm:$0xff]
          %v6527 = vld [vmem:[#allocation2 + $0x48] sm:$0xff]
          %v6528 = vld [vmem:[#allocation2 + $0x50] sm:$0xff]
          %v6529 = vld [vmem:[#allocation2 + $0x58] sm:$0xff]
          %v6530 = vld [vmem:[#allocation2 + $0x60] sm:$0xff]
          %v6531 = vld [vmem:[#allocation2 + $0x68] sm:$0xff]
          %v6532 = vld [vmem:[#allocation2 + $0x70] sm:$0xff]
          %v6533 = vld [vmem:[#allocation2 + $0x78] sm:$0xff]
          %v6534 = vld [vmem:[#allocation2 + $0x80] sm:$0xff]
          %v6535 = vld [vmem:[#allocation2 + $0x88] sm:$0xff]
          %v6536 = vld [vmem:[#allocation2 + $0x90] sm:$0xff]
          %v6537 = vld [vmem:[#allocation2 + $0x98] sm:$0xff]
          %v6538 = vld [vmem:[#allocation2 + $0xa0] sm:$0xff]
          %v6539 = vld [vmem:[#allocation2 + $0xa8] sm:$0xff]
          %v6540 = vld [vmem:[#allocation2 + $0xb0] sm:$0xff]
          %v6541 = vld [vmem:[#allocation2 + $0xb8] sm:$0xff]
          %v6542 = vld [vmem:[#allocation2 + $0xc0] sm:$0xff]
          %v6543 = vld [vmem:[#allocation2 + $0xc8] sm:$0xff]
          %v6544 = vld [vmem:[#allocation2 + $0xd0] sm:$0xff]
          %v6545 = vld [vmem:[#allocation2 + $0xd8] sm:$0xff]
          %v6546 = vld [vmem:[#allocation2 + $0xe0] sm:$0xff]
          %v6547 = vld [vmem:[#allocation2 + $0xe8] sm:$0xff]
          %v6548 = vld [vmem:[#allocation2 + $0xf0] sm:$0xff]
          %v6549 = vld [vmem:[#allocation2 + $0xf8] sm:$0xff]
          %v6550 = vld [vmem:[#allocation2 + $0x100] sm:$0xff]
          %v6551 = vld [vmem:[#allocation2 + $0x108] sm:$0xff]
          %v6552 = vld [vmem:[#allocation2 + $0x110] sm:$0xff]
          %v6553 = vld [vmem:[#allocation2 + $0x118] sm:$0xff]
          %v6554 = vld [vmem:[#allocation2 + $0x120] sm:$0xff]
          %v6555 = vld [vmem:[#allocation2 + $0x128] sm:$0xff]
          %v6556 = vld [vmem:[#allocation2 + $0x130] sm:$0xff]
          %v6557 = vld [vmem:[#allocation2 + $0x138] sm:$0xff]
          %v6558 = vld [vmem:[#allocation2 + $0x140] sm:$0xff]
          %v6559 = vld [vmem:[#allocation2 + $0x148] sm:$0xff]
          %v6560 = vld [vmem:[#allocation2 + $0x150] sm:$0xff]
          %v6561 = vld [vmem:[#allocation2 + $0x158] sm:$0xff]
          %v6562 = vld [vmem:[#allocation2 + $0x160] sm:$0xff]
          %v6563 = vld [vmem:[#allocation2 + $0x168] sm:$0xff]
          %v6564 = vld [vmem:[#allocation2 + $0x170] sm:$0xff]
          %v6565 = vld [vmem:[#allocation2 + $0x178] sm:$0xff]
          %v6566 = vld [vmem:[#allocation2 + $0x180] sm:$0xff]
          %v6567 = vld [vmem:[#allocation2 + $0x188] sm:$0xff]
          %v6568 = vld [vmem:[#allocation2 + $0x190] sm:$0xff]
          %v6569 = vld [vmem:[#allocation2 + $0x198] sm:$0xff]
          %v6570 = vld [vmem:[#allocation2 + $0x1a0] sm:$0xff]
          %v6571 = vld [vmem:[#allocation2 + $0x1a8] sm:$0xff]
          %v6572 = vld [vmem:[#allocation2 + $0x1b0] sm:$0xff]
          %v6573 = vld [vmem:[#allocation2 + $0x1b8] sm:$0xff]
          %v6574 = vld [vmem:[#allocation2 + $0x1c0] sm:$0xff]
          %v6575 = vld [vmem:[#allocation2 + $0x1c8] sm:$0xff]
          %v6576 = vld [vmem:[#allocation2 + $0x1d0] sm:$0xff]
          %v6577 = vld [vmem:[#allocation2 + $0x1d8] sm:$0xff]
          %v6578 = vld [vmem:[#allocation2 + $0x1e0] sm:$0xff]
          %v6579 = vld [vmem:[#allocation2 + $0x1e8] sm:$0xff]
          %v6580 = vld [vmem:[#allocation2 + $0x1f0] sm:$0xff]
          %v6581 = vld [vmem:[#allocation2 + $0x1f8] sm:$0xff]
          %v6582 = vld [vmem:[#allocation2 + $0x200] sm:$0xff]
          %v6583 = vld [vmem:[#allocation2 + $0x208] sm:$0xff]
          %v6584 = vld [vmem:[#allocation2 + $0x210] sm:$0xff]
          %v6585 = vld [vmem:[#allocation2 + $0x218] sm:$0xff]
          %v6586 = vld [vmem:[#allocation2 + $0x220] sm:$0xff]
          %v6587 = vld [vmem:[#allocation2 + $0x228] sm:$0xff]
          %v6588 = vld [vmem:[#allocation2 + $0x230] sm:$0xff]
          %v6589 = vld [vmem:[#allocation2 + $0x238] sm:$0xff]
          %v6590 = vld [vmem:[#allocation2 + $0x240] sm:$0xff]
          %v6591 = vld [vmem:[#allocation2 + $0x248] sm:$0xff]
          %v6592 = vld [vmem:[#allocation2 + $0x250] sm:$0xff]
          %v6593 = vld [vmem:[#allocation2 + $0x258] sm:$0xff]
          %v6594 = vld [vmem:[#allocation2 + $0x260] sm:$0xff]
          %v6595 = vld [vmem:[#allocation2 + $0x268] sm:$0xff]
          %v6596 = vld [vmem:[#allocation2 + $0x270] sm:$0xff]
          %v6597 = vld [vmem:[#allocation2 + $0x278] sm:$0xff]
          %v6598 = vld [vmem:[#allocation2 + $0x280] sm:$0xff]
          %v6599 = vld [vmem:[#allocation2 + $0x288] sm:$0xff]
          %v6600 = vld [vmem:[#allocation2 + $0x290] sm:$0xff]
          %v6601 = vld [vmem:[#allocation2 + $0x298] sm:$0xff]
          %v6602 = vld [vmem:[#allocation2 + $0x2a0] sm:$0xff]
          %v6603 = vld [vmem:[#allocation2 + $0x2a8] sm:$0xff]
          %v6604 = vld [vmem:[#allocation2 + $0x2b0] sm:$0xff]
          %v6605 = vld [vmem:[#allocation2 + $0x2b8] sm:$0xff]
          %v6606 = vld [vmem:[#allocation2 + $0x2c0] sm:$0xff]
          %v6607 = vld [vmem:[#allocation2 + $0x2c8] sm:$0xff]
          %v6608 = vld [vmem:[#allocation2 + $0x2d0] sm:$0xff]
          %v6609 = vld [vmem:[#allocation2 + $0x2d8] sm:$0xff]
          %v6610 = vld [vmem:[#allocation2 + $0x2e0] sm:$0xff]
          %v6611 = vld [vmem:[#allocation2 + $0x2e8] sm:$0xff]
          %v6612 = vld [vmem:[#allocation2 + $0x2f0] sm:$0xff]
          %v6613 = vld [vmem:[#allocation2 + $0x2f8] sm:$0xff]
          %v6614 = vld [vmem:[#allocation2 + $0x300] sm:$0xff]
          %v6615 = vld [vmem:[#allocation2 + $0x308] sm:$0xff]
          %v6616 = vld [vmem:[#allocation2 + $0x310] sm:$0xff]
          %v6617 = vld [vmem:[#allocation2 + $0x318] sm:$0xff]
          %v6618 = vld [vmem:[#allocation2 + $0x320] sm:$0xff]
          %v6619 = vld [vmem:[#allocation2 + $0x328] sm:$0xff]
          %v6620 = vld [vmem:[#allocation2 + $0x330] sm:$0xff]
          %v6621 = vld [vmem:[#allocation2 + $0x338] sm:$0xff]
          %v6622 = vld [vmem:[#allocation2 + $0x340] sm:$0xff]
          %v6623 = vld [vmem:[#allocation2 + $0x348] sm:$0xff]
          %v6624 = vld [vmem:[#allocation2 + $0x350] sm:$0xff]
          %v6625 = vld [vmem:[#allocation2 + $0x358] sm:$0xff]
          %v6626 = vld [vmem:[#allocation2 + $0x360] sm:$0xff]
          %v6627 = vld [vmem:[#allocation2 + $0x368] sm:$0xff]
          %v6628 = vld [vmem:[#allocation2 + $0x370] sm:$0xff]
          %v6629 = vld [vmem:[#allocation2 + $0x378] sm:$0xff]
          %v6630 = vld [vmem:[#allocation2 + $0x380] sm:$0xff]
          %v6631 = vld [vmem:[#allocation2 + $0x388] sm:$0xff]
          %v6632 = vld [vmem:[#allocation2 + $0x390] sm:$0xff]
          %v6633 = vld [vmem:[#allocation2 + $0x398] sm:$0xff]
          %v6634 = vld [vmem:[#allocation2 + $0x3a0] sm:$0xff]
          %v6635 = vld [vmem:[#allocation2 + $0x3a8] sm:$0xff]
          %v6636 = vld [vmem:[#allocation2 + $0x3b0] sm:$0xff]
          %v6637 = vld [vmem:[#allocation2 + $0x3b8] sm:$0xff]
          %v6638 = vld [vmem:[#allocation2 + $0x3c0] sm:$0xff]
          %v6639 = vld [vmem:[#allocation2 + $0x3c8] sm:$0xff]
          %v6640 = vld [vmem:[#allocation2 + $0x3d0] sm:$0xff]
          %v6641 = vld [vmem:[#allocation2 + $0x3d8] sm:$0xff]
          %v6642 = vld [vmem:[#allocation2 + $0x3e0] sm:$0xff]
          %v6643 = vld [vmem:[#allocation2 + $0x3e8] sm:$0xff]
          %v6644 = vld [vmem:[#allocation2 + $0x3f0] sm:$0xff]
          %v6645 = vld [vmem:[#allocation2 + $0x3f8] sm:$0xff]
          %v6646 = vld [vmem:[#allocation2 + $0x400] sm:$0xff]
          %v6647 = vld [vmem:[#allocation2 + $0x408] sm:$0xff]
          %v6648 = vld [vmem:[#allocation2 + $0x410] sm:$0xff]
          %v6649 = vld [vmem:[#allocation2 + $0x418] sm:$0xff]
          %v6650 = vld [vmem:[#allocation2 + $0x420] sm:$0xff]
          %v6651 = vld [vmem:[#allocation2 + $0x428] sm:$0xff]
          %v6652 = vld [vmem:[#allocation2 + $0x430] sm:$0xff]
          %v6653 = vld [vmem:[#allocation2 + $0x438] sm:$0xff]
          %v6654 = vld [vmem:[#allocation2 + $0x440] sm:$0xff]
          %v6655 = vld [vmem:[#allocation2 + $0x448] sm:$0xff]
          %v6656 = vld [vmem:[#allocation2 + $0x450] sm:$0xff]
          %v6657 = vld [vmem:[#allocation2 + $0x458] sm:$0xff]
          %v6658 = vld [vmem:[#allocation2 + $0x460] sm:$0xff]
          %v6659 = vld [vmem:[#allocation2 + $0x468] sm:$0xff]
          %v6660 = vld [vmem:[#allocation2 + $0x470] sm:$0xff]
          %v6661 = vld [vmem:[#allocation2 + $0x478] sm:$0xff]
          %v6662 = vld [vmem:[#allocation2 + $0x480] sm:$0xff]
          %v6663 = vld [vmem:[#allocation2 + $0x488] sm:$0xff]
          %v6664 = vld [vmem:[#allocation2 + $0x490] sm:$0xff]
          %v6665 = vld [vmem:[#allocation2 + $0x498] sm:$0xff]
          %v6666 = vld [vmem:[#allocation2 + $0x4a0] sm:$0xff]
          %v6667 = vld [vmem:[#allocation2 + $0x4a8] sm:$0xff]
          %v6668 = vld [vmem:[#allocation2 + $0x4b0] sm:$0xff]
          %v6669 = vld [vmem:[#allocation2 + $0x4b8] sm:$0xff]
          %v6670 = vld [vmem:[#allocation2 + $0x4c0] sm:$0xff]
          %v6671 = vld [vmem:[#allocation2 + $0x4c8] sm:$0xff]
          %v6672 = vld [vmem:[#allocation2 + $0x4d0] sm:$0xff]
          %v6673 = vld [vmem:[#allocation2 + $0x4d8] sm:$0xff]
          %v6674 = vld [vmem:[#allocation2 + $0x4e0] sm:$0xff]
          %v6675 = vld [vmem:[#allocation2 + $0x4e8] sm:$0xff]
          %v6676 = vld [vmem:[#allocation2 + $0x4f0] sm:$0xff]
          %v6677 = vld [vmem:[#allocation2 + $0x4f8] sm:$0xff]
          %v6678 = vld [vmem:[%s3] sm:$0xff]
          %v6679 = vld [vmem:[%s3 + $0x8] sm:$0xff]
          %v6680 = vld [vmem:[%s3 + $0x10] sm:$0xff]
          %v6681 = vld [vmem:[%s3 + $0x18] sm:$0xff]
          %v6682 = vld [vmem:[%s3 + $0x20] sm:$0xff]
          %v6683 = vld [vmem:[%s3 + $0x28] sm:$0xff]
          %v6684 = vld [vmem:[%s3 + $0x30] sm:$0xff]
          %v6685 = vld [vmem:[%s3 + $0x38] sm:$0xff]
          %v6686 = vld [vmem:[%s3 + $0x40] sm:$0xff]
          %v6687 = vld [vmem:[%s3 + $0x48] sm:$0xff]
          %v6688 = vld [vmem:[%s3 + $0x50] sm:$0xff]
          %v6689 = vld [vmem:[%s3 + $0x58] sm:$0xff]
          %v6690 = vld [vmem:[%s3 + $0x60] sm:$0xff]
          %v6691 = vld [vmem:[%s3 + $0x68] sm:$0xff]
          %v6692 = vld [vmem:[%s3 + $0x70] sm:$0xff]
          %v6693 = vld [vmem:[%s3 + $0x78] sm:$0xff]
          %v6694 = vld [vmem:[%s3 + $0x80] sm:$0xff]
          %v6695 = vld [vmem:[%s3 + $0x88] sm:$0xff]
          %v6696 = vld [vmem:[%s3 + $0x90] sm:$0xff]
          %v6697 = vld [vmem:[%s3 + $0x98] sm:$0xff]
          %v6698 = vld [vmem:[%s3 + $0xa0] sm:$0xff]
          %v6699 = vld [vmem:[%s3 + $0xa8] sm:$0xff]
          %v6700 = vld [vmem:[%s3 + $0xb0] sm:$0xff]
          %v6701 = vld [vmem:[%s3 + $0xb8] sm:$0xff]
          %v6702 = vld [vmem:[%s3 + $0xc0] sm:$0xff]
          %v6703 = vld [vmem:[%s3 + $0xc8] sm:$0xff]
          %v6704 = vld [vmem:[%s3 + $0xd0] sm:$0xff]
          %v6705 = vld [vmem:[%s3 + $0xd8] sm:$0xff]
          %v6706 = vld [vmem:[%s3 + $0xe0] sm:$0xff]
          %v6707 = vld [vmem:[%s3 + $0xe8] sm:$0xff]
          %v6708 = vld [vmem:[%s3 + $0xf0] sm:$0xff]
          %v6709 = vld [vmem:[%s3 + $0xf8] sm:$0xff]
          %v6710 = vld [vmem:[%s3 + $0x100] sm:$0xff]
          %v6711 = vld [vmem:[%s3 + $0x108] sm:$0xff]
          %v6712 = vld [vmem:[%s3 + $0x110] sm:$0xff]
          %v6713 = vld [vmem:[%s3 + $0x118] sm:$0xff]
          %v6714 = vld [vmem:[%s3 + $0x120] sm:$0xff]
          %v6715 = vld [vmem:[%s3 + $0x128] sm:$0xff]
          %v6716 = vld [vmem:[%s3 + $0x130] sm:$0xff]
          %v6717 = vld [vmem:[%s3 + $0x138] sm:$0xff]
          %v6718 = vld [vmem:[%s3 + $0x140] sm:$0xff]
          %v6719 = vld [vmem:[%s3 + $0x148] sm:$0xff]
          %v6720 = vld [vmem:[%s3 + $0x150] sm:$0xff]
          %v6721 = vld [vmem:[%s3 + $0x158] sm:$0xff]
          %v6722 = vld [vmem:[%s3 + $0x160] sm:$0xff]
          %v6723 = vld [vmem:[%s3 + $0x168] sm:$0xff]
          %v6724 = vld [vmem:[%s3 + $0x170] sm:$0xff]
          %v6725 = vld [vmem:[%s3 + $0x178] sm:$0xff]
          %v6726 = vld [vmem:[%s3 + $0x180] sm:$0xff]
          %v6727 = vld [vmem:[%s3 + $0x188] sm:$0xff]
          %v6728 = vld [vmem:[%s3 + $0x190] sm:$0xff]
          %v6729 = vld [vmem:[%s3 + $0x198] sm:$0xff]
          %v6730 = vld [vmem:[%s3 + $0x1a0] sm:$0xff]
          %v6731 = vld [vmem:[%s3 + $0x1a8] sm:$0xff]
          %v6732 = vld [vmem:[%s3 + $0x1b0] sm:$0xff]
          %v6733 = vld [vmem:[%s3 + $0x1b8] sm:$0xff]
          %v6734 = vld [vmem:[%s3 + $0x1c0] sm:$0xff]
          %v6735 = vld [vmem:[%s3 + $0x1c8] sm:$0xff]
          %v6736 = vld [vmem:[%s3 + $0x1d0] sm:$0xff]
          %v6737 = vld [vmem:[%s3 + $0x1d8] sm:$0xff]
          %v6738 = vld [vmem:[%s3 + $0x1e0] sm:$0xff]
          %v6739 = vld [vmem:[%s3 + $0x1e8] sm:$0xff]
          %v6740 = vld [vmem:[%s3 + $0x1f0] sm:$0xff]
          %v6741 = vld [vmem:[%s3 + $0x1f8] sm:$0xff]
          %v6742 = vld [vmem:[%s3 + $0x200] sm:$0xff]
          %v6743 = vld [vmem:[%s3 + $0x208] sm:$0xff]
          %v6744 = vld [vmem:[%s3 + $0x210] sm:$0xff]
          %v6745 = vld [vmem:[%s3 + $0x218] sm:$0xff]
          %v6746 = vld [vmem:[%s3 + $0x220] sm:$0xff]
          %v6747 = vld [vmem:[%s3 + $0x228] sm:$0xff]
          %v6748 = vld [vmem:[%s3 + $0x230] sm:$0xff]
          %v6749 = vld [vmem:[%s3 + $0x238] sm:$0xff]
          %v6750 = vld [vmem:[%s3 + $0x240] sm:$0xff]
          %v6751 = vld [vmem:[%s3 + $0x248] sm:$0xff]
          %v6752 = vld [vmem:[%s3 + $0x250] sm:$0xff]
          %v6753 = vld [vmem:[%s3 + $0x258] sm:$0xff]
          %v6754 = vld [vmem:[%s3 + $0x260] sm:$0xff]
          %v6755 = vld [vmem:[%s3 + $0x268] sm:$0xff]
          %v6756 = vld [vmem:[%s3 + $0x270] sm:$0xff]
          %v6757 = vld [vmem:[%s3 + $0x278] sm:$0xff]
          %v6758 = vld [vmem:[%s3 + $0x280] sm:$0xff]
          %v6759 = vld [vmem:[%s3 + $0x288] sm:$0xff]
          %v6760 = vld [vmem:[%s3 + $0x290] sm:$0xff]
          %v6761 = vld [vmem:[%s3 + $0x298] sm:$0xff]
          %v6762 = vld [vmem:[%s3 + $0x2a0] sm:$0xff]
          %v6763 = vld [vmem:[%s3 + $0x2a8] sm:$0xff]
          %v6764 = vld [vmem:[%s3 + $0x2b0] sm:$0xff]
          %v6765 = vld [vmem:[%s3 + $0x2b8] sm:$0xff]
          %v6766 = vld [vmem:[%s3 + $0x2c0] sm:$0xff]
          %v6767 = vld [vmem:[%s3 + $0x2c8] sm:$0xff]
          %v6768 = vld [vmem:[%s3 + $0x2d0] sm:$0xff]
          %v6769 = vld [vmem:[%s3 + $0x2d8] sm:$0xff]
          %v6770 = vld [vmem:[%s3 + $0x2e0] sm:$0xff]
          %v6771 = vld [vmem:[%s3 + $0x2e8] sm:$0xff]
          %v6772 = vld [vmem:[%s3 + $0x2f0] sm:$0xff]
          %v6773 = vld [vmem:[%s3 + $0x2f8] sm:$0xff]
          %v6774 = vld [vmem:[%s3 + $0x300] sm:$0xff]
          %v6775 = vld [vmem:[%s3 + $0x308] sm:$0xff]
          %v6776 = vld [vmem:[%s3 + $0x310] sm:$0xff]
          %v6777 = vld [vmem:[%s3 + $0x318] sm:$0xff]
          %v6778 = vld [vmem:[%s3 + $0x320] sm:$0xff]
          %v6779 = vld [vmem:[%s3 + $0x328] sm:$0xff]
          %v6780 = vld [vmem:[%s3 + $0x330] sm:$0xff]
          %v6781 = vld [vmem:[%s3 + $0x338] sm:$0xff]
          %v6782 = vld [vmem:[%s3 + $0x340] sm:$0xff]
          %v6783 = vld [vmem:[%s3 + $0x348] sm:$0xff]
          %v6784 = vld [vmem:[%s3 + $0x350] sm:$0xff]
          %v6785 = vld [vmem:[%s3 + $0x358] sm:$0xff]
          %v6786 = vld [vmem:[%s3 + $0x360] sm:$0xff]
          %v6787 = vld [vmem:[%s3 + $0x368] sm:$0xff]
          %v6788 = vld [vmem:[%s3 + $0x370] sm:$0xff]
          %v6789 = vld [vmem:[%s3 + $0x378] sm:$0xff]
          %v6790 = vld [vmem:[%s3 + $0x380] sm:$0xff]
          %v6791 = vld [vmem:[%s3 + $0x388] sm:$0xff]
          %v6792 = vld [vmem:[%s3 + $0x390] sm:$0xff]
          %v6793 = vld [vmem:[%s3 + $0x398] sm:$0xff]
          %v6794 = vld [vmem:[%s3 + $0x3a0] sm:$0xff]
          %v6795 = vld [vmem:[%s3 + $0x3a8] sm:$0xff]
          %v6796 = vld [vmem:[%s3 + $0x3b0] sm:$0xff]
          %v6797 = vld [vmem:[%s3 + $0x3b8] sm:$0xff]
          %v6798 = vld [vmem:[%s3 + $0x3c0] sm:$0xff]
          %v6799 = vld [vmem:[%s3 + $0x3c8] sm:$0xff]
          %v6800 = vld [vmem:[%s3 + $0x3d0] sm:$0xff]
          %v6801 = vld [vmem:[%s3 + $0x3d8] sm:$0xff]
          %v6802 = vld [vmem:[%s3 + $0x3e0] sm:$0xff]
          %v6803 = vld [vmem:[%s3 + $0x3e8] sm:$0xff]
          %v6804 = vld [vmem:[%s3 + $0x3f0] sm:$0xff]
          %v6805 = vld [vmem:[%s3 + $0x3f8] sm:$0xff]
          %v6806 = vld [vmem:[%s3 + $0x400] sm:$0xff]
          %v6807 = vld [vmem:[%s3 + $0x408] sm:$0xff]
          %v6808 = vld [vmem:[%s3 + $0x410] sm:$0xff]
          %v6809 = vld [vmem:[%s3 + $0x418] sm:$0xff]
          %v6810 = vld [vmem:[%s3 + $0x420] sm:$0xff]
          %v6811 = vld [vmem:[%s3 + $0x428] sm:$0xff]
          %v6812 = vld [vmem:[%s3 + $0x430] sm:$0xff]
          %v6813 = vld [vmem:[%s3 + $0x438] sm:$0xff]
          %v6814 = vld [vmem:[%s3 + $0x440] sm:$0xff]
          %v6815 = vld [vmem:[%s3 + $0x448] sm:$0xff]
          %v6816 = vld [vmem:[%s3 + $0x450] sm:$0xff]
          %v6817 = vld [vmem:[%s3 + $0x458] sm:$0xff]
          %v6818 = vld [vmem:[%s3 + $0x460] sm:$0xff]
          %v6819 = vld [vmem:[%s3 + $0x468] sm:$0xff]
          %v6820 = vld [vmem:[%s3 + $0x470] sm:$0xff]
          %v6821 = vld [vmem:[%s3 + $0x478] sm:$0xff]
          %v6822 = vld [vmem:[%s3 + $0x480] sm:$0xff]
          %v6823 = vld [vmem:[%s3 + $0x488] sm:$0xff]
          %v6824 = vld [vmem:[%s3 + $0x490] sm:$0xff]
          %v6825 = vld [vmem:[%s3 + $0x498] sm:$0xff]
          %v6826 = vld [vmem:[%s3 + $0x4a0] sm:$0xff]
          %v6827 = vld [vmem:[%s3 + $0x4a8] sm:$0xff]
          %v6828 = vld [vmem:[%s3 + $0x4b0] sm:$0xff]
          %v6829 = vld [vmem:[%s3 + $0x4b8] sm:$0xff]
          %v6830 = vld [vmem:[%s3 + $0x4c0] sm:$0xff]
          %v6831 = vld [vmem:[%s3 + $0x4c8] sm:$0xff]
          %v6832 = vld [vmem:[%s3 + $0x4d0] sm:$0xff]
          %v6833 = vld [vmem:[%s3 + $0x4d8] sm:$0xff]
          %v6834 = vld [vmem:[%s3 + $0x4e0] sm:$0xff]
          %v6835 = vld [vmem:[%s3 + $0x4e8] sm:$0xff]
          %v6836 = vld [vmem:[%s3 + $0x4f0] sm:$0xff]
          %v6837 = vld [vmem:[%s3 + $0x4f8] sm:$0xff]
          %6839 = vset.pattern.permute.xlu0 0
          %6840 = vperm.xlu0 %6839, %v6518
          %v6841 = vpop.permute.xlu0 %6840
          %6844 = vset.pattern.permute.xlu0 0
          %6845 = vperm.xlu0 %6844, %v6519
          %v6846 = vpop.permute.xlu0 %6845
          %6849 = vset.pattern.permute.xlu0 0
          %6850 = vperm.xlu0 %6849, %v6520
          %v6851 = vpop.permute.xlu0 %6850
          %6854 = vset.pattern.permute.xlu0 0
          %6855 = vperm.xlu0 %6854, %v6521
          %v6856 = vpop.permute.xlu0 %6855
          %6859 = vset.pattern.permute.xlu0 0
          %6860 = vperm.xlu0 %6859, %v6522
          %v6861 = vpop.permute.xlu0 %6860
          %6864 = vset.pattern.permute.xlu0 0
          %6865 = vperm.xlu0 %6864, %v6523
          %v6866 = vpop.permute.xlu0 %6865
          %6869 = vset.pattern.permute.xlu0 0
          %6870 = vperm.xlu0 %6869, %v6524
          %v6871 = vpop.permute.xlu0 %6870
          %6874 = vset.pattern.permute.xlu0 0
          %6875 = vperm.xlu0 %6874, %v6525
          %v6876 = vpop.permute.xlu0 %6875
          %6879 = vset.pattern.permute.xlu0 0
          %6880 = vperm.xlu0 %6879, %v6526
          %v6881 = vpop.permute.xlu0 %6880
          %6884 = vset.pattern.permute.xlu0 0
          %6885 = vperm.xlu0 %6884, %v6527
          %v6886 = vpop.permute.xlu0 %6885
          %6889 = vset.pattern.permute.xlu0 0
          %6890 = vperm.xlu0 %6889, %v6528
          %v6891 = vpop.permute.xlu0 %6890
          %6894 = vset.pattern.permute.xlu0 0
          %6895 = vperm.xlu0 %6894, %v6529
          %v6896 = vpop.permute.xlu0 %6895
          %6899 = vset.pattern.permute.xlu0 0
          %6900 = vperm.xlu0 %6899, %v6530
          %v6901 = vpop.permute.xlu0 %6900
          %6904 = vset.pattern.permute.xlu0 0
          %6905 = vperm.xlu0 %6904, %v6531
          %v6906 = vpop.permute.xlu0 %6905
          %6909 = vset.pattern.permute.xlu0 0
          %6910 = vperm.xlu0 %6909, %v6532
          %v6911 = vpop.permute.xlu0 %6910
          %6914 = vset.pattern.permute.xlu0 0
          %6915 = vperm.xlu0 %6914, %v6533
          %v6916 = vpop.permute.xlu0 %6915
          %6919 = vset.pattern.permute.xlu0 0
          %6920 = vperm.xlu0 %6919, %v6534
          %v6921 = vpop.permute.xlu0 %6920
          %6924 = vset.pattern.permute.xlu0 0
          %6925 = vperm.xlu0 %6924, %v6535
          %v6926 = vpop.permute.xlu0 %6925
          %6929 = vset.pattern.permute.xlu0 0
          %6930 = vperm.xlu0 %6929, %v6536
          %v6931 = vpop.permute.xlu0 %6930
          %6934 = vset.pattern.permute.xlu0 0
          %6935 = vperm.xlu0 %6934, %v6537
          %v6936 = vpop.permute.xlu0 %6935
          %6939 = vset.pattern.permute.xlu0 0
          %6940 = vperm.xlu0 %6939, %v6538
          %v6941 = vpop.permute.xlu0 %6940
          %6944 = vset.pattern.permute.xlu0 0
          %6945 = vperm.xlu0 %6944, %v6539
          %v6946 = vpop.permute.xlu0 %6945
          %6949 = vset.pattern.permute.xlu0 0
          %6950 = vperm.xlu0 %6949, %v6540
          %v6951 = vpop.permute.xlu0 %6950
          %6954 = vset.pattern.permute.xlu0 0
          %6955 = vperm.xlu0 %6954, %v6541
          %v6956 = vpop.permute.xlu0 %6955
          %6959 = vset.pattern.permute.xlu0 0
          %6960 = vperm.xlu0 %6959, %v6542
          %v6961 = vpop.permute.xlu0 %6960
          %6964 = vset.pattern.permute.xlu0 0
          %6965 = vperm.xlu0 %6964, %v6543
          %v6966 = vpop.permute.xlu0 %6965
          %6969 = vset.pattern.permute.xlu0 0
          %6970 = vperm.xlu0 %6969, %v6544
          %v6971 = vpop.permute.xlu0 %6970
          %6974 = vset.pattern.permute.xlu0 0
          %6975 = vperm.xlu0 %6974, %v6545
          %v6976 = vpop.permute.xlu0 %6975
          %6979 = vset.pattern.permute.xlu0 0
          %6980 = vperm.xlu0 %6979, %v6546
          %v6981 = vpop.permute.xlu0 %6980
          %6984 = vset.pattern.permute.xlu0 0
          %6985 = vperm.xlu0 %6984, %v6547
          %v6986 = vpop.permute.xlu0 %6985
          %6989 = vset.pattern.permute.xlu0 0
          %6990 = vperm.xlu0 %6989, %v6548
          %v6991 = vpop.permute.xlu0 %6990
          %6994 = vset.pattern.permute.xlu0 0
          %6995 = vperm.xlu0 %6994, %v6549
          %v6996 = vpop.permute.xlu0 %6995
          %6999 = vset.pattern.permute.xlu0 0
          %7000 = vperm.xlu0 %6999, %v6550
          %v7001 = vpop.permute.xlu0 %7000
          %7004 = vset.pattern.permute.xlu0 0
          %7005 = vperm.xlu0 %7004, %v6551
          %v7006 = vpop.permute.xlu0 %7005
          %7009 = vset.pattern.permute.xlu0 0
          %7010 = vperm.xlu0 %7009, %v6552
          %v7011 = vpop.permute.xlu0 %7010
          %7014 = vset.pattern.permute.xlu0 0
          %7015 = vperm.xlu0 %7014, %v6553
          %v7016 = vpop.permute.xlu0 %7015
          %7019 = vset.pattern.permute.xlu0 0
          %7020 = vperm.xlu0 %7019, %v6554
          %v7021 = vpop.permute.xlu0 %7020
          %7024 = vset.pattern.permute.xlu0 0
          %7025 = vperm.xlu0 %7024, %v6555
          %v7026 = vpop.permute.xlu0 %7025
          %7029 = vset.pattern.permute.xlu0 0
          %7030 = vperm.xlu0 %7029, %v6556
          %v7031 = vpop.permute.xlu0 %7030
          %7034 = vset.pattern.permute.xlu0 0
          %7035 = vperm.xlu0 %7034, %v6557
          %v7036 = vpop.permute.xlu0 %7035
          %7039 = vset.pattern.permute.xlu0 0
          %7040 = vperm.xlu0 %7039, %v6558
          %v7041 = vpop.permute.xlu0 %7040
          %7044 = vset.pattern.permute.xlu0 0
          %7045 = vperm.xlu0 %7044, %v6559
          %v7046 = vpop.permute.xlu0 %7045
          %7049 = vset.pattern.permute.xlu0 0
          %7050 = vperm.xlu0 %7049, %v6560
          %v7051 = vpop.permute.xlu0 %7050
          %7054 = vset.pattern.permute.xlu0 0
          %7055 = vperm.xlu0 %7054, %v6561
          %v7056 = vpop.permute.xlu0 %7055
          %7059 = vset.pattern.permute.xlu0 0
          %7060 = vperm.xlu0 %7059, %v6562
          %v7061 = vpop.permute.xlu0 %7060
          %7064 = vset.pattern.permute.xlu0 0
          %7065 = vperm.xlu0 %7064, %v6563
          %v7066 = vpop.permute.xlu0 %7065
          %7069 = vset.pattern.permute.xlu0 0
          %7070 = vperm.xlu0 %7069, %v6564
          %v7071 = vpop.permute.xlu0 %7070
          %7074 = vset.pattern.permute.xlu0 0
          %7075 = vperm.xlu0 %7074, %v6565
          %v7076 = vpop.permute.xlu0 %7075
          %7079 = vset.pattern.permute.xlu0 0
          %7080 = vperm.xlu0 %7079, %v6566
          %v7081 = vpop.permute.xlu0 %7080
          %7084 = vset.pattern.permute.xlu0 0
          %7085 = vperm.xlu0 %7084, %v6567
          %v7086 = vpop.permute.xlu0 %7085
          %7089 = vset.pattern.permute.xlu0 0
          %7090 = vperm.xlu0 %7089, %v6568
          %v7091 = vpop.permute.xlu0 %7090
          %7094 = vset.pattern.permute.xlu0 0
          %7095 = vperm.xlu0 %7094, %v6569
          %v7096 = vpop.permute.xlu0 %7095
          %7099 = vset.pattern.permute.xlu0 0
          %7100 = vperm.xlu0 %7099, %v6570
          %v7101 = vpop.permute.xlu0 %7100
          %7104 = vset.pattern.permute.xlu0 0
          %7105 = vperm.xlu0 %7104, %v6571
          %v7106 = vpop.permute.xlu0 %7105
          %7109 = vset.pattern.permute.xlu0 0
          %7110 = vperm.xlu0 %7109, %v6572
          %v7111 = vpop.permute.xlu0 %7110
          %7114 = vset.pattern.permute.xlu0 0
          %7115 = vperm.xlu0 %7114, %v6573
          %v7116 = vpop.permute.xlu0 %7115
          %7119 = vset.pattern.permute.xlu0 0
          %7120 = vperm.xlu0 %7119, %v6574
          %v7121 = vpop.permute.xlu0 %7120
          %7124 = vset.pattern.permute.xlu0 0
          %7125 = vperm.xlu0 %7124, %v6575
          %v7126 = vpop.permute.xlu0 %7125
          %7129 = vset.pattern.permute.xlu0 0
          %7130 = vperm.xlu0 %7129, %v6576
          %v7131 = vpop.permute.xlu0 %7130
          %7134 = vset.pattern.permute.xlu0 0
          %7135 = vperm.xlu0 %7134, %v6577
          %v7136 = vpop.permute.xlu0 %7135
          %7139 = vset.pattern.permute.xlu0 0
          %7140 = vperm.xlu0 %7139, %v6578
          %v7141 = vpop.permute.xlu0 %7140
          %7144 = vset.pattern.permute.xlu0 0
          %7145 = vperm.xlu0 %7144, %v6579
          %v7146 = vpop.permute.xlu0 %7145
          %7149 = vset.pattern.permute.xlu0 0
          %7150 = vperm.xlu0 %7149, %v6580
          %v7151 = vpop.permute.xlu0 %7150
          %7154 = vset.pattern.permute.xlu0 0
          %7155 = vperm.xlu0 %7154, %v6581
          %v7156 = vpop.permute.xlu0 %7155
          %7159 = vset.pattern.permute.xlu0 0
          %7160 = vperm.xlu0 %7159, %v6582
          %v7161 = vpop.permute.xlu0 %7160
          %7164 = vset.pattern.permute.xlu0 0
          %7165 = vperm.xlu0 %7164, %v6583
          %v7166 = vpop.permute.xlu0 %7165
          %7169 = vset.pattern.permute.xlu0 0
          %7170 = vperm.xlu0 %7169, %v6584
          %v7171 = vpop.permute.xlu0 %7170
          %7174 = vset.pattern.permute.xlu0 0
          %7175 = vperm.xlu0 %7174, %v6585
          %v7176 = vpop.permute.xlu0 %7175
          %7179 = vset.pattern.permute.xlu0 0
          %7180 = vperm.xlu0 %7179, %v6586
          %v7181 = vpop.permute.xlu0 %7180
          %7184 = vset.pattern.permute.xlu0 0
          %7185 = vperm.xlu0 %7184, %v6587
          %v7186 = vpop.permute.xlu0 %7185
          %7189 = vset.pattern.permute.xlu0 0
          %7190 = vperm.xlu0 %7189, %v6588
          %v7191 = vpop.permute.xlu0 %7190
          %7194 = vset.pattern.permute.xlu0 0
          %7195 = vperm.xlu0 %7194, %v6589
          %v7196 = vpop.permute.xlu0 %7195
          %7199 = vset.pattern.permute.xlu0 0
          %7200 = vperm.xlu0 %7199, %v6590
          %v7201 = vpop.permute.xlu0 %7200
          %7204 = vset.pattern.permute.xlu0 0
          %7205 = vperm.xlu0 %7204, %v6591
          %v7206 = vpop.permute.xlu0 %7205
          %7209 = vset.pattern.permute.xlu0 0
          %7210 = vperm.xlu0 %7209, %v6592
          %v7211 = vpop.permute.xlu0 %7210
          %7214 = vset.pattern.permute.xlu0 0
          %7215 = vperm.xlu0 %7214, %v6593
          %v7216 = vpop.permute.xlu0 %7215
          %7219 = vset.pattern.permute.xlu0 0
          %7220 = vperm.xlu0 %7219, %v6594
          %v7221 = vpop.permute.xlu0 %7220
          %7224 = vset.pattern.permute.xlu0 0
          %7225 = vperm.xlu0 %7224, %v6595
          %v7226 = vpop.permute.xlu0 %7225
          %7229 = vset.pattern.permute.xlu0 0
          %7230 = vperm.xlu0 %7229, %v6596
          %v7231 = vpop.permute.xlu0 %7230
          %7234 = vset.pattern.permute.xlu0 0
          %7235 = vperm.xlu0 %7234, %v6597
          %v7236 = vpop.permute.xlu0 %7235
          %7239 = vset.pattern.permute.xlu0 0
          %7240 = vperm.xlu0 %7239, %v6598
          %v7241 = vpop.permute.xlu0 %7240
          %7244 = vset.pattern.permute.xlu0 0
          %7245 = vperm.xlu0 %7244, %v6599
          %v7246 = vpop.permute.xlu0 %7245
          %7249 = vset.pattern.permute.xlu0 0
          %7250 = vperm.xlu0 %7249, %v6600
          %v7251 = vpop.permute.xlu0 %7250
          %7254 = vset.pattern.permute.xlu0 0
          %7255 = vperm.xlu0 %7254, %v6601
          %v7256 = vpop.permute.xlu0 %7255
          %7259 = vset.pattern.permute.xlu0 0
          %7260 = vperm.xlu0 %7259, %v6602
          %v7261 = vpop.permute.xlu0 %7260
          %7264 = vset.pattern.permute.xlu0 0
          %7265 = vperm.xlu0 %7264, %v6603
          %v7266 = vpop.permute.xlu0 %7265
          %7269 = vset.pattern.permute.xlu0 0
          %7270 = vperm.xlu0 %7269, %v6604
          %v7271 = vpop.permute.xlu0 %7270
          %7274 = vset.pattern.permute.xlu0 0
          %7275 = vperm.xlu0 %7274, %v6605
          %v7276 = vpop.permute.xlu0 %7275
          %7279 = vset.pattern.permute.xlu0 0
          %7280 = vperm.xlu0 %7279, %v6606
          %v7281 = vpop.permute.xlu0 %7280
          %7284 = vset.pattern.permute.xlu0 0
          %7285 = vperm.xlu0 %7284, %v6607
          %v7286 = vpop.permute.xlu0 %7285
          %7289 = vset.pattern.permute.xlu0 0
          %7290 = vperm.xlu0 %7289, %v6608
          %v7291 = vpop.permute.xlu0 %7290
          %7294 = vset.pattern.permute.xlu0 0
          %7295 = vperm.xlu0 %7294, %v6609
          %v7296 = vpop.permute.xlu0 %7295
          %7299 = vset.pattern.permute.xlu0 0
          %7300 = vperm.xlu0 %7299, %v6610
          %v7301 = vpop.permute.xlu0 %7300
          %7304 = vset.pattern.permute.xlu0 0
          %7305 = vperm.xlu0 %7304, %v6611
          %v7306 = vpop.permute.xlu0 %7305
          %7309 = vset.pattern.permute.xlu0 0
          %7310 = vperm.xlu0 %7309, %v6612
          %v7311 = vpop.permute.xlu0 %7310
          %7314 = vset.pattern.permute.xlu0 0
          %7315 = vperm.xlu0 %7314, %v6613
          %v7316 = vpop.permute.xlu0 %7315
          %7319 = vset.pattern.permute.xlu0 0
          %7320 = vperm.xlu0 %7319, %v6614
          %v7321 = vpop.permute.xlu0 %7320
          %7324 = vset.pattern.permute.xlu0 0
          %7325 = vperm.xlu0 %7324, %v6615
          %v7326 = vpop.permute.xlu0 %7325
          %7329 = vset.pattern.permute.xlu0 0
          %7330 = vperm.xlu0 %7329, %v6616
          %v7331 = vpop.permute.xlu0 %7330
          %7334 = vset.pattern.permute.xlu0 0
          %7335 = vperm.xlu0 %7334, %v6617
          %v7336 = vpop.permute.xlu0 %7335
          %7339 = vset.pattern.permute.xlu0 0
          %7340 = vperm.xlu0 %7339, %v6618
          %v7341 = vpop.permute.xlu0 %7340
          %7344 = vset.pattern.permute.xlu0 0
          %7345 = vperm.xlu0 %7344, %v6619
          %v7346 = vpop.permute.xlu0 %7345
          %7349 = vset.pattern.permute.xlu0 0
          %7350 = vperm.xlu0 %7349, %v6620
          %v7351 = vpop.permute.xlu0 %7350
          %7354 = vset.pattern.permute.xlu0 0
          %7355 = vperm.xlu0 %7354, %v6621
          %v7356 = vpop.permute.xlu0 %7355
          %7359 = vset.pattern.permute.xlu0 0
          %7360 = vperm.xlu0 %7359, %v6622
          %v7361 = vpop.permute.xlu0 %7360
          %7364 = vset.pattern.permute.xlu0 0
          %7365 = vperm.xlu0 %7364, %v6623
          %v7366 = vpop.permute.xlu0 %7365
          %7369 = vset.pattern.permute.xlu0 0
          %7370 = vperm.xlu0 %7369, %v6624
          %v7371 = vpop.permute.xlu0 %7370
          %7374 = vset.pattern.permute.xlu0 0
          %7375 = vperm.xlu0 %7374, %v6625
          %v7376 = vpop.permute.xlu0 %7375
          %7379 = vset.pattern.permute.xlu0 0
          %7380 = vperm.xlu0 %7379, %v6626
          %v7381 = vpop.permute.xlu0 %7380
          %7384 = vset.pattern.permute.xlu0 0
          %7385 = vperm.xlu0 %7384, %v6627
          %v7386 = vpop.permute.xlu0 %7385
          %7389 = vset.pattern.permute.xlu0 0
          %7390 = vperm.xlu0 %7389, %v6628
          %v7391 = vpop.permute.xlu0 %7390
          %7394 = vset.pattern.permute.xlu0 0
          %7395 = vperm.xlu0 %7394, %v6629
          %v7396 = vpop.permute.xlu0 %7395
          %7399 = vset.pattern.permute.xlu0 0
          %7400 = vperm.xlu0 %7399, %v6630
          %v7401 = vpop.permute.xlu0 %7400
          %7404 = vset.pattern.permute.xlu0 0
          %7405 = vperm.xlu0 %7404, %v6631
          %v7406 = vpop.permute.xlu0 %7405
          %7409 = vset.pattern.permute.xlu0 0
          %7410 = vperm.xlu0 %7409, %v6632
          %v7411 = vpop.permute.xlu0 %7410
          %7414 = vset.pattern.permute.xlu0 0
          %7415 = vperm.xlu0 %7414, %v6633
          %v7416 = vpop.permute.xlu0 %7415
          %7419 = vset.pattern.permute.xlu0 0
          %7420 = vperm.xlu0 %7419, %v6634
          %v7421 = vpop.permute.xlu0 %7420
          %7424 = vset.pattern.permute.xlu0 0
          %7425 = vperm.xlu0 %7424, %v6635
          %v7426 = vpop.permute.xlu0 %7425
          %7429 = vset.pattern.permute.xlu0 0
          %7430 = vperm.xlu0 %7429, %v6636
          %v7431 = vpop.permute.xlu0 %7430
          %7434 = vset.pattern.permute.xlu0 0
          %7435 = vperm.xlu0 %7434, %v6637
          %v7436 = vpop.permute.xlu0 %7435
          %7439 = vset.pattern.permute.xlu0 0
          %7440 = vperm.xlu0 %7439, %v6638
          %v7441 = vpop.permute.xlu0 %7440
          %7444 = vset.pattern.permute.xlu0 0
          %7445 = vperm.xlu0 %7444, %v6639
          %v7446 = vpop.permute.xlu0 %7445
          %7449 = vset.pattern.permute.xlu0 0
          %7450 = vperm.xlu0 %7449, %v6640
          %v7451 = vpop.permute.xlu0 %7450
          %7454 = vset.pattern.permute.xlu0 0
          %7455 = vperm.xlu0 %7454, %v6641
          %v7456 = vpop.permute.xlu0 %7455
          %7459 = vset.pattern.permute.xlu0 0
          %7460 = vperm.xlu0 %7459, %v6642
          %v7461 = vpop.permute.xlu0 %7460
          %7464 = vset.pattern.permute.xlu0 0
          %7465 = vperm.xlu0 %7464, %v6643
          %v7466 = vpop.permute.xlu0 %7465
          %7469 = vset.pattern.permute.xlu0 0
          %7470 = vperm.xlu0 %7469, %v6644
          %v7471 = vpop.permute.xlu0 %7470
          %7474 = vset.pattern.permute.xlu0 0
          %7475 = vperm.xlu0 %7474, %v6645
          %v7476 = vpop.permute.xlu0 %7475
          %7479 = vset.pattern.permute.xlu0 0
          %7480 = vperm.xlu0 %7479, %v6646
          %v7481 = vpop.permute.xlu0 %7480
          %7484 = vset.pattern.permute.xlu0 0
          %7485 = vperm.xlu0 %7484, %v6647
          %v7486 = vpop.permute.xlu0 %7485
          %7489 = vset.pattern.permute.xlu0 0
          %7490 = vperm.xlu0 %7489, %v6648
          %v7491 = vpop.permute.xlu0 %7490
          %7494 = vset.pattern.permute.xlu0 0
          %7495 = vperm.xlu0 %7494, %v6649
          %v7496 = vpop.permute.xlu0 %7495
          %7499 = vset.pattern.permute.xlu0 0
          %7500 = vperm.xlu0 %7499, %v6650
          %v7501 = vpop.permute.xlu0 %7500
          %7504 = vset.pattern.permute.xlu0 0
          %7505 = vperm.xlu0 %7504, %v6651
          %v7506 = vpop.permute.xlu0 %7505
          %7509 = vset.pattern.permute.xlu0 0
          %7510 = vperm.xlu0 %7509, %v6652
          %v7511 = vpop.permute.xlu0 %7510
          %7514 = vset.pattern.permute.xlu0 0
          %7515 = vperm.xlu0 %7514, %v6653
          %v7516 = vpop.permute.xlu0 %7515
          %7519 = vset.pattern.permute.xlu0 0
          %7520 = vperm.xlu0 %7519, %v6654
          %v7521 = vpop.permute.xlu0 %7520
          %7524 = vset.pattern.permute.xlu0 0
          %7525 = vperm.xlu0 %7524, %v6655
          %v7526 = vpop.permute.xlu0 %7525
          %7529 = vset.pattern.permute.xlu0 0
          %7530 = vperm.xlu0 %7529, %v6656
          %v7531 = vpop.permute.xlu0 %7530
          %7534 = vset.pattern.permute.xlu0 0
          %7535 = vperm.xlu0 %7534, %v6657
          %v7536 = vpop.permute.xlu0 %7535
          %7539 = vset.pattern.permute.xlu0 0
          %7540 = vperm.xlu0 %7539, %v6658
          %v7541 = vpop.permute.xlu0 %7540
          %7544 = vset.pattern.permute.xlu0 0
          %7545 = vperm.xlu0 %7544, %v6659
          %v7546 = vpop.permute.xlu0 %7545
          %7549 = vset.pattern.permute.xlu0 0
          %7550 = vperm.xlu0 %7549, %v6660
          %v7551 = vpop.permute.xlu0 %7550
          %7554 = vset.pattern.permute.xlu0 0
          %7555 = vperm.xlu0 %7554, %v6661
          %v7556 = vpop.permute.xlu0 %7555
          %7559 = vset.pattern.permute.xlu0 0
          %7560 = vperm.xlu0 %7559, %v6662
          %v7561 = vpop.permute.xlu0 %7560
          %7564 = vset.pattern.permute.xlu0 0
          %7565 = vperm.xlu0 %7564, %v6663
          %v7566 = vpop.permute.xlu0 %7565
          %7569 = vset.pattern.permute.xlu0 0
          %7570 = vperm.xlu0 %7569, %v6664
          %v7571 = vpop.permute.xlu0 %7570
          %7574 = vset.pattern.permute.xlu0 0
          %7575 = vperm.xlu0 %7574, %v6665
          %v7576 = vpop.permute.xlu0 %7575
          %7579 = vset.pattern.permute.xlu0 0
          %7580 = vperm.xlu0 %7579, %v6666
          %v7581 = vpop.permute.xlu0 %7580
          %7584 = vset.pattern.permute.xlu0 0
          %7585 = vperm.xlu0 %7584, %v6667
          %v7586 = vpop.permute.xlu0 %7585
          %7589 = vset.pattern.permute.xlu0 0
          %7590 = vperm.xlu0 %7589, %v6668
          %v7591 = vpop.permute.xlu0 %7590
          %7594 = vset.pattern.permute.xlu0 0
          %7595 = vperm.xlu0 %7594, %v6669
          %v7596 = vpop.permute.xlu0 %7595
          %7599 = vset.pattern.permute.xlu0 0
          %7600 = vperm.xlu0 %7599, %v6670
          %v7601 = vpop.permute.xlu0 %7600
          %7604 = vset.pattern.permute.xlu0 0
          %7605 = vperm.xlu0 %7604, %v6671
          %v7606 = vpop.permute.xlu0 %7605
          %7609 = vset.pattern.permute.xlu0 0
          %7610 = vperm.xlu0 %7609, %v6672
          %v7611 = vpop.permute.xlu0 %7610
          %7614 = vset.pattern.permute.xlu0 0
          %7615 = vperm.xlu0 %7614, %v6673
          %v7616 = vpop.permute.xlu0 %7615
          %7619 = vset.pattern.permute.xlu0 0
          %7620 = vperm.xlu0 %7619, %v6674
          %v7621 = vpop.permute.xlu0 %7620
          %7624 = vset.pattern.permute.xlu0 0
          %7625 = vperm.xlu0 %7624, %v6675
          %v7626 = vpop.permute.xlu0 %7625
          %7629 = vset.pattern.permute.xlu0 0
          %7630 = vperm.xlu0 %7629, %v6676
          %v7631 = vpop.permute.xlu0 %7630
          %7634 = vset.pattern.permute.xlu0 0
          %7635 = vperm.xlu0 %7634, %v6677
          %v7636 = vpop.permute.xlu0 %7635
          %v7638 = vmul.f32 %v6841, %v6678
          %v7639 = vmul.f32 %v6846, %v6679
          %v7640 = vmul.f32 %v6851, %v6680
          %v7641 = vmul.f32 %v6856, %v6681
          %v7642 = vmul.f32 %v6861, %v6682
          %v7643 = vmul.f32 %v6866, %v6683
          %v7644 = vmul.f32 %v6871, %v6684
          %v7645 = vmul.f32 %v6876, %v6685
          %v7646 = vmul.f32 %v6881, %v6686
          %v7647 = vmul.f32 %v6886, %v6687
          %v7648 = vmul.f32 %v6891, %v6688
          %v7649 = vmul.f32 %v6896, %v6689
          %v7650 = vmul.f32 %v6901, %v6690
          %v7651 = vmul.f32 %v6906, %v6691
          %v7652 = vmul.f32 %v6911, %v6692
          %v7653 = vmul.f32 %v6916, %v6693
          %v7654 = vmul.f32 %v6921, %v6694
          %v7655 = vmul.f32 %v6926, %v6695
          %v7656 = vmul.f32 %v6931, %v6696
          %v7657 = vmul.f32 %v6936, %v6697
          %v7658 = vmul.f32 %v6941, %v6698
          %v7659 = vmul.f32 %v6946, %v6699
          %v7660 = vmul.f32 %v6951, %v6700
          %v7661 = vmul.f32 %v6956, %v6701
          %v7662 = vmul.f32 %v6961, %v6702
          %v7663 = vmul.f32 %v6966, %v6703
          %v7664 = vmul.f32 %v6971, %v6704
          %v7665 = vmul.f32 %v6976, %v6705
          %v7666 = vmul.f32 %v6981, %v6706
          %v7667 = vmul.f32 %v6986, %v6707
          %v7668 = vmul.f32 %v6991, %v6708
          %v7669 = vmul.f32 %v6996, %v6709
          %v7670 = vmul.f32 %v7001, %v6710
          %v7671 = vmul.f32 %v7006, %v6711
          %v7672 = vmul.f32 %v7011, %v6712
          %v7673 = vmul.f32 %v7016, %v6713
          %v7674 = vmul.f32 %v7021, %v6714
          %v7675 = vmul.f32 %v7026, %v6715
          %v7676 = vmul.f32 %v7031, %v6716
          %v7677 = vmul.f32 %v7036, %v6717
          %v7678 = vmul.f32 %v7041, %v6718
          %v7679 = vmul.f32 %v7046, %v6719
          %v7680 = vmul.f32 %v7051, %v6720
          %v7681 = vmul.f32 %v7056, %v6721
          %v7682 = vmul.f32 %v7061, %v6722
          %v7683 = vmul.f32 %v7066, %v6723
          %v7684 = vmul.f32 %v7071, %v6724
          %v7685 = vmul.f32 %v7076, %v6725
          %v7686 = vmul.f32 %v7081, %v6726
          %v7687 = vmul.f32 %v7086, %v6727
          %v7688 = vmul.f32 %v7091, %v6728
          %v7689 = vmul.f32 %v7096, %v6729
          %v7690 = vmul.f32 %v7101, %v6730
          %v7691 = vmul.f32 %v7106, %v6731
          %v7692 = vmul.f32 %v7111, %v6732
          %v7693 = vmul.f32 %v7116, %v6733
          %v7694 = vmul.f32 %v7121, %v6734
          %v7695 = vmul.f32 %v7126, %v6735
          %v7696 = vmul.f32 %v7131, %v6736
          %v7697 = vmul.f32 %v7136, %v6737
          %v7698 = vmul.f32 %v7141, %v6738
          %v7699 = vmul.f32 %v7146, %v6739
          %v7700 = vmul.f32 %v7151, %v6740
          %v7701 = vmul.f32 %v7156, %v6741
          %v7702 = vmul.f32 %v7161, %v6742
          %v7703 = vmul.f32 %v7166, %v6743
          %v7704 = vmul.f32 %v7171, %v6744
          %v7705 = vmul.f32 %v7176, %v6745
          %v7706 = vmul.f32 %v7181, %v6746
          %v7707 = vmul.f32 %v7186, %v6747
          %v7708 = vmul.f32 %v7191, %v6748
          %v7709 = vmul.f32 %v7196, %v6749
          %v7710 = vmul.f32 %v7201, %v6750
          %v7711 = vmul.f32 %v7206, %v6751
          %v7712 = vmul.f32 %v7211, %v6752
          %v7713 = vmul.f32 %v7216, %v6753
          %v7714 = vmul.f32 %v7221, %v6754
          %v7715 = vmul.f32 %v7226, %v6755
          %v7716 = vmul.f32 %v7231, %v6756
          %v7717 = vmul.f32 %v7236, %v6757
          %v7718 = vmul.f32 %v7241, %v6758
          %v7719 = vmul.f32 %v7246, %v6759
          %v7720 = vmul.f32 %v7251, %v6760
          %v7721 = vmul.f32 %v7256, %v6761
          %v7722 = vmul.f32 %v7261, %v6762
          %v7723 = vmul.f32 %v7266, %v6763
          %v7724 = vmul.f32 %v7271, %v6764
          %v7725 = vmul.f32 %v7276, %v6765
          %v7726 = vmul.f32 %v7281, %v6766
          %v7727 = vmul.f32 %v7286, %v6767
          %v7728 = vmul.f32 %v7291, %v6768
          %v7729 = vmul.f32 %v7296, %v6769
          %v7730 = vmul.f32 %v7301, %v6770
          %v7731 = vmul.f32 %v7306, %v6771
          %v7732 = vmul.f32 %v7311, %v6772
          %v7733 = vmul.f32 %v7316, %v6773
          %v7734 = vmul.f32 %v7321, %v6774
          %v7735 = vmul.f32 %v7326, %v6775
          %v7736 = vmul.f32 %v7331, %v6776
          %v7737 = vmul.f32 %v7336, %v6777
          %v7738 = vmul.f32 %v7341, %v6778
          %v7739 = vmul.f32 %v7346, %v6779
          %v7740 = vmul.f32 %v7351, %v6780
          %v7741 = vmul.f32 %v7356, %v6781
          %v7742 = vmul.f32 %v7361, %v6782
          %v7743 = vmul.f32 %v7366, %v6783
          %v7744 = vmul.f32 %v7371, %v6784
          %v7745 = vmul.f32 %v7376, %v6785
          %v7746 = vmul.f32 %v7381, %v6786
          %v7747 = vmul.f32 %v7386, %v6787
          %v7748 = vmul.f32 %v7391, %v6788
          %v7749 = vmul.f32 %v7396, %v6789
          %v7750 = vmul.f32 %v7401, %v6790
          %v7751 = vmul.f32 %v7406, %v6791
          %v7752 = vmul.f32 %v7411, %v6792
          %v7753 = vmul.f32 %v7416, %v6793
          %v7754 = vmul.f32 %v7421, %v6794
          %v7755 = vmul.f32 %v7426, %v6795
          %v7756 = vmul.f32 %v7431, %v6796
          %v7757 = vmul.f32 %v7436, %v6797
          %v7758 = vmul.f32 %v7441, %v6798
          %v7759 = vmul.f32 %v7446, %v6799
          %v7760 = vmul.f32 %v7451, %v6800
          %v7761 = vmul.f32 %v7456, %v6801
          %v7762 = vmul.f32 %v7461, %v6802
          %v7763 = vmul.f32 %v7466, %v6803
          %v7764 = vmul.f32 %v7471, %v6804
          %v7765 = vmul.f32 %v7476, %v6805
          %v7766 = vmul.f32 %v7481, %v6806
          %v7767 = vmul.f32 %v7486, %v6807
          %v7768 = vmul.f32 %v7491, %v6808
          %v7769 = vmul.f32 %v7496, %v6809
          %v7770 = vmul.f32 %v7501, %v6810
          %v7771 = vmul.f32 %v7506, %v6811
          %v7772 = vmul.f32 %v7511, %v6812
          %v7773 = vmul.f32 %v7516, %v6813
          %v7774 = vmul.f32 %v7521, %v6814
          %v7775 = vmul.f32 %v7526, %v6815
          %v7776 = vmul.f32 %v7531, %v6816
          %v7777 = vmul.f32 %v7536, %v6817
          %v7778 = vmul.f32 %v7541, %v6818
          %v7779 = vmul.f32 %v7546, %v6819
          %v7780 = vmul.f32 %v7551, %v6820
          %v7781 = vmul.f32 %v7556, %v6821
          %v7782 = vmul.f32 %v7561, %v6822
          %v7783 = vmul.f32 %v7566, %v6823
          %v7784 = vmul.f32 %v7571, %v6824
          %v7785 = vmul.f32 %v7576, %v6825
          %v7786 = vmul.f32 %v7581, %v6826
          %v7787 = vmul.f32 %v7586, %v6827
          %v7788 = vmul.f32 %v7591, %v6828
          %v7789 = vmul.f32 %v7596, %v6829
          %v7790 = vmul.f32 %v7601, %v6830
          %v7791 = vmul.f32 %v7606, %v6831
          %v7792 = vmul.f32 %v7611, %v6832
          %v7793 = vmul.f32 %v7616, %v6833
          %v7794 = vmul.f32 %v7621, %v6834
          %v7795 = vmul.f32 %v7626, %v6835
          %v7796 = vmul.f32 %v7631, %v6836
          %v7797 = vmul.f32 %v7636, %v6837
          %v7798 = vadd.f32 %v7638, %v7639
          %v7799 = vadd.f32 %v7798, %v7640
          %v7800 = vadd.f32 %v7799, %v7641
          %v7801 = vadd.f32 %v7800, %v7642
          %v7802 = vadd.f32 %v7801, %v7643
          %v7803 = vadd.f32 %v7802, %v7644
          %v7804 = vadd.f32 %v7803, %v7645
          %v7805 = vadd.f32 %v7804, %v7646
          %v7806 = vadd.f32 %v7805, %v7647
          %v7807 = vadd.f32 %v7806, %v7648
          %v7808 = vadd.f32 %v7807, %v7649
          %v7809 = vadd.f32 %v7808, %v7650
          %v7810 = vadd.f32 %v7809, %v7651
          %v7811 = vadd.f32 %v7810, %v7652
          %v7812 = vadd.f32 %v7811, %v7653
          %v7813 = vadd.f32 %v7812, %v7654
          %v7814 = vadd.f32 %v7813, %v7655
          %v7815 = vadd.f32 %v7814, %v7656
          %v7816 = vadd.f32 %v7815, %v7657
          %v7817 = vadd.f32 %v7816, %v7658
          %v7818 = vadd.f32 %v7817, %v7659
          %v7819 = vadd.f32 %v7818, %v7660
          %v7820 = vadd.f32 %v7819, %v7661
          %v7821 = vadd.f32 %v7820, %v7662
          %v7822 = vadd.f32 %v7821, %v7663
          %v7823 = vadd.f32 %v7822, %v7664
          %v7824 = vadd.f32 %v7823, %v7665
          %v7825 = vadd.f32 %v7824, %v7666
          %v7826 = vadd.f32 %v7825, %v7667
          %v7827 = vadd.f32 %v7826, %v7668
          %v7828 = vadd.f32 %v7827, %v7669
          %v7829 = vadd.f32 %v7828, %v7670
          %v7830 = vadd.f32 %v7829, %v7671
          %v7831 = vadd.f32 %v7830, %v7672
          %v7832 = vadd.f32 %v7831, %v7673
          %v7833 = vadd.f32 %v7832, %v7674
          %v7834 = vadd.f32 %v7833, %v7675
          %v7835 = vadd.f32 %v7834, %v7676
          %v7836 = vadd.f32 %v7835, %v7677
          %v7837 = vadd.f32 %v7836, %v7678
          %v7838 = vadd.f32 %v7837, %v7679
          %v7839 = vadd.f32 %v7838, %v7680
          %v7840 = vadd.f32 %v7839, %v7681
          %v7841 = vadd.f32 %v7840, %v7682
          %v7842 = vadd.f32 %v7841, %v7683
          %v7843 = vadd.f32 %v7842, %v7684
          %v7844 = vadd.f32 %v7843, %v7685
          %v7845 = vadd.f32 %v7844, %v7686
          %v7846 = vadd.f32 %v7845, %v7687
          %v7847 = vadd.f32 %v7846, %v7688
          %v7848 = vadd.f32 %v7847, %v7689
          %v7849 = vadd.f32 %v7848, %v7690
          %v7850 = vadd.f32 %v7849, %v7691
          %v7851 = vadd.f32 %v7850, %v7692
          %v7852 = vadd.f32 %v7851, %v7693
          %v7853 = vadd.f32 %v7852, %v7694
          %v7854 = vadd.f32 %v7853, %v7695
          %v7855 = vadd.f32 %v7854, %v7696
          %v7856 = vadd.f32 %v7855, %v7697
          %v7857 = vadd.f32 %v7856, %v7698
          %v7858 = vadd.f32 %v7857, %v7699
          %v7859 = vadd.f32 %v7858, %v7700
          %v7860 = vadd.f32 %v7859, %v7701
          %v7861 = vadd.f32 %v7860, %v7702
          %v7862 = vadd.f32 %v7861, %v7703
          %v7863 = vadd.f32 %v7862, %v7704
          %v7864 = vadd.f32 %v7863, %v7705
          %v7865 = vadd.f32 %v7864, %v7706
          %v7866 = vadd.f32 %v7865, %v7707
          %v7867 = vadd.f32 %v7866, %v7708
          %v7868 = vadd.f32 %v7867, %v7709
          %v7869 = vadd.f32 %v7868, %v7710
          %v7870 = vadd.f32 %v7869, %v7711
          %v7871 = vadd.f32 %v7870, %v7712
          %v7872 = vadd.f32 %v7871, %v7713
          %v7873 = vadd.f32 %v7872, %v7714
          %v7874 = vadd.f32 %v7873, %v7715
          %v7875 = vadd.f32 %v7874, %v7716
          %v7876 = vadd.f32 %v7875, %v7717
          %v7877 = vadd.f32 %v7876, %v7718
          %v7878 = vadd.f32 %v7877, %v7719
          %v7879 = vadd.f32 %v7878, %v7720
          %v7880 = vadd.f32 %v7879, %v7721
          %v7881 = vadd.f32 %v7880, %v7722
          %v7882 = vadd.f32 %v7881, %v7723
          %v7883 = vadd.f32 %v7882, %v7724
          %v7884 = vadd.f32 %v7883, %v7725
          %v7885 = vadd.f32 %v7884, %v7726
          %v7886 = vadd.f32 %v7885, %v7727
          %v7887 = vadd.f32 %v7886, %v7728
          %v7888 = vadd.f32 %v7887, %v7729
          %v7889 = vadd.f32 %v7888, %v7730
          %v7890 = vadd.f32 %v7889, %v7731
          %v7891 = vadd.f32 %v7890, %v7732
          %v7892 = vadd.f32 %v7891, %v7733
          %v7893 = vadd.f32 %v7892, %v7734
          %v7894 = vadd.f32 %v7893, %v7735
          %v7895 = vadd.f32 %v7894, %v7736
          %v7896 = vadd.f32 %v7895, %v7737
          %v7897 = vadd.f32 %v7896, %v7738
          %v7898 = vadd.f32 %v7897, %v7739
          %v7899 = vadd.f32 %v7898, %v7740
          %v7900 = vadd.f32 %v7899, %v7741
          %v7901 = vadd.f32 %v7900, %v7742
          %v7902 = vadd.f32 %v7901, %v7743
          %v7903 = vadd.f32 %v7902, %v7744
          %v7904 = vadd.f32 %v7903, %v7745
          %v7905 = vadd.f32 %v7904, %v7746
          %v7906 = vadd.f32 %v7905, %v7747
          %v7907 = vadd.f32 %v7906, %v7748
          %v7908 = vadd.f32 %v7907, %v7749
          %v7909 = vadd.f32 %v7908, %v7750
          %v7910 = vadd.f32 %v7909, %v7751
          %v7911 = vadd.f32 %v7910, %v7752
          %v7912 = vadd.f32 %v7911, %v7753
          %v7913 = vadd.f32 %v7912, %v7754
          %v7914 = vadd.f32 %v7913, %v7755
          %v7915 = vadd.f32 %v7914, %v7756
          %v7916 = vadd.f32 %v7915, %v7757
          %v7917 = vadd.f32 %v7916, %v7758
          %v7918 = vadd.f32 %v7917, %v7759
          %v7919 = vadd.f32 %v7918, %v7760
          %v7920 = vadd.f32 %v7919, %v7761
          %v7921 = vadd.f32 %v7920, %v7762
          %v7922 = vadd.f32 %v7921, %v7763
          %v7923 = vadd.f32 %v7922, %v7764
          %v7924 = vadd.f32 %v7923, %v7765
          %v7925 = vadd.f32 %v7924, %v7766
          %v7926 = vadd.f32 %v7925, %v7767
          %v7927 = vadd.f32 %v7926, %v7768
          %v7928 = vadd.f32 %v7927, %v7769
          %v7929 = vadd.f32 %v7928, %v7770
          %v7930 = vadd.f32 %v7929, %v7771
          %v7931 = vadd.f32 %v7930, %v7772
          %v7932 = vadd.f32 %v7931, %v7773
          %v7933 = vadd.f32 %v7932, %v7774
          %v7934 = vadd.f32 %v7933, %v7775
          %v7935 = vadd.f32 %v7934, %v7776
          %v7936 = vadd.f32 %v7935, %v7777
          %v7937 = vadd.f32 %v7936, %v7778
          %v7938 = vadd.f32 %v7937, %v7779
          %v7939 = vadd.f32 %v7938, %v7780
          %v7940 = vadd.f32 %v7939, %v7781
          %v7941 = vadd.f32 %v7940, %v7782
          %v7942 = vadd.f32 %v7941, %v7783
          %v7943 = vadd.f32 %v7942, %v7784
          %v7944 = vadd.f32 %v7943, %v7785
          %v7945 = vadd.f32 %v7944, %v7786
          %v7946 = vadd.f32 %v7945, %v7787
          %v7947 = vadd.f32 %v7946, %v7788
          %v7948 = vadd.f32 %v7947, %v7789
          %v7949 = vadd.f32 %v7948, %v7790
          %v7950 = vadd.f32 %v7949, %v7791
          %v7951 = vadd.f32 %v7950, %v7792
          %v7952 = vadd.f32 %v7951, %v7793
          %v7953 = vadd.f32 %v7952, %v7794
          %v7954 = vadd.f32 %v7953, %v7795
          %v7955 = vadd.f32 %v7954, %v7796
          %v7956 = vadd.f32 %v7955, %v7797
          %v7957 = vrot.slane %v7956, 4
          %v7958 = vadd.f32 %v7956, %v7957
          %v7959 = vrot.slane %v7958, 2
          %v7960 = vadd.f32 %v7958, %v7959
          %v7961 = vrot.slane %v7960, 1
          %v7962 = vadd.f32 %v7960, %v7961
          %v7963 = vmul.f32 %v7962, 0.00390625
          %v7964 = vld [vmem:[%s4] sm:$0x1]
          %v7965 = vadd.f32 %v7963, %v7964
          %7966 = vst [vmem:[%s236] sm:$0x1] %v7965
        $region48: #{tpu_custom_call.1} parent=39 // pred_fallthru
          _
        %s7967 = sand.u32 %s151, 1
        %s7968 = scalar_lea.sflag [#allocation4], %s7967
        %s7969 = sand.u32 %s151, 1
        %s7970 = scalar_lea.vmem [#allocation3], %s7969
        // Predicated region
        $region49: #{tpu_custom_call.1} parent=39 // pred_check
          %p7971 = pneg %p161
        $region50: #{tpu_custom_call.1} parent=39 // pred_check_branch
          %7973 = sbr.rel (%p7971) target = $region52
        $region51: #{tpu_custom_call.1} parent=39 // pred_region
          %7975 = vsyncadd %s7968, 0
          %s7976 = scalar_lea.hbm %s5, %s23
          %s7978 = sshll.u32 %s7970, 4
          %s7979 = int_to_ptr.vmem [resolvable:$true] %s7978
          %s7980 = sshll.u32 %s7976, 4
          %s7981 = int_to_ptr.hbm [resolvable:$true] %s7980
          %7983 = dma.vmem_to_hbm [thread:$0]  %s7979, 16, %s7981, %s7968
        $region52: #{tpu_custom_call.1} parent=39 // pred_fallthru
          _
      $region40: #{tpu_custom_call.1} parent=5 // pred_fallthru
        _
      %p7984 = scmp.le.s32.totalorder 2, %s14
      // Predicated region
      $region53: #{tpu_custom_call.1} parent=5 // pred_check
        %p7985 = pneg %p7984
      $region54: #{tpu_custom_call.1} parent=5 // pred_check_branch
        %7987 = sbr.rel (%p7985) target = $region56
      $region55: #{tpu_custom_call.1} parent=5 // pred_region
        %s7988 = ssub.s32 %s14, 2
        // Predicated region
        $region57: #{tpu_custom_call.1} parent=55 // pred_check
          %p7989 = pneg %p167
        $region58: #{tpu_custom_call.1} parent=55 // pred_check_branch
          %7991 = sbr.rel (%p7989) target = $region60
        $region59: #{tpu_custom_call.1} parent=55 // pred_region
          %s7992 = sand.u32 %s152, 1
          %s7993 = scalar_lea.sflag [#allocation4], %s7992
          %s7994 = sand.u32 %s152, 1
          %s7995 = scalar_lea.vmem [#allocation3], %s7994
          %7997 = dma.done %s7993, 16
        $region60: #{tpu_custom_call.1} parent=55 // pred_fallthru
          _
      $region56: #{tpu_custom_call.1} parent=5 // pred_fallthru
        _
    $region6: #{tpu_custom_call.1} parent=1 // loop_footer
      %s18 = sadd.s32 1, %s14
    $region7: #{tpu_custom_call.1} parent=1 // loop_footer_branch
      %13 = sbr.rel target = $region3
    $region8: #{tpu_custom_call.1} parent=1 // loop_exit
      _
    %7998 = vsyncpa [#allocation4], 1
    %s7999 = scalar_lea.sflag [#allocation4], 1
    %8000 = vsyncpa %s7999, 1

</llo_original>
